<compile_context>
chip_gen: v5e
topology: v5e:2x2
jax: 0.10.0
libtpu: 0.0.40
codegen_flags: <defaults>
</compile_context>

<pallas_src>
import math
from functools import partial

import numpy as np
import jax
import jax.numpy as jnp
from jax import lax
from jax.experimental import pallas as pl
from jax.experimental.pallas import tpu as pltpu

_SUBLANES = 8
_LANES = 128


# -----------------------------------------------------------------------------
# In-kernel building blocks (pure functions on loaded VMEM values)
# -----------------------------------------------------------------------------

def _attention(q_in, k_in, v_in, w, num_heads):
    """Multi-head attention on one batch element.

    q_in: (Nq, C)   k_in / v_in: (Nk, C)
    w = [wq, bq, wk, bk, wv, bv, wo, bo] with natural (in, out) layouts:
        wq/wk/wv: (C, Cint)  bq/bk/bv: (1, Cint)  wo: (Cint, C)  bo: (1, C)
    (wq / bq already carry the 1/sqrt(dh) scale.)
    """
    wq, bq, wk, bk, wv, bv, wo, bo = w
    cint = wq.shape[1]
    dh = cint // num_heads

    # Un-split projections: one full-width matmul each (no per-head dh-wide
    # matmuls, no broadcast_to of the activations).
    q = jnp.dot(q_in, wq, preferred_element_type=jnp.float32) + bq   # (Nq, Cint)
    k = jnp.dot(k_in, wk, preferred_element_type=jnp.float32) + bk   # (Nk, Cint)
    v = jnp.dot(v_in, wv, preferred_element_type=jnp.float32) + bv   # (Nk, Cint)

    heads = []
    for h in range(num_heads):
        sl = slice(h * dh, (h + 1) * dh)
        q_h = q[:, sl]          # (Nq, dh)   static lane slice
        k_h = k[:, sl]          # (Nk, dh)
        v_h = v[:, sl]          # (Nk, dh)
        # Scores: contraction on the last dim of both operands (idiomatic TPU
        # form; no explicit XLU transpose of K).  Scale already folded into q.
        s = jnp.einsum('qd,kd->qk', q_h, k_h,
                       preferred_element_type=jnp.float32)           # (Nq, Nk)
        # NOTE: the PyTorch +/-inf clamp is unreachable for finite f32 inputs
        # of this magnitude, so it is intentionally omitted (dead VPU work).
        s = s - jnp.max(s, axis=-1, keepdims=True)
        p = jnp.exp(s)
        p = p * pl.reciprocal(jnp.sum(p, axis=-1, keepdims=True), approx=True)
        heads.append(jnp.dot(p, v_h, preferred_element_type=jnp.float32))

    # Head recombination folded into the output projection: one
    # (Nq, Cint) @ (Cint, C) contraction, accumulation happens in the MXU.
    o = jnp.concatenate(heads, axis=-1)                              # (Nq, Cint)
    return jnp.dot(o, wo, preferred_element_type=jnp.float32) + bo


def _layernorm(x, w):
    """LayerNorm over the last axis. x: (N, C); w = [gamma, beta] each (1, C)."""
    gamma, beta = w
    mean = jnp.mean(x, axis=-1, keepdims=True)
    var = jnp.mean(jnp.square(x - mean), axis=-1, keepdims=True)
    return (x - mean) * lax.rsqrt(var + 1e-5) * gamma + beta


def _mlp(x, w):
    """Linear -> ReLU -> Linear. x: (N, C); w = [w1, b1, w2, b2]."""
    w1, b1, w2, b2 = w
    h = jnp.maximum(
        jnp.dot(x, w1, preferred_element_type=jnp.float32) + b1, 0.0)
    return jnp.dot(h, w2, preferred_element_type=jnp.float32) + b2


def _forward_one(point_emb, img_cn, imgpe_cn, wvals, depth, num_heads):
    """Full TwoWayTransformer forward for ONE batch element.

    point_emb: (Nq, C)   img_cn / imgpe_cn: (C, Nk)  (channel-major)
    wvals: flat list of loaded weight arrays in consumption order.
    """
    it = iter(wvals)

    def take(n):
        return [next(it) for _ in range(n)]

    query_pe = point_emb                 # (Nq, C)
    # Token-major relayout happens here (XLU is otherwise idle) instead of as
    # standalone XLA transpose kernels in the wrapper.
    key_pe = jnp.transpose(imgpe_cn)     # (Nk, C)
    keys = jnp.transpose(img_cn)         # (Nk, C)
    queries = query_pe                   # initial queries = point_embedding

    for i in range(depth):
        sa = take(8)      # self_attn
        n1 = take(2)      # norm1
        t2i = take(8)     # cross_attn_token_to_image
        n2 = take(2)      # norm2
        mlpw = take(4)    # mlp
        n3 = take(2)      # norm3
        n4 = take(2)      # norm4
        i2t = take(8)     # cross_attn_image_to_token

        # (1) self attention of sparse tokens (PE skipped on the first layer).
        if i == 0:
            queries = _attention(queries, queries, queries, sa, num_heads)
        else:
            q = queries + query_pe
            queries = queries + _attention(q, q, queries, sa, num_heads)
        queries = _layernorm(queries, n1)

        # (2) cross attention, tokens -> image.
        q = queries + query_pe
        k = keys + key_pe
        queries = queries + _attention(q, k, keys, t2i, num_heads)
        queries = _layernorm(queries, n2)

        # (3) MLP on tokens.
        queries = queries + _mlp(queries, mlpw)
        queries = _layernorm(queries, n3)

        # (4) cross attention, image -> tokens.
        q = queries + query_pe
        k = keys + key_pe
        keys = keys + _attention(k, q, queries, i2t, num_heads)
        keys = _layernorm(keys, n4)

    fa = take(8)   # final_attn_token_to_image
    nf = take(2)   # norm_final_attn

    q = queries + query_pe
    k = keys + key_pe
    queries = queries + _attention(q, k, keys, fa, num_heads)
    queries = _layernorm(queries, nf)
    return queries, keys


def _fused_kernel(depth, num_heads, nb, layout,
                  pe_ref, img_ref, imgpe_ref, slab_ref, out_q_ref, out_k_ref):
    """pe_ref: (nb, Nq, C)  img_ref/imgpe_ref: (nb, C, Nk)
    slab_ref: (R, 128) packed weights.  nb = batch rows handled per grid step.
    """
    # Carve every parameter out of the single packed slab with static views:
    # one big contiguous weight DMA instead of ~86 tiny masked ones.
    wvals = [slab_ref[pl.ds(off, r), pl.ds(0, c)] for (off, r, c) in layout]

    for b in range(nb):
        q_out, k_out = _forward_one(pe_ref[b], img_ref[b], imgpe_ref[b],
                                    wvals, depth, num_heads)
        out_q_ref[b] = q_out.astype(out_q_ref.dtype)
        out_k_ref[b] = k_out.astype(out_k_ref.dtype)


# -----------------------------------------------------------------------------
# Weight preparation + packing into one lane-dense slab (run ONCE, outside jit)
# -----------------------------------------------------------------------------

def _attn_prep(p, num_heads):
    cint = p["wq"].shape[1]
    dh = cint // num_heads
    scale = 1.0 / math.sqrt(dh)
    # 1/sqrt(dh) folded into the q projection -> zero in-kernel scaling cost.
    return [p["wq"] * scale, p["bq"] * scale,
            p["wk"], p["bk"], p["wv"], p["bv"], p["wo"], p["bo"]]


def _ln_prep(p):
    return [p["gamma"], p["beta"]]


def _mlp_prep(p):
    return [p["w1"], p["b1"], p["w2"], p["b2"]]


def _flatten_prepared(params, num_heads):
    flat = []
    for lp in params["layers"]:
        flat += _attn_prep(lp["self_attn"], num_heads)
        flat += _ln_prep(lp["norm1"])
        flat += _attn_prep(lp["cross_t2i"], num_heads)
        flat += _ln_prep(lp["norm2"])
        flat += _mlp_prep(lp["mlp"])
        flat += _ln_prep(lp["norm3"])
        flat += _ln_prep(lp["norm4"])
        flat += _attn_prep(lp["cross_i2t"], num_heads)
    flat += _attn_prep(params["final_attn"], num_heads)
    flat += _ln_prep(params["norm_final"])
    return flat


def _pack_slab(arrays):
    """Pad each (r, c) param to (round_up(r, 8), 128) f32 and stack along rows.

    Returns (slab, layout) where layout[i] = (row_offset, r, c); all row
    offsets are sublane-aligned (multiples of 8).
    """
    layout, pieces, off = [], [], 0
    for a in arrays:
        a = np.asarray(a, dtype=np.float32)
        r, c = a.shape
        rp = ((r + _SUBLANES - 1) // _SUBLANES) * _SUBLANES
        piece = np.zeros((rp, _LANES), dtype=np.float32)
        piece[:r, :c] = a
        pieces.append(piece)
        layout.append((off, r, c))
        off += rp
    slab = jnp.asarray(np.concatenate(pieces, axis=0))
    return slab, tuple(layout)


def prepare_two_way_transformer_params(params, num_heads):
    """One-time packing of every weight (scale-folded) into a single
    lane-dense (R, 128) f32 slab + static layout metadata."""
    return _pack_slab(_flatten_prepared(params, num_heads))


# -----------------------------------------------------------------------------
# pallas_call wrapper (the whole forward = one kernel launch)
# -----------------------------------------------------------------------------

def _is_single_tensorcore():
    """True on chips with one TensorCore (v5e / v6e) where a batch grid is
    just a serial loop paying per-step pipeline overhead."""
    try:
        kind = jax.devices()[0].device_kind.lower()
    except Exception:
        return False
    return any(t in kind for t in ("v5 lite", "v5e", "v6 lite", "v6e"))


def two_way_transformer(image_embedding, image_pe, point_embedding, slab, *,
                        layout, depth, num_heads, single_step=None):
    """image_embedding / image_pe: (B, C, H, W); point_embedding: (B, Nq, C).
    slab/layout come from prepare_two_way_transformer_params (outside jit)."""
    B, C, Himg, Wimg = image_embedding.shape
    Nk = Himg * Wimg
    Nq = point_embedding.shape[1]
    assert len(layout) == depth * 36 + 10, "packed layout does not match depth"

    if single_step is None:
        single_step = _is_single_tensorcore() or B == 1

    # (B, C, H, W) -> (B, C, HW): pure reshape, no data movement. The
    # token-major transpose happens in-kernel.
    img = image_embedding.reshape(B, C, Nk)
    imgpe = image_pe.reshape(B, C, Nk)

    nb = B if single_step else 1
    grid = (1,) if single_step else (B,)
    dmap = (lambda b: (0, 0, 0)) if single_step else (lambda b: (b, 0, 0))

    in_specs = [
        pl.BlockSpec((nb, Nq, C), dmap),
        pl.BlockSpec((nb, C, Nk), dmap),
        pl.BlockSpec((nb, C, Nk), dmap),
        # Single packed weight slab, constant block index across the grid.
        pl.BlockSpec(slab.shape, lambda b: (0, 0)),
    ]
    out_specs = (pl.BlockSpec((nb, Nq, C), dmap),
                 pl.BlockSpec((nb, Nk, C), dmap))
    out_shape = (jax.ShapeDtypeStruct((B, Nq, C), jnp.float32),
                 jax.ShapeDtypeStruct((B, Nk, C), jnp.float32))

    kernel = partial(_fused_kernel, depth, num_heads, nb, layout)
    return pl.pallas_call(
        kernel,
        out_shape=out_shape,
        grid=grid,
        in_specs=in_specs,
        out_specs=out_specs,
        compiler_params=pltpu.CompilerParams(
            # Batch axis splits across the 2 TensorCores on v7x/v5p; on
            # single-TC chips the grid is a single step anyway.
            dimension_semantics=("arbitrary",) if single_step else ("parallel",)),
    )(point_embedding, img, imgpe, slab)


# -----------------------------------------------------------------------------
# Parameter initialization (deterministic, synthetic; mirrors the PyTorch tree)
# -----------------------------------------------------------------------------

def _init_linear(key, in_dim, out_dim):
    w = jax.random.normal(key, (in_dim, out_dim), dtype=jnp.float32) * 0.02
    b = jnp.zeros((1, out_dim), dtype=jnp.float32)
    return w, b


def _init_attention(key, embedding_dim, downsample_rate):
    internal = embedding_dim // downsample_rate
    k1, k2, k3, k4 = jax.random.split(key, 4)
    wq, bq = _init_linear(k1, embedding_dim, internal)
    wk, bk = _init_linear(k2, embedding_dim, internal)
    wv, bv = _init_linear(k3, embedding_dim, internal)
    wo, bo = _init_linear(k4, internal, embedding_dim)
    return dict(wq=wq, bq=bq, wk=wk, bk=bk, wv=wv, bv=bv, wo=wo, bo=bo)


def _init_layernorm(embedding_dim):
    return dict(gamma=jnp.ones((1, embedding_dim), dtype=jnp.float32),
                beta=jnp.zeros((1, embedding_dim), dtype=jnp.float32))


def _init_block(key, embedding_dim, mlp_dim, attention_downsample_rate):
    ks = jax.random.split(key, 5)
    w1, b1 = _init_linear(ks[3], embedding_dim, mlp_dim)
    w2, b2 = _init_linear(ks[4], mlp_dim, embedding_dim)
    return dict(
        self_attn=_init_attention(ks[0], embedding_dim, 1),
        norm1=_init_layernorm(embedding_dim),
        cross_t2i=_init_attention(ks[1], embedding_dim,
                                  attention_downsample_rate),
        norm2=_init_layernorm(embedding_dim),
        mlp=dict(w1=w1, b1=b1, w2=w2, b2=b2),
        norm3=_init_layernorm(embedding_dim),
        norm4=_init_layernorm(embedding_dim),
        cross_i2t=_init_attention(ks[2], embedding_dim,
                                  attention_downsample_rate),
    )


def init_two_way_transformer(key, depth, embedding_dim, mlp_dim,
                             attention_downsample_rate=2):
    keys = jax.random.split(key, depth + 1)
    layers = [_init_block(keys[i], embedding_dim, mlp_dim,
                          attention_downsample_rate) for i in range(depth)]
    return dict(
        layers=layers,
        final_attn=_init_attention(keys[depth], embedding_dim,
                                   attention_downsample_rate),
        norm_final=_init_layernorm(embedding_dim),
    )


# -----------------------------------------------------------------------------
# Main
# -----------------------------------------------------------------------------

if __name__ == "__main__":
    depth = 2
    embedding_dim = 32
    num_heads = 4
    mlp_dim = 64
    attention_downsample_rate = 2

    B, H, W = 2, 8, 8          # image spatial
    N_points = 8               # sparse query tokens

    key = jax.random.PRNGKey(0)
    k_img, k_pe, k_pts, k_params = jax.random.split(key, 4)

    image_embedding = jax.random.normal(
        k_img, (B, embedding_dim, H, W), dtype=jnp.float32)
    image_pe = jax.random.normal(
        k_pe, (B, embedding_dim, H, W), dtype=jnp.float32)
    point_embedding = jax.random.normal(
        k_pts, (B, N_points, embedding_dim), dtype=jnp.float32)

    params = init_two_way_transformer(
        k_params, depth, embedding_dim, mlp_dim, attention_downsample_rate)

    # One-time weight prep: scale folding + packing into a single VMEM slab.
    slab, layout = prepare_two_way_transformer_params(params, num_heads)

    fwd = jax.jit(partial(two_way_transformer, layout=layout, depth=depth,
                          num_heads=num_heads))
    queries_out, keys_out = fwd(image_embedding, image_pe, point_embedding,
                                slab)

    jax.block_until_ready((queries_out, keys_out))
    assert queries_out.shape == (B, N_points, embedding_dim)
    assert keys_out.shape == (B, H * W, embedding_dim)
    assert bool(jnp.isfinite(queries_out).all())
    assert bool(jnp.isfinite(keys_out).all())
    print("KERNEL_OK")
</pallas_src>

<mosaic_0001>
module attributes {stable_mosaic.version = 11 : i64} {
  func.func @_fused_kernel(%arg0: i32, %arg1: memref<1x8x32xf32, #tpu.memory_space<vmem>>, %arg2: memref<1x32x64xf32, #tpu.memory_space<vmem>>, %arg3: memref<1x32x64xf32, #tpu.memory_space<vmem>>, %arg4: memref<1408x128xf32, #tpu.memory_space<vmem>>, %arg5: memref<1x8x32xf32, #tpu.memory_space<vmem>>, %arg6: memref<1x64x32xf32, #tpu.memory_space<vmem>>) attributes {dimension_semantics = [#tpu.dimension_semantics<parallel>], iteration_bounds = array<i64: 2>, scalar_prefetch = 0 : i64, scratch_operands = 0 : i64, tpu.core_type = #tpu.core_type<tc>, window_params = [{transform_indices = @transform_0, window_bounds = array<i64: 1, 8, 32>}, {transform_indices = @transform_1, window_bounds = array<i64: 1, 32, 64>}, {transform_indices = @transform_2, window_bounds = array<i64: 1, 32, 64>}, {pipeline_mode = #tpu.pipeline_mode<synchronous>, transform_indices = @transform_3, window_bounds = array<i64: 1408, 128>}, {transform_indices = @transform_4, window_bounds = array<i64: 1, 8, 32>}, {transform_indices = @transform_5, window_bounds = array<i64: 1, 64, 32>}]} {
    %c0 = arith.constant 0 : index
    %c0_0 = arith.constant 0 : index
    %0 = vector.load %arg4[%c0, %c0_0] : memref<1408x128xf32, #tpu.memory_space<vmem>>, vector<32x32xf32>
    %c32 = arith.constant 32 : index
    %c0_1 = arith.constant 0 : index
    %1 = vector.load %arg4[%c32, %c0_1] : memref<1408x128xf32, #tpu.memory_space<vmem>>, vector<1x32xf32>
    %c40 = arith.constant 40 : index
    %c0_2 = arith.constant 0 : index
    %2 = vector.load %arg4[%c40, %c0_2] : memref<1408x128xf32, #tpu.memory_space<vmem>>, vector<32x32xf32>
    %c72 = arith.constant 72 : index
    %c0_3 = arith.constant 0 : index
    %3 = vector.load %arg4[%c72, %c0_3] : memref<1408x128xf32, #tpu.memory_space<vmem>>, vector<1x32xf32>
    %c80 = arith.constant 80 : index
    %c0_4 = arith.constant 0 : index
    %4 = vector.load %arg4[%c80, %c0_4] : memref<1408x128xf32, #tpu.memory_space<vmem>>, vector<32x32xf32>
    %c112 = arith.constant 112 : index
    %c0_5 = arith.constant 0 : index
    %5 = vector.load %arg4[%c112, %c0_5] : memref<1408x128xf32, #tpu.memory_space<vmem>>, vector<1x32xf32>
    %c120 = arith.constant 120 : index
    %c0_6 = arith.constant 0 : index
    %6 = vector.load %arg4[%c120, %c0_6] : memref<1408x128xf32, #tpu.memory_space<vmem>>, vector<32x32xf32>
    %c152 = arith.constant 152 : index
    %c0_7 = arith.constant 0 : index
    %7 = vector.load %arg4[%c152, %c0_7] : memref<1408x128xf32, #tpu.memory_space<vmem>>, vector<1x32xf32>
    %c160 = arith.constant 160 : index
    %c0_8 = arith.constant 0 : index
    %8 = vector.load %arg4[%c160, %c0_8] : memref<1408x128xf32, #tpu.memory_space<vmem>>, vector<1x32xf32>
    %c168 = arith.constant 168 : index
    %c0_9 = arith.constant 0 : index
    %9 = vector.load %arg4[%c168, %c0_9] : memref<1408x128xf32, #tpu.memory_space<vmem>>, vector<1x32xf32>
    %c176 = arith.constant 176 : index
    %c0_10 = arith.constant 0 : index
    %10 = vector.load %arg4[%c176, %c0_10] : memref<1408x128xf32, #tpu.memory_space<vmem>>, vector<32x16xf32>
    %c208 = arith.constant 208 : index
    %c0_11 = arith.constant 0 : index
    %11 = vector.load %arg4[%c208, %c0_11] : memref<1408x128xf32, #tpu.memory_space<vmem>>, vector<1x16xf32>
    %c216 = arith.constant 216 : index
    %c0_12 = arith.constant 0 : index
    %12 = vector.load %arg4[%c216, %c0_12] : memref<1408x128xf32, #tpu.memory_space<vmem>>, vector<32x16xf32>
    %c248 = arith.constant 248 : index
    %c0_13 = arith.constant 0 : index
    %13 = vector.load %arg4[%c248, %c0_13] : memref<1408x128xf32, #tpu.memory_space<vmem>>, vector<1x16xf32>
    %c256 = arith.constant 256 : index
    %c0_14 = arith.constant 0 : index
    %14 = vector.load %arg4[%c256, %c0_14] : memref<1408x128xf32, #tpu.memory_space<vmem>>, vector<32x16xf32>
    %c288 = arith.constant 288 : index
    %c0_15 = arith.constant 0 : index
    %15 = vector.load %arg4[%c288, %c0_15] : memref<1408x128xf32, #tpu.memory_space<vmem>>, vector<1x16xf32>
    %c296 = arith.constant 296 : index
    %c0_16 = arith.constant 0 : index
    %16 = vector.load %arg4[%c296, %c0_16] : memref<1408x128xf32, #tpu.memory_space<vmem>>, vector<16x32xf32>
    %c312 = arith.constant 312 : index
    %c0_17 = arith.constant 0 : index
    %17 = vector.load %arg4[%c312, %c0_17] : memref<1408x128xf32, #tpu.memory_space<vmem>>, vector<1x32xf32>
    %c320 = arith.constant 320 : index
    %c0_18 = arith.constant 0 : index
    %18 = vector.load %arg4[%c320, %c0_18] : memref<1408x128xf32, #tpu.memory_space<vmem>>, vector<1x32xf32>
    %c328 = arith.constant 328 : index
    %c0_19 = arith.constant 0 : index
    %19 = vector.load %arg4[%c328, %c0_19] : memref<1408x128xf32, #tpu.memory_space<vmem>>, vector<1x32xf32>
    %c336 = arith.constant 336 : index
    %c0_20 = arith.constant 0 : index
    %20 = vector.load %arg4[%c336, %c0_20] : memref<1408x128xf32, #tpu.memory_space<vmem>>, vector<32x64xf32>
    %c368 = arith.constant 368 : index
    %c0_21 = arith.constant 0 : index
    %21 = vector.load %arg4[%c368, %c0_21] : memref<1408x128xf32, #tpu.memory_space<vmem>>, vector<1x64xf32>
    %c376 = arith.constant 376 : index
    %c0_22 = arith.constant 0 : index
    %22 = vector.load %arg4[%c376, %c0_22] : memref<1408x128xf32, #tpu.memory_space<vmem>>, vector<64x32xf32>
    %c440 = arith.constant 440 : index
    %c0_23 = arith.constant 0 : index
    %23 = vector.load %arg4[%c440, %c0_23] : memref<1408x128xf32, #tpu.memory_space<vmem>>, vector<1x32xf32>
    %c448 = arith.constant 448 : index
    %c0_24 = arith.constant 0 : index
    %24 = vector.load %arg4[%c448, %c0_24] : memref<1408x128xf32, #tpu.memory_space<vmem>>, vector<1x32xf32>
    %c456 = arith.constant 456 : index
    %c0_25 = arith.constant 0 : index
    %25 = vector.load %arg4[%c456, %c0_25] : memref<1408x128xf32, #tpu.memory_space<vmem>>, vector<1x32xf32>
    %c464 = arith.constant 464 : index
    %c0_26 = arith.constant 0 : index
    %26 = vector.load %arg4[%c464, %c0_26] : memref<1408x128xf32, #tpu.memory_space<vmem>>, vector<1x32xf32>
    %c472 = arith.constant 472 : index
    %c0_27 = arith.constant 0 : index
    %27 = vector.load %arg4[%c472, %c0_27] : memref<1408x128xf32, #tpu.memory_space<vmem>>, vector<1x32xf32>
    %c480 = arith.constant 480 : index
    %c0_28 = arith.constant 0 : index
    %28 = vector.load %arg4[%c480, %c0_28] : memref<1408x128xf32, #tpu.memory_space<vmem>>, vector<32x16xf32>
    %c512 = arith.constant 512 : index
    %c0_29 = arith.constant 0 : index
    %29 = vector.load %arg4[%c512, %c0_29] : memref<1408x128xf32, #tpu.memory_space<vmem>>, vector<1x16xf32>
    %c520 = arith.constant 520 : index
    %c0_30 = arith.constant 0 : index
    %30 = vector.load %arg4[%c520, %c0_30] : memref<1408x128xf32, #tpu.memory_space<vmem>>, vector<32x16xf32>
    %c552 = arith.constant 552 : index
    %c0_31 = arith.constant 0 : index
    %31 = vector.load %arg4[%c552, %c0_31] : memref<1408x128xf32, #tpu.memory_space<vmem>>, vector<1x16xf32>
    %c560 = arith.constant 560 : index
    %c0_32 = arith.constant 0 : index
    %32 = vector.load %arg4[%c560, %c0_32] : memref<1408x128xf32, #tpu.memory_space<vmem>>, vector<32x16xf32>
    %c592 = arith.constant 592 : index
    %c0_33 = arith.constant 0 : index
    %33 = vector.load %arg4[%c592, %c0_33] : memref<1408x128xf32, #tpu.memory_space<vmem>>, vector<1x16xf32>
    %c600 = arith.constant 600 : index
    %c0_34 = arith.constant 0 : index
    %34 = vector.load %arg4[%c600, %c0_34] : memref<1408x128xf32, #tpu.memory_space<vmem>>, vector<16x32xf32>
    %c616 = arith.constant 616 : index
    %c0_35 = arith.constant 0 : index
    %35 = vector.load %arg4[%c616, %c0_35] : memref<1408x128xf32, #tpu.memory_space<vmem>>, vector<1x32xf32>
    %c624 = arith.constant 624 : index
    %c0_36 = arith.constant 0 : index
    %36 = vector.load %arg4[%c624, %c0_36] : memref<1408x128xf32, #tpu.memory_space<vmem>>, vector<32x32xf32>
    %c656 = arith.constant 656 : index
    %c0_37 = arith.constant 0 : index
    %37 = vector.load %arg4[%c656, %c0_37] : memref<1408x128xf32, #tpu.memory_space<vmem>>, vector<1x32xf32>
    %c664 = arith.constant 664 : index
    %c0_38 = arith.constant 0 : index
    %38 = vector.load %arg4[%c664, %c0_38] : memref<1408x128xf32, #tpu.memory_space<vmem>>, vector<32x32xf32>
    %c696 = arith.constant 696 : index
    %c0_39 = arith.constant 0 : index
    %39 = vector.load %arg4[%c696, %c0_39] : memref<1408x128xf32, #tpu.memory_space<vmem>>, vector<1x32xf32>
    %c704 = arith.constant 704 : index
    %c0_40 = arith.constant 0 : index
    %40 = vector.load %arg4[%c704, %c0_40] : memref<1408x128xf32, #tpu.memory_space<vmem>>, vector<32x32xf32>
    %c736 = arith.constant 736 : index
    %c0_41 = arith.constant 0 : index
    %41 = vector.load %arg4[%c736, %c0_41] : memref<1408x128xf32, #tpu.memory_space<vmem>>, vector<1x32xf32>
    %c744 = arith.constant 744 : index
    %c0_42 = arith.constant 0 : index
    %42 = vector.load %arg4[%c744, %c0_42] : memref<1408x128xf32, #tpu.memory_space<vmem>>, vector<32x32xf32>
    %c776 = arith.constant 776 : index
    %c0_43 = arith.constant 0 : index
    %43 = vector.load %arg4[%c776, %c0_43] : memref<1408x128xf32, #tpu.memory_space<vmem>>, vector<1x32xf32>
    %c784 = arith.constant 784 : index
    %c0_44 = arith.constant 0 : index
    %44 = vector.load %arg4[%c784, %c0_44] : memref<1408x128xf32, #tpu.memory_space<vmem>>, vector<1x32xf32>
    %c792 = arith.constant 792 : index
    %c0_45 = arith.constant 0 : index
    %45 = vector.load %arg4[%c792, %c0_45] : memref<1408x128xf32, #tpu.memory_space<vmem>>, vector<1x32xf32>
    %c800 = arith.constant 800 : index
    %c0_46 = arith.constant 0 : index
    %46 = vector.load %arg4[%c800, %c0_46] : memref<1408x128xf32, #tpu.memory_space<vmem>>, vector<32x16xf32>
    %c832 = arith.constant 832 : index
    %c0_47 = arith.constant 0 : index
    %47 = vector.load %arg4[%c832, %c0_47] : memref<1408x128xf32, #tpu.memory_space<vmem>>, vector<1x16xf32>
    %c840 = arith.constant 840 : index
    %c0_48 = arith.constant 0 : index
    %48 = vector.load %arg4[%c840, %c0_48] : memref<1408x128xf32, #tpu.memory_space<vmem>>, vector<32x16xf32>
    %c872 = arith.constant 872 : index
    %c0_49 = arith.constant 0 : index
    %49 = vector.load %arg4[%c872, %c0_49] : memref<1408x128xf32, #tpu.memory_space<vmem>>, vector<1x16xf32>
    %c880 = arith.constant 880 : index
    %c0_50 = arith.constant 0 : index
    %50 = vector.load %arg4[%c880, %c0_50] : memref<1408x128xf32, #tpu.memory_space<vmem>>, vector<32x16xf32>
    %c912 = arith.constant 912 : index
    %c0_51 = arith.constant 0 : index
    %51 = vector.load %arg4[%c912, %c0_51] : memref<1408x128xf32, #tpu.memory_space<vmem>>, vector<1x16xf32>
    %c920 = arith.constant 920 : index
    %c0_52 = arith.constant 0 : index
    %52 = vector.load %arg4[%c920, %c0_52] : memref<1408x128xf32, #tpu.memory_space<vmem>>, vector<16x32xf32>
    %c936 = arith.constant 936 : index
    %c0_53 = arith.constant 0 : index
    %53 = vector.load %arg4[%c936, %c0_53] : memref<1408x128xf32, #tpu.memory_space<vmem>>, vector<1x32xf32>
    %c944 = arith.constant 944 : index
    %c0_54 = arith.constant 0 : index
    %54 = vector.load %arg4[%c944, %c0_54] : memref<1408x128xf32, #tpu.memory_space<vmem>>, vector<1x32xf32>
    %c952 = arith.constant 952 : index
    %c0_55 = arith.constant 0 : index
    %55 = vector.load %arg4[%c952, %c0_55] : memref<1408x128xf32, #tpu.memory_space<vmem>>, vector<1x32xf32>
    %c960 = arith.constant 960 : index
    %c0_56 = arith.constant 0 : index
    %56 = vector.load %arg4[%c960, %c0_56] : memref<1408x128xf32, #tpu.memory_space<vmem>>, vector<32x64xf32>
    %c992 = arith.constant 992 : index
    %c0_57 = arith.constant 0 : index
    %57 = vector.load %arg4[%c992, %c0_57] : memref<1408x128xf32, #tpu.memory_space<vmem>>, vector<1x64xf32>
    %c1000 = arith.constant 1000 : index
    %c0_58 = arith.constant 0 : index
    %58 = vector.load %arg4[%c1000, %c0_58] : memref<1408x128xf32, #tpu.memory_space<vmem>>, vector<64x32xf32>
    %c1064 = arith.constant 1064 : index
    %c0_59 = arith.constant 0 : index
    %59 = vector.load %arg4[%c1064, %c0_59] : memref<1408x128xf32, #tpu.memory_space<vmem>>, vector<1x32xf32>
    %c1072 = arith.constant 1072 : index
    %c0_60 = arith.constant 0 : index
    %60 = vector.load %arg4[%c1072, %c0_60] : memref<1408x128xf32, #tpu.memory_space<vmem>>, vector<1x32xf32>
    %c1080 = arith.constant 1080 : index
    %c0_61 = arith.constant 0 : index
    %61 = vector.load %arg4[%c1080, %c0_61] : memref<1408x128xf32, #tpu.memory_space<vmem>>, vector<1x32xf32>
    %c1088 = arith.constant 1088 : index
    %c0_62 = arith.constant 0 : index
    %62 = vector.load %arg4[%c1088, %c0_62] : memref<1408x128xf32, #tpu.memory_space<vmem>>, vector<1x32xf32>
    %c1096 = arith.constant 1096 : index
    %c0_63 = arith.constant 0 : index
    %63 = vector.load %arg4[%c1096, %c0_63] : memref<1408x128xf32, #tpu.memory_space<vmem>>, vector<1x32xf32>
    %c1104 = arith.constant 1104 : index
    %c0_64 = arith.constant 0 : index
    %64 = vector.load %arg4[%c1104, %c0_64] : memref<1408x128xf32, #tpu.memory_space<vmem>>, vector<32x16xf32>
    %c1136 = arith.constant 1136 : index
    %c0_65 = arith.constant 0 : index
    %65 = vector.load %arg4[%c1136, %c0_65] : memref<1408x128xf32, #tpu.memory_space<vmem>>, vector<1x16xf32>
    %c1144 = arith.constant 1144 : index
    %c0_66 = arith.constant 0 : index
    %66 = vector.load %arg4[%c1144, %c0_66] : memref<1408x128xf32, #tpu.memory_space<vmem>>, vector<32x16xf32>
    %c1176 = arith.constant 1176 : index
    %c0_67 = arith.constant 0 : index
    %67 = vector.load %arg4[%c1176, %c0_67] : memref<1408x128xf32, #tpu.memory_space<vmem>>, vector<1x16xf32>
    %c1184 = arith.constant 1184 : index
    %c0_68 = arith.constant 0 : index
    %68 = vector.load %arg4[%c1184, %c0_68] : memref<1408x128xf32, #tpu.memory_space<vmem>>, vector<32x16xf32>
    %c1216 = arith.constant 1216 : index
    %c0_69 = arith.constant 0 : index
    %69 = vector.load %arg4[%c1216, %c0_69] : memref<1408x128xf32, #tpu.memory_space<vmem>>, vector<1x16xf32>
    %c1224 = arith.constant 1224 : index
    %c0_70 = arith.constant 0 : index
    %70 = vector.load %arg4[%c1224, %c0_70] : memref<1408x128xf32, #tpu.memory_space<vmem>>, vector<16x32xf32>
    %c1240 = arith.constant 1240 : index
    %c0_71 = arith.constant 0 : index
    %71 = vector.load %arg4[%c1240, %c0_71] : memref<1408x128xf32, #tpu.memory_space<vmem>>, vector<1x32xf32>
    %c1248 = arith.constant 1248 : index
    %c0_72 = arith.constant 0 : index
    %72 = vector.load %arg4[%c1248, %c0_72] : memref<1408x128xf32, #tpu.memory_space<vmem>>, vector<32x16xf32>
    %c1280 = arith.constant 1280 : index
    %c0_73 = arith.constant 0 : index
    %73 = vector.load %arg4[%c1280, %c0_73] : memref<1408x128xf32, #tpu.memory_space<vmem>>, vector<1x16xf32>
    %c1288 = arith.constant 1288 : index
    %c0_74 = arith.constant 0 : index
    %74 = vector.load %arg4[%c1288, %c0_74] : memref<1408x128xf32, #tpu.memory_space<vmem>>, vector<32x16xf32>
    %c1320 = arith.constant 1320 : index
    %c0_75 = arith.constant 0 : index
    %75 = vector.load %arg4[%c1320, %c0_75] : memref<1408x128xf32, #tpu.memory_space<vmem>>, vector<1x16xf32>
    %c1328 = arith.constant 1328 : index
    %c0_76 = arith.constant 0 : index
    %76 = vector.load %arg4[%c1328, %c0_76] : memref<1408x128xf32, #tpu.memory_space<vmem>>, vector<32x16xf32>
    %c1360 = arith.constant 1360 : index
    %c0_77 = arith.constant 0 : index
    %77 = vector.load %arg4[%c1360, %c0_77] : memref<1408x128xf32, #tpu.memory_space<vmem>>, vector<1x16xf32>
    %c1368 = arith.constant 1368 : index
    %c0_78 = arith.constant 0 : index
    %78 = vector.load %arg4[%c1368, %c0_78] : memref<1408x128xf32, #tpu.memory_space<vmem>>, vector<16x32xf32>
    %c1384 = arith.constant 1384 : index
    %c0_79 = arith.constant 0 : index
    %79 = vector.load %arg4[%c1384, %c0_79] : memref<1408x128xf32, #tpu.memory_space<vmem>>, vector<1x32xf32>
    %c1392 = arith.constant 1392 : index
    %c0_80 = arith.constant 0 : index
    %80 = vector.load %arg4[%c1392, %c0_80] : memref<1408x128xf32, #tpu.memory_space<vmem>>, vector<1x32xf32>
    %c1400 = arith.constant 1400 : index
    %c0_81 = arith.constant 0 : index
    %81 = vector.load %arg4[%c1400, %c0_81] : memref<1408x128xf32, #tpu.memory_space<vmem>>, vector<1x32xf32>
    %c0_82 = arith.constant 0 : index
    %c0_83 = arith.constant 0 : index
    %c0_84 = arith.constant 0 : index
    %82 = vector.load %arg1[%c0_82, %c0_83, %c0_84] : memref<1x8x32xf32, #tpu.memory_space<vmem>>, vector<1x8x32xf32>
    %83 = vector.shape_cast %82 : vector<1x8x32xf32> to vector<8x32xf32>
    %c0_85 = arith.constant 0 : index
    %c0_86 = arith.constant 0 : index
    %c0_87 = arith.constant 0 : index
    %84 = vector.load %arg2[%c0_85, %c0_86, %c0_87] : memref<1x32x64xf32, #tpu.memory_space<vmem>>, vector<1x32x64xf32>
    %85 = vector.shape_cast %84 : vector<1x32x64xf32> to vector<32x64xf32>
    %c0_88 = arith.constant 0 : index
    %c0_89 = arith.constant 0 : index
    %c0_90 = arith.constant 0 : index
    %86 = vector.load %arg3[%c0_88, %c0_89, %c0_90] : memref<1x32x64xf32, #tpu.memory_space<vmem>>, vector<1x32x64xf32>
    %87 = vector.shape_cast %86 : vector<1x32x64xf32> to vector<32x64xf32>
    %88 = tpu.transpose %87, [1, 0] : vector<32x64xf32> -> vector<64x32xf32>
    %89 = tpu.transpose %85, [1, 0] : vector<32x64xf32> -> vector<64x32xf32>
    %cst = arith.constant dense<0.000000e+00> : vector<8x32xf32>
    %90 = tpu.matmul %83, %0, %cst {dimension_numbers = #tpu.dot_dimension_numbers<[1], [0], [0], [1], [0, 0, 1, 1], [], []>} : vector<8x32xf32>, vector<32x32xf32>, vector<8x32xf32> -> vector<8x32xf32>
    %91 = vector.broadcast %1 : vector<1x32xf32> to vector<8x32xf32>
    %92 = arith.addf %90, %91 : vector<8x32xf32>
    %cst_91 = arith.constant dense<0.000000e+00> : vector<8x32xf32>
    %93 = tpu.matmul %83, %2, %cst_91 {dimension_numbers = #tpu.dot_dimension_numbers<[1], [0], [0], [1], [0, 0, 1, 1], [], []>} : vector<8x32xf32>, vector<32x32xf32>, vector<8x32xf32> -> vector<8x32xf32>
    %94 = vector.broadcast %3 : vector<1x32xf32> to vector<8x32xf32>
    %95 = arith.addf %93, %94 : vector<8x32xf32>
    %cst_92 = arith.constant dense<0.000000e+00> : vector<8x32xf32>
    %96 = tpu.matmul %83, %4, %cst_92 {dimension_numbers = #tpu.dot_dimension_numbers<[1], [0], [0], [1], [0, 0, 1, 1], [], []>} : vector<8x32xf32>, vector<32x32xf32>, vector<8x32xf32> -> vector<8x32xf32>
    %97 = vector.broadcast %5 : vector<1x32xf32> to vector<8x32xf32>
    %98 = arith.addf %96, %97 : vector<8x32xf32>
    %99 = vector.extract_strided_slice %92 {offsets = [0, 0], sizes = [8, 8], strides = [1, 1]} : vector<8x32xf32> to vector<8x8xf32>
    %100 = vector.extract_strided_slice %95 {offsets = [0, 0], sizes = [8, 8], strides = [1, 1]} : vector<8x32xf32> to vector<8x8xf32>
    %101 = vector.extract_strided_slice %98 {offsets = [0, 0], sizes = [8, 8], strides = [1, 1]} : vector<8x32xf32> to vector<8x8xf32>
    "tpu.trace_start"() <{level = 10 : i32, message = "qd,kd->qk"}> : () -> ()
    %cst_93 = arith.constant dense<0.000000e+00> : vector<8x8xf32>
    %102 = tpu.matmul %99, %100, %cst_93 {dimension_numbers = #tpu.dot_dimension_numbers<[1], [1], [0], [0], [0, 0, 1, 0], [], []>} : vector<8x8xf32>, vector<8x8xf32>, vector<8x8xf32> -> vector<8x8xf32>
    "tpu.trace_stop"() : () -> ()
    %cst_94 = arith.constant dense<0xFF800000> : vector<8xf32>
    %103 = vector.multi_reduction <maximumf>, %102, %cst_94 [1] : vector<8x8xf32> to vector<8xf32>
    %104 = vector.shape_cast %103 : vector<8xf32> to vector<8x1xf32>
    %105 = vector.broadcast %104 : vector<8x1xf32> to vector<8x8xf32>
    %106 = arith.subf %102, %105 : vector<8x8xf32>
    %107 = math.exp %106 : vector<8x8xf32>
    %cst_95 = arith.constant dense<0.000000e+00> : vector<8xf32>
    %108 = vector.multi_reduction <add>, %107, %cst_95 [1] : vector<8x8xf32> to vector<8xf32>
    %109 = vector.shape_cast %108 : vector<8xf32> to vector<8x1xf32>
    %110 = tpu.reciprocal %109 {approx = true} : vector<8x1xf32> -> vector<8x1xf32>
    %111 = vector.broadcast %110 : vector<8x1xf32> to vector<8x8xf32>
    %112 = arith.mulf %107, %111 : vector<8x8xf32>
    %cst_96 = arith.constant dense<0.000000e+00> : vector<8x8xf32>
    %113 = tpu.matmul %112, %101, %cst_96 {dimension_numbers = #tpu.dot_dimension_numbers<[1], [0], [0], [1], [0, 0, 1, 1], [], []>} : vector<8x8xf32>, vector<8x8xf32>, vector<8x8xf32> -> vector<8x8xf32>
    %114 = vector.extract_strided_slice %92 {offsets = [0, 8], sizes = [8, 8], strides = [1, 1]} : vector<8x32xf32> to vector<8x8xf32>
    %115 = vector.extract_strided_slice %95 {offsets = [0, 8], sizes = [8, 8], strides = [1, 1]} : vector<8x32xf32> to vector<8x8xf32>
    %116 = vector.extract_strided_slice %98 {offsets = [0, 8], sizes = [8, 8], strides = [1, 1]} : vector<8x32xf32> to vector<8x8xf32>
    "tpu.trace_start"() <{level = 10 : i32, message = "qd,kd->qk"}> : () -> ()
    %cst_97 = arith.constant dense<0.000000e+00> : vector<8x8xf32>
    %117 = tpu.matmul %114, %115, %cst_97 {dimension_numbers = #tpu.dot_dimension_numbers<[1], [1], [0], [0], [0, 0, 1, 0], [], []>} : vector<8x8xf32>, vector<8x8xf32>, vector<8x8xf32> -> vector<8x8xf32>
    "tpu.trace_stop"() : () -> ()
    %cst_98 = arith.constant dense<0xFF800000> : vector<8xf32>
    %118 = vector.multi_reduction <maximumf>, %117, %cst_98 [1] : vector<8x8xf32> to vector<8xf32>
    %119 = vector.shape_cast %118 : vector<8xf32> to vector<8x1xf32>
    %120 = vector.broadcast %119 : vector<8x1xf32> to vector<8x8xf32>
    %121 = arith.subf %117, %120 : vector<8x8xf32>
    %122 = math.exp %121 : vector<8x8xf32>
    %cst_99 = arith.constant dense<0.000000e+00> : vector<8xf32>
    %123 = vector.multi_reduction <add>, %122, %cst_99 [1] : vector<8x8xf32> to vector<8xf32>
    %124 = vector.shape_cast %123 : vector<8xf32> to vector<8x1xf32>
    %125 = tpu.reciprocal %124 {approx = true} : vector<8x1xf32> -> vector<8x1xf32>
    %126 = vector.broadcast %125 : vector<8x1xf32> to vector<8x8xf32>
    %127 = arith.mulf %122, %126 : vector<8x8xf32>
    %cst_100 = arith.constant dense<0.000000e+00> : vector<8x8xf32>
    %128 = tpu.matmul %127, %116, %cst_100 {dimension_numbers = #tpu.dot_dimension_numbers<[1], [0], [0], [1], [0, 0, 1, 1], [], []>} : vector<8x8xf32>, vector<8x8xf32>, vector<8x8xf32> -> vector<8x8xf32>
    %129 = vector.extract_strided_slice %92 {offsets = [0, 16], sizes = [8, 8], strides = [1, 1]} : vector<8x32xf32> to vector<8x8xf32>
    %130 = vector.extract_strided_slice %95 {offsets = [0, 16], sizes = [8, 8], strides = [1, 1]} : vector<8x32xf32> to vector<8x8xf32>
    %131 = vector.extract_strided_slice %98 {offsets = [0, 16], sizes = [8, 8], strides = [1, 1]} : vector<8x32xf32> to vector<8x8xf32>
    "tpu.trace_start"() <{level = 10 : i32, message = "qd,kd->qk"}> : () -> ()
    %cst_101 = arith.constant dense<0.000000e+00> : vector<8x8xf32>
    %132 = tpu.matmul %129, %130, %cst_101 {dimension_numbers = #tpu.dot_dimension_numbers<[1], [1], [0], [0], [0, 0, 1, 0], [], []>} : vector<8x8xf32>, vector<8x8xf32>, vector<8x8xf32> -> vector<8x8xf32>
    "tpu.trace_stop"() : () -> ()
    %cst_102 = arith.constant dense<0xFF800000> : vector<8xf32>
    %133 = vector.multi_reduction <maximumf>, %132, %cst_102 [1] : vector<8x8xf32> to vector<8xf32>
    %134 = vector.shape_cast %133 : vector<8xf32> to vector<8x1xf32>
    %135 = vector.broadcast %134 : vector<8x1xf32> to vector<8x8xf32>
    %136 = arith.subf %132, %135 : vector<8x8xf32>
    %137 = math.exp %136 : vector<8x8xf32>
    %cst_103 = arith.constant dense<0.000000e+00> : vector<8xf32>
    %138 = vector.multi_reduction <add>, %137, %cst_103 [1] : vector<8x8xf32> to vector<8xf32>
    %139 = vector.shape_cast %138 : vector<8xf32> to vector<8x1xf32>
    %140 = tpu.reciprocal %139 {approx = true} : vector<8x1xf32> -> vector<8x1xf32>
    %141 = vector.broadcast %140 : vector<8x1xf32> to vector<8x8xf32>
    %142 = arith.mulf %137, %141 : vector<8x8xf32>
    %cst_104 = arith.constant dense<0.000000e+00> : vector<8x8xf32>
    %143 = tpu.matmul %142, %131, %cst_104 {dimension_numbers = #tpu.dot_dimension_numbers<[1], [0], [0], [1], [0, 0, 1, 1], [], []>} : vector<8x8xf32>, vector<8x8xf32>, vector<8x8xf32> -> vector<8x8xf32>
    %144 = vector.extract_strided_slice %92 {offsets = [0, 24], sizes = [8, 8], strides = [1, 1]} : vector<8x32xf32> to vector<8x8xf32>
    %145 = vector.extract_strided_slice %95 {offsets = [0, 24], sizes = [8, 8], strides = [1, 1]} : vector<8x32xf32> to vector<8x8xf32>
    %146 = vector.extract_strided_slice %98 {offsets = [0, 24], sizes = [8, 8], strides = [1, 1]} : vector<8x32xf32> to vector<8x8xf32>
    "tpu.trace_start"() <{level = 10 : i32, message = "qd,kd->qk"}> : () -> ()
    %cst_105 = arith.constant dense<0.000000e+00> : vector<8x8xf32>
    %147 = tpu.matmul %144, %145, %cst_105 {dimension_numbers = #tpu.dot_dimension_numbers<[1], [1], [0], [0], [0, 0, 1, 0], [], []>} : vector<8x8xf32>, vector<8x8xf32>, vector<8x8xf32> -> vector<8x8xf32>
    "tpu.trace_stop"() : () -> ()
    %cst_106 = arith.constant dense<0xFF800000> : vector<8xf32>
    %148 = vector.multi_reduction <maximumf>, %147, %cst_106 [1] : vector<8x8xf32> to vector<8xf32>
    %149 = vector.shape_cast %148 : vector<8xf32> to vector<8x1xf32>
    %150 = vector.broadcast %149 : vector<8x1xf32> to vector<8x8xf32>
    %151 = arith.subf %147, %150 : vector<8x8xf32>
    %152 = math.exp %151 : vector<8x8xf32>
    %cst_107 = arith.constant dense<0.000000e+00> : vector<8xf32>
    %153 = vector.multi_reduction <add>, %152, %cst_107 [1] : vector<8x8xf32> to vector<8xf32>
    %154 = vector.shape_cast %153 : vector<8xf32> to vector<8x1xf32>
    %155 = tpu.reciprocal %154 {approx = true} : vector<8x1xf32> -> vector<8x1xf32>
    %156 = vector.broadcast %155 : vector<8x1xf32> to vector<8x8xf32>
    %157 = arith.mulf %152, %156 : vector<8x8xf32>
    %cst_108 = arith.constant dense<0.000000e+00> : vector<8x8xf32>
    %158 = tpu.matmul %157, %146, %cst_108 {dimension_numbers = #tpu.dot_dimension_numbers<[1], [0], [0], [1], [0, 0, 1, 1], [], []>} : vector<8x8xf32>, vector<8x8xf32>, vector<8x8xf32> -> vector<8x8xf32>
    %159 = tpu.concatenate %113, %128, %143, %158 in 1 : vector<8x8xf32>, vector<8x8xf32>, vector<8x8xf32>, vector<8x8xf32> -> vector<8x32xf32>
    %cst_109 = arith.constant dense<0.000000e+00> : vector<8x32xf32>
    %160 = tpu.matmul %159, %6, %cst_109 {dimension_numbers = #tpu.dot_dimension_numbers<[1], [0], [0], [1], [0, 0, 1, 1], [], []>} : vector<8x32xf32>, vector<32x32xf32>, vector<8x32xf32> -> vector<8x32xf32>
    %161 = vector.broadcast %7 : vector<1x32xf32> to vector<8x32xf32>
    %162 = arith.addf %160, %161 : vector<8x32xf32>
    %cst_110 = arith.constant dense<0.000000e+00> : vector<8xf32>
    %163 = vector.multi_reduction <add>, %162, %cst_110 [1] : vector<8x32xf32> to vector<8xf32>
    %164 = vector.shape_cast %163 : vector<8xf32> to vector<8x1xf32>
    %cst_111 = arith.constant 3.200000e+01 : f32
    %165 = vector.broadcast %cst_111 : f32 to vector<8x1xf32>
    %166 = arith.divf %164, %165 : vector<8x1xf32>
    %167 = vector.broadcast %166 : vector<8x1xf32> to vector<8x32xf32>
    %168 = arith.subf %162, %167 : vector<8x32xf32>
    %169 = arith.mulf %168, %168 : vector<8x32xf32>
    %cst_112 = arith.constant dense<0.000000e+00> : vector<8xf32>
    %170 = vector.multi_reduction <add>, %169, %cst_112 [1] : vector<8x32xf32> to vector<8xf32>
    %171 = vector.shape_cast %170 : vector<8xf32> to vector<8x1xf32>
    %cst_113 = arith.constant 3.200000e+01 : f32
    %172 = vector.broadcast %cst_113 : f32 to vector<8x1xf32>
    %173 = arith.divf %171, %172 : vector<8x1xf32>
    %174 = vector.broadcast %166 : vector<8x1xf32> to vector<8x32xf32>
    %175 = arith.subf %162, %174 : vector<8x32xf32>
    %cst_114 = arith.constant 9.99999974E-6 : f32
    %176 = vector.broadcast %cst_114 : f32 to vector<8x1xf32>
    %177 = arith.addf %173, %176 : vector<8x1xf32>
    %178 = math.rsqrt %177 : vector<8x1xf32>
    %179 = vector.broadcast %178 : vector<8x1xf32> to vector<8x32xf32>
    %180 = arith.mulf %175, %179 : vector<8x32xf32>
    %181 = vector.broadcast %8 : vector<1x32xf32> to vector<8x32xf32>
    %182 = arith.mulf %180, %181 : vector<8x32xf32>
    %183 = vector.broadcast %9 : vector<1x32xf32> to vector<8x32xf32>
    %184 = arith.addf %182, %183 : vector<8x32xf32>
    %185 = arith.addf %184, %83 : vector<8x32xf32>
    %186 = arith.addf %89, %88 : vector<64x32xf32>
    %cst_115 = arith.constant dense<0.000000e+00> : vector<8x16xf32>
    %187 = tpu.matmul %185, %10, %cst_115 {dimension_numbers = #tpu.dot_dimension_numbers<[1], [0], [0], [1], [0, 0, 1, 1], [], []>} : vector<8x32xf32>, vector<32x16xf32>, vector<8x16xf32> -> vector<8x16xf32>
    %188 = vector.broadcast %11 : vector<1x16xf32> to vector<8x16xf32>
    %189 = arith.addf %187, %188 : vector<8x16xf32>
    %cst_116 = arith.constant dense<0.000000e+00> : vector<64x16xf32>
    %190 = tpu.matmul %186, %12, %cst_116 {dimension_numbers = #tpu.dot_dimension_numbers<[1], [0], [0], [1], [0, 0, 1, 1], [], []>} : vector<64x32xf32>, vector<32x16xf32>, vector<64x16xf32> -> vector<64x16xf32>
    %191 = vector.broadcast %13 : vector<1x16xf32> to vector<64x16xf32>
    %192 = arith.addf %190, %191 : vector<64x16xf32>
    %cst_117 = arith.constant dense<0.000000e+00> : vector<64x16xf32>
    %193 = tpu.matmul %89, %14, %cst_117 {dimension_numbers = #tpu.dot_dimension_numbers<[1], [0], [0], [1], [0, 0, 1, 1], [], []>} : vector<64x32xf32>, vector<32x16xf32>, vector<64x16xf32> -> vector<64x16xf32>
    %194 = vector.broadcast %15 : vector<1x16xf32> to vector<64x16xf32>
    %195 = arith.addf %193, %194 : vector<64x16xf32>
    %196 = vector.extract_strided_slice %189 {offsets = [0, 0], sizes = [8, 4], strides = [1, 1]} : vector<8x16xf32> to vector<8x4xf32>
    %197 = vector.extract_strided_slice %192 {offsets = [0, 0], sizes = [64, 4], strides = [1, 1]} : vector<64x16xf32> to vector<64x4xf32>
    %198 = vector.extract_strided_slice %195 {offsets = [0, 0], sizes = [64, 4], strides = [1, 1]} : vector<64x16xf32> to vector<64x4xf32>
    "tpu.trace_start"() <{level = 10 : i32, message = "qd,kd->qk"}> : () -> ()
    %cst_118 = arith.constant dense<0.000000e+00> : vector<8x64xf32>
    %199 = tpu.matmul %196, %197, %cst_118 {dimension_numbers = #tpu.dot_dimension_numbers<[1], [1], [0], [0], [0, 0, 1, 0], [], []>} : vector<8x4xf32>, vector<64x4xf32>, vector<8x64xf32> -> vector<8x64xf32>
    "tpu.trace_stop"() : () -> ()
    %cst_119 = arith.constant dense<0xFF800000> : vector<8xf32>
    %200 = vector.multi_reduction <maximumf>, %199, %cst_119 [1] : vector<8x64xf32> to vector<8xf32>
    %201 = vector.shape_cast %200 : vector<8xf32> to vector<8x1xf32>
    %202 = vector.broadcast %201 : vector<8x1xf32> to vector<8x64xf32>
    %203 = arith.subf %199, %202 : vector<8x64xf32>
    %204 = math.exp %203 : vector<8x64xf32>
    %cst_120 = arith.constant dense<0.000000e+00> : vector<8xf32>
    %205 = vector.multi_reduction <add>, %204, %cst_120 [1] : vector<8x64xf32> to vector<8xf32>
    %206 = vector.shape_cast %205 : vector<8xf32> to vector<8x1xf32>
    %207 = tpu.reciprocal %206 {approx = true} : vector<8x1xf32> -> vector<8x1xf32>
    %208 = vector.broadcast %207 : vector<8x1xf32> to vector<8x64xf32>
    %209 = arith.mulf %204, %208 : vector<8x64xf32>
    %cst_121 = arith.constant dense<0.000000e+00> : vector<8x4xf32>
    %210 = tpu.matmul %209, %198, %cst_121 {dimension_numbers = #tpu.dot_dimension_numbers<[1], [0], [0], [1], [0, 0, 1, 1], [], []>} : vector<8x64xf32>, vector<64x4xf32>, vector<8x4xf32> -> vector<8x4xf32>
    %211 = vector.extract_strided_slice %189 {offsets = [0, 4], sizes = [8, 4], strides = [1, 1]} : vector<8x16xf32> to vector<8x4xf32>
    %212 = vector.extract_strided_slice %192 {offsets = [0, 4], sizes = [64, 4], strides = [1, 1]} : vector<64x16xf32> to vector<64x4xf32>
    %213 = vector.extract_strided_slice %195 {offsets = [0, 4], sizes = [64, 4], strides = [1, 1]} : vector<64x16xf32> to vector<64x4xf32>
    "tpu.trace_start"() <{level = 10 : i32, message = "qd,kd->qk"}> : () -> ()
    %cst_122 = arith.constant dense<0.000000e+00> : vector<8x64xf32>
    %214 = tpu.matmul %211, %212, %cst_122 {dimension_numbers = #tpu.dot_dimension_numbers<[1], [1], [0], [0], [0, 0, 1, 0], [], []>} : vector<8x4xf32>, vector<64x4xf32>, vector<8x64xf32> -> vector<8x64xf32>
    "tpu.trace_stop"() : () -> ()
    %cst_123 = arith.constant dense<0xFF800000> : vector<8xf32>
    %215 = vector.multi_reduction <maximumf>, %214, %cst_123 [1] : vector<8x64xf32> to vector<8xf32>
    %216 = vector.shape_cast %215 : vector<8xf32> to vector<8x1xf32>
    %217 = vector.broadcast %216 : vector<8x1xf32> to vector<8x64xf32>
    %218 = arith.subf %214, %217 : vector<8x64xf32>
    %219 = math.exp %218 : vector<8x64xf32>
    %cst_124 = arith.constant dense<0.000000e+00> : vector<8xf32>
    %220 = vector.multi_reduction <add>, %219, %cst_124 [1] : vector<8x64xf32> to vector<8xf32>
    %221 = vector.shape_cast %220 : vector<8xf32> to vector<8x1xf32>
    %222 = tpu.reciprocal %221 {approx = true} : vector<8x1xf32> -> vector<8x1xf32>
    %223 = vector.broadcast %222 : vector<8x1xf32> to vector<8x64xf32>
    %224 = arith.mulf %219, %223 : vector<8x64xf32>
    %cst_125 = arith.constant dense<0.000000e+00> : vector<8x4xf32>
    %225 = tpu.matmul %224, %213, %cst_125 {dimension_numbers = #tpu.dot_dimension_numbers<[1], [0], [0], [1], [0, 0, 1, 1], [], []>} : vector<8x64xf32>, vector<64x4xf32>, vector<8x4xf32> -> vector<8x4xf32>
    %226 = vector.extract_strided_slice %189 {offsets = [0, 8], sizes = [8, 4], strides = [1, 1]} : vector<8x16xf32> to vector<8x4xf32>
    %227 = vector.extract_strided_slice %192 {offsets = [0, 8], sizes = [64, 4], strides = [1, 1]} : vector<64x16xf32> to vector<64x4xf32>
    %228 = vector.extract_strided_slice %195 {offsets = [0, 8], sizes = [64, 4], strides = [1, 1]} : vector<64x16xf32> to vector<64x4xf32>
    "tpu.trace_start"() <{level = 10 : i32, message = "qd,kd->qk"}> : () -> ()
    %cst_126 = arith.constant dense<0.000000e+00> : vector<8x64xf32>
    %229 = tpu.matmul %226, %227, %cst_126 {dimension_numbers = #tpu.dot_dimension_numbers<[1], [1], [0], [0], [0, 0, 1, 0], [], []>} : vector<8x4xf32>, vector<64x4xf32>, vector<8x64xf32> -> vector<8x64xf32>
    "tpu.trace_stop"() : () -> ()
    %cst_127 = arith.constant dense<0xFF800000> : vector<8xf32>
    %230 = vector.multi_reduction <maximumf>, %229, %cst_127 [1] : vector<8x64xf32> to vector<8xf32>
    %231 = vector.shape_cast %230 : vector<8xf32> to vector<8x1xf32>
    %232 = vector.broadcast %231 : vector<8x1xf32> to vector<8x64xf32>
    %233 = arith.subf %229, %232 : vector<8x64xf32>
    %234 = math.exp %233 : vector<8x64xf32>
    %cst_128 = arith.constant dense<0.000000e+00> : vector<8xf32>
    %235 = vector.multi_reduction <add>, %234, %cst_128 [1] : vector<8x64xf32> to vector<8xf32>
    %236 = vector.shape_cast %235 : vector<8xf32> to vector<8x1xf32>
    %237 = tpu.reciprocal %236 {approx = true} : vector<8x1xf32> -> vector<8x1xf32>
    %238 = vector.broadcast %237 : vector<8x1xf32> to vector<8x64xf32>
    %239 = arith.mulf %234, %238 : vector<8x64xf32>
    %cst_129 = arith.constant dense<0.000000e+00> : vector<8x4xf32>
    %240 = tpu.matmul %239, %228, %cst_129 {dimension_numbers = #tpu.dot_dimension_numbers<[1], [0], [0], [1], [0, 0, 1, 1], [], []>} : vector<8x64xf32>, vector<64x4xf32>, vector<8x4xf32> -> vector<8x4xf32>
    %241 = vector.extract_strided_slice %189 {offsets = [0, 12], sizes = [8, 4], strides = [1, 1]} : vector<8x16xf32> to vector<8x4xf32>
    %242 = vector.extract_strided_slice %192 {offsets = [0, 12], sizes = [64, 4], strides = [1, 1]} : vector<64x16xf32> to vector<64x4xf32>
    %243 = vector.extract_strided_slice %195 {offsets = [0, 12], sizes = [64, 4], strides = [1, 1]} : vector<64x16xf32> to vector<64x4xf32>
    "tpu.trace_start"() <{level = 10 : i32, message = "qd,kd->qk"}> : () -> ()
    %cst_130 = arith.constant dense<0.000000e+00> : vector<8x64xf32>
    %244 = tpu.matmul %241, %242, %cst_130 {dimension_numbers = #tpu.dot_dimension_numbers<[1], [1], [0], [0], [0, 0, 1, 0], [], []>} : vector<8x4xf32>, vector<64x4xf32>, vector<8x64xf32> -> vector<8x64xf32>
    "tpu.trace_stop"() : () -> ()
    %cst_131 = arith.constant dense<0xFF800000> : vector<8xf32>
    %245 = vector.multi_reduction <maximumf>, %244, %cst_131 [1] : vector<8x64xf32> to vector<8xf32>
    %246 = vector.shape_cast %245 : vector<8xf32> to vector<8x1xf32>
    %247 = vector.broadcast %246 : vector<8x1xf32> to vector<8x64xf32>
    %248 = arith.subf %244, %247 : vector<8x64xf32>
    %249 = math.exp %248 : vector<8x64xf32>
    %cst_132 = arith.constant dense<0.000000e+00> : vector<8xf32>
    %250 = vector.multi_reduction <add>, %249, %cst_132 [1] : vector<8x64xf32> to vector<8xf32>
    %251 = vector.shape_cast %250 : vector<8xf32> to vector<8x1xf32>
    %252 = tpu.reciprocal %251 {approx = true} : vector<8x1xf32> -> vector<8x1xf32>
    %253 = vector.broadcast %252 : vector<8x1xf32> to vector<8x64xf32>
    %254 = arith.mulf %249, %253 : vector<8x64xf32>
    %cst_133 = arith.constant dense<0.000000e+00> : vector<8x4xf32>
    %255 = tpu.matmul %254, %243, %cst_133 {dimension_numbers = #tpu.dot_dimension_numbers<[1], [0], [0], [1], [0, 0, 1, 1], [], []>} : vector<8x64xf32>, vector<64x4xf32>, vector<8x4xf32> -> vector<8x4xf32>
    %256 = tpu.concatenate %210, %225, %240, %255 in 1 : vector<8x4xf32>, vector<8x4xf32>, vector<8x4xf32>, vector<8x4xf32> -> vector<8x16xf32>
    %cst_134 = arith.constant dense<0.000000e+00> : vector<8x32xf32>
    %257 = tpu.matmul %256, %16, %cst_134 {dimension_numbers = #tpu.dot_dimension_numbers<[1], [0], [0], [1], [0, 0, 1, 1], [], []>} : vector<8x16xf32>, vector<16x32xf32>, vector<8x32xf32> -> vector<8x32xf32>
    %258 = vector.broadcast %17 : vector<1x32xf32> to vector<8x32xf32>
    %259 = arith.addf %257, %258 : vector<8x32xf32>
    %260 = arith.addf %184, %259 : vector<8x32xf32>
    %cst_135 = arith.constant dense<0.000000e+00> : vector<8xf32>
    %261 = vector.multi_reduction <add>, %260, %cst_135 [1] : vector<8x32xf32> to vector<8xf32>
    %262 = vector.shape_cast %261 : vector<8xf32> to vector<8x1xf32>
    %cst_136 = arith.constant 3.200000e+01 : f32
    %263 = vector.broadcast %cst_136 : f32 to vector<8x1xf32>
    %264 = arith.divf %262, %263 : vector<8x1xf32>
    %265 = vector.broadcast %264 : vector<8x1xf32> to vector<8x32xf32>
    %266 = arith.subf %260, %265 : vector<8x32xf32>
    %267 = arith.mulf %266, %266 : vector<8x32xf32>
    %cst_137 = arith.constant dense<0.000000e+00> : vector<8xf32>
    %268 = vector.multi_reduction <add>, %267, %cst_137 [1] : vector<8x32xf32> to vector<8xf32>
    %269 = vector.shape_cast %268 : vector<8xf32> to vector<8x1xf32>
    %cst_138 = arith.constant 3.200000e+01 : f32
    %270 = vector.broadcast %cst_138 : f32 to vector<8x1xf32>
    %271 = arith.divf %269, %270 : vector<8x1xf32>
    %272 = vector.broadcast %264 : vector<8x1xf32> to vector<8x32xf32>
    %273 = arith.subf %260, %272 : vector<8x32xf32>
    %cst_139 = arith.constant 9.99999974E-6 : f32
    %274 = vector.broadcast %cst_139 : f32 to vector<8x1xf32>
    %275 = arith.addf %271, %274 : vector<8x1xf32>
    %276 = math.rsqrt %275 : vector<8x1xf32>
    %277 = vector.broadcast %276 : vector<8x1xf32> to vector<8x32xf32>
    %278 = arith.mulf %273, %277 : vector<8x32xf32>
    %279 = vector.broadcast %18 : vector<1x32xf32> to vector<8x32xf32>
    %280 = arith.mulf %278, %279 : vector<8x32xf32>
    %281 = vector.broadcast %19 : vector<1x32xf32> to vector<8x32xf32>
    %282 = arith.addf %280, %281 : vector<8x32xf32>
    %cst_140 = arith.constant dense<0.000000e+00> : vector<8x64xf32>
    %283 = tpu.matmul %282, %20, %cst_140 {dimension_numbers = #tpu.dot_dimension_numbers<[1], [0], [0], [1], [0, 0, 1, 1], [], []>} : vector<8x32xf32>, vector<32x64xf32>, vector<8x64xf32> -> vector<8x64xf32>
    %284 = vector.broadcast %21 : vector<1x64xf32> to vector<8x64xf32>
    %285 = arith.addf %283, %284 : vector<8x64xf32>
    %cst_141 = arith.constant 0.000000e+00 : f32
    %286 = vector.broadcast %cst_141 : f32 to vector<8x64xf32>
    %287 = arith.maximumf %285, %286 : vector<8x64xf32>
    %cst_142 = arith.constant dense<0.000000e+00> : vector<8x32xf32>
    %288 = tpu.matmul %287, %22, %cst_142 {dimension_numbers = #tpu.dot_dimension_numbers<[1], [0], [0], [1], [0, 0, 1, 1], [], []>} : vector<8x64xf32>, vector<64x32xf32>, vector<8x32xf32> -> vector<8x32xf32>
    %289 = vector.broadcast %23 : vector<1x32xf32> to vector<8x32xf32>
    %290 = arith.addf %288, %289 : vector<8x32xf32>
    %291 = arith.addf %282, %290 : vector<8x32xf32>
    %cst_143 = arith.constant dense<0.000000e+00> : vector<8xf32>
    %292 = vector.multi_reduction <add>, %291, %cst_143 [1] : vector<8x32xf32> to vector<8xf32>
    %293 = vector.shape_cast %292 : vector<8xf32> to vector<8x1xf32>
    %cst_144 = arith.constant 3.200000e+01 : f32
    %294 = vector.broadcast %cst_144 : f32 to vector<8x1xf32>
    %295 = arith.divf %293, %294 : vector<8x1xf32>
    %296 = vector.broadcast %295 : vector<8x1xf32> to vector<8x32xf32>
    %297 = arith.subf %291, %296 : vector<8x32xf32>
    %298 = arith.mulf %297, %297 : vector<8x32xf32>
    %cst_145 = arith.constant dense<0.000000e+00> : vector<8xf32>
    %299 = vector.multi_reduction <add>, %298, %cst_145 [1] : vector<8x32xf32> to vector<8xf32>
    %300 = vector.shape_cast %299 : vector<8xf32> to vector<8x1xf32>
    %cst_146 = arith.constant 3.200000e+01 : f32
    %301 = vector.broadcast %cst_146 : f32 to vector<8x1xf32>
    %302 = arith.divf %300, %301 : vector<8x1xf32>
    %303 = vector.broadcast %295 : vector<8x1xf32> to vector<8x32xf32>
    %304 = arith.subf %291, %303 : vector<8x32xf32>
    %cst_147 = arith.constant 9.99999974E-6 : f32
    %305 = vector.broadcast %cst_147 : f32 to vector<8x1xf32>
    %306 = arith.addf %302, %305 : vector<8x1xf32>
    %307 = math.rsqrt %306 : vector<8x1xf32>
    %308 = vector.broadcast %307 : vector<8x1xf32> to vector<8x32xf32>
    %309 = arith.mulf %304, %308 : vector<8x32xf32>
    %310 = vector.broadcast %24 : vector<1x32xf32> to vector<8x32xf32>
    %311 = arith.mulf %309, %310 : vector<8x32xf32>
    %312 = vector.broadcast %25 : vector<1x32xf32> to vector<8x32xf32>
    %313 = arith.addf %311, %312 : vector<8x32xf32>
    %314 = arith.addf %313, %83 : vector<8x32xf32>
    %315 = arith.addf %89, %88 : vector<64x32xf32>
    %cst_148 = arith.constant dense<0.000000e+00> : vector<64x16xf32>
    %316 = tpu.matmul %315, %28, %cst_148 {dimension_numbers = #tpu.dot_dimension_numbers<[1], [0], [0], [1], [0, 0, 1, 1], [], []>} : vector<64x32xf32>, vector<32x16xf32>, vector<64x16xf32> -> vector<64x16xf32>
    %317 = vector.broadcast %29 : vector<1x16xf32> to vector<64x16xf32>
    %318 = arith.addf %316, %317 : vector<64x16xf32>
    %cst_149 = arith.constant dense<0.000000e+00> : vector<8x16xf32>
    %319 = tpu.matmul %314, %30, %cst_149 {dimension_numbers = #tpu.dot_dimension_numbers<[1], [0], [0], [1], [0, 0, 1, 1], [], []>} : vector<8x32xf32>, vector<32x16xf32>, vector<8x16xf32> -> vector<8x16xf32>
    %320 = vector.broadcast %31 : vector<1x16xf32> to vector<8x16xf32>
    %321 = arith.addf %319, %320 : vector<8x16xf32>
    %cst_150 = arith.constant dense<0.000000e+00> : vector<8x16xf32>
    %322 = tpu.matmul %313, %32, %cst_150 {dimension_numbers = #tpu.dot_dimension_numbers<[1], [0], [0], [1], [0, 0, 1, 1], [], []>} : vector<8x32xf32>, vector<32x16xf32>, vector<8x16xf32> -> vector<8x16xf32>
    %323 = vector.broadcast %33 : vector<1x16xf32> to vector<8x16xf32>
    %324 = arith.addf %322, %323 : vector<8x16xf32>
    %325 = vector.extract_strided_slice %318 {offsets = [0, 0], sizes = [64, 4], strides = [1, 1]} : vector<64x16xf32> to vector<64x4xf32>
    %326 = vector.extract_strided_slice %321 {offsets = [0, 0], sizes = [8, 4], strides = [1, 1]} : vector<8x16xf32> to vector<8x4xf32>
    %327 = vector.extract_strided_slice %324 {offsets = [0, 0], sizes = [8, 4], strides = [1, 1]} : vector<8x16xf32> to vector<8x4xf32>
    "tpu.trace_start"() <{level = 10 : i32, message = "qd,kd->qk"}> : () -> ()
    %cst_151 = arith.constant dense<0.000000e+00> : vector<64x8xf32>
    %328 = tpu.matmul %325, %326, %cst_151 {dimension_numbers = #tpu.dot_dimension_numbers<[1], [1], [0], [0], [0, 0, 1, 0], [], []>} : vector<64x4xf32>, vector<8x4xf32>, vector<64x8xf32> -> vector<64x8xf32>
    "tpu.trace_stop"() : () -> ()
    %cst_152 = arith.constant dense<0xFF800000> : vector<64xf32>
    %329 = vector.multi_reduction <maximumf>, %328, %cst_152 [1] : vector<64x8xf32> to vector<64xf32>
    %330 = vector.shape_cast %329 : vector<64xf32> to vector<64x1xf32>
    %331 = vector.broadcast %330 : vector<64x1xf32> to vector<64x8xf32>
    %332 = arith.subf %328, %331 : vector<64x8xf32>
    %333 = math.exp %332 : vector<64x8xf32>
    %cst_153 = arith.constant dense<0.000000e+00> : vector<64xf32>
    %334 = vector.multi_reduction <add>, %333, %cst_153 [1] : vector<64x8xf32> to vector<64xf32>
    %335 = vector.shape_cast %334 : vector<64xf32> to vector<64x1xf32>
    %336 = tpu.reciprocal %335 {approx = true} : vector<64x1xf32> -> vector<64x1xf32>
    %337 = vector.broadcast %336 : vector<64x1xf32> to vector<64x8xf32>
    %338 = arith.mulf %333, %337 : vector<64x8xf32>
    %cst_154 = arith.constant dense<0.000000e+00> : vector<64x4xf32>
    %339 = tpu.matmul %338, %327, %cst_154 {dimension_numbers = #tpu.dot_dimension_numbers<[1], [0], [0], [1], [0, 0, 1, 1], [], []>} : vector<64x8xf32>, vector<8x4xf32>, vector<64x4xf32> -> vector<64x4xf32>
    %340 = vector.extract_strided_slice %318 {offsets = [0, 4], sizes = [64, 4], strides = [1, 1]} : vector<64x16xf32> to vector<64x4xf32>
    %341 = vector.extract_strided_slice %321 {offsets = [0, 4], sizes = [8, 4], strides = [1, 1]} : vector<8x16xf32> to vector<8x4xf32>
    %342 = vector.extract_strided_slice %324 {offsets = [0, 4], sizes = [8, 4], strides = [1, 1]} : vector<8x16xf32> to vector<8x4xf32>
    "tpu.trace_start"() <{level = 10 : i32, message = "qd,kd->qk"}> : () -> ()
    %cst_155 = arith.constant dense<0.000000e+00> : vector<64x8xf32>
    %343 = tpu.matmul %340, %341, %cst_155 {dimension_numbers = #tpu.dot_dimension_numbers<[1], [1], [0], [0], [0, 0, 1, 0], [], []>} : vector<64x4xf32>, vector<8x4xf32>, vector<64x8xf32> -> vector<64x8xf32>
    "tpu.trace_stop"() : () -> ()
    %cst_156 = arith.constant dense<0xFF800000> : vector<64xf32>
    %344 = vector.multi_reduction <maximumf>, %343, %cst_156 [1] : vector<64x8xf32> to vector<64xf32>
    %345 = vector.shape_cast %344 : vector<64xf32> to vector<64x1xf32>
    %346 = vector.broadcast %345 : vector<64x1xf32> to vector<64x8xf32>
    %347 = arith.subf %343, %346 : vector<64x8xf32>
    %348 = math.exp %347 : vector<64x8xf32>
    %cst_157 = arith.constant dense<0.000000e+00> : vector<64xf32>
    %349 = vector.multi_reduction <add>, %348, %cst_157 [1] : vector<64x8xf32> to vector<64xf32>
    %350 = vector.shape_cast %349 : vector<64xf32> to vector<64x1xf32>
    %351 = tpu.reciprocal %350 {approx = true} : vector<64x1xf32> -> vector<64x1xf32>
    %352 = vector.broadcast %351 : vector<64x1xf32> to vector<64x8xf32>
    %353 = arith.mulf %348, %352 : vector<64x8xf32>
    %cst_158 = arith.constant dense<0.000000e+00> : vector<64x4xf32>
    %354 = tpu.matmul %353, %342, %cst_158 {dimension_numbers = #tpu.dot_dimension_numbers<[1], [0], [0], [1], [0, 0, 1, 1], [], []>} : vector<64x8xf32>, vector<8x4xf32>, vector<64x4xf32> -> vector<64x4xf32>
    %355 = vector.extract_strided_slice %318 {offsets = [0, 8], sizes = [64, 4], strides = [1, 1]} : vector<64x16xf32> to vector<64x4xf32>
    %356 = vector.extract_strided_slice %321 {offsets = [0, 8], sizes = [8, 4], strides = [1, 1]} : vector<8x16xf32> to vector<8x4xf32>
    %357 = vector.extract_strided_slice %324 {offsets = [0, 8], sizes = [8, 4], strides = [1, 1]} : vector<8x16xf32> to vector<8x4xf32>
    "tpu.trace_start"() <{level = 10 : i32, message = "qd,kd->qk"}> : () -> ()
    %cst_159 = arith.constant dense<0.000000e+00> : vector<64x8xf32>
    %358 = tpu.matmul %355, %356, %cst_159 {dimension_numbers = #tpu.dot_dimension_numbers<[1], [1], [0], [0], [0, 0, 1, 0], [], []>} : vector<64x4xf32>, vector<8x4xf32>, vector<64x8xf32> -> vector<64x8xf32>
    "tpu.trace_stop"() : () -> ()
    %cst_160 = arith.constant dense<0xFF800000> : vector<64xf32>
    %359 = vector.multi_reduction <maximumf>, %358, %cst_160 [1] : vector<64x8xf32> to vector<64xf32>
    %360 = vector.shape_cast %359 : vector<64xf32> to vector<64x1xf32>
    %361 = vector.broadcast %360 : vector<64x1xf32> to vector<64x8xf32>
    %362 = arith.subf %358, %361 : vector<64x8xf32>
    %363 = math.exp %362 : vector<64x8xf32>
    %cst_161 = arith.constant dense<0.000000e+00> : vector<64xf32>
    %364 = vector.multi_reduction <add>, %363, %cst_161 [1] : vector<64x8xf32> to vector<64xf32>
    %365 = vector.shape_cast %364 : vector<64xf32> to vector<64x1xf32>
    %366 = tpu.reciprocal %365 {approx = true} : vector<64x1xf32> -> vector<64x1xf32>
    %367 = vector.broadcast %366 : vector<64x1xf32> to vector<64x8xf32>
    %368 = arith.mulf %363, %367 : vector<64x8xf32>
    %cst_162 = arith.constant dense<0.000000e+00> : vector<64x4xf32>
    %369 = tpu.matmul %368, %357, %cst_162 {dimension_numbers = #tpu.dot_dimension_numbers<[1], [0], [0], [1], [0, 0, 1, 1], [], []>} : vector<64x8xf32>, vector<8x4xf32>, vector<64x4xf32> -> vector<64x4xf32>
    %370 = vector.extract_strided_slice %318 {offsets = [0, 12], sizes = [64, 4], strides = [1, 1]} : vector<64x16xf32> to vector<64x4xf32>
    %371 = vector.extract_strided_slice %321 {offsets = [0, 12], sizes = [8, 4], strides = [1, 1]} : vector<8x16xf32> to vector<8x4xf32>
    %372 = vector.extract_strided_slice %324 {offsets = [0, 12], sizes = [8, 4], strides = [1, 1]} : vector<8x16xf32> to vector<8x4xf32>
    "tpu.trace_start"() <{level = 10 : i32, message = "qd,kd->qk"}> : () -> ()
    %cst_163 = arith.constant dense<0.000000e+00> : vector<64x8xf32>
    %373 = tpu.matmul %370, %371, %cst_163 {dimension_numbers = #tpu.dot_dimension_numbers<[1], [1], [0], [0], [0, 0, 1, 0], [], []>} : vector<64x4xf32>, vector<8x4xf32>, vector<64x8xf32> -> vector<64x8xf32>
    "tpu.trace_stop"() : () -> ()
    %cst_164 = arith.constant dense<0xFF800000> : vector<64xf32>
    %374 = vector.multi_reduction <maximumf>, %373, %cst_164 [1] : vector<64x8xf32> to vector<64xf32>
    %375 = vector.shape_cast %374 : vector<64xf32> to vector<64x1xf32>
    %376 = vector.broadcast %375 : vector<64x1xf32> to vector<64x8xf32>
    %377 = arith.subf %373, %376 : vector<64x8xf32>
    %378 = math.exp %377 : vector<64x8xf32>
    %cst_165 = arith.constant dense<0.000000e+00> : vector<64xf32>
    %379 = vector.multi_reduction <add>, %378, %cst_165 [1] : vector<64x8xf32> to vector<64xf32>
    %380 = vector.shape_cast %379 : vector<64xf32> to vector<64x1xf32>
    %381 = tpu.reciprocal %380 {approx = true} : vector<64x1xf32> -> vector<64x1xf32>
    %382 = vector.broadcast %381 : vector<64x1xf32> to vector<64x8xf32>
    %383 = arith.mulf %378, %382 : vector<64x8xf32>
    %cst_166 = arith.constant dense<0.000000e+00> : vector<64x4xf32>
    %384 = tpu.matmul %383, %372, %cst_166 {dimension_numbers = #tpu.dot_dimension_numbers<[1], [0], [0], [1], [0, 0, 1, 1], [], []>} : vector<64x8xf32>, vector<8x4xf32>, vector<64x4xf32> -> vector<64x4xf32>
    %385 = tpu.concatenate %339, %354, %369, %384 in 1 : vector<64x4xf32>, vector<64x4xf32>, vector<64x4xf32>, vector<64x4xf32> -> vector<64x16xf32>
    %cst_167 = arith.constant dense<0.000000e+00> : vector<64x32xf32>
    %386 = tpu.matmul %385, %34, %cst_167 {dimension_numbers = #tpu.dot_dimension_numbers<[1], [0], [0], [1], [0, 0, 1, 1], [], []>} : vector<64x16xf32>, vector<16x32xf32>, vector<64x32xf32> -> vector<64x32xf32>
    %387 = vector.broadcast %35 : vector<1x32xf32> to vector<64x32xf32>
    %388 = arith.addf %386, %387 : vector<64x32xf32>
    %389 = arith.addf %89, %388 : vector<64x32xf32>
    %cst_168 = arith.constant dense<0.000000e+00> : vector<64xf32>
    %390 = vector.multi_reduction <add>, %389, %cst_168 [1] : vector<64x32xf32> to vector<64xf32>
    %391 = vector.shape_cast %390 : vector<64xf32> to vector<64x1xf32>
    %cst_169 = arith.constant 3.200000e+01 : f32
    %392 = vector.broadcast %cst_169 : f32 to vector<64x1xf32>
    %393 = arith.divf %391, %392 : vector<64x1xf32>
    %394 = vector.broadcast %393 : vector<64x1xf32> to vector<64x32xf32>
    %395 = arith.subf %389, %394 : vector<64x32xf32>
    %396 = arith.mulf %395, %395 : vector<64x32xf32>
    %cst_170 = arith.constant dense<0.000000e+00> : vector<64xf32>
    %397 = vector.multi_reduction <add>, %396, %cst_170 [1] : vector<64x32xf32> to vector<64xf32>
    %398 = vector.shape_cast %397 : vector<64xf32> to vector<64x1xf32>
    %cst_171 = arith.constant 3.200000e+01 : f32
    %399 = vector.broadcast %cst_171 : f32 to vector<64x1xf32>
    %400 = arith.divf %398, %399 : vector<64x1xf32>
    %401 = vector.broadcast %393 : vector<64x1xf32> to vector<64x32xf32>
    %402 = arith.subf %389, %401 : vector<64x32xf32>
    %cst_172 = arith.constant 9.99999974E-6 : f32
    %403 = vector.broadcast %cst_172 : f32 to vector<64x1xf32>
    %404 = arith.addf %400, %403 : vector<64x1xf32>
    %405 = math.rsqrt %404 : vector<64x1xf32>
    %406 = vector.broadcast %405 : vector<64x1xf32> to vector<64x32xf32>
    %407 = arith.mulf %402, %406 : vector<64x32xf32>
    %408 = vector.broadcast %26 : vector<1x32xf32> to vector<64x32xf32>
    %409 = arith.mulf %407, %408 : vector<64x32xf32>
    %410 = vector.broadcast %27 : vector<1x32xf32> to vector<64x32xf32>
    %411 = arith.addf %409, %410 : vector<64x32xf32>
    %412 = arith.addf %313, %83 : vector<8x32xf32>
    %cst_173 = arith.constant dense<0.000000e+00> : vector<8x32xf32>
    %413 = tpu.matmul %412, %36, %cst_173 {dimension_numbers = #tpu.dot_dimension_numbers<[1], [0], [0], [1], [0, 0, 1, 1], [], []>} : vector<8x32xf32>, vector<32x32xf32>, vector<8x32xf32> -> vector<8x32xf32>
    %414 = vector.broadcast %37 : vector<1x32xf32> to vector<8x32xf32>
    %415 = arith.addf %413, %414 : vector<8x32xf32>
    %cst_174 = arith.constant dense<0.000000e+00> : vector<8x32xf32>
    %416 = tpu.matmul %412, %38, %cst_174 {dimension_numbers = #tpu.dot_dimension_numbers<[1], [0], [0], [1], [0, 0, 1, 1], [], []>} : vector<8x32xf32>, vector<32x32xf32>, vector<8x32xf32> -> vector<8x32xf32>
    %417 = vector.broadcast %39 : vector<1x32xf32> to vector<8x32xf32>
    %418 = arith.addf %416, %417 : vector<8x32xf32>
    %cst_175 = arith.constant dense<0.000000e+00> : vector<8x32xf32>
    %419 = tpu.matmul %313, %40, %cst_175 {dimension_numbers = #tpu.dot_dimension_numbers<[1], [0], [0], [1], [0, 0, 1, 1], [], []>} : vector<8x32xf32>, vector<32x32xf32>, vector<8x32xf32> -> vector<8x32xf32>
    %420 = vector.broadcast %41 : vector<1x32xf32> to vector<8x32xf32>
    %421 = arith.addf %419, %420 : vector<8x32xf32>
    %422 = vector.extract_strided_slice %415 {offsets = [0, 0], sizes = [8, 8], strides = [1, 1]} : vector<8x32xf32> to vector<8x8xf32>
    %423 = vector.extract_strided_slice %418 {offsets = [0, 0], sizes = [8, 8], strides = [1, 1]} : vector<8x32xf32> to vector<8x8xf32>
    %424 = vector.extract_strided_slice %421 {offsets = [0, 0], sizes = [8, 8], strides = [1, 1]} : vector<8x32xf32> to vector<8x8xf32>
    "tpu.trace_start"() <{level = 10 : i32, message = "qd,kd->qk"}> : () -> ()
    %cst_176 = arith.constant dense<0.000000e+00> : vector<8x8xf32>
    %425 = tpu.matmul %422, %423, %cst_176 {dimension_numbers = #tpu.dot_dimension_numbers<[1], [1], [0], [0], [0, 0, 1, 0], [], []>} : vector<8x8xf32>, vector<8x8xf32>, vector<8x8xf32> -> vector<8x8xf32>
    "tpu.trace_stop"() : () -> ()
    %cst_177 = arith.constant dense<0xFF800000> : vector<8xf32>
    %426 = vector.multi_reduction <maximumf>, %425, %cst_177 [1] : vector<8x8xf32> to vector<8xf32>
    %427 = vector.shape_cast %426 : vector<8xf32> to vector<8x1xf32>
    %428 = vector.broadcast %427 : vector<8x1xf32> to vector<8x8xf32>
    %429 = arith.subf %425, %428 : vector<8x8xf32>
    %430 = math.exp %429 : vector<8x8xf32>
    %cst_178 = arith.constant dense<0.000000e+00> : vector<8xf32>
    %431 = vector.multi_reduction <add>, %430, %cst_178 [1] : vector<8x8xf32> to vector<8xf32>
    %432 = vector.shape_cast %431 : vector<8xf32> to vector<8x1xf32>
    %433 = tpu.reciprocal %432 {approx = true} : vector<8x1xf32> -> vector<8x1xf32>
    %434 = vector.broadcast %433 : vector<8x1xf32> to vector<8x8xf32>
    %435 = arith.mulf %430, %434 : vector<8x8xf32>
    %cst_179 = arith.constant dense<0.000000e+00> : vector<8x8xf32>
    %436 = tpu.matmul %435, %424, %cst_179 {dimension_numbers = #tpu.dot_dimension_numbers<[1], [0], [0], [1], [0, 0, 1, 1], [], []>} : vector<8x8xf32>, vector<8x8xf32>, vector<8x8xf32> -> vector<8x8xf32>
    %437 = vector.extract_strided_slice %415 {offsets = [0, 8], sizes = [8, 8], strides = [1, 1]} : vector<8x32xf32> to vector<8x8xf32>
    %438 = vector.extract_strided_slice %418 {offsets = [0, 8], sizes = [8, 8], strides = [1, 1]} : vector<8x32xf32> to vector<8x8xf32>
    %439 = vector.extract_strided_slice %421 {offsets = [0, 8], sizes = [8, 8], strides = [1, 1]} : vector<8x32xf32> to vector<8x8xf32>
    "tpu.trace_start"() <{level = 10 : i32, message = "qd,kd->qk"}> : () -> ()
    %cst_180 = arith.constant dense<0.000000e+00> : vector<8x8xf32>
    %440 = tpu.matmul %437, %438, %cst_180 {dimension_numbers = #tpu.dot_dimension_numbers<[1], [1], [0], [0], [0, 0, 1, 0], [], []>} : vector<8x8xf32>, vector<8x8xf32>, vector<8x8xf32> -> vector<8x8xf32>
    "tpu.trace_stop"() : () -> ()
    %cst_181 = arith.constant dense<0xFF800000> : vector<8xf32>
    %441 = vector.multi_reduction <maximumf>, %440, %cst_181 [1] : vector<8x8xf32> to vector<8xf32>
    %442 = vector.shape_cast %441 : vector<8xf32> to vector<8x1xf32>
    %443 = vector.broadcast %442 : vector<8x1xf32> to vector<8x8xf32>
    %444 = arith.subf %440, %443 : vector<8x8xf32>
    %445 = math.exp %444 : vector<8x8xf32>
    %cst_182 = arith.constant dense<0.000000e+00> : vector<8xf32>
    %446 = vector.multi_reduction <add>, %445, %cst_182 [1] : vector<8x8xf32> to vector<8xf32>
    %447 = vector.shape_cast %446 : vector<8xf32> to vector<8x1xf32>
    %448 = tpu.reciprocal %447 {approx = true} : vector<8x1xf32> -> vector<8x1xf32>
    %449 = vector.broadcast %448 : vector<8x1xf32> to vector<8x8xf32>
    %450 = arith.mulf %445, %449 : vector<8x8xf32>
    %cst_183 = arith.constant dense<0.000000e+00> : vector<8x8xf32>
    %451 = tpu.matmul %450, %439, %cst_183 {dimension_numbers = #tpu.dot_dimension_numbers<[1], [0], [0], [1], [0, 0, 1, 1], [], []>} : vector<8x8xf32>, vector<8x8xf32>, vector<8x8xf32> -> vector<8x8xf32>
    %452 = vector.extract_strided_slice %415 {offsets = [0, 16], sizes = [8, 8], strides = [1, 1]} : vector<8x32xf32> to vector<8x8xf32>
    %453 = vector.extract_strided_slice %418 {offsets = [0, 16], sizes = [8, 8], strides = [1, 1]} : vector<8x32xf32> to vector<8x8xf32>
    %454 = vector.extract_strided_slice %421 {offsets = [0, 16], sizes = [8, 8], strides = [1, 1]} : vector<8x32xf32> to vector<8x8xf32>
    "tpu.trace_start"() <{level = 10 : i32, message = "qd,kd->qk"}> : () -> ()
    %cst_184 = arith.constant dense<0.000000e+00> : vector<8x8xf32>
    %455 = tpu.matmul %452, %453, %cst_184 {dimension_numbers = #tpu.dot_dimension_numbers<[1], [1], [0], [0], [0, 0, 1, 0], [], []>} : vector<8x8xf32>, vector<8x8xf32>, vector<8x8xf32> -> vector<8x8xf32>
    "tpu.trace_stop"() : () -> ()
    %cst_185 = arith.constant dense<0xFF800000> : vector<8xf32>
    %456 = vector.multi_reduction <maximumf>, %455, %cst_185 [1] : vector<8x8xf32> to vector<8xf32>
    %457 = vector.shape_cast %456 : vector<8xf32> to vector<8x1xf32>
    %458 = vector.broadcast %457 : vector<8x1xf32> to vector<8x8xf32>
    %459 = arith.subf %455, %458 : vector<8x8xf32>
    %460 = math.exp %459 : vector<8x8xf32>
    %cst_186 = arith.constant dense<0.000000e+00> : vector<8xf32>
    %461 = vector.multi_reduction <add>, %460, %cst_186 [1] : vector<8x8xf32> to vector<8xf32>
    %462 = vector.shape_cast %461 : vector<8xf32> to vector<8x1xf32>
    %463 = tpu.reciprocal %462 {approx = true} : vector<8x1xf32> -> vector<8x1xf32>
    %464 = vector.broadcast %463 : vector<8x1xf32> to vector<8x8xf32>
    %465 = arith.mulf %460, %464 : vector<8x8xf32>
    %cst_187 = arith.constant dense<0.000000e+00> : vector<8x8xf32>
    %466 = tpu.matmul %465, %454, %cst_187 {dimension_numbers = #tpu.dot_dimension_numbers<[1], [0], [0], [1], [0, 0, 1, 1], [], []>} : vector<8x8xf32>, vector<8x8xf32>, vector<8x8xf32> -> vector<8x8xf32>
    %467 = vector.extract_strided_slice %415 {offsets = [0, 24], sizes = [8, 8], strides = [1, 1]} : vector<8x32xf32> to vector<8x8xf32>
    %468 = vector.extract_strided_slice %418 {offsets = [0, 24], sizes = [8, 8], strides = [1, 1]} : vector<8x32xf32> to vector<8x8xf32>
    %469 = vector.extract_strided_slice %421 {offsets = [0, 24], sizes = [8, 8], strides = [1, 1]} : vector<8x32xf32> to vector<8x8xf32>
    "tpu.trace_start"() <{level = 10 : i32, message = "qd,kd->qk"}> : () -> ()
    %cst_188 = arith.constant dense<0.000000e+00> : vector<8x8xf32>
    %470 = tpu.matmul %467, %468, %cst_188 {dimension_numbers = #tpu.dot_dimension_numbers<[1], [1], [0], [0], [0, 0, 1, 0], [], []>} : vector<8x8xf32>, vector<8x8xf32>, vector<8x8xf32> -> vector<8x8xf32>
    "tpu.trace_stop"() : () -> ()
    %cst_189 = arith.constant dense<0xFF800000> : vector<8xf32>
    %471 = vector.multi_reduction <maximumf>, %470, %cst_189 [1] : vector<8x8xf32> to vector<8xf32>
    %472 = vector.shape_cast %471 : vector<8xf32> to vector<8x1xf32>
    %473 = vector.broadcast %472 : vector<8x1xf32> to vector<8x8xf32>
    %474 = arith.subf %470, %473 : vector<8x8xf32>
    %475 = math.exp %474 : vector<8x8xf32>
    %cst_190 = arith.constant dense<0.000000e+00> : vector<8xf32>
    %476 = vector.multi_reduction <add>, %475, %cst_190 [1] : vector<8x8xf32> to vector<8xf32>
    %477 = vector.shape_cast %476 : vector<8xf32> to vector<8x1xf32>
    %478 = tpu.reciprocal %477 {approx = true} : vector<8x1xf32> -> vector<8x1xf32>
    %479 = vector.broadcast %478 : vector<8x1xf32> to vector<8x8xf32>
    %480 = arith.mulf %475, %479 : vector<8x8xf32>
    %cst_191 = arith.constant dense<0.000000e+00> : vector<8x8xf32>
    %481 = tpu.matmul %480, %469, %cst_191 {dimension_numbers = #tpu.dot_dimension_numbers<[1], [0], [0], [1], [0, 0, 1, 1], [], []>} : vector<8x8xf32>, vector<8x8xf32>, vector<8x8xf32> -> vector<8x8xf32>
    %482 = tpu.concatenate %436, %451, %466, %481 in 1 : vector<8x8xf32>, vector<8x8xf32>, vector<8x8xf32>, vector<8x8xf32> -> vector<8x32xf32>
    %cst_192 = arith.constant dense<0.000000e+00> : vector<8x32xf32>
    %483 = tpu.matmul %482, %42, %cst_192 {dimension_numbers = #tpu.dot_dimension_numbers<[1], [0], [0], [1], [0, 0, 1, 1], [], []>} : vector<8x32xf32>, vector<32x32xf32>, vector<8x32xf32> -> vector<8x32xf32>
    %484 = vector.broadcast %43 : vector<1x32xf32> to vector<8x32xf32>
    %485 = arith.addf %483, %484 : vector<8x32xf32>
    %486 = arith.addf %313, %485 : vector<8x32xf32>
    %cst_193 = arith.constant dense<0.000000e+00> : vector<8xf32>
    %487 = vector.multi_reduction <add>, %486, %cst_193 [1] : vector<8x32xf32> to vector<8xf32>
    %488 = vector.shape_cast %487 : vector<8xf32> to vector<8x1xf32>
    %cst_194 = arith.constant 3.200000e+01 : f32
    %489 = vector.broadcast %cst_194 : f32 to vector<8x1xf32>
    %490 = arith.divf %488, %489 : vector<8x1xf32>
    %491 = vector.broadcast %490 : vector<8x1xf32> to vector<8x32xf32>
    %492 = arith.subf %486, %491 : vector<8x32xf32>
    %493 = arith.mulf %492, %492 : vector<8x32xf32>
    %cst_195 = arith.constant dense<0.000000e+00> : vector<8xf32>
    %494 = vector.multi_reduction <add>, %493, %cst_195 [1] : vector<8x32xf32> to vector<8xf32>
    %495 = vector.shape_cast %494 : vector<8xf32> to vector<8x1xf32>
    %cst_196 = arith.constant 3.200000e+01 : f32
    %496 = vector.broadcast %cst_196 : f32 to vector<8x1xf32>
    %497 = arith.divf %495, %496 : vector<8x1xf32>
    %498 = vector.broadcast %490 : vector<8x1xf32> to vector<8x32xf32>
    %499 = arith.subf %486, %498 : vector<8x32xf32>
    %cst_197 = arith.constant 9.99999974E-6 : f32
    %500 = vector.broadcast %cst_197 : f32 to vector<8x1xf32>
    %501 = arith.addf %497, %500 : vector<8x1xf32>
    %502 = math.rsqrt %501 : vector<8x1xf32>
    %503 = vector.broadcast %502 : vector<8x1xf32> to vector<8x32xf32>
    %504 = arith.mulf %499, %503 : vector<8x32xf32>
    %505 = vector.broadcast %44 : vector<1x32xf32> to vector<8x32xf32>
    %506 = arith.mulf %504, %505 : vector<8x32xf32>
    %507 = vector.broadcast %45 : vector<1x32xf32> to vector<8x32xf32>
    %508 = arith.addf %506, %507 : vector<8x32xf32>
    %509 = arith.addf %508, %83 : vector<8x32xf32>
    %510 = arith.addf %411, %88 : vector<64x32xf32>
    %cst_198 = arith.constant dense<0.000000e+00> : vector<8x16xf32>
    %511 = tpu.matmul %509, %46, %cst_198 {dimension_numbers = #tpu.dot_dimension_numbers<[1], [0], [0], [1], [0, 0, 1, 1], [], []>} : vector<8x32xf32>, vector<32x16xf32>, vector<8x16xf32> -> vector<8x16xf32>
    %512 = vector.broadcast %47 : vector<1x16xf32> to vector<8x16xf32>
    %513 = arith.addf %511, %512 : vector<8x16xf32>
    %cst_199 = arith.constant dense<0.000000e+00> : vector<64x16xf32>
    %514 = tpu.matmul %510, %48, %cst_199 {dimension_numbers = #tpu.dot_dimension_numbers<[1], [0], [0], [1], [0, 0, 1, 1], [], []>} : vector<64x32xf32>, vector<32x16xf32>, vector<64x16xf32> -> vector<64x16xf32>
    %515 = vector.broadcast %49 : vector<1x16xf32> to vector<64x16xf32>
    %516 = arith.addf %514, %515 : vector<64x16xf32>
    %cst_200 = arith.constant dense<0.000000e+00> : vector<64x16xf32>
    %517 = tpu.matmul %411, %50, %cst_200 {dimension_numbers = #tpu.dot_dimension_numbers<[1], [0], [0], [1], [0, 0, 1, 1], [], []>} : vector<64x32xf32>, vector<32x16xf32>, vector<64x16xf32> -> vector<64x16xf32>
    %518 = vector.broadcast %51 : vector<1x16xf32> to vector<64x16xf32>
    %519 = arith.addf %517, %518 : vector<64x16xf32>
    %520 = vector.extract_strided_slice %513 {offsets = [0, 0], sizes = [8, 4], strides = [1, 1]} : vector<8x16xf32> to vector<8x4xf32>
    %521 = vector.extract_strided_slice %516 {offsets = [0, 0], sizes = [64, 4], strides = [1, 1]} : vector<64x16xf32> to vector<64x4xf32>
    %522 = vector.extract_strided_slice %519 {offsets = [0, 0], sizes = [64, 4], strides = [1, 1]} : vector<64x16xf32> to vector<64x4xf32>
    "tpu.trace_start"() <{level = 10 : i32, message = "qd,kd->qk"}> : () -> ()
    %cst_201 = arith.constant dense<0.000000e+00> : vector<8x64xf32>
    %523 = tpu.matmul %520, %521, %cst_201 {dimension_numbers = #tpu.dot_dimension_numbers<[1], [1], [0], [0], [0, 0, 1, 0], [], []>} : vector<8x4xf32>, vector<64x4xf32>, vector<8x64xf32> -> vector<8x64xf32>
    "tpu.trace_stop"() : () -> ()
    %cst_202 = arith.constant dense<0xFF800000> : vector<8xf32>
    %524 = vector.multi_reduction <maximumf>, %523, %cst_202 [1] : vector<8x64xf32> to vector<8xf32>
    %525 = vector.shape_cast %524 : vector<8xf32> to vector<8x1xf32>
    %526 = vector.broadcast %525 : vector<8x1xf32> to vector<8x64xf32>
    %527 = arith.subf %523, %526 : vector<8x64xf32>
    %528 = math.exp %527 : vector<8x64xf32>
    %cst_203 = arith.constant dense<0.000000e+00> : vector<8xf32>
    %529 = vector.multi_reduction <add>, %528, %cst_203 [1] : vector<8x64xf32> to vector<8xf32>
    %530 = vector.shape_cast %529 : vector<8xf32> to vector<8x1xf32>
    %531 = tpu.reciprocal %530 {approx = true} : vector<8x1xf32> -> vector<8x1xf32>
    %532 = vector.broadcast %531 : vector<8x1xf32> to vector<8x64xf32>
    %533 = arith.mulf %528, %532 : vector<8x64xf32>
    %cst_204 = arith.constant dense<0.000000e+00> : vector<8x4xf32>
    %534 = tpu.matmul %533, %522, %cst_204 {dimension_numbers = #tpu.dot_dimension_numbers<[1], [0], [0], [1], [0, 0, 1, 1], [], []>} : vector<8x64xf32>, vector<64x4xf32>, vector<8x4xf32> -> vector<8x4xf32>
    %535 = vector.extract_strided_slice %513 {offsets = [0, 4], sizes = [8, 4], strides = [1, 1]} : vector<8x16xf32> to vector<8x4xf32>
    %536 = vector.extract_strided_slice %516 {offsets = [0, 4], sizes = [64, 4], strides = [1, 1]} : vector<64x16xf32> to vector<64x4xf32>
    %537 = vector.extract_strided_slice %519 {offsets = [0, 4], sizes = [64, 4], strides = [1, 1]} : vector<64x16xf32> to vector<64x4xf32>
    "tpu.trace_start"() <{level = 10 : i32, message = "qd,kd->qk"}> : () -> ()
    %cst_205 = arith.constant dense<0.000000e+00> : vector<8x64xf32>
    %538 = tpu.matmul %535, %536, %cst_205 {dimension_numbers = #tpu.dot_dimension_numbers<[1], [1], [0], [0], [0, 0, 1, 0], [], []>} : vector<8x4xf32>, vector<64x4xf32>, vector<8x64xf32> -> vector<8x64xf32>
    "tpu.trace_stop"() : () -> ()
    %cst_206 = arith.constant dense<0xFF800000> : vector<8xf32>
    %539 = vector.multi_reduction <maximumf>, %538, %cst_206 [1] : vector<8x64xf32> to vector<8xf32>
    %540 = vector.shape_cast %539 : vector<8xf32> to vector<8x1xf32>
    %541 = vector.broadcast %540 : vector<8x1xf32> to vector<8x64xf32>
    %542 = arith.subf %538, %541 : vector<8x64xf32>
    %543 = math.exp %542 : vector<8x64xf32>
    %cst_207 = arith.constant dense<0.000000e+00> : vector<8xf32>
    %544 = vector.multi_reduction <add>, %543, %cst_207 [1] : vector<8x64xf32> to vector<8xf32>
    %545 = vector.shape_cast %544 : vector<8xf32> to vector<8x1xf32>
    %546 = tpu.reciprocal %545 {approx = true} : vector<8x1xf32> -> vector<8x1xf32>
    %547 = vector.broadcast %546 : vector<8x1xf32> to vector<8x64xf32>
    %548 = arith.mulf %543, %547 : vector<8x64xf32>
    %cst_208 = arith.constant dense<0.000000e+00> : vector<8x4xf32>
    %549 = tpu.matmul %548, %537, %cst_208 {dimension_numbers = #tpu.dot_dimension_numbers<[1], [0], [0], [1], [0, 0, 1, 1], [], []>} : vector<8x64xf32>, vector<64x4xf32>, vector<8x4xf32> -> vector<8x4xf32>
    %550 = vector.extract_strided_slice %513 {offsets = [0, 8], sizes = [8, 4], strides = [1, 1]} : vector<8x16xf32> to vector<8x4xf32>
    %551 = vector.extract_strided_slice %516 {offsets = [0, 8], sizes = [64, 4], strides = [1, 1]} : vector<64x16xf32> to vector<64x4xf32>
    %552 = vector.extract_strided_slice %519 {offsets = [0, 8], sizes = [64, 4], strides = [1, 1]} : vector<64x16xf32> to vector<64x4xf32>
    "tpu.trace_start"() <{level = 10 : i32, message = "qd,kd->qk"}> : () -> ()
    %cst_209 = arith.constant dense<0.000000e+00> : vector<8x64xf32>
    %553 = tpu.matmul %550, %551, %cst_209 {dimension_numbers = #tpu.dot_dimension_numbers<[1], [1], [0], [0], [0, 0, 1, 0], [], []>} : vector<8x4xf32>, vector<64x4xf32>, vector<8x64xf32> -> vector<8x64xf32>
    "tpu.trace_stop"() : () -> ()
    %cst_210 = arith.constant dense<0xFF800000> : vector<8xf32>
    %554 = vector.multi_reduction <maximumf>, %553, %cst_210 [1] : vector<8x64xf32> to vector<8xf32>
    %555 = vector.shape_cast %554 : vector<8xf32> to vector<8x1xf32>
    %556 = vector.broadcast %555 : vector<8x1xf32> to vector<8x64xf32>
    %557 = arith.subf %553, %556 : vector<8x64xf32>
    %558 = math.exp %557 : vector<8x64xf32>
    %cst_211 = arith.constant dense<0.000000e+00> : vector<8xf32>
    %559 = vector.multi_reduction <add>, %558, %cst_211 [1] : vector<8x64xf32> to vector<8xf32>
    %560 = vector.shape_cast %559 : vector<8xf32> to vector<8x1xf32>
    %561 = tpu.reciprocal %560 {approx = true} : vector<8x1xf32> -> vector<8x1xf32>
    %562 = vector.broadcast %561 : vector<8x1xf32> to vector<8x64xf32>
    %563 = arith.mulf %558, %562 : vector<8x64xf32>
    %cst_212 = arith.constant dense<0.000000e+00> : vector<8x4xf32>
    %564 = tpu.matmul %563, %552, %cst_212 {dimension_numbers = #tpu.dot_dimension_numbers<[1], [0], [0], [1], [0, 0, 1, 1], [], []>} : vector<8x64xf32>, vector<64x4xf32>, vector<8x4xf32> -> vector<8x4xf32>
    %565 = vector.extract_strided_slice %513 {offsets = [0, 12], sizes = [8, 4], strides = [1, 1]} : vector<8x16xf32> to vector<8x4xf32>
    %566 = vector.extract_strided_slice %516 {offsets = [0, 12], sizes = [64, 4], strides = [1, 1]} : vector<64x16xf32> to vector<64x4xf32>
    %567 = vector.extract_strided_slice %519 {offsets = [0, 12], sizes = [64, 4], strides = [1, 1]} : vector<64x16xf32> to vector<64x4xf32>
    "tpu.trace_start"() <{level = 10 : i32, message = "qd,kd->qk"}> : () -> ()
    %cst_213 = arith.constant dense<0.000000e+00> : vector<8x64xf32>
    %568 = tpu.matmul %565, %566, %cst_213 {dimension_numbers = #tpu.dot_dimension_numbers<[1], [1], [0], [0], [0, 0, 1, 0], [], []>} : vector<8x4xf32>, vector<64x4xf32>, vector<8x64xf32> -> vector<8x64xf32>
    "tpu.trace_stop"() : () -> ()
    %cst_214 = arith.constant dense<0xFF800000> : vector<8xf32>
    %569 = vector.multi_reduction <maximumf>, %568, %cst_214 [1] : vector<8x64xf32> to vector<8xf32>
    %570 = vector.shape_cast %569 : vector<8xf32> to vector<8x1xf32>
    %571 = vector.broadcast %570 : vector<8x1xf32> to vector<8x64xf32>
    %572 = arith.subf %568, %571 : vector<8x64xf32>
    %573 = math.exp %572 : vector<8x64xf32>
    %cst_215 = arith.constant dense<0.000000e+00> : vector<8xf32>
    %574 = vector.multi_reduction <add>, %573, %cst_215 [1] : vector<8x64xf32> to vector<8xf32>
    %575 = vector.shape_cast %574 : vector<8xf32> to vector<8x1xf32>
    %576 = tpu.reciprocal %575 {approx = true} : vector<8x1xf32> -> vector<8x1xf32>
    %577 = vector.broadcast %576 : vector<8x1xf32> to vector<8x64xf32>
    %578 = arith.mulf %573, %577 : vector<8x64xf32>
    %cst_216 = arith.constant dense<0.000000e+00> : vector<8x4xf32>
    %579 = tpu.matmul %578, %567, %cst_216 {dimension_numbers = #tpu.dot_dimension_numbers<[1], [0], [0], [1], [0, 0, 1, 1], [], []>} : vector<8x64xf32>, vector<64x4xf32>, vector<8x4xf32> -> vector<8x4xf32>
    %580 = tpu.concatenate %534, %549, %564, %579 in 1 : vector<8x4xf32>, vector<8x4xf32>, vector<8x4xf32>, vector<8x4xf32> -> vector<8x16xf32>
    %cst_217 = arith.constant dense<0.000000e+00> : vector<8x32xf32>
    %581 = tpu.matmul %580, %52, %cst_217 {dimension_numbers = #tpu.dot_dimension_numbers<[1], [0], [0], [1], [0, 0, 1, 1], [], []>} : vector<8x16xf32>, vector<16x32xf32>, vector<8x32xf32> -> vector<8x32xf32>
    %582 = vector.broadcast %53 : vector<1x32xf32> to vector<8x32xf32>
    %583 = arith.addf %581, %582 : vector<8x32xf32>
    %584 = arith.addf %508, %583 : vector<8x32xf32>
    %cst_218 = arith.constant dense<0.000000e+00> : vector<8xf32>
    %585 = vector.multi_reduction <add>, %584, %cst_218 [1] : vector<8x32xf32> to vector<8xf32>
    %586 = vector.shape_cast %585 : vector<8xf32> to vector<8x1xf32>
    %cst_219 = arith.constant 3.200000e+01 : f32
    %587 = vector.broadcast %cst_219 : f32 to vector<8x1xf32>
    %588 = arith.divf %586, %587 : vector<8x1xf32>
    %589 = vector.broadcast %588 : vector<8x1xf32> to vector<8x32xf32>
    %590 = arith.subf %584, %589 : vector<8x32xf32>
    %591 = arith.mulf %590, %590 : vector<8x32xf32>
    %cst_220 = arith.constant dense<0.000000e+00> : vector<8xf32>
    %592 = vector.multi_reduction <add>, %591, %cst_220 [1] : vector<8x32xf32> to vector<8xf32>
    %593 = vector.shape_cast %592 : vector<8xf32> to vector<8x1xf32>
    %cst_221 = arith.constant 3.200000e+01 : f32
    %594 = vector.broadcast %cst_221 : f32 to vector<8x1xf32>
    %595 = arith.divf %593, %594 : vector<8x1xf32>
    %596 = vector.broadcast %588 : vector<8x1xf32> to vector<8x32xf32>
    %597 = arith.subf %584, %596 : vector<8x32xf32>
    %cst_222 = arith.constant 9.99999974E-6 : f32
    %598 = vector.broadcast %cst_222 : f32 to vector<8x1xf32>
    %599 = arith.addf %595, %598 : vector<8x1xf32>
    %600 = math.rsqrt %599 : vector<8x1xf32>
    %601 = vector.broadcast %600 : vector<8x1xf32> to vector<8x32xf32>
    %602 = arith.mulf %597, %601 : vector<8x32xf32>
    %603 = vector.broadcast %54 : vector<1x32xf32> to vector<8x32xf32>
    %604 = arith.mulf %602, %603 : vector<8x32xf32>
    %605 = vector.broadcast %55 : vector<1x32xf32> to vector<8x32xf32>
    %606 = arith.addf %604, %605 : vector<8x32xf32>
    %cst_223 = arith.constant dense<0.000000e+00> : vector<8x64xf32>
    %607 = tpu.matmul %606, %56, %cst_223 {dimension_numbers = #tpu.dot_dimension_numbers<[1], [0], [0], [1], [0, 0, 1, 1], [], []>} : vector<8x32xf32>, vector<32x64xf32>, vector<8x64xf32> -> vector<8x64xf32>
    %608 = vector.broadcast %57 : vector<1x64xf32> to vector<8x64xf32>
    %609 = arith.addf %607, %608 : vector<8x64xf32>
    %cst_224 = arith.constant 0.000000e+00 : f32
    %610 = vector.broadcast %cst_224 : f32 to vector<8x64xf32>
    %611 = arith.maximumf %609, %610 : vector<8x64xf32>
    %cst_225 = arith.constant dense<0.000000e+00> : vector<8x32xf32>
    %612 = tpu.matmul %611, %58, %cst_225 {dimension_numbers = #tpu.dot_dimension_numbers<[1], [0], [0], [1], [0, 0, 1, 1], [], []>} : vector<8x64xf32>, vector<64x32xf32>, vector<8x32xf32> -> vector<8x32xf32>
    %613 = vector.broadcast %59 : vector<1x32xf32> to vector<8x32xf32>
    %614 = arith.addf %612, %613 : vector<8x32xf32>
    %615 = arith.addf %606, %614 : vector<8x32xf32>
    %cst_226 = arith.constant dense<0.000000e+00> : vector<8xf32>
    %616 = vector.multi_reduction <add>, %615, %cst_226 [1] : vector<8x32xf32> to vector<8xf32>
    %617 = vector.shape_cast %616 : vector<8xf32> to vector<8x1xf32>
    %cst_227 = arith.constant 3.200000e+01 : f32
    %618 = vector.broadcast %cst_227 : f32 to vector<8x1xf32>
    %619 = arith.divf %617, %618 : vector<8x1xf32>
    %620 = vector.broadcast %619 : vector<8x1xf32> to vector<8x32xf32>
    %621 = arith.subf %615, %620 : vector<8x32xf32>
    %622 = arith.mulf %621, %621 : vector<8x32xf32>
    %cst_228 = arith.constant dense<0.000000e+00> : vector<8xf32>
    %623 = vector.multi_reduction <add>, %622, %cst_228 [1] : vector<8x32xf32> to vector<8xf32>
    %624 = vector.shape_cast %623 : vector<8xf32> to vector<8x1xf32>
    %cst_229 = arith.constant 3.200000e+01 : f32
    %625 = vector.broadcast %cst_229 : f32 to vector<8x1xf32>
    %626 = arith.divf %624, %625 : vector<8x1xf32>
    %627 = vector.broadcast %619 : vector<8x1xf32> to vector<8x32xf32>
    %628 = arith.subf %615, %627 : vector<8x32xf32>
    %cst_230 = arith.constant 9.99999974E-6 : f32
    %629 = vector.broadcast %cst_230 : f32 to vector<8x1xf32>
    %630 = arith.addf %626, %629 : vector<8x1xf32>
    %631 = math.rsqrt %630 : vector<8x1xf32>
    %632 = vector.broadcast %631 : vector<8x1xf32> to vector<8x32xf32>
    %633 = arith.mulf %628, %632 : vector<8x32xf32>
    %634 = vector.broadcast %60 : vector<1x32xf32> to vector<8x32xf32>
    %635 = arith.mulf %633, %634 : vector<8x32xf32>
    %636 = vector.broadcast %61 : vector<1x32xf32> to vector<8x32xf32>
    %637 = arith.addf %635, %636 : vector<8x32xf32>
    %638 = arith.addf %637, %83 : vector<8x32xf32>
    %639 = arith.addf %411, %88 : vector<64x32xf32>
    %cst_231 = arith.constant dense<0.000000e+00> : vector<64x16xf32>
    %640 = tpu.matmul %639, %64, %cst_231 {dimension_numbers = #tpu.dot_dimension_numbers<[1], [0], [0], [1], [0, 0, 1, 1], [], []>} : vector<64x32xf32>, vector<32x16xf32>, vector<64x16xf32> -> vector<64x16xf32>
    %641 = vector.broadcast %65 : vector<1x16xf32> to vector<64x16xf32>
    %642 = arith.addf %640, %641 : vector<64x16xf32>
    %cst_232 = arith.constant dense<0.000000e+00> : vector<8x16xf32>
    %643 = tpu.matmul %638, %66, %cst_232 {dimension_numbers = #tpu.dot_dimension_numbers<[1], [0], [0], [1], [0, 0, 1, 1], [], []>} : vector<8x32xf32>, vector<32x16xf32>, vector<8x16xf32> -> vector<8x16xf32>
    %644 = vector.broadcast %67 : vector<1x16xf32> to vector<8x16xf32>
    %645 = arith.addf %643, %644 : vector<8x16xf32>
    %cst_233 = arith.constant dense<0.000000e+00> : vector<8x16xf32>
    %646 = tpu.matmul %637, %68, %cst_233 {dimension_numbers = #tpu.dot_dimension_numbers<[1], [0], [0], [1], [0, 0, 1, 1], [], []>} : vector<8x32xf32>, vector<32x16xf32>, vector<8x16xf32> -> vector<8x16xf32>
    %647 = vector.broadcast %69 : vector<1x16xf32> to vector<8x16xf32>
    %648 = arith.addf %646, %647 : vector<8x16xf32>
    %649 = vector.extract_strided_slice %642 {offsets = [0, 0], sizes = [64, 4], strides = [1, 1]} : vector<64x16xf32> to vector<64x4xf32>
    %650 = vector.extract_strided_slice %645 {offsets = [0, 0], sizes = [8, 4], strides = [1, 1]} : vector<8x16xf32> to vector<8x4xf32>
    %651 = vector.extract_strided_slice %648 {offsets = [0, 0], sizes = [8, 4], strides = [1, 1]} : vector<8x16xf32> to vector<8x4xf32>
    "tpu.trace_start"() <{level = 10 : i32, message = "qd,kd->qk"}> : () -> ()
    %cst_234 = arith.constant dense<0.000000e+00> : vector<64x8xf32>
    %652 = tpu.matmul %649, %650, %cst_234 {dimension_numbers = #tpu.dot_dimension_numbers<[1], [1], [0], [0], [0, 0, 1, 0], [], []>} : vector<64x4xf32>, vector<8x4xf32>, vector<64x8xf32> -> vector<64x8xf32>
    "tpu.trace_stop"() : () -> ()
    %cst_235 = arith.constant dense<0xFF800000> : vector<64xf32>
    %653 = vector.multi_reduction <maximumf>, %652, %cst_235 [1] : vector<64x8xf32> to vector<64xf32>
    %654 = vector.shape_cast %653 : vector<64xf32> to vector<64x1xf32>
    %655 = vector.broadcast %654 : vector<64x1xf32> to vector<64x8xf32>
    %656 = arith.subf %652, %655 : vector<64x8xf32>
    %657 = math.exp %656 : vector<64x8xf32>
    %cst_236 = arith.constant dense<0.000000e+00> : vector<64xf32>
    %658 = vector.multi_reduction <add>, %657, %cst_236 [1] : vector<64x8xf32> to vector<64xf32>
    %659 = vector.shape_cast %658 : vector<64xf32> to vector<64x1xf32>
    %660 = tpu.reciprocal %659 {approx = true} : vector<64x1xf32> -> vector<64x1xf32>
    %661 = vector.broadcast %660 : vector<64x1xf32> to vector<64x8xf32>
    %662 = arith.mulf %657, %661 : vector<64x8xf32>
    %cst_237 = arith.constant dense<0.000000e+00> : vector<64x4xf32>
    %663 = tpu.matmul %662, %651, %cst_237 {dimension_numbers = #tpu.dot_dimension_numbers<[1], [0], [0], [1], [0, 0, 1, 1], [], []>} : vector<64x8xf32>, vector<8x4xf32>, vector<64x4xf32> -> vector<64x4xf32>
    %664 = vector.extract_strided_slice %642 {offsets = [0, 4], sizes = [64, 4], strides = [1, 1]} : vector<64x16xf32> to vector<64x4xf32>
    %665 = vector.extract_strided_slice %645 {offsets = [0, 4], sizes = [8, 4], strides = [1, 1]} : vector<8x16xf32> to vector<8x4xf32>
    %666 = vector.extract_strided_slice %648 {offsets = [0, 4], sizes = [8, 4], strides = [1, 1]} : vector<8x16xf32> to vector<8x4xf32>
    "tpu.trace_start"() <{level = 10 : i32, message = "qd,kd->qk"}> : () -> ()
    %cst_238 = arith.constant dense<0.000000e+00> : vector<64x8xf32>
    %667 = tpu.matmul %664, %665, %cst_238 {dimension_numbers = #tpu.dot_dimension_numbers<[1], [1], [0], [0], [0, 0, 1, 0], [], []>} : vector<64x4xf32>, vector<8x4xf32>, vector<64x8xf32> -> vector<64x8xf32>
    "tpu.trace_stop"() : () -> ()
    %cst_239 = arith.constant dense<0xFF800000> : vector<64xf32>
    %668 = vector.multi_reduction <maximumf>, %667, %cst_239 [1] : vector<64x8xf32> to vector<64xf32>
    %669 = vector.shape_cast %668 : vector<64xf32> to vector<64x1xf32>
    %670 = vector.broadcast %669 : vector<64x1xf32> to vector<64x8xf32>
    %671 = arith.subf %667, %670 : vector<64x8xf32>
    %672 = math.exp %671 : vector<64x8xf32>
    %cst_240 = arith.constant dense<0.000000e+00> : vector<64xf32>
    %673 = vector.multi_reduction <add>, %672, %cst_240 [1] : vector<64x8xf32> to vector<64xf32>
    %674 = vector.shape_cast %673 : vector<64xf32> to vector<64x1xf32>
    %675 = tpu.reciprocal %674 {approx = true} : vector<64x1xf32> -> vector<64x1xf32>
    %676 = vector.broadcast %675 : vector<64x1xf32> to vector<64x8xf32>
    %677 = arith.mulf %672, %676 : vector<64x8xf32>
    %cst_241 = arith.constant dense<0.000000e+00> : vector<64x4xf32>
    %678 = tpu.matmul %677, %666, %cst_241 {dimension_numbers = #tpu.dot_dimension_numbers<[1], [0], [0], [1], [0, 0, 1, 1], [], []>} : vector<64x8xf32>, vector<8x4xf32>, vector<64x4xf32> -> vector<64x4xf32>
    %679 = vector.extract_strided_slice %642 {offsets = [0, 8], sizes = [64, 4], strides = [1, 1]} : vector<64x16xf32> to vector<64x4xf32>
    %680 = vector.extract_strided_slice %645 {offsets = [0, 8], sizes = [8, 4], strides = [1, 1]} : vector<8x16xf32> to vector<8x4xf32>
    %681 = vector.extract_strided_slice %648 {offsets = [0, 8], sizes = [8, 4], strides = [1, 1]} : vector<8x16xf32> to vector<8x4xf32>
    "tpu.trace_start"() <{level = 10 : i32, message = "qd,kd->qk"}> : () -> ()
    %cst_242 = arith.constant dense<0.000000e+00> : vector<64x8xf32>
    %682 = tpu.matmul %679, %680, %cst_242 {dimension_numbers = #tpu.dot_dimension_numbers<[1], [1], [0], [0], [0, 0, 1, 0], [], []>} : vector<64x4xf32>, vector<8x4xf32>, vector<64x8xf32> -> vector<64x8xf32>
    "tpu.trace_stop"() : () -> ()
    %cst_243 = arith.constant dense<0xFF800000> : vector<64xf32>
    %683 = vector.multi_reduction <maximumf>, %682, %cst_243 [1] : vector<64x8xf32> to vector<64xf32>
    %684 = vector.shape_cast %683 : vector<64xf32> to vector<64x1xf32>
    %685 = vector.broadcast %684 : vector<64x1xf32> to vector<64x8xf32>
    %686 = arith.subf %682, %685 : vector<64x8xf32>
    %687 = math.exp %686 : vector<64x8xf32>
    %cst_244 = arith.constant dense<0.000000e+00> : vector<64xf32>
    %688 = vector.multi_reduction <add>, %687, %cst_244 [1] : vector<64x8xf32> to vector<64xf32>
    %689 = vector.shape_cast %688 : vector<64xf32> to vector<64x1xf32>
    %690 = tpu.reciprocal %689 {approx = true} : vector<64x1xf32> -> vector<64x1xf32>
    %691 = vector.broadcast %690 : vector<64x1xf32> to vector<64x8xf32>
    %692 = arith.mulf %687, %691 : vector<64x8xf32>
    %cst_245 = arith.constant dense<0.000000e+00> : vector<64x4xf32>
    %693 = tpu.matmul %692, %681, %cst_245 {dimension_numbers = #tpu.dot_dimension_numbers<[1], [0], [0], [1], [0, 0, 1, 1], [], []>} : vector<64x8xf32>, vector<8x4xf32>, vector<64x4xf32> -> vector<64x4xf32>
    %694 = vector.extract_strided_slice %642 {offsets = [0, 12], sizes = [64, 4], strides = [1, 1]} : vector<64x16xf32> to vector<64x4xf32>
    %695 = vector.extract_strided_slice %645 {offsets = [0, 12], sizes = [8, 4], strides = [1, 1]} : vector<8x16xf32> to vector<8x4xf32>
    %696 = vector.extract_strided_slice %648 {offsets = [0, 12], sizes = [8, 4], strides = [1, 1]} : vector<8x16xf32> to vector<8x4xf32>
    "tpu.trace_start"() <{level = 10 : i32, message = "qd,kd->qk"}> : () -> ()
    %cst_246 = arith.constant dense<0.000000e+00> : vector<64x8xf32>
    %697 = tpu.matmul %694, %695, %cst_246 {dimension_numbers = #tpu.dot_dimension_numbers<[1], [1], [0], [0], [0, 0, 1, 0], [], []>} : vector<64x4xf32>, vector<8x4xf32>, vector<64x8xf32> -> vector<64x8xf32>
    "tpu.trace_stop"() : () -> ()
    %cst_247 = arith.constant dense<0xFF800000> : vector<64xf32>
    %698 = vector.multi_reduction <maximumf>, %697, %cst_247 [1] : vector<64x8xf32> to vector<64xf32>
    %699 = vector.shape_cast %698 : vector<64xf32> to vector<64x1xf32>
    %700 = vector.broadcast %699 : vector<64x1xf32> to vector<64x8xf32>
    %701 = arith.subf %697, %700 : vector<64x8xf32>
    %702 = math.exp %701 : vector<64x8xf32>
    %cst_248 = arith.constant dense<0.000000e+00> : vector<64xf32>
    %703 = vector.multi_reduction <add>, %702, %cst_248 [1] : vector<64x8xf32> to vector<64xf32>
    %704 = vector.shape_cast %703 : vector<64xf32> to vector<64x1xf32>
    %705 = tpu.reciprocal %704 {approx = true} : vector<64x1xf32> -> vector<64x1xf32>
    %706 = vector.broadcast %705 : vector<64x1xf32> to vector<64x8xf32>
    %707 = arith.mulf %702, %706 : vector<64x8xf32>
    %cst_249 = arith.constant dense<0.000000e+00> : vector<64x4xf32>
    %708 = tpu.matmul %707, %696, %cst_249 {dimension_numbers = #tpu.dot_dimension_numbers<[1], [0], [0], [1], [0, 0, 1, 1], [], []>} : vector<64x8xf32>, vector<8x4xf32>, vector<64x4xf32> -> vector<64x4xf32>
    %709 = tpu.concatenate %663, %678, %693, %708 in 1 : vector<64x4xf32>, vector<64x4xf32>, vector<64x4xf32>, vector<64x4xf32> -> vector<64x16xf32>
    %cst_250 = arith.constant dense<0.000000e+00> : vector<64x32xf32>
    %710 = tpu.matmul %709, %70, %cst_250 {dimension_numbers = #tpu.dot_dimension_numbers<[1], [0], [0], [1], [0, 0, 1, 1], [], []>} : vector<64x16xf32>, vector<16x32xf32>, vector<64x32xf32> -> vector<64x32xf32>
    %711 = vector.broadcast %71 : vector<1x32xf32> to vector<64x32xf32>
    %712 = arith.addf %710, %711 : vector<64x32xf32>
    %713 = arith.addf %411, %712 : vector<64x32xf32>
    %cst_251 = arith.constant dense<0.000000e+00> : vector<64xf32>
    %714 = vector.multi_reduction <add>, %713, %cst_251 [1] : vector<64x32xf32> to vector<64xf32>
    %715 = vector.shape_cast %714 : vector<64xf32> to vector<64x1xf32>
    %cst_252 = arith.constant 3.200000e+01 : f32
    %716 = vector.broadcast %cst_252 : f32 to vector<64x1xf32>
    %717 = arith.divf %715, %716 : vector<64x1xf32>
    %718 = vector.broadcast %717 : vector<64x1xf32> to vector<64x32xf32>
    %719 = arith.subf %713, %718 : vector<64x32xf32>
    %720 = arith.mulf %719, %719 : vector<64x32xf32>
    %cst_253 = arith.constant dense<0.000000e+00> : vector<64xf32>
    %721 = vector.multi_reduction <add>, %720, %cst_253 [1] : vector<64x32xf32> to vector<64xf32>
    %722 = vector.shape_cast %721 : vector<64xf32> to vector<64x1xf32>
    %cst_254 = arith.constant 3.200000e+01 : f32
    %723 = vector.broadcast %cst_254 : f32 to vector<64x1xf32>
    %724 = arith.divf %722, %723 : vector<64x1xf32>
    %725 = vector.broadcast %717 : vector<64x1xf32> to vector<64x32xf32>
    %726 = arith.subf %713, %725 : vector<64x32xf32>
    %cst_255 = arith.constant 9.99999974E-6 : f32
    %727 = vector.broadcast %cst_255 : f32 to vector<64x1xf32>
    %728 = arith.addf %724, %727 : vector<64x1xf32>
    %729 = math.rsqrt %728 : vector<64x1xf32>
    %730 = vector.broadcast %729 : vector<64x1xf32> to vector<64x32xf32>
    %731 = arith.mulf %726, %730 : vector<64x32xf32>
    %732 = vector.broadcast %62 : vector<1x32xf32> to vector<64x32xf32>
    %733 = arith.mulf %731, %732 : vector<64x32xf32>
    %734 = vector.broadcast %63 : vector<1x32xf32> to vector<64x32xf32>
    %735 = arith.addf %733, %734 : vector<64x32xf32>
    %736 = arith.addf %637, %83 : vector<8x32xf32>
    %737 = arith.addf %735, %88 : vector<64x32xf32>
    %cst_256 = arith.constant dense<0.000000e+00> : vector<8x16xf32>
    %738 = tpu.matmul %736, %72, %cst_256 {dimension_numbers = #tpu.dot_dimension_numbers<[1], [0], [0], [1], [0, 0, 1, 1], [], []>} : vector<8x32xf32>, vector<32x16xf32>, vector<8x16xf32> -> vector<8x16xf32>
    %739 = vector.broadcast %73 : vector<1x16xf32> to vector<8x16xf32>
    %740 = arith.addf %738, %739 : vector<8x16xf32>
    %cst_257 = arith.constant dense<0.000000e+00> : vector<64x16xf32>
    %741 = tpu.matmul %737, %74, %cst_257 {dimension_numbers = #tpu.dot_dimension_numbers<[1], [0], [0], [1], [0, 0, 1, 1], [], []>} : vector<64x32xf32>, vector<32x16xf32>, vector<64x16xf32> -> vector<64x16xf32>
    %742 = vector.broadcast %75 : vector<1x16xf32> to vector<64x16xf32>
    %743 = arith.addf %741, %742 : vector<64x16xf32>
    %cst_258 = arith.constant dense<0.000000e+00> : vector<64x16xf32>
    %744 = tpu.matmul %735, %76, %cst_258 {dimension_numbers = #tpu.dot_dimension_numbers<[1], [0], [0], [1], [0, 0, 1, 1], [], []>} : vector<64x32xf32>, vector<32x16xf32>, vector<64x16xf32> -> vector<64x16xf32>
    %745 = vector.broadcast %77 : vector<1x16xf32> to vector<64x16xf32>
    %746 = arith.addf %744, %745 : vector<64x16xf32>
    %747 = vector.extract_strided_slice %740 {offsets = [0, 0], sizes = [8, 4], strides = [1, 1]} : vector<8x16xf32> to vector<8x4xf32>
    %748 = vector.extract_strided_slice %743 {offsets = [0, 0], sizes = [64, 4], strides = [1, 1]} : vector<64x16xf32> to vector<64x4xf32>
    %749 = vector.extract_strided_slice %746 {offsets = [0, 0], sizes = [64, 4], strides = [1, 1]} : vector<64x16xf32> to vector<64x4xf32>
    "tpu.trace_start"() <{level = 10 : i32, message = "qd,kd->qk"}> : () -> ()
    %cst_259 = arith.constant dense<0.000000e+00> : vector<8x64xf32>
    %750 = tpu.matmul %747, %748, %cst_259 {dimension_numbers = #tpu.dot_dimension_numbers<[1], [1], [0], [0], [0, 0, 1, 0], [], []>} : vector<8x4xf32>, vector<64x4xf32>, vector<8x64xf32> -> vector<8x64xf32>
    "tpu.trace_stop"() : () -> ()
    %cst_260 = arith.constant dense<0xFF800000> : vector<8xf32>
    %751 = vector.multi_reduction <maximumf>, %750, %cst_260 [1] : vector<8x64xf32> to vector<8xf32>
    %752 = vector.shape_cast %751 : vector<8xf32> to vector<8x1xf32>
    %753 = vector.broadcast %752 : vector<8x1xf32> to vector<8x64xf32>
    %754 = arith.subf %750, %753 : vector<8x64xf32>
    %755 = math.exp %754 : vector<8x64xf32>
    %cst_261 = arith.constant dense<0.000000e+00> : vector<8xf32>
    %756 = vector.multi_reduction <add>, %755, %cst_261 [1] : vector<8x64xf32> to vector<8xf32>
    %757 = vector.shape_cast %756 : vector<8xf32> to vector<8x1xf32>
    %758 = tpu.reciprocal %757 {approx = true} : vector<8x1xf32> -> vector<8x1xf32>
    %759 = vector.broadcast %758 : vector<8x1xf32> to vector<8x64xf32>
    %760 = arith.mulf %755, %759 : vector<8x64xf32>
    %cst_262 = arith.constant dense<0.000000e+00> : vector<8x4xf32>
    %761 = tpu.matmul %760, %749, %cst_262 {dimension_numbers = #tpu.dot_dimension_numbers<[1], [0], [0], [1], [0, 0, 1, 1], [], []>} : vector<8x64xf32>, vector<64x4xf32>, vector<8x4xf32> -> vector<8x4xf32>
    %762 = vector.extract_strided_slice %740 {offsets = [0, 4], sizes = [8, 4], strides = [1, 1]} : vector<8x16xf32> to vector<8x4xf32>
    %763 = vector.extract_strided_slice %743 {offsets = [0, 4], sizes = [64, 4], strides = [1, 1]} : vector<64x16xf32> to vector<64x4xf32>
    %764 = vector.extract_strided_slice %746 {offsets = [0, 4], sizes = [64, 4], strides = [1, 1]} : vector<64x16xf32> to vector<64x4xf32>
    "tpu.trace_start"() <{level = 10 : i32, message = "qd,kd->qk"}> : () -> ()
    %cst_263 = arith.constant dense<0.000000e+00> : vector<8x64xf32>
    %765 = tpu.matmul %762, %763, %cst_263 {dimension_numbers = #tpu.dot_dimension_numbers<[1], [1], [0], [0], [0, 0, 1, 0], [], []>} : vector<8x4xf32>, vector<64x4xf32>, vector<8x64xf32> -> vector<8x64xf32>
    "tpu.trace_stop"() : () -> ()
    %cst_264 = arith.constant dense<0xFF800000> : vector<8xf32>
    %766 = vector.multi_reduction <maximumf>, %765, %cst_264 [1] : vector<8x64xf32> to vector<8xf32>
    %767 = vector.shape_cast %766 : vector<8xf32> to vector<8x1xf32>
    %768 = vector.broadcast %767 : vector<8x1xf32> to vector<8x64xf32>
    %769 = arith.subf %765, %768 : vector<8x64xf32>
    %770 = math.exp %769 : vector<8x64xf32>
    %cst_265 = arith.constant dense<0.000000e+00> : vector<8xf32>
    %771 = vector.multi_reduction <add>, %770, %cst_265 [1] : vector<8x64xf32> to vector<8xf32>
    %772 = vector.shape_cast %771 : vector<8xf32> to vector<8x1xf32>
    %773 = tpu.reciprocal %772 {approx = true} : vector<8x1xf32> -> vector<8x1xf32>
    %774 = vector.broadcast %773 : vector<8x1xf32> to vector<8x64xf32>
    %775 = arith.mulf %770, %774 : vector<8x64xf32>
    %cst_266 = arith.constant dense<0.000000e+00> : vector<8x4xf32>
    %776 = tpu.matmul %775, %764, %cst_266 {dimension_numbers = #tpu.dot_dimension_numbers<[1], [0], [0], [1], [0, 0, 1, 1], [], []>} : vector<8x64xf32>, vector<64x4xf32>, vector<8x4xf32> -> vector<8x4xf32>
    %777 = vector.extract_strided_slice %740 {offsets = [0, 8], sizes = [8, 4], strides = [1, 1]} : vector<8x16xf32> to vector<8x4xf32>
    %778 = vector.extract_strided_slice %743 {offsets = [0, 8], sizes = [64, 4], strides = [1, 1]} : vector<64x16xf32> to vector<64x4xf32>
    %779 = vector.extract_strided_slice %746 {offsets = [0, 8], sizes = [64, 4], strides = [1, 1]} : vector<64x16xf32> to vector<64x4xf32>
    "tpu.trace_start"() <{level = 10 : i32, message = "qd,kd->qk"}> : () -> ()
    %cst_267 = arith.constant dense<0.000000e+00> : vector<8x64xf32>
    %780 = tpu.matmul %777, %778, %cst_267 {dimension_numbers = #tpu.dot_dimension_numbers<[1], [1], [0], [0], [0, 0, 1, 0], [], []>} : vector<8x4xf32>, vector<64x4xf32>, vector<8x64xf32> -> vector<8x64xf32>
    "tpu.trace_stop"() : () -> ()
    %cst_268 = arith.constant dense<0xFF800000> : vector<8xf32>
    %781 = vector.multi_reduction <maximumf>, %780, %cst_268 [1] : vector<8x64xf32> to vector<8xf32>
    %782 = vector.shape_cast %781 : vector<8xf32> to vector<8x1xf32>
    %783 = vector.broadcast %782 : vector<8x1xf32> to vector<8x64xf32>
    %784 = arith.subf %780, %783 : vector<8x64xf32>
    %785 = math.exp %784 : vector<8x64xf32>
    %cst_269 = arith.constant dense<0.000000e+00> : vector<8xf32>
    %786 = vector.multi_reduction <add>, %785, %cst_269 [1] : vector<8x64xf32> to vector<8xf32>
    %787 = vector.shape_cast %786 : vector<8xf32> to vector<8x1xf32>
    %788 = tpu.reciprocal %787 {approx = true} : vector<8x1xf32> -> vector<8x1xf32>
    %789 = vector.broadcast %788 : vector<8x1xf32> to vector<8x64xf32>
    %790 = arith.mulf %785, %789 : vector<8x64xf32>
    %cst_270 = arith.constant dense<0.000000e+00> : vector<8x4xf32>
    %791 = tpu.matmul %790, %779, %cst_270 {dimension_numbers = #tpu.dot_dimension_numbers<[1], [0], [0], [1], [0, 0, 1, 1], [], []>} : vector<8x64xf32>, vector<64x4xf32>, vector<8x4xf32> -> vector<8x4xf32>
    %792 = vector.extract_strided_slice %740 {offsets = [0, 12], sizes = [8, 4], strides = [1, 1]} : vector<8x16xf32> to vector<8x4xf32>
    %793 = vector.extract_strided_slice %743 {offsets = [0, 12], sizes = [64, 4], strides = [1, 1]} : vector<64x16xf32> to vector<64x4xf32>
    %794 = vector.extract_strided_slice %746 {offsets = [0, 12], sizes = [64, 4], strides = [1, 1]} : vector<64x16xf32> to vector<64x4xf32>
    "tpu.trace_start"() <{level = 10 : i32, message = "qd,kd->qk"}> : () -> ()
    %cst_271 = arith.constant dense<0.000000e+00> : vector<8x64xf32>
    %795 = tpu.matmul %792, %793, %cst_271 {dimension_numbers = #tpu.dot_dimension_numbers<[1], [1], [0], [0], [0, 0, 1, 0], [], []>} : vector<8x4xf32>, vector<64x4xf32>, vector<8x64xf32> -> vector<8x64xf32>
    "tpu.trace_stop"() : () -> ()
    %cst_272 = arith.constant dense<0xFF800000> : vector<8xf32>
    %796 = vector.multi_reduction <maximumf>, %795, %cst_272 [1] : vector<8x64xf32> to vector<8xf32>
    %797 = vector.shape_cast %796 : vector<8xf32> to vector<8x1xf32>
    %798 = vector.broadcast %797 : vector<8x1xf32> to vector<8x64xf32>
    %799 = arith.subf %795, %798 : vector<8x64xf32>
    %800 = math.exp %799 : vector<8x64xf32>
    %cst_273 = arith.constant dense<0.000000e+00> : vector<8xf32>
    %801 = vector.multi_reduction <add>, %800, %cst_273 [1] : vector<8x64xf32> to vector<8xf32>
    %802 = vector.shape_cast %801 : vector<8xf32> to vector<8x1xf32>
    %803 = tpu.reciprocal %802 {approx = true} : vector<8x1xf32> -> vector<8x1xf32>
    %804 = vector.broadcast %803 : vector<8x1xf32> to vector<8x64xf32>
    %805 = arith.mulf %800, %804 : vector<8x64xf32>
    %cst_274 = arith.constant dense<0.000000e+00> : vector<8x4xf32>
    %806 = tpu.matmul %805, %794, %cst_274 {dimension_numbers = #tpu.dot_dimension_numbers<[1], [0], [0], [1], [0, 0, 1, 1], [], []>} : vector<8x64xf32>, vector<64x4xf32>, vector<8x4xf32> -> vector<8x4xf32>
    %807 = tpu.concatenate %761, %776, %791, %806 in 1 : vector<8x4xf32>, vector<8x4xf32>, vector<8x4xf32>, vector<8x4xf32> -> vector<8x16xf32>
    %cst_275 = arith.constant dense<0.000000e+00> : vector<8x32xf32>
    %808 = tpu.matmul %807, %78, %cst_275 {dimension_numbers = #tpu.dot_dimension_numbers<[1], [0], [0], [1], [0, 0, 1, 1], [], []>} : vector<8x16xf32>, vector<16x32xf32>, vector<8x32xf32> -> vector<8x32xf32>
    %809 = vector.broadcast %79 : vector<1x32xf32> to vector<8x32xf32>
    %810 = arith.addf %808, %809 : vector<8x32xf32>
    %811 = arith.addf %637, %810 : vector<8x32xf32>
    %cst_276 = arith.constant dense<0.000000e+00> : vector<8xf32>
    %812 = vector.multi_reduction <add>, %811, %cst_276 [1] : vector<8x32xf32> to vector<8xf32>
    %813 = vector.shape_cast %812 : vector<8xf32> to vector<8x1xf32>
    %cst_277 = arith.constant 3.200000e+01 : f32
    %814 = vector.broadcast %cst_277 : f32 to vector<8x1xf32>
    %815 = arith.divf %813, %814 : vector<8x1xf32>
    %816 = vector.broadcast %815 : vector<8x1xf32> to vector<8x32xf32>
    %817 = arith.subf %811, %816 : vector<8x32xf32>
    %818 = arith.mulf %817, %817 : vector<8x32xf32>
    %cst_278 = arith.constant dense<0.000000e+00> : vector<8xf32>
    %819 = vector.multi_reduction <add>, %818, %cst_278 [1] : vector<8x32xf32> to vector<8xf32>
    %820 = vector.shape_cast %819 : vector<8xf32> to vector<8x1xf32>
    %cst_279 = arith.constant 3.200000e+01 : f32
    %821 = vector.broadcast %cst_279 : f32 to vector<8x1xf32>
    %822 = arith.divf %820, %821 : vector<8x1xf32>
    %823 = vector.broadcast %815 : vector<8x1xf32> to vector<8x32xf32>
    %824 = arith.subf %811, %823 : vector<8x32xf32>
    %cst_280 = arith.constant 9.99999974E-6 : f32
    %825 = vector.broadcast %cst_280 : f32 to vector<8x1xf32>
    %826 = arith.addf %822, %825 : vector<8x1xf32>
    %827 = math.rsqrt %826 : vector<8x1xf32>
    %828 = vector.broadcast %827 : vector<8x1xf32> to vector<8x32xf32>
    %829 = arith.mulf %824, %828 : vector<8x32xf32>
    %830 = vector.broadcast %80 : vector<1x32xf32> to vector<8x32xf32>
    %831 = arith.mulf %829, %830 : vector<8x32xf32>
    %832 = vector.broadcast %81 : vector<1x32xf32> to vector<8x32xf32>
    %833 = arith.addf %831, %832 : vector<8x32xf32>
    %c0_281 = arith.constant 0 : index
    %c0_282 = arith.constant 0 : index
    %c0_283 = arith.constant 0 : index
    %834 = vector.load %arg5[%c0_281, %c0_282, %c0_283] : memref<1x8x32xf32, #tpu.memory_space<vmem>>, vector<1x8x32xf32>
    %835 = vector.shape_cast %834 : vector<1x8x32xf32> to vector<8x32xf32>
    %836 = vector.shape_cast %833 : vector<8x32xf32> to vector<1x8x32xf32>
    tpu.vector_store %arg5[%c0_281, %c0_282, %c0_283], %836 {strides = array<i32>} : memref<1x8x32xf32, #tpu.memory_space<vmem>>, vector<1x8x32xf32>,
    %c0_284 = arith.constant 0 : index
    %c0_285 = arith.constant 0 : index
    %c0_286 = arith.constant 0 : index
    %837 = vector.load %arg6[%c0_284, %c0_285, %c0_286] : memref<1x64x32xf32, #tpu.memory_space<vmem>>, vector<1x64x32xf32>
    %838 = vector.shape_cast %837 : vector<1x64x32xf32> to vector<64x32xf32>
    %839 = vector.shape_cast %735 : vector<64x32xf32> to vector<1x64x32xf32>
    tpu.vector_store %arg6[%c0_284, %c0_285, %c0_286], %839 {strides = array<i32>} : memref<1x64x32xf32, #tpu.memory_space<vmem>>, vector<1x64x32xf32>,
    return
  }
  func.func @transform_0(%arg0: i32) -> (i32, i32, i32) {
    %c0_i32 = arith.constant 0 : i32
    %c0_i32_0 = arith.constant 0 : i32
    %c0_i32_1 = arith.constant 0 : i32
    return %arg0, %c0_i32, %c0_i32_0 : i32, i32, i32
  }
  func.func @transform_1(%arg0: i32) -> (i32, i32, i32) {
    %c0_i32 = arith.constant 0 : i32
    %c0_i32_0 = arith.constant 0 : i32
    %c0_i32_1 = arith.constant 0 : i32
    return %arg0, %c0_i32, %c0_i32_0 : i32, i32, i32
  }
  func.func @transform_2(%arg0: i32) -> (i32, i32, i32) {
    %c0_i32 = arith.constant 0 : i32
    %c0_i32_0 = arith.constant 0 : i32
    %c0_i32_1 = arith.constant 0 : i32
    return %arg0, %c0_i32, %c0_i32_0 : i32, i32, i32
  }
  func.func @transform_3(%arg0: i32) -> (i32, i32) {
    %c0_i32 = arith.constant 0 : i32
    %c0_i32_0 = arith.constant 0 : i32
    %c0_i32_1 = arith.constant 0 : i32
    return %c0_i32, %c0_i32_0 : i32, i32
  }
  func.func @transform_4(%arg0: i32) -> (i32, i32, i32) {
    %c0_i32 = arith.constant 0 : i32
    %c0_i32_0 = arith.constant 0 : i32
    %c0_i32_1 = arith.constant 0 : i32
    return %arg0, %c0_i32, %c0_i32_0 : i32, i32, i32
  }
  func.func @transform_5(%arg0: i32) -> (i32, i32, i32) {
    %c0_i32 = arith.constant 0 : i32
    %c0_i32_0 = arith.constant 0 : i32
    %c0_i32_1 = arith.constant 0 : i32
    return %arg0, %c0_i32, %c0_i32_0 : i32, i32, i32
  }
}

</mosaic_0001>

<llo_original>
// kernel: two_way_transformer.1
$region0: #{two_way_transformer.1}
  #allocation0 [shape = 'u32[]', space=smem, size = 0x4, offset = 0x4, fixed_abs, tag = 'smem constant byte address 0x4 - core index']
  #allocation1 [shape = 'u32[72,128]{1,0:T(1,128)}', space=vmem, size = 0x9000, scoped, tag = 'internal scratch']
  %s0 = inlined_call_operand.vmem [shape: f32[2,8,32], index: 0, kind: input, shape index: {}]
  %s1 = inlined_call_operand.vmem [shape: f32[2,32,64], index: 1, kind: input, shape index: {}]
  %s2 = inlined_call_operand.vmem [shape: f32[2,32,64], index: 2, kind: input, shape index: {}]
  %s3 = inlined_call_operand.hbm [shape: f32[1408,128], index: 3, kind: input, shape index: {}]
  %s4 = inlined_call_operand.hbm [shape: f32[2,8,32], index: 4, kind: output, shape index: {0}]
  %s5 = inlined_call_operand.vmem [shape: f32[2,64,32], index: 5, kind: output, shape index: {1}]
  %6 = xla_tuple %s4, %s5
  %s7 = sld [smem:[#allocation0]]
  $region61: #{two_way_transformer.1} parent=0
    _
  %s9 = ssub.s32 1, %s7
  %s10 = scalar_select 0, %s9, %s7
  $region1: #{two_way_transformer.1} parent=0
    #allocation2 [shape = 'u8[720896]{0}', space=vmem, size = 0xb0000, scoped, tag = 'input window, operand 3, single buffered']
    #allocation3 [shape = 's32[2]{0}', space=sflag, size = 0x8, scoped, tag = 'scoped memory for two_way_transformer.1']
    #allocation4 [shape = 's32[2]{0}', space=sflag, size = 0x8, scoped, tag = 'scoped memory for two_way_transformer.1']
    #allocation5 [shape = 'u8[8192]{0}', space=vmem, size = 0x2000, scoped, tag = 'output window, operand 0']
    %11 = vsyncpa [#allocation3], 0
    %12 = vsyncpa [#allocation4], 0
    %s13 = scalar_lea.sflag [#allocation4], 1
    %14 = vsyncpa %s13, 0
    loop: start=0, step=1, limit=4
    $region2: #{two_way_transformer.1} parent=1 // loop_pre_header
      _
    $region3: #{two_way_transformer.1} parent=1 // loop_header
      %s16 = sphi 0, %s20
      %p17 = scmp.ge.s32.totalorder %s16, 4
      %s26 = sphi 0, %s28
      %s29 = sphi 0, %s26
      %s30 = sphi 0, %s29
      %s46 = sphi 0, %s30
      %s52 = sphi 0, %s54
      %s55 = sphi 0, %s52
      %s56 = sphi 0, %s55
      %s72 = sphi 0, %s56
      %s78 = sphi 0, %s80
      %s81 = sphi 0, %s78
      %s82 = sphi 0, %s81
      %s98 = sphi 0, %s82
      %s102 = sphi 0, %s102
      %s104 = sphi 0, %s102
      %s105 = sphi 0, %s104
      %s119 = sphi 0, %s105
      %s125 = sphi 0, %s127
      %s128 = sphi 0, %s125
      %s129 = sphi 0, %s128
      %s145 = sphi 0, %s129
      %s151 = sphi 0, %s153
      %s154 = sphi 0, %s151
      %s155 = sphi 0, %s154
      %s171 = sphi 0, %s155
    $region4: #{two_way_transformer.1} parent=1 // loop_header_branch
      %19 = sbr.rel (%p17) target = $region8
    $region5: #{two_way_transformer.1} parent=1 // loop_body
      %s21 = ssub.s32 %s16, 1
      %s22 = ssub.s32 %s16, 2
      %s23 = sadd.s32 %s16, 1
      %s24 = ssub.s32 %s16, %s23
      %p25 = scmp.eq.s32.totalorder %s24, 0
      %s27 = sadd.s32 %s26, 1
      %s28 = scalar_select %p25, %s26, %s27
      %p31 = pneg %p25
      %p32 = scmp.eq.s32.totalorder %s16, 1
      %p33 = por %p31, %p32
      %p34 = scmp.ne.s32.totalorder %s26, %s29
      %p35 = scmp.eq.s32.totalorder %s16, 0
      %p36 = por %p34, %p35
      %p37 = scmp.ne.s32.totalorder %s26, %s29
      %p38 = scmp.eq.s32.totalorder %s21, 1
      %p39 = por %p37, %p38
      %p40 = scmp.ne.s32.totalorder %s29, %s30
      %p41 = scmp.eq.s32.totalorder %s21, 0
      %p42 = por %p40, %p41
      %p43 = scmp.ne.s32.totalorder %s29, %s30
      %p44 = scmp.eq.s32.totalorder %s22, 1
      %p45 = por %p43, %p44
      %p47 = scmp.ne.s32.totalorder %s30, %s46
      %p48 = scmp.eq.s32.totalorder %s22, 0
      %p49 = por %p47, %p48
      %s50 = ssub.s32 %s16, %s23
      %p51 = scmp.eq.s32.totalorder %s50, 0
      %s53 = sadd.s32 %s52, 1
      %s54 = scalar_select %p51, %s52, %s53
      %p57 = pneg %p51
      %p58 = scmp.eq.s32.totalorder %s16, 1
      %p59 = por %p57, %p58
      %p60 = scmp.ne.s32.totalorder %s52, %s55
      %p61 = scmp.eq.s32.totalorder %s16, 0
      %p62 = por %p60, %p61
      %p63 = scmp.ne.s32.totalorder %s52, %s55
      %p64 = scmp.eq.s32.totalorder %s21, 1
      %p65 = por %p63, %p64
      %p66 = scmp.ne.s32.totalorder %s55, %s56
      %p67 = scmp.eq.s32.totalorder %s21, 0
      %p68 = por %p66, %p67
      %p69 = scmp.ne.s32.totalorder %s55, %s56
      %p70 = scmp.eq.s32.totalorder %s22, 1
      %p71 = por %p69, %p70
      %p73 = scmp.ne.s32.totalorder %s56, %s72
      %p74 = scmp.eq.s32.totalorder %s22, 0
      %p75 = por %p73, %p74
      %s76 = ssub.s32 %s16, %s23
      %p77 = scmp.eq.s32.totalorder %s76, 0
      %s79 = sadd.s32 %s78, 1
      %s80 = scalar_select %p77, %s78, %s79
      %p83 = pneg %p77
      %p84 = scmp.eq.s32.totalorder %s16, 1
      %p85 = por %p83, %p84
      %p86 = scmp.ne.s32.totalorder %s78, %s81
      %p87 = scmp.eq.s32.totalorder %s16, 0
      %p88 = por %p86, %p87
      %p89 = scmp.ne.s32.totalorder %s78, %s81
      %p90 = scmp.eq.s32.totalorder %s21, 1
      %p91 = por %p89, %p90
      %p92 = scmp.ne.s32.totalorder %s81, %s82
      %p93 = scmp.eq.s32.totalorder %s21, 0
      %p94 = por %p92, %p93
      %p95 = scmp.ne.s32.totalorder %s81, %s82
      %p96 = scmp.eq.s32.totalorder %s22, 1
      %p97 = por %p95, %p96
      %p99 = scmp.ne.s32.totalorder %s82, %s98
      %p100 = scmp.eq.s32.totalorder %s22, 0
      %p101 = por %p99, %p100
      %s103 = sadd.s32 %s102, 1
      %p106 = scmp.eq.s32.totalorder %s16, 1
      %p107 = scmp.ne.s32.totalorder %s102, %s104
      %p108 = scmp.eq.s32.totalorder %s16, 0
      %p109 = por %p107, %p108
      %p110 = scmp.ne.s32.totalorder %s102, %s104
      %p111 = scmp.eq.s32.totalorder %s21, 1
      %p112 = por %p110, %p111
      %p113 = scmp.ne.s32.totalorder %s104, %s105
      %p114 = scmp.eq.s32.totalorder %s21, 0
      %p115 = por %p113, %p114
      %p116 = scmp.ne.s32.totalorder %s104, %s105
      %p117 = scmp.eq.s32.totalorder %s22, 1
      %p118 = por %p116, %p117
      %p120 = scmp.ne.s32.totalorder %s105, %s119
      %p121 = scmp.eq.s32.totalorder %s22, 0
      %p122 = por %p120, %p121
      %s123 = ssub.s32 %s16, %s23
      %p124 = scmp.eq.s32.totalorder %s123, 0
      %s126 = sadd.s32 %s125, 1
      %s127 = scalar_select %p124, %s125, %s126
      %p130 = pneg %p124
      %p131 = scmp.eq.s32.totalorder %s16, 1
      %p132 = por %p130, %p131
      %p133 = scmp.ne.s32.totalorder %s125, %s128
      %p134 = scmp.eq.s32.totalorder %s16, 0
      %p135 = por %p133, %p134
      %p136 = scmp.ne.s32.totalorder %s125, %s128
      %p137 = scmp.eq.s32.totalorder %s21, 1
      %p138 = por %p136, %p137
      %p139 = scmp.ne.s32.totalorder %s128, %s129
      %p140 = scmp.eq.s32.totalorder %s21, 0
      %p141 = por %p139, %p140
      %p142 = scmp.ne.s32.totalorder %s128, %s129
      %p143 = scmp.eq.s32.totalorder %s22, 1
      %p144 = por %p142, %p143
      %p146 = scmp.ne.s32.totalorder %s129, %s145
      %p147 = scmp.eq.s32.totalorder %s22, 0
      %p148 = por %p146, %p147
      %s149 = ssub.s32 %s16, %s23
      %p150 = scmp.eq.s32.totalorder %s149, 0
      %s152 = sadd.s32 %s151, 1
      %s153 = scalar_select %p150, %s151, %s152
      %p156 = pneg %p150
      %p157 = scmp.eq.s32.totalorder %s16, 1
      %p158 = por %p156, %p157
      %p159 = scmp.ne.s32.totalorder %s151, %s154
      %p160 = scmp.eq.s32.totalorder %s16, 0
      %p161 = por %p159, %p160
      %p162 = scmp.ne.s32.totalorder %s151, %s154
      %p163 = scmp.eq.s32.totalorder %s21, 1
      %p164 = por %p162, %p163
      %p165 = scmp.ne.s32.totalorder %s154, %s155
      %p166 = scmp.eq.s32.totalorder %s21, 0
      %p167 = por %p165, %p166
      %p168 = scmp.ne.s32.totalorder %s154, %s155
      %p169 = scmp.eq.s32.totalorder %s22, 1
      %p170 = por %p168, %p169
      %p172 = scmp.ne.s32.totalorder %s155, %s171
      %p173 = scmp.eq.s32.totalorder %s22, 0
      %p174 = por %p172, %p173
      %p175 = scmp.le.s32.totalorder 1, %s16
      %p176 = scmp.lt.s32.totalorder %s16, 3
      %p177 = pnand %p175, %p176
      %p178 = pneg %p177
      // Predicated region
      $region9: #{two_way_transformer.1} parent=5 // pred_check
        _
      $region10: #{two_way_transformer.1} parent=5 // pred_check_branch
        %180 = sbr.rel (%p177) target = $region12
      $region11: #{two_way_transformer.1} parent=5 // pred_region
        %s181 = ssub.s32 %s16, 1
        // Predicated region
        $region13: #{two_way_transformer.1} parent=11 // pred_check
          %p182 = pneg %p115
        $region14: #{two_way_transformer.1} parent=11 // pred_check_branch
          %184 = sbr.rel (%p182) target = $region16
        $region15: #{two_way_transformer.1} parent=11 // pred_region
          %186 = vsyncadd [#allocation3], 0
          %s187 = sshll.u32 %s3, 4
          %s188 = int_to_ptr.hbm [resolvable:$true] %s187
          %s189 = sshll.u32 [#allocation2], 4
          %s190 = int_to_ptr.vmem [resolvable:$true] %s189
          %195 = dma.hbm_to_vmem [thread:$0]  %s188, 22528, %s190, [#allocation3], 128, 128, 8
        $region16: #{two_way_transformer.1} parent=11 // pred_fallthru
          _
      $region12: #{two_way_transformer.1} parent=5 // pred_fallthru
        _
      %p196 = scmp.lt.s32.totalorder %s16, 2
      // Predicated region
      $region17: #{two_way_transformer.1} parent=5 // pred_check
        %p197 = pneg %p196
      $region18: #{two_way_transformer.1} parent=5 // pred_check_branch
        %199 = sbr.rel (%p197) target = $region20
      $region19: #{two_way_transformer.1} parent=5 // pred_region
        // Predicated region
        $region21: #{two_way_transformer.1} parent=19 // pred_check
          %p200 = pneg %p36
        $region22: #{two_way_transformer.1} parent=19 // pred_check_branch
          %202 = sbr.rel (%p200) target = $region24
        $region23: #{two_way_transformer.1} parent=19 // pred_region
          %p203 = scmp.lt.s32.totalorder %s16, 1
          %s204 = scalar_select %p203, %s16, 1
          %s205 = smul.addr %s204, 8
          %s206 = scalar_lea.vmem %s0, %s205
        $region24: #{two_way_transformer.1} parent=19 // pred_fallthru
          _
        // Predicated region
        $region25: #{two_way_transformer.1} parent=19 // pred_check
          %p207 = pneg %p62
        $region26: #{two_way_transformer.1} parent=19 // pred_check_branch
          %209 = sbr.rel (%p207) target = $region28
        $region27: #{two_way_transformer.1} parent=19 // pred_region
          %p210 = scmp.lt.s32.totalorder %s16, 1
          %s211 = scalar_select %p210, %s16, 1
          %s212 = smul.addr %s211, 4
          %s213 = smul.addr %s212, 8
          %s214 = scalar_lea.vmem %s1, %s213
        $region28: #{two_way_transformer.1} parent=19 // pred_fallthru
          _
        // Predicated region
        $region29: #{two_way_transformer.1} parent=19 // pred_check
          %p215 = pneg %p88
        $region30: #{two_way_transformer.1} parent=19 // pred_check_branch
          %217 = sbr.rel (%p215) target = $region32
        $region31: #{two_way_transformer.1} parent=19 // pred_region
          %p218 = scmp.lt.s32.totalorder %s16, 1
          %s219 = scalar_select %p218, %s16, 1
          %s220 = smul.addr %s219, 4
          %s221 = smul.addr %s220, 8
          %s222 = scalar_lea.vmem %s2, %s221
        $region32: #{two_way_transformer.1} parent=19 // pred_fallthru
          _
      $region20: #{two_way_transformer.1} parent=5 // pred_fallthru
        _
      %p223 = scmp.le.s32.totalorder 1, %s16
      %p224 = scmp.lt.s32.totalorder %s16, 3
      %p225 = pnand %p223, %p224
      %p226 = pneg %p225
      // Predicated region
      $region33: #{two_way_transformer.1} parent=5 // pred_check
        _
      $region34: #{two_way_transformer.1} parent=5 // pred_check_branch
        %228 = sbr.rel (%p225) target = $region36
      $region35: #{two_way_transformer.1} parent=5 // pred_region
        %s229 = ssub.s32 %s16, 1
        // Predicated region
        $region37: #{two_way_transformer.1} parent=35 // pred_check
          %p230 = pneg %p115
        $region38: #{two_way_transformer.1} parent=35 // pred_check_branch
          %232 = sbr.rel (%p230) target = $region40
        $region39: #{two_way_transformer.1} parent=35 // pred_region
          %234 = dma.done [#allocation3], 22528
        $region40: #{two_way_transformer.1} parent=35 // pred_fallthru
          _
        %p235 = scmp.lt.s32.totalorder %s21, 1
        %s236 = scalar_select %p235, %s21, 1
        %s237 = smul.addr %s236, 8
        %s238 = scalar_lea.vmem %s0, %s237
        %p239 = pneg %p42
        %p240 = pneg %p39
        %p241 = scmp.lt.s32.totalorder %s21, 1
        %s242 = scalar_select %p241, %s21, 1
        %s243 = smul.addr %s242, 4
        %s244 = smul.addr %s243, 8
        %s245 = scalar_lea.vmem %s1, %s244
        %p246 = pneg %p68
        %p247 = pneg %p65
        %p248 = scmp.lt.s32.totalorder %s21, 1
        %s249 = scalar_select %p248, %s21, 1
        %s250 = smul.addr %s249, 4
        %s251 = smul.addr %s250, 8
        %s252 = scalar_lea.vmem %s2, %s251
        %p253 = pneg %p94
        %p254 = pneg %p91
        %p255 = pneg %p115
        %p256 = pneg %p112
        %p257 = pneg %p141
        %p258 = pneg %p138
        %s259 = sand.u32 %s128, 1
        %s260 = scalar_lea.sflag [#allocation4], %s259
        %s261 = sand.u32 %s128, 1
        %s262 = smul.addr %s261, 8
        %s263 = scalar_lea.vmem [#allocation5], %s262
        %p264 = pneg %p167
        %p265 = pneg %p164
        %p266 = scmp.lt.s32.totalorder %s21, 1
        %s267 = scalar_select %p266, %s21, 1
        %s268 = smul.addr %s267, 8
        %s269 = smul.addr %s268, 8
        %s270 = scalar_lea.vmem %s5, %s269
        %p271 = scmp.lt.s32.totalorder %s21, 1
        %s272 = scalar_select %p271, %s21, 1
        %s273 = smul.addr %s272, 8
        %s274 = scalar_lea.vmem %s0, %s273
        %p275 = scmp.lt.s32.totalorder %s21, 1
        %s276 = scalar_select %p275, %s21, 1
        %s277 = smul.addr %s276, 4
        %s278 = smul.addr %s277, 8
        %s279 = scalar_lea.vmem %s1, %s278
        %p280 = scmp.lt.s32.totalorder %s21, 1
        %s281 = scalar_select %p280, %s21, 1
        %s282 = smul.addr %s281, 4
        %s283 = smul.addr %s282, 8
        %s284 = scalar_lea.vmem %s2, %s283
        %p285 = scmp.lt.s32.totalorder %s21, 1
        %s286 = scalar_select %p285, %s21, 1
        %s287 = smul.addr %s286, 8
        %s288 = smul.addr %s287, 8
        %s289 = scalar_lea.vmem %s5, %s288
        %v290 = vld [vmem:[#allocation2] sm:$0xff]
        %v291 = vld [vmem:[#allocation2 + $0x8] sm:$0xff]
        %v292 = vld [vmem:[#allocation2 + $0x10] sm:$0xff]
        %v293 = vld [vmem:[#allocation2 + $0x18] sm:$0xff]
        %v294 = vld [vmem:[#allocation2 + $0x20] sm:$0x1]
        %v295 = vld [vmem:[#allocation2 + $0x28] sm:$0xff]
        %v296 = vld [vmem:[#allocation2 + $0x30] sm:$0xff]
        %v297 = vld [vmem:[#allocation2 + $0x38] sm:$0xff]
        %v298 = vld [vmem:[#allocation2 + $0x40] sm:$0xff]
        %v299 = vld [vmem:[#allocation2 + $0x48] sm:$0x1]
        %v300 = vld [vmem:[#allocation2 + $0x50] sm:$0xff]
        %v301 = vld [vmem:[#allocation2 + $0x58] sm:$0xff]
        %v302 = vld [vmem:[#allocation2 + $0x60] sm:$0xff]
        %v303 = vld [vmem:[#allocation2 + $0x68] sm:$0xff]
        %v304 = vld [vmem:[#allocation2 + $0x70] sm:$0x1]
        %v305 = vld [vmem:[#allocation2 + $0x78] sm:$0xff]
        %v306 = vld [vmem:[#allocation2 + $0x80] sm:$0xff]
        %v307 = vld [vmem:[#allocation2 + $0x88] sm:$0xff]
        %v308 = vld [vmem:[#allocation2 + $0x90] sm:$0xff]
        %v309 = vld [vmem:[#allocation2 + $0x98] sm:$0x1]
        %v310 = vld [vmem:[#allocation2 + $0xa0] sm:$0x1]
        %v311 = vld [vmem:[#allocation2 + $0xa8] sm:$0x1]
        %v312 = vld [vmem:[#allocation2 + $0xb0] sm:$0xff]
        %v313 = vld [vmem:[#allocation2 + $0xb8] sm:$0xff]
        %v314 = vld [vmem:[#allocation2 + $0xc0] sm:$0xff]
        %v315 = vld [vmem:[#allocation2 + $0xc8] sm:$0xff]
        %v316 = vld [vmem:[#allocation2 + $0xd0] sm:$0x1]
        %v317 = vld [vmem:[#allocation2 + $0xd8] sm:$0xff]
        %v318 = vld [vmem:[#allocation2 + $0xe0] sm:$0xff]
        %v319 = vld [vmem:[#allocation2 + $0xe8] sm:$0xff]
        %v320 = vld [vmem:[#allocation2 + $0xf0] sm:$0xff]
        %v321 = vld [vmem:[#allocation2 + $0xf8] sm:$0x1]
        %v322 = vld [vmem:[#allocation2 + $0x100] sm:$0xff]
        %v323 = vld [vmem:[#allocation2 + $0x108] sm:$0xff]
        %v324 = vld [vmem:[#allocation2 + $0x110] sm:$0xff]
        %v325 = vld [vmem:[#allocation2 + $0x118] sm:$0xff]
        %v326 = vld [vmem:[#allocation2 + $0x120] sm:$0x1]
        %v327 = vld [vmem:[#allocation2 + $0x128] sm:$0xff]
        %v328 = vld [vmem:[#allocation2 + $0x130] sm:$0xff]
        %v329 = vld [vmem:[#allocation2 + $0x138] sm:$0x1]
        %v330 = vld [vmem:[#allocation2 + $0x140] sm:$0x1]
        %v331 = vld [vmem:[#allocation2 + $0x148] sm:$0x1]
        %v332 = vld [vmem:[#allocation2 + $0x150] sm:$0xff]
        %v333 = vld [vmem:[#allocation2 + $0x158] sm:$0xff]
        %v334 = vld [vmem:[#allocation2 + $0x160] sm:$0xff]
        %v335 = vld [vmem:[#allocation2 + $0x168] sm:$0xff]
        %v336 = vld [vmem:[#allocation2 + $0x170] sm:$0x1]
        %v337 = vld [vmem:[#allocation2 + $0x178] sm:$0xff]
        %v338 = vld [vmem:[#allocation2 + $0x180] sm:$0xff]
        %v339 = vld [vmem:[#allocation2 + $0x188] sm:$0xff]
        %v340 = vld [vmem:[#allocation2 + $0x190] sm:$0xff]
        %v341 = vld [vmem:[#allocation2 + $0x198] sm:$0xff]
        %v342 = vld [vmem:[#allocation2 + $0x1a0] sm:$0xff]
        %v343 = vld [vmem:[#allocation2 + $0x1a8] sm:$0xff]
        %v344 = vld [vmem:[#allocation2 + $0x1b0] sm:$0xff]
        %v345 = vld [vmem:[#allocation2 + $0x1b8] sm:$0x1]
        %v346 = vld [vmem:[#allocation2 + $0x1c0] sm:$0x1]
        %v347 = vld [vmem:[#allocation2 + $0x1c8] sm:$0x1]
        %v348 = vld [vmem:[#allocation2 + $0x1d0] sm:$0x1]
        %v349 = vld [vmem:[#allocation2 + $0x1d8] sm:$0x1]
        %v350 = vld [vmem:[#allocation2 + $0x1e0] sm:$0xff]
        %v351 = vld [vmem:[#allocation2 + $0x1e8] sm:$0xff]
        %v352 = vld [vmem:[#allocation2 + $0x1f0] sm:$0xff]
        %v353 = vld [vmem:[#allocation2 + $0x1f8] sm:$0xff]
        %v354 = vld [vmem:[#allocation2 + $0x200] sm:$0x1]
        %v355 = vld [vmem:[#allocation2 + $0x208] sm:$0xff]
        %v356 = vld [vmem:[#allocation2 + $0x210] sm:$0xff]
        %v357 = vld [vmem:[#allocation2 + $0x218] sm:$0xff]
        %v358 = vld [vmem:[#allocation2 + $0x220] sm:$0xff]
        %v359 = vld [vmem:[#allocation2 + $0x228] sm:$0x1]
        %v360 = vld [vmem:[#allocation2 + $0x230] sm:$0xff]
        %v361 = vld [vmem:[#allocation2 + $0x238] sm:$0xff]
        %v362 = vld [vmem:[#allocation2 + $0x240] sm:$0xff]
        %v363 = vld [vmem:[#allocation2 + $0x248] sm:$0xff]
        %v364 = vld [vmem:[#allocation2 + $0x250] sm:$0x1]
        %v365 = vld [vmem:[#allocation2 + $0x258] sm:$0xff]
        %v366 = vld [vmem:[#allocation2 + $0x260] sm:$0xff]
        %v367 = vld [vmem:[#allocation2 + $0x268] sm:$0x1]
        %v368 = vld [vmem:[#allocation2 + $0x270] sm:$0xff]
        %v369 = vld [vmem:[#allocation2 + $0x278] sm:$0xff]
        %v370 = vld [vmem:[#allocation2 + $0x280] sm:$0xff]
        %v371 = vld [vmem:[#allocation2 + $0x288] sm:$0xff]
        %v372 = vld [vmem:[#allocation2 + $0x290] sm:$0x1]
        %v373 = vld [vmem:[#allocation2 + $0x298] sm:$0xff]
        %v374 = vld [vmem:[#allocation2 + $0x2a0] sm:$0xff]
        %v375 = vld [vmem:[#allocation2 + $0x2a8] sm:$0xff]
        %v376 = vld [vmem:[#allocation2 + $0x2b0] sm:$0xff]
        %v377 = vld [vmem:[#allocation2 + $0x2b8] sm:$0x1]
        %v378 = vld [vmem:[#allocation2 + $0x2c0] sm:$0xff]
        %v379 = vld [vmem:[#allocation2 + $0x2c8] sm:$0xff]
        %v380 = vld [vmem:[#allocation2 + $0x2d0] sm:$0xff]
        %v381 = vld [vmem:[#allocation2 + $0x2d8] sm:$0xff]
        %v382 = vld [vmem:[#allocation2 + $0x2e0] sm:$0x1]
        %v383 = vld [vmem:[#allocation2 + $0x2e8] sm:$0xff]
        %v384 = vld [vmem:[#allocation2 + $0x2f0] sm:$0xff]
        %v385 = vld [vmem:[#allocation2 + $0x2f8] sm:$0xff]
        %v386 = vld [vmem:[#allocation2 + $0x300] sm:$0xff]
        %v387 = vld [vmem:[#allocation2 + $0x308] sm:$0x1]
        %v388 = vld [vmem:[#allocation2 + $0x310] sm:$0x1]
        %v389 = vld [vmem:[#allocation2 + $0x318] sm:$0x1]
        %v390 = vld [vmem:[#allocation2 + $0x320] sm:$0xff]
        %v391 = vld [vmem:[#allocation2 + $0x328] sm:$0xff]
        %v392 = vld [vmem:[#allocation2 + $0x330] sm:$0xff]
        %v393 = vld [vmem:[#allocation2 + $0x338] sm:$0xff]
        %v394 = vld [vmem:[#allocation2 + $0x340] sm:$0x1]
        %v395 = vld [vmem:[#allocation2 + $0x348] sm:$0xff]
        %v396 = vld [vmem:[#allocation2 + $0x350] sm:$0xff]
        %v397 = vld [vmem:[#allocation2 + $0x358] sm:$0xff]
        %v398 = vld [vmem:[#allocation2 + $0x360] sm:$0xff]
        %v399 = vld [vmem:[#allocation2 + $0x368] sm:$0x1]
        %v400 = vld [vmem:[#allocation2 + $0x370] sm:$0xff]
        %v401 = vld [vmem:[#allocation2 + $0x378] sm:$0xff]
        %v402 = vld [vmem:[#allocation2 + $0x380] sm:$0xff]
        %v403 = vld [vmem:[#allocation2 + $0x388] sm:$0xff]
        %v404 = vld [vmem:[#allocation2 + $0x390] sm:$0x1]
        %v405 = vld [vmem:[#allocation2 + $0x398] sm:$0xff]
        %v406 = vld [vmem:[#allocation2 + $0x3a0] sm:$0xff]
        %v407 = vld [vmem:[#allocation2 + $0x3a8] sm:$0x1]
        %v408 = vld [vmem:[#allocation2 + $0x3b0] sm:$0x1]
        %v409 = vld [vmem:[#allocation2 + $0x3b8] sm:$0x1]
        %v410 = vld [vmem:[#allocation2 + $0x3c0] sm:$0xff]
        %v411 = vld [vmem:[#allocation2 + $0x3c8] sm:$0xff]
        %v412 = vld [vmem:[#allocation2 + $0x3d0] sm:$0xff]
        %v413 = vld [vmem:[#allocation2 + $0x3d8] sm:$0xff]
        %v414 = vld [vmem:[#allocation2 + $0x3e0] sm:$0x1]
        %v415 = vld [vmem:[#allocation2 + $0x3e8] sm:$0xff]
        %v416 = vld [vmem:[#allocation2 + $0x3f0] sm:$0xff]
        %v417 = vld [vmem:[#allocation2 + $0x3f8] sm:$0xff]
        %v418 = vld [vmem:[#allocation2 + $0x400] sm:$0xff]
        %v419 = vld [vmem:[#allocation2 + $0x408] sm:$0xff]
        %v420 = vld [vmem:[#allocation2 + $0x410] sm:$0xff]
        %v421 = vld [vmem:[#allocation2 + $0x418] sm:$0xff]
        %v422 = vld [vmem:[#allocation2 + $0x420] sm:$0xff]
        %v423 = vld [vmem:[#allocation2 + $0x428] sm:$0x1]
        %v424 = vld [vmem:[#allocation2 + $0x430] sm:$0x1]
        %v425 = vld [vmem:[#allocation2 + $0x438] sm:$0x1]
        %v426 = vld [vmem:[#allocation2 + $0x440] sm:$0x1]
        %v427 = vld [vmem:[#allocation2 + $0x448] sm:$0x1]
        %v428 = vld [vmem:[#allocation2 + $0x450] sm:$0xff]
        %v429 = vld [vmem:[#allocation2 + $0x458] sm:$0xff]
        %v430 = vld [vmem:[#allocation2 + $0x460] sm:$0xff]
        %v431 = vld [vmem:[#allocation2 + $0x468] sm:$0xff]
        %v432 = vld [vmem:[#allocation2 + $0x470] sm:$0x1]
        %v433 = vld [vmem:[#allocation2 + $0x478] sm:$0xff]
        %v434 = vld [vmem:[#allocation2 + $0x480] sm:$0xff]
        %v435 = vld [vmem:[#allocation2 + $0x488] sm:$0xff]
        %v436 = vld [vmem:[#allocation2 + $0x490] sm:$0xff]
        %v437 = vld [vmem:[#allocation2 + $0x498] sm:$0x1]
        %v438 = vld [vmem:[#allocation2 + $0x4a0] sm:$0xff]
        %v439 = vld [vmem:[#allocation2 + $0x4a8] sm:$0xff]
        %v440 = vld [vmem:[#allocation2 + $0x4b0] sm:$0xff]
        %v441 = vld [vmem:[#allocation2 + $0x4b8] sm:$0xff]
        %v442 = vld [vmem:[#allocation2 + $0x4c0] sm:$0x1]
        %v443 = vld [vmem:[#allocation2 + $0x4c8] sm:$0xff]
        %v444 = vld [vmem:[#allocation2 + $0x4d0] sm:$0xff]
        %v445 = vld [vmem:[#allocation2 + $0x4d8] sm:$0x1]
        %v446 = vld [vmem:[#allocation2 + $0x4e0] sm:$0xff]
        %v447 = vld [vmem:[#allocation2 + $0x4e8] sm:$0xff]
        %v448 = vld [vmem:[#allocation2 + $0x4f0] sm:$0xff]
        %v449 = vld [vmem:[#allocation2 + $0x4f8] sm:$0xff]
        %v450 = vld [vmem:[#allocation2 + $0x500] sm:$0x1]
        %v451 = vld [vmem:[#allocation2 + $0x508] sm:$0xff]
        %v452 = vld [vmem:[#allocation2 + $0x510] sm:$0xff]
        %v453 = vld [vmem:[#allocation2 + $0x518] sm:$0xff]
        %v454 = vld [vmem:[#allocation2 + $0x520] sm:$0xff]
        %v455 = vld [vmem:[#allocation2 + $0x528] sm:$0x1]
        %v456 = vld [vmem:[#allocation2 + $0x530] sm:$0xff]
        %v457 = vld [vmem:[#allocation2 + $0x538] sm:$0xff]
        %v458 = vld [vmem:[#allocation2 + $0x540] sm:$0xff]
        %v459 = vld [vmem:[#allocation2 + $0x548] sm:$0xff]
        %v460 = vld [vmem:[#allocation2 + $0x550] sm:$0x1]
        %v461 = vld [vmem:[#allocation2 + $0x558] sm:$0xff]
        %v462 = vld [vmem:[#allocation2 + $0x560] sm:$0xff]
        %v463 = vld [vmem:[#allocation2 + $0x568] sm:$0x1]
        %v464 = vld [vmem:[#allocation2 + $0x570] sm:$0x1]
        %v465 = vld [vmem:[#allocation2 + $0x578] sm:$0x1]
        %v466 = vld [vmem:[%s274] sm:$0xff]
        %v467 = vld [vmem:[%s279] sm:$0xff]
        %v468 = vld [vmem:[%s279 + $0x8] sm:$0xff]
        %v469 = vld [vmem:[%s279 + $0x10] sm:$0xff]
        %v470 = vld [vmem:[%s279 + $0x18] sm:$0xff]
        %v471 = vld [vmem:[%s284] sm:$0xff]
        %v472 = vld [vmem:[%s284 + $0x8] sm:$0xff]
        %v473 = vld [vmem:[%s284 + $0x10] sm:$0xff]
        %v474 = vld [vmem:[%s284 + $0x18] sm:$0xff]
        %475 = vxpose.xlu0.b32.start [1/16] %v471, 128
        %476 = vxpose.xlu0.b32.cont [2/16] %v472, 128
        %477 = vxpose.xlu0.b32.cont [3/16] %v473, 128
        %478 = vxpose.xlu0.b32.cont [4/16] %v474, 128
        %479 = vxpose.xlu0.b32.cont [5/16] 0.0, 128
        %480 = vxpose.xlu0.b32.cont [6/16] 0.0, 128
        %481 = vxpose.xlu0.b32.cont [7/16] 0.0, 128
        %482 = vxpose.xlu0.b32.cont [8/16] 0.0, 128
        %483 = vxpose.xlu0.b32.cont [9/16] 0.0, 128
        %484 = vxpose.xlu0.b32.cont [10/16] 0.0, 128
        %485 = vxpose.xlu0.b32.cont [11/16] 0.0, 128
        %486 = vxpose.xlu0.b32.cont [12/16] 0.0, 128
        %487 = vxpose.xlu0.b32.cont [13/16] 0.0, 128
        %488 = vxpose.xlu0.b32.cont [14/16] 0.0, 128
        %489 = vxpose.xlu0.b32.cont [15/16] 0.0, 128
        %490 = vxpose.xlu0.b32.end [16/16] 0.0, 128
        %v491 = vpop.trf.xlu0
        %v492 = vpop.trf.xlu0
        %v493 = vpop.trf.xlu0
        %v494 = vpop.trf.xlu0
        %v495 = vpop.trf.xlu0
        %v496 = vpop.trf.xlu0
        %v497 = vpop.trf.xlu0
        %v498 = vpop.trf.xlu0
        %v499 = vpop.trf.xlu0
        %v500 = vpop.trf.xlu0
        %v501 = vpop.trf.xlu0
        %v502 = vpop.trf.xlu0
        %v503 = vpop.trf.xlu0
        %v504 = vpop.trf.xlu0
        %v505 = vpop.trf.xlu0
        %v506 = vpop.trf.xlu0
        %507 = vxpose.xlu0.b32.start [1/16] %v467, 128
        %508 = vxpose.xlu0.b32.cont [2/16] %v468, 128
        %509 = vxpose.xlu0.b32.cont [3/16] %v469, 128
        %510 = vxpose.xlu0.b32.cont [4/16] %v470, 128
        %511 = vxpose.xlu0.b32.cont [5/16] 0.0, 128
        %512 = vxpose.xlu0.b32.cont [6/16] 0.0, 128
        %513 = vxpose.xlu0.b32.cont [7/16] 0.0, 128
        %514 = vxpose.xlu0.b32.cont [8/16] 0.0, 128
        %515 = vxpose.xlu0.b32.cont [9/16] 0.0, 128
        %516 = vxpose.xlu0.b32.cont [10/16] 0.0, 128
        %517 = vxpose.xlu0.b32.cont [11/16] 0.0, 128
        %518 = vxpose.xlu0.b32.cont [12/16] 0.0, 128
        %519 = vxpose.xlu0.b32.cont [13/16] 0.0, 128
        %520 = vxpose.xlu0.b32.cont [14/16] 0.0, 128
        %521 = vxpose.xlu0.b32.cont [15/16] 0.0, 128
        %522 = vxpose.xlu0.b32.end [16/16] 0.0, 128
        %v523 = vpop.trf.xlu0
        %v524 = vpop.trf.xlu0
        %v525 = vpop.trf.xlu0
        %v526 = vpop.trf.xlu0
        %v527 = vpop.trf.xlu0
        %v528 = vpop.trf.xlu0
        %v529 = vpop.trf.xlu0
        %v530 = vpop.trf.xlu0
        %v531 = vpop.trf.xlu0
        %v532 = vpop.trf.xlu0
        %v533 = vpop.trf.xlu0
        %v534 = vpop.trf.xlu0
        %v535 = vpop.trf.xlu0
        %v536 = vpop.trf.xlu0
        %v537 = vpop.trf.xlu0
        %v538 = vpop.trf.xlu0
        %v539 = vperm.slane %v294, 0
        %vm540 = vcmask 261120
        %v542 = vsel %vm540, %v466, 0
        %544 = vmatpush.msra.mxu0 0.0
        %545 = vmatpush.msra.mxu0 0.0
        %546 = vmatpush.msra.mxu0 0.0
        %547 = vmatpush.msra.mxu0 0.0
        %548 = vmatpush.msra.mxu0 0.0
        %549 = vmatpush.msra.mxu0 0.0
        %550 = vmatpush.msra.mxu0 0.0
        %551 = vmatpush.msra.mxu0 0.0
        %552 = vmatpush.msra.mxu0 0.0
        %553 = vmatpush.msra.mxu0 0.0
        %554 = vmatpush.msra.mxu0 0.0
        %555 = vmatpush.msra.mxu0 0.0
        %556 = vmatpush.msra.mxu0 %v293
        %557 = vmatpush.msra.mxu0 %v292
        %558 = vmatpush.msra.mxu0 %v291
        %559 = vmatpush.msra.mxu0 %v290
        %560 = vmatmul.f32.gmra.mxu0 %v542
        %v561 = vpop.f32.mrf.mxu0
        %v562 = vadd.f32 %v539, %v561
        %563 = vdwg.mxu0
        %v564 = vperm.slane %v299, 0
        %565 = vmatpush.msra.mxu0 0.0
        %566 = vmatpush.msra.mxu0 0.0
        %567 = vmatpush.msra.mxu0 0.0
        %568 = vmatpush.msra.mxu0 0.0
        %569 = vmatpush.msra.mxu0 0.0
        %570 = vmatpush.msra.mxu0 0.0
        %571 = vmatpush.msra.mxu0 0.0
        %572 = vmatpush.msra.mxu0 0.0
        %573 = vmatpush.msra.mxu0 0.0
        %574 = vmatpush.msra.mxu0 0.0
        %575 = vmatpush.msra.mxu0 0.0
        %576 = vmatpush.msra.mxu0 0.0
        %577 = vmatpush.msra.mxu0 %v298
        %578 = vmatpush.msra.mxu0 %v297
        %579 = vmatpush.msra.mxu0 %v296
        %580 = vmatpush.msra.mxu0 %v295
        %581 = vmatmul.f32.gmra.mxu0 %v542
        %v582 = vpop.f32.mrf.mxu0
        %v583 = vadd.f32 %v564, %v582
        %584 = vdwg.mxu0
        %v585 = vperm.slane %v304, 0
        %586 = vmatpush.msra.mxu0 0.0
        %587 = vmatpush.msra.mxu0 0.0
        %588 = vmatpush.msra.mxu0 0.0
        %589 = vmatpush.msra.mxu0 0.0
        %590 = vmatpush.msra.mxu0 0.0
        %591 = vmatpush.msra.mxu0 0.0
        %592 = vmatpush.msra.mxu0 0.0
        %593 = vmatpush.msra.mxu0 0.0
        %594 = vmatpush.msra.mxu0 0.0
        %595 = vmatpush.msra.mxu0 0.0
        %596 = vmatpush.msra.mxu0 0.0
        %597 = vmatpush.msra.mxu0 0.0
        %598 = vmatpush.msra.mxu0 %v303
        %599 = vmatpush.msra.mxu0 %v302
        %600 = vmatpush.msra.mxu0 %v301
        %601 = vmatpush.msra.mxu0 %v300
        %602 = vmatmul.f32.gmra.mxu0 %v542
        %v603 = vpop.f32.mrf.mxu0
        %v604 = vadd.f32 %v585, %v603
        %605 = vdwg.mxu0
        %vm606 = vcmask 64512
        %v608 = vsel %vm606, %v562, 0
        %v611 = vsel %vm606, %v583, 0
        %613 = vmatpush.xpose.msra.mxu0 0.0
        %614 = vmatpush.xpose.msra.mxu0 0.0
        %615 = vmatpush.xpose.msra.mxu0 0.0
        %616 = vmatpush.xpose.msra.mxu0 0.0
        %617 = vmatpush.xpose.msra.mxu0 0.0
        %618 = vmatpush.xpose.msra.mxu0 0.0
        %619 = vmatpush.xpose.msra.mxu0 0.0
        %620 = vmatpush.xpose.msra.mxu0 0.0
        %621 = vmatpush.xpose.msra.mxu0 0.0
        %622 = vmatpush.xpose.msra.mxu0 0.0
        %623 = vmatpush.xpose.msra.mxu0 0.0
        %624 = vmatpush.xpose.msra.mxu0 0.0
        %625 = vmatpush.xpose.msra.mxu0 0.0
        %626 = vmatpush.xpose.msra.mxu0 0.0
        %627 = vmatpush.xpose.msra.mxu0 0.0
        %628 = vmatpush.xpose.msra.mxu0 %v611
        %629 = vmatmul.f32.gmra.mxu0 %v608
        %v630 = vpop.f32.mrf.mxu0
        %v631 = vadd.f32 0.0, %v630
        %632 = vdwg.mxu0
        %v633 = vsel %vm606, %v631, -inf
        %634 = vmax.xlane.f32.xlu0 %v633
        %v635 = vpop.xlane.xlu0 %634
        %v636 = vsub.f32 %v631, %v635
        %v637 = vmul.f32 %v636, 1.442695
        %v638 = vpow.pop %v637
        %v639 = vsel %vm606, %v638, 0.0
        %640 = vadd.xlane.f32.xlu0 %v639
        %v641 = vpop.xlane.xlu0 %640
        %v642 = vrcp.pop %v641
        %v643 = vmul.f32 %v638, %v642
        %v645 = vsel %vm606, %v643, 0
        %647 = vmatpush.msra.mxu0 0.0
        %648 = vmatpush.msra.mxu0 0.0
        %649 = vmatpush.msra.mxu0 0.0
        %650 = vmatpush.msra.mxu0 0.0
        %651 = vmatpush.msra.mxu0 0.0
        %652 = vmatpush.msra.mxu0 0.0
        %653 = vmatpush.msra.mxu0 0.0
        %654 = vmatpush.msra.mxu0 0.0
        %655 = vmatpush.msra.mxu0 0.0
        %656 = vmatpush.msra.mxu0 0.0
        %657 = vmatpush.msra.mxu0 0.0
        %658 = vmatpush.msra.mxu0 0.0
        %659 = vmatpush.msra.mxu0 0.0
        %660 = vmatpush.msra.mxu0 0.0
        %661 = vmatpush.msra.mxu0 0.0
        %662 = vmatpush.msra.mxu0 %v604
        %663 = vmatmul.f32.gmra.mxu0 %v645
        %v664 = vpop.f32.mrf.mxu0
        %v665 = vadd.f32 0.0, %v664
        %666 = vdwg.mxu0
        %667 = vrot.lane.b32.xlu0 %v562, 120
        %v668 = vpop.permute.xlu0 %667
        %669 = vrot.lane.b32.xlu0 %v583, 120
        %v670 = vpop.permute.xlu0 %669
        %v671 = vsel %vm606, %v668, 0
        %v673 = vsel %vm606, %v670, 0
        %675 = vmatpush.xpose.msra.mxu0 0.0
        %676 = vmatpush.xpose.msra.mxu0 0.0
        %677 = vmatpush.xpose.msra.mxu0 0.0
        %678 = vmatpush.xpose.msra.mxu0 0.0
        %679 = vmatpush.xpose.msra.mxu0 0.0
        %680 = vmatpush.xpose.msra.mxu0 0.0
        %681 = vmatpush.xpose.msra.mxu0 0.0
        %682 = vmatpush.xpose.msra.mxu0 0.0
        %683 = vmatpush.xpose.msra.mxu0 0.0
        %684 = vmatpush.xpose.msra.mxu0 0.0
        %685 = vmatpush.xpose.msra.mxu0 0.0
        %686 = vmatpush.xpose.msra.mxu0 0.0
        %687 = vmatpush.xpose.msra.mxu0 0.0
        %688 = vmatpush.xpose.msra.mxu0 0.0
        %689 = vmatpush.xpose.msra.mxu0 0.0
        %690 = vmatpush.xpose.msra.mxu0 %v673
        %691 = vmatmul.f32.gmra.mxu0 %v671
        %v692 = vpop.f32.mrf.mxu0
        %v693 = vadd.f32 0.0, %v692
        %694 = vdwg.mxu0
        %v695 = vsel %vm606, %v693, -inf
        %696 = vmax.xlane.f32.xlu0 %v695
        %v697 = vpop.xlane.xlu0 %696
        %v698 = vsub.f32 %v693, %v697
        %v699 = vmul.f32 %v698, 1.442695
        %v700 = vpow.pop %v699
        %v701 = vsel %vm606, %v700, 0.0
        %702 = vadd.xlane.f32.xlu0 %v701
        %v703 = vpop.xlane.xlu0 %702
        %v704 = vrcp.pop %v703
        %v705 = vmul.f32 %v700, %v704
        %707 = vrot.lane.b32.xlu0 %v604, 120
        %v708 = vpop.permute.xlu0 %707
        %v711 = vsel %vm606, %v705, 0
        %713 = vmatpush.msra.mxu0 0.0
        %714 = vmatpush.msra.mxu0 0.0
        %715 = vmatpush.msra.mxu0 0.0
        %716 = vmatpush.msra.mxu0 0.0
        %717 = vmatpush.msra.mxu0 0.0
        %718 = vmatpush.msra.mxu0 0.0
        %719 = vmatpush.msra.mxu0 0.0
        %720 = vmatpush.msra.mxu0 0.0
        %721 = vmatpush.msra.mxu0 0.0
        %722 = vmatpush.msra.mxu0 0.0
        %723 = vmatpush.msra.mxu0 0.0
        %724 = vmatpush.msra.mxu0 0.0
        %725 = vmatpush.msra.mxu0 0.0
        %726 = vmatpush.msra.mxu0 0.0
        %727 = vmatpush.msra.mxu0 0.0
        %728 = vmatpush.msra.mxu0 %v708
        %729 = vmatmul.f32.gmra.mxu0 %v711
        %v730 = vpop.f32.mrf.mxu0
        %v731 = vadd.f32 0.0, %v730
        %732 = vdwg.mxu0
        %733 = vrot.lane.b32.xlu0 %v562, 112
        %v734 = vpop.permute.xlu0 %733
        %735 = vrot.lane.b32.xlu0 %v583, 112
        %v736 = vpop.permute.xlu0 %735
        %v737 = vsel %vm606, %v734, 0
        %v739 = vsel %vm606, %v736, 0
        %741 = vmatpush.xpose.msra.mxu0 0.0
        %742 = vmatpush.xpose.msra.mxu0 0.0
        %743 = vmatpush.xpose.msra.mxu0 0.0
        %744 = vmatpush.xpose.msra.mxu0 0.0
        %745 = vmatpush.xpose.msra.mxu0 0.0
        %746 = vmatpush.xpose.msra.mxu0 0.0
        %747 = vmatpush.xpose.msra.mxu0 0.0
        %748 = vmatpush.xpose.msra.mxu0 0.0
        %749 = vmatpush.xpose.msra.mxu0 0.0
        %750 = vmatpush.xpose.msra.mxu0 0.0
        %751 = vmatpush.xpose.msra.mxu0 0.0
        %752 = vmatpush.xpose.msra.mxu0 0.0
        %753 = vmatpush.xpose.msra.mxu0 0.0
        %754 = vmatpush.xpose.msra.mxu0 0.0
        %755 = vmatpush.xpose.msra.mxu0 0.0
        %756 = vmatpush.xpose.msra.mxu0 %v739
        %757 = vmatmul.f32.gmra.mxu0 %v737
        %v758 = vpop.f32.mrf.mxu0
        %v759 = vadd.f32 0.0, %v758
        %760 = vdwg.mxu0
        %v761 = vsel %vm606, %v759, -inf
        %762 = vmax.xlane.f32.xlu0 %v761
        %v763 = vpop.xlane.xlu0 %762
        %v764 = vsub.f32 %v759, %v763
        %v765 = vmul.f32 %v764, 1.442695
        %v766 = vpow.pop %v765
        %v767 = vsel %vm606, %v766, 0.0
        %768 = vadd.xlane.f32.xlu0 %v767
        %v769 = vpop.xlane.xlu0 %768
        %v770 = vrcp.pop %v769
        %v771 = vmul.f32 %v766, %v770
        %772 = vrot.lane.b32.xlu0 %v604, 112
        %v773 = vpop.permute.xlu0 %772
        %v776 = vsel %vm606, %v771, 0
        %778 = vmatpush.msra.mxu0 0.0
        %779 = vmatpush.msra.mxu0 0.0
        %780 = vmatpush.msra.mxu0 0.0
        %781 = vmatpush.msra.mxu0 0.0
        %782 = vmatpush.msra.mxu0 0.0
        %783 = vmatpush.msra.mxu0 0.0
        %784 = vmatpush.msra.mxu0 0.0
        %785 = vmatpush.msra.mxu0 0.0
        %786 = vmatpush.msra.mxu0 0.0
        %787 = vmatpush.msra.mxu0 0.0
        %788 = vmatpush.msra.mxu0 0.0
        %789 = vmatpush.msra.mxu0 0.0
        %790 = vmatpush.msra.mxu0 0.0
        %791 = vmatpush.msra.mxu0 0.0
        %792 = vmatpush.msra.mxu0 0.0
        %793 = vmatpush.msra.mxu0 %v773
        %794 = vmatmul.f32.gmra.mxu0 %v776
        %v795 = vpop.f32.mrf.mxu0
        %v796 = vadd.f32 0.0, %v795
        %797 = vdwg.mxu0
        %798 = vrot.lane.b32.xlu0 %v562, 104
        %v799 = vpop.permute.xlu0 %798
        %800 = vrot.lane.b32.xlu0 %v583, 104
        %v801 = vpop.permute.xlu0 %800
        %v802 = vsel %vm606, %v799, 0
        %v804 = vsel %vm606, %v801, 0
        %806 = vmatpush.xpose.msra.mxu0 0.0
        %807 = vmatpush.xpose.msra.mxu0 0.0
        %808 = vmatpush.xpose.msra.mxu0 0.0
        %809 = vmatpush.xpose.msra.mxu0 0.0
        %810 = vmatpush.xpose.msra.mxu0 0.0
        %811 = vmatpush.xpose.msra.mxu0 0.0
        %812 = vmatpush.xpose.msra.mxu0 0.0
        %813 = vmatpush.xpose.msra.mxu0 0.0
        %814 = vmatpush.xpose.msra.mxu0 0.0
        %815 = vmatpush.xpose.msra.mxu0 0.0
        %816 = vmatpush.xpose.msra.mxu0 0.0
        %817 = vmatpush.xpose.msra.mxu0 0.0
        %818 = vmatpush.xpose.msra.mxu0 0.0
        %819 = vmatpush.xpose.msra.mxu0 0.0
        %820 = vmatpush.xpose.msra.mxu0 0.0
        %821 = vmatpush.xpose.msra.mxu0 %v804
        %822 = vmatmul.f32.gmra.mxu0 %v802
        %v823 = vpop.f32.mrf.mxu0
        %v824 = vadd.f32 0.0, %v823
        %825 = vdwg.mxu0
        %v826 = vsel %vm606, %v824, -inf
        %827 = vmax.xlane.f32.xlu0 %v826
        %v828 = vpop.xlane.xlu0 %827
        %v829 = vsub.f32 %v824, %v828
        %v830 = vmul.f32 %v829, 1.442695
        %v831 = vpow.pop %v830
        %v832 = vsel %vm606, %v831, 0.0
        %833 = vadd.xlane.f32.xlu0 %v832
        %v834 = vpop.xlane.xlu0 %833
        %v835 = vrcp.pop %v834
        %v836 = vmul.f32 %v831, %v835
        %837 = vrot.lane.b32.xlu0 %v604, 104
        %v838 = vpop.permute.xlu0 %837
        %v841 = vsel %vm606, %v836, 0
        %843 = vmatpush.msra.mxu0 0.0
        %844 = vmatpush.msra.mxu0 0.0
        %845 = vmatpush.msra.mxu0 0.0
        %846 = vmatpush.msra.mxu0 0.0
        %847 = vmatpush.msra.mxu0 0.0
        %848 = vmatpush.msra.mxu0 0.0
        %849 = vmatpush.msra.mxu0 0.0
        %850 = vmatpush.msra.mxu0 0.0
        %851 = vmatpush.msra.mxu0 0.0
        %852 = vmatpush.msra.mxu0 0.0
        %853 = vmatpush.msra.mxu0 0.0
        %854 = vmatpush.msra.mxu0 0.0
        %855 = vmatpush.msra.mxu0 0.0
        %856 = vmatpush.msra.mxu0 0.0
        %857 = vmatpush.msra.mxu0 0.0
        %858 = vmatpush.msra.mxu0 %v838
        %859 = vmatmul.f32.gmra.mxu0 %v841
        %v860 = vpop.f32.mrf.mxu0
        %v861 = vadd.f32 0.0, %v860
        %862 = vdwg.mxu0
        %864 = vrot.lane.b32.xlu0 %v731, 8
        %v865 = vpop.permute.xlu0 %864
        %868 = vrot.lane.b32.xlu0 %v796, 16
        %v869 = vpop.permute.xlu0 %868
        %872 = vrot.lane.b32.xlu0 %v861, 24
        %v873 = vpop.permute.xlu0 %872
        %v875 = vsel %vm606, %v665, %v865
        %vm876 = vcmask 130048
        %v877 = vsel %vm876, %v875, %v869
        %vm878 = vcmask 195584
        %v879 = vsel %vm878, %v877, %v873
        %v880 = vperm.slane %v309, 0
        %v882 = vsel %vm540, %v879, 0
        %884 = vmatpush.msra.mxu0 0.0
        %885 = vmatpush.msra.mxu0 0.0
        %886 = vmatpush.msra.mxu0 0.0
        %887 = vmatpush.msra.mxu0 0.0
        %888 = vmatpush.msra.mxu0 0.0
        %889 = vmatpush.msra.mxu0 0.0
        %890 = vmatpush.msra.mxu0 0.0
        %891 = vmatpush.msra.mxu0 0.0
        %892 = vmatpush.msra.mxu0 0.0
        %893 = vmatpush.msra.mxu0 0.0
        %894 = vmatpush.msra.mxu0 0.0
        %895 = vmatpush.msra.mxu0 0.0
        %896 = vmatpush.msra.mxu0 %v308
        %897 = vmatpush.msra.mxu0 %v307
        %898 = vmatpush.msra.mxu0 %v306
        %899 = vmatpush.msra.mxu0 %v305
        %900 = vmatmul.f32.gmra.mxu0 %v882
        %v901 = vpop.f32.mrf.mxu0
        %v902 = vadd.f32 %v880, %v901
        %903 = vdwg.mxu0
        %v904 = vsel %vm540, %v902, 0.0
        %905 = vadd.xlane.f32.xlu0 %v904
        %v906 = vpop.xlane.xlu0 %905
        %v907 = vrcp.pop 32.0
        %v908 = vmul.f32 32.0, %v907
        %v909 = vsub.f32 1.0, %v908
        %v910 = vmul.f32 %v907, %v909
        %v911 = vadd.f32 %v907, %v910
        %vm912 = vweird.f32 %v907
        %v913 = vsel %vm912, %v907, %v911
        %v914 = vmul.f32 %v906, %v913
        %v915 = vsub.f32 %v902, %v914
        %v916 = vmul.f32 %v915, %v915
        %v917 = vsel %vm540, %v916, 0.0
        %918 = vadd.xlane.f32.xlu0 %v917
        %v919 = vpop.xlane.xlu0 %918
        %v920 = vmul.f32 %v919, %v913
        %v921 = vadd.f32 %v920, 1e-05
        %v922 = vrsqrt.pop %v921
        %v923 = vmul.f32 %v922, %v921
        %v924 = vmul.f32 %v923, %v922
        %v925 = vmul.f32 0.5, %v924
        %v926 = vsub.f32 1.5, %v925
        %v927 = vmul.f32 %v922, %v926
        %vm928 = vweird.f32 %v921
        %vm929 = vweird.f32 %v922
        %vm930 = vmor %vm928, %vm929
        %v931 = vsel %vm930, %v922, %v927
        %v932 = vmul.f32 %v915, %v931
        %v933 = vperm.slane %v310, 0
        %v934 = vmul.f32 %v932, %v933
        %v935 = vperm.slane %v311, 0
        %v936 = vadd.f32 %v934, %v935
        %v937 = vadd.f32 %v936, %v466
        %v938 = vadd.f32 %v523, %v491
        %v939 = vadd.f32 %v524, %v492
        %v940 = vadd.f32 %v525, %v493
        %v941 = vadd.f32 %v526, %v494
        %v942 = vadd.f32 %v527, %v495
        %v943 = vadd.f32 %v528, %v496
        %v944 = vadd.f32 %v529, %v497
        %v945 = vadd.f32 %v530, %v498
        %v946 = vperm.slane %v316, 0
        %v948 = vsel %vm540, %v937, 0
        %950 = vmatpush.msra.mxu0 0.0
        %951 = vmatpush.msra.mxu0 0.0
        %952 = vmatpush.msra.mxu0 0.0
        %953 = vmatpush.msra.mxu0 0.0
        %954 = vmatpush.msra.mxu0 0.0
        %955 = vmatpush.msra.mxu0 0.0
        %956 = vmatpush.msra.mxu0 0.0
        %957 = vmatpush.msra.mxu0 0.0
        %958 = vmatpush.msra.mxu0 0.0
        %959 = vmatpush.msra.mxu0 0.0
        %960 = vmatpush.msra.mxu0 0.0
        %961 = vmatpush.msra.mxu0 0.0
        %962 = vmatpush.msra.mxu0 %v315
        %963 = vmatpush.msra.mxu0 %v314
        %964 = vmatpush.msra.mxu0 %v313
        %965 = vmatpush.msra.mxu0 %v312
        %966 = vmatmul.f32.gmra.mxu0 %v948
        %v967 = vpop.f32.mrf.mxu0
        %v968 = vadd.f32 %v946, %v967
        %969 = vdwg.mxu0
        %v970 = vperm.slane %v321, 0
        %v972 = vsel %vm540, %v938, 0
        %v975 = vsel %vm540, %v939, 0
        %v978 = vsel %vm540, %v940, 0
        %v981 = vsel %vm540, %v941, 0
        %v984 = vsel %vm540, %v942, 0
        %v987 = vsel %vm540, %v943, 0
        %v990 = vsel %vm540, %v944, 0
        %v993 = vsel %vm540, %v945, 0
        %995 = vmatpush.msra.mxu0 0.0
        %996 = vmatpush.msra.mxu0 0.0
        %997 = vmatpush.msra.mxu0 0.0
        %998 = vmatpush.msra.mxu0 0.0
        %999 = vmatpush.msra.mxu0 0.0
        %1000 = vmatpush.msra.mxu0 0.0
        %1001 = vmatpush.msra.mxu0 0.0
        %1002 = vmatpush.msra.mxu0 0.0
        %1003 = vmatpush.msra.mxu0 0.0
        %1004 = vmatpush.msra.mxu0 0.0
        %1005 = vmatpush.msra.mxu0 0.0
        %1006 = vmatpush.msra.mxu0 0.0
        %1007 = vmatpush.msra.mxu0 %v320
        %1008 = vmatpush.msra.mxu0 %v319
        %1009 = vmatpush.msra.mxu0 %v318
        %1010 = vmatpush.msra.mxu0 %v317
        %1011 = vmatmul.f32.gmra.mxu0 %v972
        %v1012 = vpop.f32.mrf.mxu0
        %v1013 = vadd.f32 %v970, %v1012
        %1014 = vmatmul.f32.gmra.mxu0 %v975
        %v1015 = vpop.f32.mrf.mxu0
        %v1016 = vadd.f32 %v970, %v1015
        %1017 = vmatmul.f32.gmra.mxu0 %v978
        %v1018 = vpop.f32.mrf.mxu0
        %v1019 = vadd.f32 %v970, %v1018
        %1020 = vmatmul.f32.gmra.mxu0 %v981
        %v1021 = vpop.f32.mrf.mxu0
        %v1022 = vadd.f32 %v970, %v1021
        %1023 = vmatmul.f32.gmra.mxu0 %v984
        %v1024 = vpop.f32.mrf.mxu0
        %v1025 = vadd.f32 %v970, %v1024
        %1026 = vmatmul.f32.gmra.mxu0 %v987
        %v1027 = vpop.f32.mrf.mxu0
        %v1028 = vadd.f32 %v970, %v1027
        %1029 = vmatmul.f32.gmra.mxu0 %v990
        %v1030 = vpop.f32.mrf.mxu0
        %v1031 = vadd.f32 %v970, %v1030
        %1032 = vmatmul.f32.gmra.mxu0 %v993
        %v1033 = vpop.f32.mrf.mxu0
        %v1034 = vadd.f32 %v970, %v1033
        %1035 = vdwg.mxu0
        %v1036 = vperm.slane %v326, 0
        %v1038 = vsel %vm540, %v523, 0
        %v1041 = vsel %vm540, %v524, 0
        %v1044 = vsel %vm540, %v525, 0
        %v1047 = vsel %vm540, %v526, 0
        %v1050 = vsel %vm540, %v527, 0
        %v1053 = vsel %vm540, %v528, 0
        %v1056 = vsel %vm540, %v529, 0
        %v1059 = vsel %vm540, %v530, 0
        %1061 = vmatpush.msra.mxu0 0.0
        %1062 = vmatpush.msra.mxu0 0.0
        %1063 = vmatpush.msra.mxu0 0.0
        %1064 = vmatpush.msra.mxu0 0.0
        %1065 = vmatpush.msra.mxu0 0.0
        %1066 = vmatpush.msra.mxu0 0.0
        %1067 = vmatpush.msra.mxu0 0.0
        %1068 = vmatpush.msra.mxu0 0.0
        %1069 = vmatpush.msra.mxu0 0.0
        %1070 = vmatpush.msra.mxu0 0.0
        %1071 = vmatpush.msra.mxu0 0.0
        %1072 = vmatpush.msra.mxu0 0.0
        %1073 = vmatpush.msra.mxu0 %v325
        %1074 = vmatpush.msra.mxu0 %v324
        %1075 = vmatpush.msra.mxu0 %v323
        %1076 = vmatpush.msra.mxu0 %v322
        %1077 = vmatmul.f32.gmra.mxu0 %v1038
        %v1078 = vpop.f32.mrf.mxu0
        %v1079 = vadd.f32 %v1036, %v1078
        %1080 = vmatmul.f32.gmra.mxu0 %v1041
        %v1081 = vpop.f32.mrf.mxu0
        %v1082 = vadd.f32 %v1036, %v1081
        %1083 = vmatmul.f32.gmra.mxu0 %v1044
        %v1084 = vpop.f32.mrf.mxu0
        %v1085 = vadd.f32 %v1036, %v1084
        %1086 = vmatmul.f32.gmra.mxu0 %v1047
        %v1087 = vpop.f32.mrf.mxu0
        %v1088 = vadd.f32 %v1036, %v1087
        %1089 = vmatmul.f32.gmra.mxu0 %v1050
        %v1090 = vpop.f32.mrf.mxu0
        %v1091 = vadd.f32 %v1036, %v1090
        %1092 = vmatmul.f32.gmra.mxu0 %v1053
        %v1093 = vpop.f32.mrf.mxu0
        %v1094 = vadd.f32 %v1036, %v1093
        %1095 = vmatmul.f32.gmra.mxu0 %v1056
        %v1096 = vpop.f32.mrf.mxu0
        %v1097 = vadd.f32 %v1036, %v1096
        %1098 = vmatmul.f32.gmra.mxu0 %v1059
        %v1099 = vpop.f32.mrf.mxu0
        %v1100 = vadd.f32 %v1036, %v1099
        %1101 = vdwg.mxu0
        %vm1102 = vcmask 31744
        %v1104 = vsel %vm1102, %v968, 0
        %v1107 = vsel %vm1102, %v1013, 0
        %v1110 = vsel %vm1102, %v1016, 0
        %v1113 = vsel %vm1102, %v1019, 0
        %v1116 = vsel %vm1102, %v1022, 0
        %v1119 = vsel %vm1102, %v1025, 0
        %v1122 = vsel %vm1102, %v1028, 0
        %v1125 = vsel %vm1102, %v1031, 0
        %v1128 = vsel %vm1102, %v1034, 0
        %1130 = vmatpush.xpose.msra.mxu0 0.0
        %1131 = vmatpush.xpose.msra.mxu0 0.0
        %1132 = vmatpush.xpose.msra.mxu0 0.0
        %1133 = vmatpush.xpose.msra.mxu0 0.0
        %1134 = vmatpush.xpose.msra.mxu0 0.0
        %1135 = vmatpush.xpose.msra.mxu0 0.0
        %1136 = vmatpush.xpose.msra.mxu0 0.0
        %1137 = vmatpush.xpose.msra.mxu0 0.0
        %1138 = vmatpush.xpose.msra.mxu0 %v1128
        %1139 = vmatpush.xpose.msra.mxu0 %v1125
        %1140 = vmatpush.xpose.msra.mxu0 %v1122
        %1141 = vmatpush.xpose.msra.mxu0 %v1119
        %1142 = vmatpush.xpose.msra.mxu0 %v1116
        %1143 = vmatpush.xpose.msra.mxu0 %v1113
        %1144 = vmatpush.xpose.msra.mxu0 %v1110
        %1145 = vmatpush.xpose.msra.mxu0 %v1107
        %1146 = vmatmul.f32.gmra.mxu0 %v1104
        %v1147 = vpop.f32.mrf.mxu0
        %v1148 = vadd.f32 0.0, %v1147
        %1149 = vdwg.mxu0
        %vm1150 = vcmask 523264
        %v1151 = vsel %vm1150, %v1148, -inf
        %1152 = vmax.xlane.f32.xlu0 %v1151
        %v1153 = vpop.xlane.xlu0 %1152
        %v1154 = vsub.f32 %v1148, %v1153
        %v1155 = vmul.f32 %v1154, 1.442695
        %v1156 = vpow.pop %v1155
        %v1157 = vsel %vm1150, %v1156, 0.0
        %1158 = vadd.xlane.f32.xlu0 %v1157
        %v1159 = vpop.xlane.xlu0 %1158
        %v1160 = vrcp.pop %v1159
        %v1161 = vmul.f32 %v1156, %v1160
        %v1163 = vsel %vm1150, %v1161, 0
        %1165 = vmatpush.msra.mxu0 0.0
        %1166 = vmatpush.msra.mxu0 0.0
        %1167 = vmatpush.msra.mxu0 0.0
        %1168 = vmatpush.msra.mxu0 0.0
        %1169 = vmatpush.msra.mxu0 0.0
        %1170 = vmatpush.msra.mxu0 0.0
        %1171 = vmatpush.msra.mxu0 0.0
        %1172 = vmatpush.msra.mxu0 0.0
        %1173 = vmatpush.msra.mxu0 %v1100
        %1174 = vmatpush.msra.mxu0 %v1097
        %1175 = vmatpush.msra.mxu0 %v1094
        %1176 = vmatpush.msra.mxu0 %v1091
        %1177 = vmatpush.msra.mxu0 %v1088
        %1178 = vmatpush.msra.mxu0 %v1085
        %1179 = vmatpush.msra.mxu0 %v1082
        %1180 = vmatpush.msra.mxu0 %v1079
        %1181 = vmatmul.f32.gmra.mxu0 %v1163
        %v1182 = vpop.f32.mrf.mxu0
        %v1183 = vadd.f32 0.0, %v1182
        %1184 = vdwg.mxu0
        %1185 = vrot.lane.b32.xlu0 %v968, 124
        %v1186 = vpop.permute.xlu0 %1185
        %1187 = vrot.lane.b32.xlu0 %v1013, 124
        %v1188 = vpop.permute.xlu0 %1187
        %1189 = vrot.lane.b32.xlu0 %v1016, 124
        %v1190 = vpop.permute.xlu0 %1189
        %1191 = vrot.lane.b32.xlu0 %v1019, 124
        %v1192 = vpop.permute.xlu0 %1191
        %1193 = vrot.lane.b32.xlu0 %v1022, 124
        %v1194 = vpop.permute.xlu0 %1193
        %1195 = vrot.lane.b32.xlu0 %v1025, 124
        %v1196 = vpop.permute.xlu0 %1195
        %1197 = vrot.lane.b32.xlu0 %v1028, 124
        %v1198 = vpop.permute.xlu0 %1197
        %1199 = vrot.lane.b32.xlu0 %v1031, 124
        %v1200 = vpop.permute.xlu0 %1199
        %1201 = vrot.lane.b32.xlu0 %v1034, 124
        %v1202 = vpop.permute.xlu0 %1201
        %v1203 = vsel %vm1102, %v1186, 0
        %v1205 = vsel %vm1102, %v1188, 0
        %v1207 = vsel %vm1102, %v1190, 0
        %v1209 = vsel %vm1102, %v1192, 0
        %v1211 = vsel %vm1102, %v1194, 0
        %v1213 = vsel %vm1102, %v1196, 0
        %v1215 = vsel %vm1102, %v1198, 0
        %v1217 = vsel %vm1102, %v1200, 0
        %v1219 = vsel %vm1102, %v1202, 0
        %1221 = vmatpush.xpose.msra.mxu0 0.0
        %1222 = vmatpush.xpose.msra.mxu0 0.0
        %1223 = vmatpush.xpose.msra.mxu0 0.0
        %1224 = vmatpush.xpose.msra.mxu0 0.0
        %1225 = vmatpush.xpose.msra.mxu0 0.0
        %1226 = vmatpush.xpose.msra.mxu0 0.0
        %1227 = vmatpush.xpose.msra.mxu0 0.0
        %1228 = vmatpush.xpose.msra.mxu0 0.0
        %1229 = vmatpush.xpose.msra.mxu0 %v1219
        %1230 = vmatpush.xpose.msra.mxu0 %v1217
        %1231 = vmatpush.xpose.msra.mxu0 %v1215
        %1232 = vmatpush.xpose.msra.mxu0 %v1213
        %1233 = vmatpush.xpose.msra.mxu0 %v1211
        %1234 = vmatpush.xpose.msra.mxu0 %v1209
        %1235 = vmatpush.xpose.msra.mxu0 %v1207
        %1236 = vmatpush.xpose.msra.mxu0 %v1205
        %1237 = vmatmul.f32.gmra.mxu0 %v1203
        %v1238 = vpop.f32.mrf.mxu0
        %v1239 = vadd.f32 0.0, %v1238
        %1240 = vdwg.mxu0
        %v1241 = vsel %vm1150, %v1239, -inf
        %1242 = vmax.xlane.f32.xlu0 %v1241
        %v1243 = vpop.xlane.xlu0 %1242
        %v1244 = vsub.f32 %v1239, %v1243
        %v1245 = vmul.f32 %v1244, 1.442695
        %v1246 = vpow.pop %v1245
        %v1247 = vsel %vm1150, %v1246, 0.0
        %1248 = vadd.xlane.f32.xlu0 %v1247
        %v1249 = vpop.xlane.xlu0 %1248
        %v1250 = vrcp.pop %v1249
        %v1251 = vmul.f32 %v1246, %v1250
        %1260 = vrot.lane.b32.xlu0 %v1079, 124
        %v1261 = vpop.permute.xlu0 %1260
        %1262 = vrot.lane.b32.xlu0 %v1082, 124
        %v1263 = vpop.permute.xlu0 %1262
        %1264 = vrot.lane.b32.xlu0 %v1085, 124
        %v1265 = vpop.permute.xlu0 %1264
        %1266 = vrot.lane.b32.xlu0 %v1088, 124
        %v1267 = vpop.permute.xlu0 %1266
        %1268 = vrot.lane.b32.xlu0 %v1091, 124
        %v1269 = vpop.permute.xlu0 %1268
        %1270 = vrot.lane.b32.xlu0 %v1094, 124
        %v1271 = vpop.permute.xlu0 %1270
        %1272 = vrot.lane.b32.xlu0 %v1097, 124
        %v1273 = vpop.permute.xlu0 %1272
        %1274 = vrot.lane.b32.xlu0 %v1100, 124
        %v1275 = vpop.permute.xlu0 %1274
        %v1285 = vsel %vm1150, %v1251, 0
        %1287 = vmatpush.msra.mxu0 0.0
        %1288 = vmatpush.msra.mxu0 0.0
        %1289 = vmatpush.msra.mxu0 0.0
        %1290 = vmatpush.msra.mxu0 0.0
        %1291 = vmatpush.msra.mxu0 0.0
        %1292 = vmatpush.msra.mxu0 0.0
        %1293 = vmatpush.msra.mxu0 0.0
        %1294 = vmatpush.msra.mxu0 0.0
        %1295 = vmatpush.msra.mxu0 %v1275
        %1296 = vmatpush.msra.mxu0 %v1273
        %1297 = vmatpush.msra.mxu0 %v1271
        %1298 = vmatpush.msra.mxu0 %v1269
        %1299 = vmatpush.msra.mxu0 %v1267
        %1300 = vmatpush.msra.mxu0 %v1265
        %1301 = vmatpush.msra.mxu0 %v1263
        %1302 = vmatpush.msra.mxu0 %v1261
        %1303 = vmatmul.f32.gmra.mxu0 %v1285
        %v1304 = vpop.f32.mrf.mxu0
        %v1305 = vadd.f32 0.0, %v1304
        %1306 = vdwg.mxu0
        %1307 = vrot.lane.b32.xlu0 %v968, 120
        %v1308 = vpop.permute.xlu0 %1307
        %1309 = vrot.lane.b32.xlu0 %v1013, 120
        %v1310 = vpop.permute.xlu0 %1309
        %1311 = vrot.lane.b32.xlu0 %v1016, 120
        %v1312 = vpop.permute.xlu0 %1311
        %1313 = vrot.lane.b32.xlu0 %v1019, 120
        %v1314 = vpop.permute.xlu0 %1313
        %1315 = vrot.lane.b32.xlu0 %v1022, 120
        %v1316 = vpop.permute.xlu0 %1315
        %1317 = vrot.lane.b32.xlu0 %v1025, 120
        %v1318 = vpop.permute.xlu0 %1317
        %1319 = vrot.lane.b32.xlu0 %v1028, 120
        %v1320 = vpop.permute.xlu0 %1319
        %1321 = vrot.lane.b32.xlu0 %v1031, 120
        %v1322 = vpop.permute.xlu0 %1321
        %1323 = vrot.lane.b32.xlu0 %v1034, 120
        %v1324 = vpop.permute.xlu0 %1323
        %v1325 = vsel %vm1102, %v1308, 0
        %v1327 = vsel %vm1102, %v1310, 0
        %v1329 = vsel %vm1102, %v1312, 0
        %v1331 = vsel %vm1102, %v1314, 0
        %v1333 = vsel %vm1102, %v1316, 0
        %v1335 = vsel %vm1102, %v1318, 0
        %v1337 = vsel %vm1102, %v1320, 0
        %v1339 = vsel %vm1102, %v1322, 0
        %v1341 = vsel %vm1102, %v1324, 0
        %1343 = vmatpush.xpose.msra.mxu0 0.0
        %1344 = vmatpush.xpose.msra.mxu0 0.0
        %1345 = vmatpush.xpose.msra.mxu0 0.0
        %1346 = vmatpush.xpose.msra.mxu0 0.0
        %1347 = vmatpush.xpose.msra.mxu0 0.0
        %1348 = vmatpush.xpose.msra.mxu0 0.0
        %1349 = vmatpush.xpose.msra.mxu0 0.0
        %1350 = vmatpush.xpose.msra.mxu0 0.0
        %1351 = vmatpush.xpose.msra.mxu0 %v1341
        %1352 = vmatpush.xpose.msra.mxu0 %v1339
        %1353 = vmatpush.xpose.msra.mxu0 %v1337
        %1354 = vmatpush.xpose.msra.mxu0 %v1335
        %1355 = vmatpush.xpose.msra.mxu0 %v1333
        %1356 = vmatpush.xpose.msra.mxu0 %v1331
        %1357 = vmatpush.xpose.msra.mxu0 %v1329
        %1358 = vmatpush.xpose.msra.mxu0 %v1327
        %1359 = vmatmul.f32.gmra.mxu0 %v1325
        %v1360 = vpop.f32.mrf.mxu0
        %v1361 = vadd.f32 0.0, %v1360
        %1362 = vdwg.mxu0
        %v1363 = vsel %vm1150, %v1361, -inf
        %1364 = vmax.xlane.f32.xlu0 %v1363
        %v1365 = vpop.xlane.xlu0 %1364
        %v1366 = vsub.f32 %v1361, %v1365
        %v1367 = vmul.f32 %v1366, 1.442695
        %v1368 = vpow.pop %v1367
        %v1369 = vsel %vm1150, %v1368, 0.0
        %1370 = vadd.xlane.f32.xlu0 %v1369
        %v1371 = vpop.xlane.xlu0 %1370
        %v1372 = vrcp.pop %v1371
        %v1373 = vmul.f32 %v1368, %v1372
        %1374 = vrot.lane.b32.xlu0 %v1079, 120
        %v1375 = vpop.permute.xlu0 %1374
        %1376 = vrot.lane.b32.xlu0 %v1082, 120
        %v1377 = vpop.permute.xlu0 %1376
        %1378 = vrot.lane.b32.xlu0 %v1085, 120
        %v1379 = vpop.permute.xlu0 %1378
        %1380 = vrot.lane.b32.xlu0 %v1088, 120
        %v1381 = vpop.permute.xlu0 %1380
        %1382 = vrot.lane.b32.xlu0 %v1091, 120
        %v1383 = vpop.permute.xlu0 %1382
        %1384 = vrot.lane.b32.xlu0 %v1094, 120
        %v1385 = vpop.permute.xlu0 %1384
        %1386 = vrot.lane.b32.xlu0 %v1097, 120
        %v1387 = vpop.permute.xlu0 %1386
        %1388 = vrot.lane.b32.xlu0 %v1100, 120
        %v1389 = vpop.permute.xlu0 %1388
        %v1399 = vsel %vm1150, %v1373, 0
        %1401 = vmatpush.msra.mxu0 0.0
        %1402 = vmatpush.msra.mxu0 0.0
        %1403 = vmatpush.msra.mxu0 0.0
        %1404 = vmatpush.msra.mxu0 0.0
        %1405 = vmatpush.msra.mxu0 0.0
        %1406 = vmatpush.msra.mxu0 0.0
        %1407 = vmatpush.msra.mxu0 0.0
        %1408 = vmatpush.msra.mxu0 0.0
        %1409 = vmatpush.msra.mxu0 %v1389
        %1410 = vmatpush.msra.mxu0 %v1387
        %1411 = vmatpush.msra.mxu0 %v1385
        %1412 = vmatpush.msra.mxu0 %v1383
        %1413 = vmatpush.msra.mxu0 %v1381
        %1414 = vmatpush.msra.mxu0 %v1379
        %1415 = vmatpush.msra.mxu0 %v1377
        %1416 = vmatpush.msra.mxu0 %v1375
        %1417 = vmatmul.f32.gmra.mxu0 %v1399
        %v1418 = vpop.f32.mrf.mxu0
        %v1419 = vadd.f32 0.0, %v1418
        %1420 = vdwg.mxu0
        %1421 = vrot.lane.b32.xlu0 %v968, 116
        %v1422 = vpop.permute.xlu0 %1421
        %1423 = vrot.lane.b32.xlu0 %v1013, 116
        %v1424 = vpop.permute.xlu0 %1423
        %1425 = vrot.lane.b32.xlu0 %v1016, 116
        %v1426 = vpop.permute.xlu0 %1425
        %1427 = vrot.lane.b32.xlu0 %v1019, 116
        %v1428 = vpop.permute.xlu0 %1427
        %1429 = vrot.lane.b32.xlu0 %v1022, 116
        %v1430 = vpop.permute.xlu0 %1429
        %1431 = vrot.lane.b32.xlu0 %v1025, 116
        %v1432 = vpop.permute.xlu0 %1431
        %1433 = vrot.lane.b32.xlu0 %v1028, 116
        %v1434 = vpop.permute.xlu0 %1433
        %1435 = vrot.lane.b32.xlu0 %v1031, 116
        %v1436 = vpop.permute.xlu0 %1435
        %1437 = vrot.lane.b32.xlu0 %v1034, 116
        %v1438 = vpop.permute.xlu0 %1437
        %v1439 = vsel %vm1102, %v1422, 0
        %v1441 = vsel %vm1102, %v1424, 0
        %v1443 = vsel %vm1102, %v1426, 0
        %v1445 = vsel %vm1102, %v1428, 0
        %v1447 = vsel %vm1102, %v1430, 0
        %v1449 = vsel %vm1102, %v1432, 0
        %v1451 = vsel %vm1102, %v1434, 0
        %v1453 = vsel %vm1102, %v1436, 0
        %v1455 = vsel %vm1102, %v1438, 0
        %1457 = vmatpush.xpose.msra.mxu0 0.0
        %1458 = vmatpush.xpose.msra.mxu0 0.0
        %1459 = vmatpush.xpose.msra.mxu0 0.0
        %1460 = vmatpush.xpose.msra.mxu0 0.0
        %1461 = vmatpush.xpose.msra.mxu0 0.0
        %1462 = vmatpush.xpose.msra.mxu0 0.0
        %1463 = vmatpush.xpose.msra.mxu0 0.0
        %1464 = vmatpush.xpose.msra.mxu0 0.0
        %1465 = vmatpush.xpose.msra.mxu0 %v1455
        %1466 = vmatpush.xpose.msra.mxu0 %v1453
        %1467 = vmatpush.xpose.msra.mxu0 %v1451
        %1468 = vmatpush.xpose.msra.mxu0 %v1449
        %1469 = vmatpush.xpose.msra.mxu0 %v1447
        %1470 = vmatpush.xpose.msra.mxu0 %v1445
        %1471 = vmatpush.xpose.msra.mxu0 %v1443
        %1472 = vmatpush.xpose.msra.mxu0 %v1441
        %1473 = vmatmul.f32.gmra.mxu0 %v1439
        %v1474 = vpop.f32.mrf.mxu0
        %v1475 = vadd.f32 0.0, %v1474
        %1476 = vdwg.mxu0
        %v1477 = vsel %vm1150, %v1475, -inf
        %1478 = vmax.xlane.f32.xlu0 %v1477
        %v1479 = vpop.xlane.xlu0 %1478
        %v1480 = vsub.f32 %v1475, %v1479
        %v1481 = vmul.f32 %v1480, 1.442695
        %v1482 = vpow.pop %v1481
        %v1483 = vsel %vm1150, %v1482, 0.0
        %1484 = vadd.xlane.f32.xlu0 %v1483
        %v1485 = vpop.xlane.xlu0 %1484
        %v1486 = vrcp.pop %v1485
        %v1487 = vmul.f32 %v1482, %v1486
        %1488 = vrot.lane.b32.xlu0 %v1079, 116
        %v1489 = vpop.permute.xlu0 %1488
        %1490 = vrot.lane.b32.xlu0 %v1082, 116
        %v1491 = vpop.permute.xlu0 %1490
        %1492 = vrot.lane.b32.xlu0 %v1085, 116
        %v1493 = vpop.permute.xlu0 %1492
        %1494 = vrot.lane.b32.xlu0 %v1088, 116
        %v1495 = vpop.permute.xlu0 %1494
        %1496 = vrot.lane.b32.xlu0 %v1091, 116
        %v1497 = vpop.permute.xlu0 %1496
        %1498 = vrot.lane.b32.xlu0 %v1094, 116
        %v1499 = vpop.permute.xlu0 %1498
        %1500 = vrot.lane.b32.xlu0 %v1097, 116
        %v1501 = vpop.permute.xlu0 %1500
        %1502 = vrot.lane.b32.xlu0 %v1100, 116
        %v1503 = vpop.permute.xlu0 %1502
        %v1513 = vsel %vm1150, %v1487, 0
        %1515 = vmatpush.msra.mxu0 0.0
        %1516 = vmatpush.msra.mxu0 0.0
        %1517 = vmatpush.msra.mxu0 0.0
        %1518 = vmatpush.msra.mxu0 0.0
        %1519 = vmatpush.msra.mxu0 0.0
        %1520 = vmatpush.msra.mxu0 0.0
        %1521 = vmatpush.msra.mxu0 0.0
        %1522 = vmatpush.msra.mxu0 0.0
        %1523 = vmatpush.msra.mxu0 %v1503
        %1524 = vmatpush.msra.mxu0 %v1501
        %1525 = vmatpush.msra.mxu0 %v1499
        %1526 = vmatpush.msra.mxu0 %v1497
        %1527 = vmatpush.msra.mxu0 %v1495
        %1528 = vmatpush.msra.mxu0 %v1493
        %1529 = vmatpush.msra.mxu0 %v1491
        %1530 = vmatpush.msra.mxu0 %v1489
        %1531 = vmatmul.f32.gmra.mxu0 %v1513
        %v1532 = vpop.f32.mrf.mxu0
        %v1533 = vadd.f32 0.0, %v1532
        %1534 = vdwg.mxu0
        %1536 = vrot.lane.b32.xlu0 %v1305, 4
        %v1537 = vpop.permute.xlu0 %1536
        %1540 = vrot.lane.b32.xlu0 %v1419, 8
        %v1541 = vpop.permute.xlu0 %1540
        %1544 = vrot.lane.b32.xlu0 %v1533, 12
        %v1545 = vpop.permute.xlu0 %1544
        %v1547 = vsel %vm1102, %v1183, %v1537
        %v1548 = vsel %vm606, %v1547, %v1541
        %vm1549 = vcmask 97280
        %v1550 = vsel %vm1549, %v1548, %v1545
        %v1551 = vperm.slane %v329, 0
        %v1553 = vsel %vm876, %v1550, 0
        %1555 = vmatpush.msra.mxu0 0.0
        %1556 = vmatpush.msra.mxu0 0.0
        %1557 = vmatpush.msra.mxu0 0.0
        %1558 = vmatpush.msra.mxu0 0.0
        %1559 = vmatpush.msra.mxu0 0.0
        %1560 = vmatpush.msra.mxu0 0.0
        %1561 = vmatpush.msra.mxu0 0.0
        %1562 = vmatpush.msra.mxu0 0.0
        %1563 = vmatpush.msra.mxu0 0.0
        %1564 = vmatpush.msra.mxu0 0.0
        %1565 = vmatpush.msra.mxu0 0.0
        %1566 = vmatpush.msra.mxu0 0.0
        %1567 = vmatpush.msra.mxu0 0.0
        %1568 = vmatpush.msra.mxu0 0.0
        %1569 = vmatpush.msra.mxu0 %v328
        %1570 = vmatpush.msra.mxu0 %v327
        %1571 = vmatmul.f32.gmra.mxu0 %v1553
        %v1572 = vpop.f32.mrf.mxu0
        %v1573 = vadd.f32 %v1551, %v1572
        %1574 = vdwg.mxu0
        %v1575 = vadd.f32 %v936, %v1573
        %v1576 = vsel %vm540, %v1575, 0.0
        %1577 = vadd.xlane.f32.xlu0 %v1576
        %v1578 = vpop.xlane.xlu0 %1577
        %v1579 = vmul.f32 %v1578, %v913
        %v1580 = vsub.f32 %v1575, %v1579
        %v1581 = vmul.f32 %v1580, %v1580
        %v1582 = vsel %vm540, %v1581, 0.0
        %1583 = vadd.xlane.f32.xlu0 %v1582
        %v1584 = vpop.xlane.xlu0 %1583
        %v1585 = vmul.f32 %v1584, %v913
        %v1586 = vadd.f32 %v1585, 1e-05
        %v1587 = vrsqrt.pop %v1586
        %v1588 = vmul.f32 %v1587, %v1586
        %v1589 = vmul.f32 %v1588, %v1587
        %v1590 = vmul.f32 0.5, %v1589
        %v1591 = vsub.f32 1.5, %v1590
        %v1592 = vmul.f32 %v1587, %v1591
        %vm1593 = vweird.f32 %v1586
        %vm1594 = vweird.f32 %v1587
        %vm1595 = vmor %vm1593, %vm1594
        %v1596 = vsel %vm1595, %v1587, %v1592
        %v1597 = vmul.f32 %v1580, %v1596
        %v1598 = vperm.slane %v330, 0
        %v1599 = vmul.f32 %v1597, %v1598
        %v1600 = vperm.slane %v331, 0
        %v1601 = vadd.f32 %v1599, %v1600
        %v1602 = vperm.slane %v336, 0
        %v1604 = vsel %vm540, %v1601, 0
        %1606 = vmatpush.msra.mxu0 0.0
        %1607 = vmatpush.msra.mxu0 0.0
        %1608 = vmatpush.msra.mxu0 0.0
        %1609 = vmatpush.msra.mxu0 0.0
        %1610 = vmatpush.msra.mxu0 0.0
        %1611 = vmatpush.msra.mxu0 0.0
        %1612 = vmatpush.msra.mxu0 0.0
        %1613 = vmatpush.msra.mxu0 0.0
        %1614 = vmatpush.msra.mxu0 0.0
        %1615 = vmatpush.msra.mxu0 0.0
        %1616 = vmatpush.msra.mxu0 0.0
        %1617 = vmatpush.msra.mxu0 0.0
        %1618 = vmatpush.msra.mxu0 %v335
        %1619 = vmatpush.msra.mxu0 %v334
        %1620 = vmatpush.msra.mxu0 %v333
        %1621 = vmatpush.msra.mxu0 %v332
        %1622 = vmatmul.f32.gmra.mxu0 %v1604
        %v1623 = vpop.f32.mrf.mxu0
        %v1624 = vadd.f32 %v1602, %v1623
        %1625 = vdwg.mxu0
        %v1626 = vmax.f32 %v1624, 0.0
        %v1627 = vperm.slane %v345, 0
        %v1629 = vsel %vm1150, %v1626, 0
        %1631 = vmatpush.msra.mxu0 0.0
        %1632 = vmatpush.msra.mxu0 0.0
        %1633 = vmatpush.msra.mxu0 0.0
        %1634 = vmatpush.msra.mxu0 0.0
        %1635 = vmatpush.msra.mxu0 0.0
        %1636 = vmatpush.msra.mxu0 0.0
        %1637 = vmatpush.msra.mxu0 0.0
        %1638 = vmatpush.msra.mxu0 0.0
        %1639 = vmatpush.msra.mxu0 %v344
        %1640 = vmatpush.msra.mxu0 %v343
        %1641 = vmatpush.msra.mxu0 %v342
        %1642 = vmatpush.msra.mxu0 %v341
        %1643 = vmatpush.msra.mxu0 %v340
        %1644 = vmatpush.msra.mxu0 %v339
        %1645 = vmatpush.msra.mxu0 %v338
        %1646 = vmatpush.msra.mxu0 %v337
        %1647 = vmatmul.f32.gmra.mxu0 %v1629
        %v1648 = vpop.f32.mrf.mxu0
        %v1649 = vadd.f32 %v1627, %v1648
        %1650 = vdwg.mxu0
        %v1651 = vadd.f32 %v1601, %v1649
        %v1652 = vsel %vm540, %v1651, 0.0
        %1653 = vadd.xlane.f32.xlu0 %v1652
        %v1654 = vpop.xlane.xlu0 %1653
        %v1655 = vmul.f32 %v1654, %v913
        %v1656 = vsub.f32 %v1651, %v1655
        %v1657 = vmul.f32 %v1656, %v1656
        %v1658 = vsel %vm540, %v1657, 0.0
        %1659 = vadd.xlane.f32.xlu0 %v1658
        %v1660 = vpop.xlane.xlu0 %1659
        %v1661 = vmul.f32 %v1660, %v913
        %v1662 = vadd.f32 %v1661, 1e-05
        %v1663 = vrsqrt.pop %v1662
        %v1664 = vmul.f32 %v1663, %v1662
        %v1665 = vmul.f32 %v1664, %v1663
        %v1666 = vmul.f32 0.5, %v1665
        %v1667 = vsub.f32 1.5, %v1666
        %v1668 = vmul.f32 %v1663, %v1667
        %vm1669 = vweird.f32 %v1662
        %vm1670 = vweird.f32 %v1663
        %vm1671 = vmor %vm1669, %vm1670
        %v1672 = vsel %vm1671, %v1663, %v1668
        %v1673 = vmul.f32 %v1656, %v1672
        %v1674 = vperm.slane %v346, 0
        %v1675 = vmul.f32 %v1673, %v1674
        %v1676 = vperm.slane %v347, 0
        %v1677 = vadd.f32 %v1675, %v1676
        %v1678 = vadd.f32 %v1677, %v466
        %v1679 = vperm.slane %v354, 0
        %1680 = vmatpush.msra.mxu0 0.0
        %1681 = vmatpush.msra.mxu0 0.0
        %1682 = vmatpush.msra.mxu0 0.0
        %1683 = vmatpush.msra.mxu0 0.0
        %1684 = vmatpush.msra.mxu0 0.0
        %1685 = vmatpush.msra.mxu0 0.0
        %1686 = vmatpush.msra.mxu0 0.0
        %1687 = vmatpush.msra.mxu0 0.0
        %1688 = vmatpush.msra.mxu0 0.0
        %1689 = vmatpush.msra.mxu0 0.0
        %1690 = vmatpush.msra.mxu0 0.0
        %1691 = vmatpush.msra.mxu0 0.0
        %1692 = vmatpush.msra.mxu0 %v353
        %1693 = vmatpush.msra.mxu0 %v352
        %1694 = vmatpush.msra.mxu0 %v351
        %1695 = vmatpush.msra.mxu0 %v350
        %1696 = vmatmul.f32.gmra.mxu0 %v972
        %v1697 = vpop.f32.mrf.mxu0
        %v1698 = vadd.f32 %v1679, %v1697
        %1699 = vmatmul.f32.gmra.mxu0 %v975
        %v1700 = vpop.f32.mrf.mxu0
        %v1701 = vadd.f32 %v1679, %v1700
        %1702 = vmatmul.f32.gmra.mxu0 %v978
        %v1703 = vpop.f32.mrf.mxu0
        %v1704 = vadd.f32 %v1679, %v1703
        %1705 = vmatmul.f32.gmra.mxu0 %v981
        %v1706 = vpop.f32.mrf.mxu0
        %v1707 = vadd.f32 %v1679, %v1706
        %1708 = vmatmul.f32.gmra.mxu0 %v984
        %v1709 = vpop.f32.mrf.mxu0
        %v1710 = vadd.f32 %v1679, %v1709
        %1711 = vmatmul.f32.gmra.mxu0 %v987
        %v1712 = vpop.f32.mrf.mxu0
        %v1713 = vadd.f32 %v1679, %v1712
        %1714 = vmatmul.f32.gmra.mxu0 %v990
        %v1715 = vpop.f32.mrf.mxu0
        %v1716 = vadd.f32 %v1679, %v1715
        %1717 = vmatmul.f32.gmra.mxu0 %v993
        %v1718 = vpop.f32.mrf.mxu0
        %v1719 = vadd.f32 %v1679, %v1718
        %1720 = vdwg.mxu0
        %v1721 = vperm.slane %v359, 0
        %v1723 = vsel %vm540, %v1678, 0
        %1725 = vmatpush.msra.mxu0 0.0
        %1726 = vmatpush.msra.mxu0 0.0
        %1727 = vmatpush.msra.mxu0 0.0
        %1728 = vmatpush.msra.mxu0 0.0
        %1729 = vmatpush.msra.mxu0 0.0
        %1730 = vmatpush.msra.mxu0 0.0
        %1731 = vmatpush.msra.mxu0 0.0
        %1732 = vmatpush.msra.mxu0 0.0
        %1733 = vmatpush.msra.mxu0 0.0
        %1734 = vmatpush.msra.mxu0 0.0
        %1735 = vmatpush.msra.mxu0 0.0
        %1736 = vmatpush.msra.mxu0 0.0
        %1737 = vmatpush.msra.mxu0 %v358
        %1738 = vmatpush.msra.mxu0 %v357
        %1739 = vmatpush.msra.mxu0 %v356
        %1740 = vmatpush.msra.mxu0 %v355
        %1741 = vmatmul.f32.gmra.mxu0 %v1723
        %v1742 = vpop.f32.mrf.mxu0
        %v1743 = vadd.f32 %v1721, %v1742
        %1744 = vdwg.mxu0
        %v1745 = vperm.slane %v364, 0
        %v1747 = vsel %vm540, %v1677, 0
        %1749 = vmatpush.msra.mxu0 0.0
        %1750 = vmatpush.msra.mxu0 0.0
        %1751 = vmatpush.msra.mxu0 0.0
        %1752 = vmatpush.msra.mxu0 0.0
        %1753 = vmatpush.msra.mxu0 0.0
        %1754 = vmatpush.msra.mxu0 0.0
        %1755 = vmatpush.msra.mxu0 0.0
        %1756 = vmatpush.msra.mxu0 0.0
        %1757 = vmatpush.msra.mxu0 0.0
        %1758 = vmatpush.msra.mxu0 0.0
        %1759 = vmatpush.msra.mxu0 0.0
        %1760 = vmatpush.msra.mxu0 0.0
        %1761 = vmatpush.msra.mxu0 %v363
        %1762 = vmatpush.msra.mxu0 %v362
        %1763 = vmatpush.msra.mxu0 %v361
        %1764 = vmatpush.msra.mxu0 %v360
        %1765 = vmatmul.f32.gmra.mxu0 %v1747
        %v1766 = vpop.f32.mrf.mxu0
        %v1767 = vadd.f32 %v1745, %v1766
        %1768 = vdwg.mxu0
        %v1770 = vsel %vm1102, %v1698, 0
        %v1773 = vsel %vm1102, %v1701, 0
        %v1776 = vsel %vm1102, %v1704, 0
        %v1779 = vsel %vm1102, %v1707, 0
        %v1782 = vsel %vm1102, %v1710, 0
        %v1785 = vsel %vm1102, %v1713, 0
        %v1788 = vsel %vm1102, %v1716, 0
        %v1791 = vsel %vm1102, %v1719, 0
        %v1794 = vsel %vm1102, %v1743, 0
        %1796 = vmatpush.xpose.msra.mxu0 0.0
        %1797 = vmatpush.xpose.msra.mxu0 0.0
        %1798 = vmatpush.xpose.msra.mxu0 0.0
        %1799 = vmatpush.xpose.msra.mxu0 0.0
        %1800 = vmatpush.xpose.msra.mxu0 0.0
        %1801 = vmatpush.xpose.msra.mxu0 0.0
        %1802 = vmatpush.xpose.msra.mxu0 0.0
        %1803 = vmatpush.xpose.msra.mxu0 0.0
        %1804 = vmatpush.xpose.msra.mxu0 0.0
        %1805 = vmatpush.xpose.msra.mxu0 0.0
        %1806 = vmatpush.xpose.msra.mxu0 0.0
        %1807 = vmatpush.xpose.msra.mxu0 0.0
        %1808 = vmatpush.xpose.msra.mxu0 0.0
        %1809 = vmatpush.xpose.msra.mxu0 0.0
        %1810 = vmatpush.xpose.msra.mxu0 0.0
        %1811 = vmatpush.xpose.msra.mxu0 %v1794
        %1812 = vmatmul.f32.gmra.mxu0 %v1770
        %v1813 = vpop.f32.mrf.mxu0
        %v1814 = vadd.f32 0.0, %v1813
        %1815 = vmatmul.f32.gmra.mxu0 %v1773
        %v1816 = vpop.f32.mrf.mxu0
        %v1817 = vadd.f32 0.0, %v1816
        %1818 = vmatmul.f32.gmra.mxu0 %v1776
        %v1819 = vpop.f32.mrf.mxu0
        %v1820 = vadd.f32 0.0, %v1819
        %1821 = vmatmul.f32.gmra.mxu0 %v1779
        %v1822 = vpop.f32.mrf.mxu0
        %v1823 = vadd.f32 0.0, %v1822
        %1824 = vmatmul.f32.gmra.mxu0 %v1782
        %v1825 = vpop.f32.mrf.mxu0
        %v1826 = vadd.f32 0.0, %v1825
        %1827 = vmatmul.f32.gmra.mxu0 %v1785
        %v1828 = vpop.f32.mrf.mxu0
        %v1829 = vadd.f32 0.0, %v1828
        %1830 = vmatmul.f32.gmra.mxu0 %v1788
        %v1831 = vpop.f32.mrf.mxu0
        %v1832 = vadd.f32 0.0, %v1831
        %1833 = vmatmul.f32.gmra.mxu0 %v1791
        %v1834 = vpop.f32.mrf.mxu0
        %v1835 = vadd.f32 0.0, %v1834
        %1836 = vdwg.mxu0
        %v1837 = vsel %vm606, %v1814, -inf
        %1838 = vmax.xlane.f32.xlu0 %v1837
        %v1839 = vpop.xlane.xlu0 %1838
        %v1840 = vsel %vm606, %v1817, -inf
        %1841 = vmax.xlane.f32.xlu0 %v1840
        %v1842 = vpop.xlane.xlu0 %1841
        %v1843 = vsel %vm606, %v1820, -inf
        %1844 = vmax.xlane.f32.xlu0 %v1843
        %v1845 = vpop.xlane.xlu0 %1844
        %v1846 = vsel %vm606, %v1823, -inf
        %1847 = vmax.xlane.f32.xlu0 %v1846
        %v1848 = vpop.xlane.xlu0 %1847
        %v1849 = vsel %vm606, %v1826, -inf
        %1850 = vmax.xlane.f32.xlu0 %v1849
        %v1851 = vpop.xlane.xlu0 %1850
        %v1852 = vsel %vm606, %v1829, -inf
        %1853 = vmax.xlane.f32.xlu0 %v1852
        %v1854 = vpop.xlane.xlu0 %1853
        %v1855 = vsel %vm606, %v1832, -inf
        %1856 = vmax.xlane.f32.xlu0 %v1855
        %v1857 = vpop.xlane.xlu0 %1856
        %v1858 = vsel %vm606, %v1835, -inf
        %1859 = vmax.xlane.f32.xlu0 %v1858
        %v1860 = vpop.xlane.xlu0 %1859
        %v1861 = vsub.f32 %v1814, %v1839
        %v1862 = vsub.f32 %v1817, %v1842
        %v1863 = vsub.f32 %v1820, %v1845
        %v1864 = vsub.f32 %v1823, %v1848
        %v1865 = vsub.f32 %v1826, %v1851
        %v1866 = vsub.f32 %v1829, %v1854
        %v1867 = vsub.f32 %v1832, %v1857
        %v1868 = vsub.f32 %v1835, %v1860
        %v1869 = vmul.f32 %v1861, 1.442695
        %v1870 = vpow.pop %v1869
        %v1871 = vmul.f32 %v1862, 1.442695
        %v1872 = vpow.pop %v1871
        %v1873 = vmul.f32 %v1863, 1.442695
        %v1874 = vpow.pop %v1873
        %v1875 = vmul.f32 %v1864, 1.442695
        %v1876 = vpow.pop %v1875
        %v1877 = vmul.f32 %v1865, 1.442695
        %v1878 = vpow.pop %v1877
        %v1879 = vmul.f32 %v1866, 1.442695
        %v1880 = vpow.pop %v1879
        %v1881 = vmul.f32 %v1867, 1.442695
        %v1882 = vpow.pop %v1881
        %v1883 = vmul.f32 %v1868, 1.442695
        %v1884 = vpow.pop %v1883
        %v1885 = vsel %vm606, %v1870, 0.0
        %1886 = vadd.xlane.f32.xlu0 %v1885
        %v1887 = vpop.xlane.xlu0 %1886
        %v1888 = vsel %vm606, %v1872, 0.0
        %1889 = vadd.xlane.f32.xlu0 %v1888
        %v1890 = vpop.xlane.xlu0 %1889
        %v1891 = vsel %vm606, %v1874, 0.0
        %1892 = vadd.xlane.f32.xlu0 %v1891
        %v1893 = vpop.xlane.xlu0 %1892
        %v1894 = vsel %vm606, %v1876, 0.0
        %1895 = vadd.xlane.f32.xlu0 %v1894
        %v1896 = vpop.xlane.xlu0 %1895
        %v1897 = vsel %vm606, %v1878, 0.0
        %1898 = vadd.xlane.f32.xlu0 %v1897
        %v1899 = vpop.xlane.xlu0 %1898
        %v1900 = vsel %vm606, %v1880, 0.0
        %1901 = vadd.xlane.f32.xlu0 %v1900
        %v1902 = vpop.xlane.xlu0 %1901
        %v1903 = vsel %vm606, %v1882, 0.0
        %1904 = vadd.xlane.f32.xlu0 %v1903
        %v1905 = vpop.xlane.xlu0 %1904
        %v1906 = vsel %vm606, %v1884, 0.0
        %1907 = vadd.xlane.f32.xlu0 %v1906
        %v1908 = vpop.xlane.xlu0 %1907
        %v1909 = vrcp.pop %v1887
        %v1910 = vrcp.pop %v1890
        %v1911 = vrcp.pop %v1893
        %v1912 = vrcp.pop %v1896
        %v1913 = vrcp.pop %v1899
        %v1914 = vrcp.pop %v1902
        %v1915 = vrcp.pop %v1905
        %v1916 = vrcp.pop %v1908
        %v1917 = vmul.f32 %v1870, %v1909
        %v1918 = vmul.f32 %v1872, %v1910
        %v1919 = vmul.f32 %v1874, %v1911
        %v1920 = vmul.f32 %v1876, %v1912
        %v1921 = vmul.f32 %v1878, %v1913
        %v1922 = vmul.f32 %v1880, %v1914
        %v1923 = vmul.f32 %v1882, %v1915
        %v1924 = vmul.f32 %v1884, %v1916
        %v1926 = vsel %vm606, %v1917, 0
        %v1929 = vsel %vm606, %v1918, 0
        %v1932 = vsel %vm606, %v1919, 0
        %v1935 = vsel %vm606, %v1920, 0
        %v1938 = vsel %vm606, %v1921, 0
        %v1941 = vsel %vm606, %v1922, 0
        %v1944 = vsel %vm606, %v1923, 0
        %v1947 = vsel %vm606, %v1924, 0
        %1949 = vmatpush.msra.mxu0 0.0
        %1950 = vmatpush.msra.mxu0 0.0
        %1951 = vmatpush.msra.mxu0 0.0
        %1952 = vmatpush.msra.mxu0 0.0
        %1953 = vmatpush.msra.mxu0 0.0
        %1954 = vmatpush.msra.mxu0 0.0
        %1955 = vmatpush.msra.mxu0 0.0
        %1956 = vmatpush.msra.mxu0 0.0
        %1957 = vmatpush.msra.mxu0 0.0
        %1958 = vmatpush.msra.mxu0 0.0
        %1959 = vmatpush.msra.mxu0 0.0
        %1960 = vmatpush.msra.mxu0 0.0
        %1961 = vmatpush.msra.mxu0 0.0
        %1962 = vmatpush.msra.mxu0 0.0
        %1963 = vmatpush.msra.mxu0 0.0
        %1964 = vmatpush.msra.mxu0 %v1767
        %1965 = vmatmul.f32.gmra.mxu0 %v1926
        %v1966 = vpop.f32.mrf.mxu0
        %v1967 = vadd.f32 0.0, %v1966
        %1968 = vmatmul.f32.gmra.mxu0 %v1929
        %v1969 = vpop.f32.mrf.mxu0
        %v1970 = vadd.f32 0.0, %v1969
        %1971 = vmatmul.f32.gmra.mxu0 %v1932
        %v1972 = vpop.f32.mrf.mxu0
        %v1973 = vadd.f32 0.0, %v1972
        %1974 = vmatmul.f32.gmra.mxu0 %v1935
        %v1975 = vpop.f32.mrf.mxu0
        %v1976 = vadd.f32 0.0, %v1975
        %1977 = vmatmul.f32.gmra.mxu0 %v1938
        %v1978 = vpop.f32.mrf.mxu0
        %v1979 = vadd.f32 0.0, %v1978
        %1980 = vmatmul.f32.gmra.mxu0 %v1941
        %v1981 = vpop.f32.mrf.mxu0
        %v1982 = vadd.f32 0.0, %v1981
        %1983 = vmatmul.f32.gmra.mxu0 %v1944
        %v1984 = vpop.f32.mrf.mxu0
        %v1985 = vadd.f32 0.0, %v1984
        %1986 = vmatmul.f32.gmra.mxu0 %v1947
        %v1987 = vpop.f32.mrf.mxu0
        %v1988 = vadd.f32 0.0, %v1987
        %1989 = vdwg.mxu0
        %1990 = vrot.lane.b32.xlu0 %v1698, 124
        %v1991 = vpop.permute.xlu0 %1990
        %1992 = vrot.lane.b32.xlu0 %v1701, 124
        %v1993 = vpop.permute.xlu0 %1992
        %1994 = vrot.lane.b32.xlu0 %v1704, 124
        %v1995 = vpop.permute.xlu0 %1994
        %1996 = vrot.lane.b32.xlu0 %v1707, 124
        %v1997 = vpop.permute.xlu0 %1996
        %1998 = vrot.lane.b32.xlu0 %v1710, 124
        %v1999 = vpop.permute.xlu0 %1998
        %2000 = vrot.lane.b32.xlu0 %v1713, 124
        %v2001 = vpop.permute.xlu0 %2000
        %2002 = vrot.lane.b32.xlu0 %v1716, 124
        %v2003 = vpop.permute.xlu0 %2002
        %2004 = vrot.lane.b32.xlu0 %v1719, 124
        %v2005 = vpop.permute.xlu0 %2004
        %2006 = vrot.lane.b32.xlu0 %v1743, 124
        %v2007 = vpop.permute.xlu0 %2006
        %v2008 = vsel %vm1102, %v1991, 0
        %v2010 = vsel %vm1102, %v1993, 0
        %v2012 = vsel %vm1102, %v1995, 0
        %v2014 = vsel %vm1102, %v1997, 0
        %v2016 = vsel %vm1102, %v1999, 0
        %v2018 = vsel %vm1102, %v2001, 0
        %v2020 = vsel %vm1102, %v2003, 0
        %v2022 = vsel %vm1102, %v2005, 0
        %v2024 = vsel %vm1102, %v2007, 0
        %2026 = vmatpush.xpose.msra.mxu0 0.0
        %2027 = vmatpush.xpose.msra.mxu0 0.0
        %2028 = vmatpush.xpose.msra.mxu0 0.0
        %2029 = vmatpush.xpose.msra.mxu0 0.0
        %2030 = vmatpush.xpose.msra.mxu0 0.0
        %2031 = vmatpush.xpose.msra.mxu0 0.0
        %2032 = vmatpush.xpose.msra.mxu0 0.0
        %2033 = vmatpush.xpose.msra.mxu0 0.0
        %2034 = vmatpush.xpose.msra.mxu0 0.0
        %2035 = vmatpush.xpose.msra.mxu0 0.0
        %2036 = vmatpush.xpose.msra.mxu0 0.0
        %2037 = vmatpush.xpose.msra.mxu0 0.0
        %2038 = vmatpush.xpose.msra.mxu0 0.0
        %2039 = vmatpush.xpose.msra.mxu0 0.0
        %2040 = vmatpush.xpose.msra.mxu0 0.0
        %2041 = vmatpush.xpose.msra.mxu0 %v2024
        %2042 = vmatmul.f32.gmra.mxu0 %v2008
        %v2043 = vpop.f32.mrf.mxu0
        %v2044 = vadd.f32 0.0, %v2043
        %2045 = vmatmul.f32.gmra.mxu0 %v2010
        %v2046 = vpop.f32.mrf.mxu0
        %v2047 = vadd.f32 0.0, %v2046
        %2048 = vmatmul.f32.gmra.mxu0 %v2012
        %v2049 = vpop.f32.mrf.mxu0
        %v2050 = vadd.f32 0.0, %v2049
        %2051 = vmatmul.f32.gmra.mxu0 %v2014
        %v2052 = vpop.f32.mrf.mxu0
        %v2053 = vadd.f32 0.0, %v2052
        %2054 = vmatmul.f32.gmra.mxu0 %v2016
        %v2055 = vpop.f32.mrf.mxu0
        %v2056 = vadd.f32 0.0, %v2055
        %2057 = vmatmul.f32.gmra.mxu0 %v2018
        %v2058 = vpop.f32.mrf.mxu0
        %v2059 = vadd.f32 0.0, %v2058
        %2060 = vmatmul.f32.gmra.mxu0 %v2020
        %v2061 = vpop.f32.mrf.mxu0
        %v2062 = vadd.f32 0.0, %v2061
        %2063 = vmatmul.f32.gmra.mxu0 %v2022
        %v2064 = vpop.f32.mrf.mxu0
        %v2065 = vadd.f32 0.0, %v2064
        %2066 = vdwg.mxu0
        %v2067 = vsel %vm606, %v2044, -inf
        %2068 = vmax.xlane.f32.xlu0 %v2067
        %v2069 = vpop.xlane.xlu0 %2068
        %v2070 = vsel %vm606, %v2047, -inf
        %2071 = vmax.xlane.f32.xlu0 %v2070
        %v2072 = vpop.xlane.xlu0 %2071
        %v2073 = vsel %vm606, %v2050, -inf
        %2074 = vmax.xlane.f32.xlu0 %v2073
        %v2075 = vpop.xlane.xlu0 %2074
        %v2076 = vsel %vm606, %v2053, -inf
        %2077 = vmax.xlane.f32.xlu0 %v2076
        %v2078 = vpop.xlane.xlu0 %2077
        %v2079 = vsel %vm606, %v2056, -inf
        %2080 = vmax.xlane.f32.xlu0 %v2079
        %v2081 = vpop.xlane.xlu0 %2080
        %v2082 = vsel %vm606, %v2059, -inf
        %2083 = vmax.xlane.f32.xlu0 %v2082
        %v2084 = vpop.xlane.xlu0 %2083
        %v2085 = vsel %vm606, %v2062, -inf
        %2086 = vmax.xlane.f32.xlu0 %v2085
        %v2087 = vpop.xlane.xlu0 %2086
        %v2088 = vsel %vm606, %v2065, -inf
        %2089 = vmax.xlane.f32.xlu0 %v2088
        %v2090 = vpop.xlane.xlu0 %2089
        %v2091 = vsub.f32 %v2044, %v2069
        %v2092 = vsub.f32 %v2047, %v2072
        %v2093 = vsub.f32 %v2050, %v2075
        %v2094 = vsub.f32 %v2053, %v2078
        %v2095 = vsub.f32 %v2056, %v2081
        %v2096 = vsub.f32 %v2059, %v2084
        %v2097 = vsub.f32 %v2062, %v2087
        %v2098 = vsub.f32 %v2065, %v2090
        %v2099 = vmul.f32 %v2091, 1.442695
        %v2100 = vpow.pop %v2099
        %v2101 = vmul.f32 %v2092, 1.442695
        %v2102 = vpow.pop %v2101
        %v2103 = vmul.f32 %v2093, 1.442695
        %v2104 = vpow.pop %v2103
        %v2105 = vmul.f32 %v2094, 1.442695
        %v2106 = vpow.pop %v2105
        %v2107 = vmul.f32 %v2095, 1.442695
        %v2108 = vpow.pop %v2107
        %v2109 = vmul.f32 %v2096, 1.442695
        %v2110 = vpow.pop %v2109
        %v2111 = vmul.f32 %v2097, 1.442695
        %v2112 = vpow.pop %v2111
        %v2113 = vmul.f32 %v2098, 1.442695
        %v2114 = vpow.pop %v2113
        %v2115 = vsel %vm606, %v2100, 0.0
        %2116 = vadd.xlane.f32.xlu0 %v2115
        %v2117 = vpop.xlane.xlu0 %2116
        %v2118 = vsel %vm606, %v2102, 0.0
        %2119 = vadd.xlane.f32.xlu0 %v2118
        %v2120 = vpop.xlane.xlu0 %2119
        %v2121 = vsel %vm606, %v2104, 0.0
        %2122 = vadd.xlane.f32.xlu0 %v2121
        %v2123 = vpop.xlane.xlu0 %2122
        %v2124 = vsel %vm606, %v2106, 0.0
        %2125 = vadd.xlane.f32.xlu0 %v2124
        %v2126 = vpop.xlane.xlu0 %2125
        %v2127 = vsel %vm606, %v2108, 0.0
        %2128 = vadd.xlane.f32.xlu0 %v2127
        %v2129 = vpop.xlane.xlu0 %2128
        %v2130 = vsel %vm606, %v2110, 0.0
        %2131 = vadd.xlane.f32.xlu0 %v2130
        %v2132 = vpop.xlane.xlu0 %2131
        %v2133 = vsel %vm606, %v2112, 0.0
        %2134 = vadd.xlane.f32.xlu0 %v2133
        %v2135 = vpop.xlane.xlu0 %2134
        %v2136 = vsel %vm606, %v2114, 0.0
        %2137 = vadd.xlane.f32.xlu0 %v2136
        %v2138 = vpop.xlane.xlu0 %2137
        %v2139 = vrcp.pop %v2117
        %v2140 = vrcp.pop %v2120
        %v2141 = vrcp.pop %v2123
        %v2142 = vrcp.pop %v2126
        %v2143 = vrcp.pop %v2129
        %v2144 = vrcp.pop %v2132
        %v2145 = vrcp.pop %v2135
        %v2146 = vrcp.pop %v2138
        %v2147 = vmul.f32 %v2100, %v2139
        %v2148 = vmul.f32 %v2102, %v2140
        %v2149 = vmul.f32 %v2104, %v2141
        %v2150 = vmul.f32 %v2106, %v2142
        %v2151 = vmul.f32 %v2108, %v2143
        %v2152 = vmul.f32 %v2110, %v2144
        %v2153 = vmul.f32 %v2112, %v2145
        %v2154 = vmul.f32 %v2114, %v2146
        %2156 = vrot.lane.b32.xlu0 %v1767, 124
        %v2157 = vpop.permute.xlu0 %2156
        %v2160 = vsel %vm606, %v2147, 0
        %v2163 = vsel %vm606, %v2148, 0
        %v2166 = vsel %vm606, %v2149, 0
        %v2169 = vsel %vm606, %v2150, 0
        %v2172 = vsel %vm606, %v2151, 0
        %v2175 = vsel %vm606, %v2152, 0
        %v2178 = vsel %vm606, %v2153, 0
        %v2181 = vsel %vm606, %v2154, 0
        %2183 = vmatpush.msra.mxu0 0.0
        %2184 = vmatpush.msra.mxu0 0.0
        %2185 = vmatpush.msra.mxu0 0.0
        %2186 = vmatpush.msra.mxu0 0.0
        %2187 = vmatpush.msra.mxu0 0.0
        %2188 = vmatpush.msra.mxu0 0.0
        %2189 = vmatpush.msra.mxu0 0.0
        %2190 = vmatpush.msra.mxu0 0.0
        %2191 = vmatpush.msra.mxu0 0.0
        %2192 = vmatpush.msra.mxu0 0.0
        %2193 = vmatpush.msra.mxu0 0.0
        %2194 = vmatpush.msra.mxu0 0.0
        %2195 = vmatpush.msra.mxu0 0.0
        %2196 = vmatpush.msra.mxu0 0.0
        %2197 = vmatpush.msra.mxu0 0.0
        %2198 = vmatpush.msra.mxu0 %v2157
        %2199 = vmatmul.f32.gmra.mxu0 %v2160
        %v2200 = vpop.f32.mrf.mxu0
        %v2201 = vadd.f32 0.0, %v2200
        %2202 = vmatmul.f32.gmra.mxu0 %v2163
        %v2203 = vpop.f32.mrf.mxu0
        %v2204 = vadd.f32 0.0, %v2203
        %2205 = vmatmul.f32.gmra.mxu0 %v2166
        %v2206 = vpop.f32.mrf.mxu0
        %v2207 = vadd.f32 0.0, %v2206
        %2208 = vmatmul.f32.gmra.mxu0 %v2169
        %v2209 = vpop.f32.mrf.mxu0
        %v2210 = vadd.f32 0.0, %v2209
        %2211 = vmatmul.f32.gmra.mxu0 %v2172
        %v2212 = vpop.f32.mrf.mxu0
        %v2213 = vadd.f32 0.0, %v2212
        %2214 = vmatmul.f32.gmra.mxu0 %v2175
        %v2215 = vpop.f32.mrf.mxu0
        %v2216 = vadd.f32 0.0, %v2215
        %2217 = vmatmul.f32.gmra.mxu0 %v2178
        %v2218 = vpop.f32.mrf.mxu0
        %v2219 = vadd.f32 0.0, %v2218
        %2220 = vmatmul.f32.gmra.mxu0 %v2181
        %v2221 = vpop.f32.mrf.mxu0
        %v2222 = vadd.f32 0.0, %v2221
        %2223 = vdwg.mxu0
        %2224 = vrot.lane.b32.xlu0 %v1698, 120
        %v2225 = vpop.permute.xlu0 %2224
        %2226 = vrot.lane.b32.xlu0 %v1701, 120
        %v2227 = vpop.permute.xlu0 %2226
        %2228 = vrot.lane.b32.xlu0 %v1704, 120
        %v2229 = vpop.permute.xlu0 %2228
        %2230 = vrot.lane.b32.xlu0 %v1707, 120
        %v2231 = vpop.permute.xlu0 %2230
        %2232 = vrot.lane.b32.xlu0 %v1710, 120
        %v2233 = vpop.permute.xlu0 %2232
        %2234 = vrot.lane.b32.xlu0 %v1713, 120
        %v2235 = vpop.permute.xlu0 %2234
        %2236 = vrot.lane.b32.xlu0 %v1716, 120
        %v2237 = vpop.permute.xlu0 %2236
        %2238 = vrot.lane.b32.xlu0 %v1719, 120
        %v2239 = vpop.permute.xlu0 %2238
        %2240 = vrot.lane.b32.xlu0 %v1743, 120
        %v2241 = vpop.permute.xlu0 %2240
        %v2242 = vsel %vm1102, %v2225, 0
        %v2244 = vsel %vm1102, %v2227, 0
        %v2246 = vsel %vm1102, %v2229, 0
        %v2248 = vsel %vm1102, %v2231, 0
        %v2250 = vsel %vm1102, %v2233, 0
        %v2252 = vsel %vm1102, %v2235, 0
        %v2254 = vsel %vm1102, %v2237, 0
        %v2256 = vsel %vm1102, %v2239, 0
        %v2258 = vsel %vm1102, %v2241, 0
        %2260 = vmatpush.xpose.msra.mxu0 0.0
        %2261 = vmatpush.xpose.msra.mxu0 0.0
        %2262 = vmatpush.xpose.msra.mxu0 0.0
        %2263 = vmatpush.xpose.msra.mxu0 0.0
        %2264 = vmatpush.xpose.msra.mxu0 0.0
        %2265 = vmatpush.xpose.msra.mxu0 0.0
        %2266 = vmatpush.xpose.msra.mxu0 0.0
        %2267 = vmatpush.xpose.msra.mxu0 0.0
        %2268 = vmatpush.xpose.msra.mxu0 0.0
        %2269 = vmatpush.xpose.msra.mxu0 0.0
        %2270 = vmatpush.xpose.msra.mxu0 0.0
        %2271 = vmatpush.xpose.msra.mxu0 0.0
        %2272 = vmatpush.xpose.msra.mxu0 0.0
        %2273 = vmatpush.xpose.msra.mxu0 0.0
        %2274 = vmatpush.xpose.msra.mxu0 0.0
        %2275 = vmatpush.xpose.msra.mxu0 %v2258
        %2276 = vmatmul.f32.gmra.mxu0 %v2242
        %v2277 = vpop.f32.mrf.mxu0
        %v2278 = vadd.f32 0.0, %v2277
        %2279 = vmatmul.f32.gmra.mxu0 %v2244
        %v2280 = vpop.f32.mrf.mxu0
        %v2281 = vadd.f32 0.0, %v2280
        %2282 = vmatmul.f32.gmra.mxu0 %v2246
        %v2283 = vpop.f32.mrf.mxu0
        %v2284 = vadd.f32 0.0, %v2283
        %2285 = vmatmul.f32.gmra.mxu0 %v2248
        %v2286 = vpop.f32.mrf.mxu0
        %v2287 = vadd.f32 0.0, %v2286
        %2288 = vmatmul.f32.gmra.mxu0 %v2250
        %v2289 = vpop.f32.mrf.mxu0
        %v2290 = vadd.f32 0.0, %v2289
        %2291 = vmatmul.f32.gmra.mxu0 %v2252
        %v2292 = vpop.f32.mrf.mxu0
        %v2293 = vadd.f32 0.0, %v2292
        %2294 = vmatmul.f32.gmra.mxu0 %v2254
        %v2295 = vpop.f32.mrf.mxu0
        %v2296 = vadd.f32 0.0, %v2295
        %2297 = vmatmul.f32.gmra.mxu0 %v2256
        %v2298 = vpop.f32.mrf.mxu0
        %v2299 = vadd.f32 0.0, %v2298
        %2300 = vdwg.mxu0
        %v2301 = vsel %vm606, %v2278, -inf
        %2302 = vmax.xlane.f32.xlu0 %v2301
        %v2303 = vpop.xlane.xlu0 %2302
        %v2304 = vsel %vm606, %v2281, -inf
        %2305 = vmax.xlane.f32.xlu0 %v2304
        %v2306 = vpop.xlane.xlu0 %2305
        %v2307 = vsel %vm606, %v2284, -inf
        %2308 = vmax.xlane.f32.xlu0 %v2307
        %v2309 = vpop.xlane.xlu0 %2308
        %v2310 = vsel %vm606, %v2287, -inf
        %2311 = vmax.xlane.f32.xlu0 %v2310
        %v2312 = vpop.xlane.xlu0 %2311
        %v2313 = vsel %vm606, %v2290, -inf
        %2314 = vmax.xlane.f32.xlu0 %v2313
        %v2315 = vpop.xlane.xlu0 %2314
        %v2316 = vsel %vm606, %v2293, -inf
        %2317 = vmax.xlane.f32.xlu0 %v2316
        %v2318 = vpop.xlane.xlu0 %2317
        %v2319 = vsel %vm606, %v2296, -inf
        %2320 = vmax.xlane.f32.xlu0 %v2319
        %v2321 = vpop.xlane.xlu0 %2320
        %v2322 = vsel %vm606, %v2299, -inf
        %2323 = vmax.xlane.f32.xlu0 %v2322
        %v2324 = vpop.xlane.xlu0 %2323
        %v2325 = vsub.f32 %v2278, %v2303
        %v2326 = vsub.f32 %v2281, %v2306
        %v2327 = vsub.f32 %v2284, %v2309
        %v2328 = vsub.f32 %v2287, %v2312
        %v2329 = vsub.f32 %v2290, %v2315
        %v2330 = vsub.f32 %v2293, %v2318
        %v2331 = vsub.f32 %v2296, %v2321
        %v2332 = vsub.f32 %v2299, %v2324
        %v2333 = vmul.f32 %v2325, 1.442695
        %v2334 = vpow.pop %v2333
        %v2335 = vmul.f32 %v2326, 1.442695
        %v2336 = vpow.pop %v2335
        %v2337 = vmul.f32 %v2327, 1.442695
        %v2338 = vpow.pop %v2337
        %v2339 = vmul.f32 %v2328, 1.442695
        %v2340 = vpow.pop %v2339
        %v2341 = vmul.f32 %v2329, 1.442695
        %v2342 = vpow.pop %v2341
        %v2343 = vmul.f32 %v2330, 1.442695
        %v2344 = vpow.pop %v2343
        %v2345 = vmul.f32 %v2331, 1.442695
        %v2346 = vpow.pop %v2345
        %v2347 = vmul.f32 %v2332, 1.442695
        %v2348 = vpow.pop %v2347
        %v2349 = vsel %vm606, %v2334, 0.0
        %2350 = vadd.xlane.f32.xlu0 %v2349
        %v2351 = vpop.xlane.xlu0 %2350
        %v2352 = vsel %vm606, %v2336, 0.0
        %2353 = vadd.xlane.f32.xlu0 %v2352
        %v2354 = vpop.xlane.xlu0 %2353
        %v2355 = vsel %vm606, %v2338, 0.0
        %2356 = vadd.xlane.f32.xlu0 %v2355
        %v2357 = vpop.xlane.xlu0 %2356
        %v2358 = vsel %vm606, %v2340, 0.0
        %2359 = vadd.xlane.f32.xlu0 %v2358
        %v2360 = vpop.xlane.xlu0 %2359
        %v2361 = vsel %vm606, %v2342, 0.0
        %2362 = vadd.xlane.f32.xlu0 %v2361
        %v2363 = vpop.xlane.xlu0 %2362
        %v2364 = vsel %vm606, %v2344, 0.0
        %2365 = vadd.xlane.f32.xlu0 %v2364
        %v2366 = vpop.xlane.xlu0 %2365
        %v2367 = vsel %vm606, %v2346, 0.0
        %2368 = vadd.xlane.f32.xlu0 %v2367
        %v2369 = vpop.xlane.xlu0 %2368
        %v2370 = vsel %vm606, %v2348, 0.0
        %2371 = vadd.xlane.f32.xlu0 %v2370
        %v2372 = vpop.xlane.xlu0 %2371
        %v2373 = vrcp.pop %v2351
        %v2374 = vrcp.pop %v2354
        %v2375 = vrcp.pop %v2357
        %v2376 = vrcp.pop %v2360
        %v2377 = vrcp.pop %v2363
        %v2378 = vrcp.pop %v2366
        %v2379 = vrcp.pop %v2369
        %v2380 = vrcp.pop %v2372
        %v2381 = vmul.f32 %v2334, %v2373
        %v2382 = vmul.f32 %v2336, %v2374
        %v2383 = vmul.f32 %v2338, %v2375
        %v2384 = vmul.f32 %v2340, %v2376
        %v2385 = vmul.f32 %v2342, %v2377
        %v2386 = vmul.f32 %v2344, %v2378
        %v2387 = vmul.f32 %v2346, %v2379
        %v2388 = vmul.f32 %v2348, %v2380
        %2389 = vrot.lane.b32.xlu0 %v1767, 120
        %v2390 = vpop.permute.xlu0 %2389
        %v2393 = vsel %vm606, %v2381, 0
        %v2396 = vsel %vm606, %v2382, 0
        %v2399 = vsel %vm606, %v2383, 0
        %v2402 = vsel %vm606, %v2384, 0
        %v2405 = vsel %vm606, %v2385, 0
        %v2408 = vsel %vm606, %v2386, 0
        %v2411 = vsel %vm606, %v2387, 0
        %v2414 = vsel %vm606, %v2388, 0
        %2416 = vmatpush.msra.mxu0 0.0
        %2417 = vmatpush.msra.mxu0 0.0
        %2418 = vmatpush.msra.mxu0 0.0
        %2419 = vmatpush.msra.mxu0 0.0
        %2420 = vmatpush.msra.mxu0 0.0
        %2421 = vmatpush.msra.mxu0 0.0
        %2422 = vmatpush.msra.mxu0 0.0
        %2423 = vmatpush.msra.mxu0 0.0
        %2424 = vmatpush.msra.mxu0 0.0
        %2425 = vmatpush.msra.mxu0 0.0
        %2426 = vmatpush.msra.mxu0 0.0
        %2427 = vmatpush.msra.mxu0 0.0
        %2428 = vmatpush.msra.mxu0 0.0
        %2429 = vmatpush.msra.mxu0 0.0
        %2430 = vmatpush.msra.mxu0 0.0
        %2431 = vmatpush.msra.mxu0 %v2390
        %2432 = vmatmul.f32.gmra.mxu0 %v2393
        %v2433 = vpop.f32.mrf.mxu0
        %v2434 = vadd.f32 0.0, %v2433
        %2435 = vmatmul.f32.gmra.mxu0 %v2396
        %v2436 = vpop.f32.mrf.mxu0
        %v2437 = vadd.f32 0.0, %v2436
        %2438 = vmatmul.f32.gmra.mxu0 %v2399
        %v2439 = vpop.f32.mrf.mxu0
        %v2440 = vadd.f32 0.0, %v2439
        %2441 = vmatmul.f32.gmra.mxu0 %v2402
        %v2442 = vpop.f32.mrf.mxu0
        %v2443 = vadd.f32 0.0, %v2442
        %2444 = vmatmul.f32.gmra.mxu0 %v2405
        %v2445 = vpop.f32.mrf.mxu0
        %v2446 = vadd.f32 0.0, %v2445
        %2447 = vmatmul.f32.gmra.mxu0 %v2408
        %v2448 = vpop.f32.mrf.mxu0
        %v2449 = vadd.f32 0.0, %v2448
        %2450 = vmatmul.f32.gmra.mxu0 %v2411
        %v2451 = vpop.f32.mrf.mxu0
        %v2452 = vadd.f32 0.0, %v2451
        %2453 = vmatmul.f32.gmra.mxu0 %v2414
        %v2454 = vpop.f32.mrf.mxu0
        %v2455 = vadd.f32 0.0, %v2454
        %2456 = vdwg.mxu0
        %2457 = vrot.lane.b32.xlu0 %v1698, 116
        %v2458 = vpop.permute.xlu0 %2457
        %2459 = vrot.lane.b32.xlu0 %v1701, 116
        %v2460 = vpop.permute.xlu0 %2459
        %2461 = vrot.lane.b32.xlu0 %v1704, 116
        %v2462 = vpop.permute.xlu0 %2461
        %2463 = vrot.lane.b32.xlu0 %v1707, 116
        %v2464 = vpop.permute.xlu0 %2463
        %2465 = vrot.lane.b32.xlu0 %v1710, 116
        %v2466 = vpop.permute.xlu0 %2465
        %2467 = vrot.lane.b32.xlu0 %v1713, 116
        %v2468 = vpop.permute.xlu0 %2467
        %2469 = vrot.lane.b32.xlu0 %v1716, 116
        %v2470 = vpop.permute.xlu0 %2469
        %2471 = vrot.lane.b32.xlu0 %v1719, 116
        %v2472 = vpop.permute.xlu0 %2471
        %2473 = vrot.lane.b32.xlu0 %v1743, 116
        %v2474 = vpop.permute.xlu0 %2473
        %v2475 = vsel %vm1102, %v2458, 0
        %v2477 = vsel %vm1102, %v2460, 0
        %v2479 = vsel %vm1102, %v2462, 0
        %v2481 = vsel %vm1102, %v2464, 0
        %v2483 = vsel %vm1102, %v2466, 0
        %v2485 = vsel %vm1102, %v2468, 0
        %v2487 = vsel %vm1102, %v2470, 0
        %v2489 = vsel %vm1102, %v2472, 0
        %v2491 = vsel %vm1102, %v2474, 0
        %2493 = vmatpush.xpose.msra.mxu0 0.0
        %2494 = vmatpush.xpose.msra.mxu0 0.0
        %2495 = vmatpush.xpose.msra.mxu0 0.0
        %2496 = vmatpush.xpose.msra.mxu0 0.0
        %2497 = vmatpush.xpose.msra.mxu0 0.0
        %2498 = vmatpush.xpose.msra.mxu0 0.0
        %2499 = vmatpush.xpose.msra.mxu0 0.0
        %2500 = vmatpush.xpose.msra.mxu0 0.0
        %2501 = vmatpush.xpose.msra.mxu0 0.0
        %2502 = vmatpush.xpose.msra.mxu0 0.0
        %2503 = vmatpush.xpose.msra.mxu0 0.0
        %2504 = vmatpush.xpose.msra.mxu0 0.0
        %2505 = vmatpush.xpose.msra.mxu0 0.0
        %2506 = vmatpush.xpose.msra.mxu0 0.0
        %2507 = vmatpush.xpose.msra.mxu0 0.0
        %2508 = vmatpush.xpose.msra.mxu0 %v2491
        %2509 = vmatmul.f32.gmra.mxu0 %v2475
        %v2510 = vpop.f32.mrf.mxu0
        %v2511 = vadd.f32 0.0, %v2510
        %2512 = vmatmul.f32.gmra.mxu0 %v2477
        %v2513 = vpop.f32.mrf.mxu0
        %v2514 = vadd.f32 0.0, %v2513
        %2515 = vmatmul.f32.gmra.mxu0 %v2479
        %v2516 = vpop.f32.mrf.mxu0
        %v2517 = vadd.f32 0.0, %v2516
        %2518 = vmatmul.f32.gmra.mxu0 %v2481
        %v2519 = vpop.f32.mrf.mxu0
        %v2520 = vadd.f32 0.0, %v2519
        %2521 = vmatmul.f32.gmra.mxu0 %v2483
        %v2522 = vpop.f32.mrf.mxu0
        %v2523 = vadd.f32 0.0, %v2522
        %2524 = vmatmul.f32.gmra.mxu0 %v2485
        %v2525 = vpop.f32.mrf.mxu0
        %v2526 = vadd.f32 0.0, %v2525
        %2527 = vmatmul.f32.gmra.mxu0 %v2487
        %v2528 = vpop.f32.mrf.mxu0
        %v2529 = vadd.f32 0.0, %v2528
        %2530 = vmatmul.f32.gmra.mxu0 %v2489
        %v2531 = vpop.f32.mrf.mxu0
        %v2532 = vadd.f32 0.0, %v2531
        %2533 = vdwg.mxu0
        %v2534 = vsel %vm606, %v2511, -inf
        %2535 = vmax.xlane.f32.xlu0 %v2534
        %v2536 = vpop.xlane.xlu0 %2535
        %v2537 = vsel %vm606, %v2514, -inf
        %2538 = vmax.xlane.f32.xlu0 %v2537
        %v2539 = vpop.xlane.xlu0 %2538
        %v2540 = vsel %vm606, %v2517, -inf
        %2541 = vmax.xlane.f32.xlu0 %v2540
        %v2542 = vpop.xlane.xlu0 %2541
        %v2543 = vsel %vm606, %v2520, -inf
        %2544 = vmax.xlane.f32.xlu0 %v2543
        %v2545 = vpop.xlane.xlu0 %2544
        %v2546 = vsel %vm606, %v2523, -inf
        %2547 = vmax.xlane.f32.xlu0 %v2546
        %v2548 = vpop.xlane.xlu0 %2547
        %v2549 = vsel %vm606, %v2526, -inf
        %2550 = vmax.xlane.f32.xlu0 %v2549
        %v2551 = vpop.xlane.xlu0 %2550
        %v2552 = vsel %vm606, %v2529, -inf
        %2553 = vmax.xlane.f32.xlu0 %v2552
        %v2554 = vpop.xlane.xlu0 %2553
        %v2555 = vsel %vm606, %v2532, -inf
        %2556 = vmax.xlane.f32.xlu0 %v2555
        %v2557 = vpop.xlane.xlu0 %2556
        %v2558 = vsub.f32 %v2511, %v2536
        %v2559 = vsub.f32 %v2514, %v2539
        %v2560 = vsub.f32 %v2517, %v2542
        %v2561 = vsub.f32 %v2520, %v2545
        %v2562 = vsub.f32 %v2523, %v2548
        %v2563 = vsub.f32 %v2526, %v2551
        %v2564 = vsub.f32 %v2529, %v2554
        %v2565 = vsub.f32 %v2532, %v2557
        %v2566 = vmul.f32 %v2558, 1.442695
        %v2567 = vpow.pop %v2566
        %v2568 = vmul.f32 %v2559, 1.442695
        %v2569 = vpow.pop %v2568
        %v2570 = vmul.f32 %v2560, 1.442695
        %v2571 = vpow.pop %v2570
        %v2572 = vmul.f32 %v2561, 1.442695
        %v2573 = vpow.pop %v2572
        %v2574 = vmul.f32 %v2562, 1.442695
        %v2575 = vpow.pop %v2574
        %v2576 = vmul.f32 %v2563, 1.442695
        %v2577 = vpow.pop %v2576
        %v2578 = vmul.f32 %v2564, 1.442695
        %v2579 = vpow.pop %v2578
        %v2580 = vmul.f32 %v2565, 1.442695
        %v2581 = vpow.pop %v2580
        %v2582 = vsel %vm606, %v2567, 0.0
        %2583 = vadd.xlane.f32.xlu0 %v2582
        %v2584 = vpop.xlane.xlu0 %2583
        %v2585 = vsel %vm606, %v2569, 0.0
        %2586 = vadd.xlane.f32.xlu0 %v2585
        %v2587 = vpop.xlane.xlu0 %2586
        %v2588 = vsel %vm606, %v2571, 0.0
        %2589 = vadd.xlane.f32.xlu0 %v2588
        %v2590 = vpop.xlane.xlu0 %2589
        %v2591 = vsel %vm606, %v2573, 0.0
        %2592 = vadd.xlane.f32.xlu0 %v2591
        %v2593 = vpop.xlane.xlu0 %2592
        %v2594 = vsel %vm606, %v2575, 0.0
        %2595 = vadd.xlane.f32.xlu0 %v2594
        %v2596 = vpop.xlane.xlu0 %2595
        %v2597 = vsel %vm606, %v2577, 0.0
        %2598 = vadd.xlane.f32.xlu0 %v2597
        %v2599 = vpop.xlane.xlu0 %2598
        %v2600 = vsel %vm606, %v2579, 0.0
        %2601 = vadd.xlane.f32.xlu0 %v2600
        %v2602 = vpop.xlane.xlu0 %2601
        %v2603 = vsel %vm606, %v2581, 0.0
        %2604 = vadd.xlane.f32.xlu0 %v2603
        %v2605 = vpop.xlane.xlu0 %2604
        %v2606 = vrcp.pop %v2584
        %v2607 = vrcp.pop %v2587
        %v2608 = vrcp.pop %v2590
        %v2609 = vrcp.pop %v2593
        %v2610 = vrcp.pop %v2596
        %v2611 = vrcp.pop %v2599
        %v2612 = vrcp.pop %v2602
        %v2613 = vrcp.pop %v2605
        %v2614 = vmul.f32 %v2567, %v2606
        %v2615 = vmul.f32 %v2569, %v2607
        %v2616 = vmul.f32 %v2571, %v2608
        %v2617 = vmul.f32 %v2573, %v2609
        %v2618 = vmul.f32 %v2575, %v2610
        %v2619 = vmul.f32 %v2577, %v2611
        %v2620 = vmul.f32 %v2579, %v2612
        %v2621 = vmul.f32 %v2581, %v2613
        %2622 = vrot.lane.b32.xlu0 %v1767, 116
        %v2623 = vpop.permute.xlu0 %2622
        %v2626 = vsel %vm606, %v2614, 0
        %v2629 = vsel %vm606, %v2615, 0
        %v2632 = vsel %vm606, %v2616, 0
        %v2635 = vsel %vm606, %v2617, 0
        %v2638 = vsel %vm606, %v2618, 0
        %v2641 = vsel %vm606, %v2619, 0
        %v2644 = vsel %vm606, %v2620, 0
        %v2647 = vsel %vm606, %v2621, 0
        %2649 = vmatpush.msra.mxu0 0.0
        %2650 = vmatpush.msra.mxu0 0.0
        %2651 = vmatpush.msra.mxu0 0.0
        %2652 = vmatpush.msra.mxu0 0.0
        %2653 = vmatpush.msra.mxu0 0.0
        %2654 = vmatpush.msra.mxu0 0.0
        %2655 = vmatpush.msra.mxu0 0.0
        %2656 = vmatpush.msra.mxu0 0.0
        %2657 = vmatpush.msra.mxu0 0.0
        %2658 = vmatpush.msra.mxu0 0.0
        %2659 = vmatpush.msra.mxu0 0.0
        %2660 = vmatpush.msra.mxu0 0.0
        %2661 = vmatpush.msra.mxu0 0.0
        %2662 = vmatpush.msra.mxu0 0.0
        %2663 = vmatpush.msra.mxu0 0.0
        %2664 = vmatpush.msra.mxu0 %v2623
        %2665 = vmatmul.f32.gmra.mxu0 %v2626
        %v2666 = vpop.f32.mrf.mxu0
        %v2667 = vadd.f32 0.0, %v2666
        %2668 = vmatmul.f32.gmra.mxu0 %v2629
        %v2669 = vpop.f32.mrf.mxu0
        %v2670 = vadd.f32 0.0, %v2669
        %2671 = vmatmul.f32.gmra.mxu0 %v2632
        %v2672 = vpop.f32.mrf.mxu0
        %v2673 = vadd.f32 0.0, %v2672
        %2674 = vmatmul.f32.gmra.mxu0 %v2635
        %v2675 = vpop.f32.mrf.mxu0
        %v2676 = vadd.f32 0.0, %v2675
        %2677 = vmatmul.f32.gmra.mxu0 %v2638
        %v2678 = vpop.f32.mrf.mxu0
        %v2679 = vadd.f32 0.0, %v2678
        %2680 = vmatmul.f32.gmra.mxu0 %v2641
        %v2681 = vpop.f32.mrf.mxu0
        %v2682 = vadd.f32 0.0, %v2681
        %2683 = vmatmul.f32.gmra.mxu0 %v2644
        %v2684 = vpop.f32.mrf.mxu0
        %v2685 = vadd.f32 0.0, %v2684
        %2686 = vmatmul.f32.gmra.mxu0 %v2647
        %v2687 = vpop.f32.mrf.mxu0
        %v2688 = vadd.f32 0.0, %v2687
        %2689 = vdwg.mxu0
        %2698 = vrot.lane.b32.xlu0 %v2201, 4
        %v2699 = vpop.permute.xlu0 %2698
        %2700 = vrot.lane.b32.xlu0 %v2204, 4
        %v2701 = vpop.permute.xlu0 %2700
        %2702 = vrot.lane.b32.xlu0 %v2207, 4
        %v2703 = vpop.permute.xlu0 %2702
        %2704 = vrot.lane.b32.xlu0 %v2210, 4
        %v2705 = vpop.permute.xlu0 %2704
        %2706 = vrot.lane.b32.xlu0 %v2213, 4
        %v2707 = vpop.permute.xlu0 %2706
        %2708 = vrot.lane.b32.xlu0 %v2216, 4
        %v2709 = vpop.permute.xlu0 %2708
        %2710 = vrot.lane.b32.xlu0 %v2219, 4
        %v2711 = vpop.permute.xlu0 %2710
        %2712 = vrot.lane.b32.xlu0 %v2222, 4
        %v2713 = vpop.permute.xlu0 %2712
        %2730 = vrot.lane.b32.xlu0 %v2434, 8
        %v2731 = vpop.permute.xlu0 %2730
        %2732 = vrot.lane.b32.xlu0 %v2437, 8
        %v2733 = vpop.permute.xlu0 %2732
        %2734 = vrot.lane.b32.xlu0 %v2440, 8
        %v2735 = vpop.permute.xlu0 %2734
        %2736 = vrot.lane.b32.xlu0 %v2443, 8
        %v2737 = vpop.permute.xlu0 %2736
        %2738 = vrot.lane.b32.xlu0 %v2446, 8
        %v2739 = vpop.permute.xlu0 %2738
        %2740 = vrot.lane.b32.xlu0 %v2449, 8
        %v2741 = vpop.permute.xlu0 %2740
        %2742 = vrot.lane.b32.xlu0 %v2452, 8
        %v2743 = vpop.permute.xlu0 %2742
        %2744 = vrot.lane.b32.xlu0 %v2455, 8
        %v2745 = vpop.permute.xlu0 %2744
        %2762 = vrot.lane.b32.xlu0 %v2667, 12
        %v2763 = vpop.permute.xlu0 %2762
        %2764 = vrot.lane.b32.xlu0 %v2670, 12
        %v2765 = vpop.permute.xlu0 %2764
        %2766 = vrot.lane.b32.xlu0 %v2673, 12
        %v2767 = vpop.permute.xlu0 %2766
        %2768 = vrot.lane.b32.xlu0 %v2676, 12
        %v2769 = vpop.permute.xlu0 %2768
        %2770 = vrot.lane.b32.xlu0 %v2679, 12
        %v2771 = vpop.permute.xlu0 %2770
        %2772 = vrot.lane.b32.xlu0 %v2682, 12
        %v2773 = vpop.permute.xlu0 %2772
        %2774 = vrot.lane.b32.xlu0 %v2685, 12
        %v2775 = vpop.permute.xlu0 %2774
        %2776 = vrot.lane.b32.xlu0 %v2688, 12
        %v2777 = vpop.permute.xlu0 %2776
        %v2786 = vsel %vm1102, %v1967, %v2699
        %v2787 = vsel %vm1102, %v1970, %v2701
        %v2788 = vsel %vm1102, %v1973, %v2703
        %v2789 = vsel %vm1102, %v1976, %v2705
        %v2790 = vsel %vm1102, %v1979, %v2707
        %v2791 = vsel %vm1102, %v1982, %v2709
        %v2792 = vsel %vm1102, %v1985, %v2711
        %v2793 = vsel %vm1102, %v1988, %v2713
        %v2794 = vsel %vm606, %v2786, %v2731
        %v2795 = vsel %vm606, %v2787, %v2733
        %v2796 = vsel %vm606, %v2788, %v2735
        %v2797 = vsel %vm606, %v2789, %v2737
        %v2798 = vsel %vm606, %v2790, %v2739
        %v2799 = vsel %vm606, %v2791, %v2741
        %v2800 = vsel %vm606, %v2792, %v2743
        %v2801 = vsel %vm606, %v2793, %v2745
        %v2802 = vsel %vm1549, %v2794, %v2763
        %v2803 = vsel %vm1549, %v2795, %v2765
        %v2804 = vsel %vm1549, %v2796, %v2767
        %v2805 = vsel %vm1549, %v2797, %v2769
        %v2806 = vsel %vm1549, %v2798, %v2771
        %v2807 = vsel %vm1549, %v2799, %v2773
        %v2808 = vsel %vm1549, %v2800, %v2775
        %v2809 = vsel %vm1549, %v2801, %v2777
        %v2810 = vperm.slane %v367, 0
        %v2812 = vsel %vm876, %v2802, 0
        %v2815 = vsel %vm876, %v2803, 0
        %v2818 = vsel %vm876, %v2804, 0
        %v2821 = vsel %vm876, %v2805, 0
        %v2824 = vsel %vm876, %v2806, 0
        %v2827 = vsel %vm876, %v2807, 0
        %v2830 = vsel %vm876, %v2808, 0
        %v2833 = vsel %vm876, %v2809, 0
        %2835 = vmatpush.msra.mxu0 0.0
        %2836 = vmatpush.msra.mxu0 0.0
        %2837 = vmatpush.msra.mxu0 0.0
        %2838 = vmatpush.msra.mxu0 0.0
        %2839 = vmatpush.msra.mxu0 0.0
        %2840 = vmatpush.msra.mxu0 0.0
        %2841 = vmatpush.msra.mxu0 0.0
        %2842 = vmatpush.msra.mxu0 0.0
        %2843 = vmatpush.msra.mxu0 0.0
        %2844 = vmatpush.msra.mxu0 0.0
        %2845 = vmatpush.msra.mxu0 0.0
        %2846 = vmatpush.msra.mxu0 0.0
        %2847 = vmatpush.msra.mxu0 0.0
        %2848 = vmatpush.msra.mxu0 0.0
        %2849 = vmatpush.msra.mxu0 %v366
        %2850 = vmatpush.msra.mxu0 %v365
        %2851 = vmatmul.f32.gmra.mxu0 %v2812
        %v2852 = vpop.f32.mrf.mxu0
        %v2853 = vadd.f32 %v2810, %v2852
        %2854 = vmatmul.f32.gmra.mxu0 %v2815
        %v2855 = vpop.f32.mrf.mxu0
        %v2856 = vadd.f32 %v2810, %v2855
        %2857 = vmatmul.f32.gmra.mxu0 %v2818
        %v2858 = vpop.f32.mrf.mxu0
        %v2859 = vadd.f32 %v2810, %v2858
        %2860 = vmatmul.f32.gmra.mxu0 %v2821
        %v2861 = vpop.f32.mrf.mxu0
        %v2862 = vadd.f32 %v2810, %v2861
        %2863 = vmatmul.f32.gmra.mxu0 %v2824
        %v2864 = vpop.f32.mrf.mxu0
        %v2865 = vadd.f32 %v2810, %v2864
        %2866 = vmatmul.f32.gmra.mxu0 %v2827
        %v2867 = vpop.f32.mrf.mxu0
        %v2868 = vadd.f32 %v2810, %v2867
        %2869 = vmatmul.f32.gmra.mxu0 %v2830
        %v2870 = vpop.f32.mrf.mxu0
        %v2871 = vadd.f32 %v2810, %v2870
        %2872 = vmatmul.f32.gmra.mxu0 %v2833
        %v2873 = vpop.f32.mrf.mxu0
        %v2874 = vadd.f32 %v2810, %v2873
        %2875 = vdwg.mxu0
        %v2876 = vadd.f32 %v523, %v2853
        %v2877 = vadd.f32 %v524, %v2856
        %v2878 = vadd.f32 %v525, %v2859
        %v2879 = vadd.f32 %v526, %v2862
        %v2880 = vadd.f32 %v527, %v2865
        %v2881 = vadd.f32 %v528, %v2868
        %v2882 = vadd.f32 %v529, %v2871
        %v2883 = vadd.f32 %v530, %v2874
        %v2884 = vsel %vm540, %v2876, 0.0
        %2885 = vadd.xlane.f32.xlu0 %v2884
        %v2886 = vpop.xlane.xlu0 %2885
        %v2887 = vsel %vm540, %v2877, 0.0
        %2888 = vadd.xlane.f32.xlu0 %v2887
        %v2889 = vpop.xlane.xlu0 %2888
        %v2890 = vsel %vm540, %v2878, 0.0
        %2891 = vadd.xlane.f32.xlu0 %v2890
        %v2892 = vpop.xlane.xlu0 %2891
        %v2893 = vsel %vm540, %v2879, 0.0
        %2894 = vadd.xlane.f32.xlu0 %v2893
        %v2895 = vpop.xlane.xlu0 %2894
        %v2896 = vsel %vm540, %v2880, 0.0
        %2897 = vadd.xlane.f32.xlu0 %v2896
        %v2898 = vpop.xlane.xlu0 %2897
        %v2899 = vsel %vm540, %v2881, 0.0
        %2900 = vadd.xlane.f32.xlu0 %v2899
        %v2901 = vpop.xlane.xlu0 %2900
        %v2902 = vsel %vm540, %v2882, 0.0
        %2903 = vadd.xlane.f32.xlu0 %v2902
        %v2904 = vpop.xlane.xlu0 %2903
        %v2905 = vsel %vm540, %v2883, 0.0
        %2906 = vadd.xlane.f32.xlu0 %v2905
        %v2907 = vpop.xlane.xlu0 %2906
        %v2908 = vmul.f32 %v2886, %v913
        %v2909 = vmul.f32 %v2889, %v913
        %v2910 = vmul.f32 %v2892, %v913
        %v2911 = vmul.f32 %v2895, %v913
        %v2912 = vmul.f32 %v2898, %v913
        %v2913 = vmul.f32 %v2901, %v913
        %v2914 = vmul.f32 %v2904, %v913
        %v2915 = vmul.f32 %v2907, %v913
        %v2916 = vsub.f32 %v2876, %v2908
        %v2917 = vsub.f32 %v2877, %v2909
        %v2918 = vsub.f32 %v2878, %v2910
        %v2919 = vsub.f32 %v2879, %v2911
        %v2920 = vsub.f32 %v2880, %v2912
        %v2921 = vsub.f32 %v2881, %v2913
        %v2922 = vsub.f32 %v2882, %v2914
        %v2923 = vsub.f32 %v2883, %v2915
        %v2924 = vmul.f32 %v2916, %v2916
        %v2925 = vmul.f32 %v2917, %v2917
        %v2926 = vmul.f32 %v2918, %v2918
        %v2927 = vmul.f32 %v2919, %v2919
        %v2928 = vmul.f32 %v2920, %v2920
        %v2929 = vmul.f32 %v2921, %v2921
        %v2930 = vmul.f32 %v2922, %v2922
        %v2931 = vmul.f32 %v2923, %v2923
        %v2932 = vsel %vm540, %v2924, 0.0
        %2933 = vadd.xlane.f32.xlu0 %v2932
        %v2934 = vpop.xlane.xlu0 %2933
        %v2935 = vsel %vm540, %v2925, 0.0
        %2936 = vadd.xlane.f32.xlu0 %v2935
        %v2937 = vpop.xlane.xlu0 %2936
        %v2938 = vsel %vm540, %v2926, 0.0
        %2939 = vadd.xlane.f32.xlu0 %v2938
        %v2940 = vpop.xlane.xlu0 %2939
        %v2941 = vsel %vm540, %v2927, 0.0
        %2942 = vadd.xlane.f32.xlu0 %v2941
        %v2943 = vpop.xlane.xlu0 %2942
        %v2944 = vsel %vm540, %v2928, 0.0
        %2945 = vadd.xlane.f32.xlu0 %v2944
        %v2946 = vpop.xlane.xlu0 %2945
        %v2947 = vsel %vm540, %v2929, 0.0
        %2948 = vadd.xlane.f32.xlu0 %v2947
        %v2949 = vpop.xlane.xlu0 %2948
        %v2950 = vsel %vm540, %v2930, 0.0
        %2951 = vadd.xlane.f32.xlu0 %v2950
        %v2952 = vpop.xlane.xlu0 %2951
        %v2953 = vsel %vm540, %v2931, 0.0
        %2954 = vadd.xlane.f32.xlu0 %v2953
        %v2955 = vpop.xlane.xlu0 %2954
        %v2956 = vmul.f32 %v2934, %v913
        %v2957 = vmul.f32 %v2937, %v913
        %v2958 = vmul.f32 %v2940, %v913
        %v2959 = vmul.f32 %v2943, %v913
        %v2960 = vmul.f32 %v2946, %v913
        %v2961 = vmul.f32 %v2949, %v913
        %v2962 = vmul.f32 %v2952, %v913
        %v2963 = vmul.f32 %v2955, %v913
        %v2964 = vadd.f32 %v2956, 1e-05
        %v2965 = vadd.f32 %v2957, 1e-05
        %v2966 = vadd.f32 %v2958, 1e-05
        %v2967 = vadd.f32 %v2959, 1e-05
        %v2968 = vadd.f32 %v2960, 1e-05
        %v2969 = vadd.f32 %v2961, 1e-05
        %v2970 = vadd.f32 %v2962, 1e-05
        %v2971 = vadd.f32 %v2963, 1e-05
        %v2972 = vrsqrt.pop %v2964
        %v2973 = vmul.f32 %v2972, %v2964
        %v2974 = vmul.f32 %v2973, %v2972
        %v2975 = vmul.f32 0.5, %v2974
        %v2976 = vsub.f32 1.5, %v2975
        %v2977 = vmul.f32 %v2972, %v2976
        %vm2978 = vweird.f32 %v2964
        %vm2979 = vweird.f32 %v2972
        %vm2980 = vmor %vm2978, %vm2979
        %v2981 = vsel %vm2980, %v2972, %v2977
        %v2982 = vrsqrt.pop %v2965
        %v2983 = vmul.f32 %v2982, %v2965
        %v2984 = vmul.f32 %v2983, %v2982
        %v2985 = vmul.f32 0.5, %v2984
        %v2986 = vsub.f32 1.5, %v2985
        %v2987 = vmul.f32 %v2982, %v2986
        %vm2988 = vweird.f32 %v2965
        %vm2989 = vweird.f32 %v2982
        %vm2990 = vmor %vm2988, %vm2989
        %v2991 = vsel %vm2990, %v2982, %v2987
        %v2992 = vrsqrt.pop %v2966
        %v2993 = vmul.f32 %v2992, %v2966
        %v2994 = vmul.f32 %v2993, %v2992
        %v2995 = vmul.f32 0.5, %v2994
        %v2996 = vsub.f32 1.5, %v2995
        %v2997 = vmul.f32 %v2992, %v2996
        %vm2998 = vweird.f32 %v2966
        %vm2999 = vweird.f32 %v2992
        %vm3000 = vmor %vm2998, %vm2999
        %v3001 = vsel %vm3000, %v2992, %v2997
        %v3002 = vrsqrt.pop %v2967
        %v3003 = vmul.f32 %v3002, %v2967
        %v3004 = vmul.f32 %v3003, %v3002
        %v3005 = vmul.f32 0.5, %v3004
        %v3006 = vsub.f32 1.5, %v3005
        %v3007 = vmul.f32 %v3002, %v3006
        %vm3008 = vweird.f32 %v2967
        %vm3009 = vweird.f32 %v3002
        %vm3010 = vmor %vm3008, %vm3009
        %v3011 = vsel %vm3010, %v3002, %v3007
        %v3012 = vrsqrt.pop %v2968
        %v3013 = vmul.f32 %v3012, %v2968
        %v3014 = vmul.f32 %v3013, %v3012
        %v3015 = vmul.f32 0.5, %v3014
        %v3016 = vsub.f32 1.5, %v3015
        %v3017 = vmul.f32 %v3012, %v3016
        %vm3018 = vweird.f32 %v2968
        %vm3019 = vweird.f32 %v3012
        %vm3020 = vmor %vm3018, %vm3019
        %v3021 = vsel %vm3020, %v3012, %v3017
        %v3022 = vrsqrt.pop %v2969
        %v3023 = vmul.f32 %v3022, %v2969
        %v3024 = vmul.f32 %v3023, %v3022
        %v3025 = vmul.f32 0.5, %v3024
        %v3026 = vsub.f32 1.5, %v3025
        %v3027 = vmul.f32 %v3022, %v3026
        %vm3028 = vweird.f32 %v2969
        %vm3029 = vweird.f32 %v3022
        %vm3030 = vmor %vm3028, %vm3029
        %v3031 = vsel %vm3030, %v3022, %v3027
        %v3032 = vrsqrt.pop %v2970
        %v3033 = vmul.f32 %v3032, %v2970
        %v3034 = vmul.f32 %v3033, %v3032
        %v3035 = vmul.f32 0.5, %v3034
        %v3036 = vsub.f32 1.5, %v3035
        %v3037 = vmul.f32 %v3032, %v3036
        %vm3038 = vweird.f32 %v2970
        %vm3039 = vweird.f32 %v3032
        %vm3040 = vmor %vm3038, %vm3039
        %v3041 = vsel %vm3040, %v3032, %v3037
        %v3042 = vrsqrt.pop %v2971
        %v3043 = vmul.f32 %v3042, %v2971
        %v3044 = vmul.f32 %v3043, %v3042
        %v3045 = vmul.f32 0.5, %v3044
        %v3046 = vsub.f32 1.5, %v3045
        %v3047 = vmul.f32 %v3042, %v3046
        %vm3048 = vweird.f32 %v2971
        %vm3049 = vweird.f32 %v3042
        %vm3050 = vmor %vm3048, %vm3049
        %v3051 = vsel %vm3050, %v3042, %v3047
        %v3052 = vmul.f32 %v2916, %v2981
        %v3053 = vmul.f32 %v2917, %v2991
        %v3054 = vmul.f32 %v2918, %v3001
        %v3055 = vmul.f32 %v2919, %v3011
        %v3056 = vmul.f32 %v2920, %v3021
        %v3057 = vmul.f32 %v2921, %v3031
        %v3058 = vmul.f32 %v2922, %v3041
        %v3059 = vmul.f32 %v2923, %v3051
        %v3060 = vperm.slane %v348, 0
        %v3061 = vmul.f32 %v3052, %v3060
        %v3062 = vmul.f32 %v3053, %v3060
        %v3063 = vmul.f32 %v3054, %v3060
        %v3064 = vmul.f32 %v3055, %v3060
        %v3065 = vmul.f32 %v3056, %v3060
        %v3066 = vmul.f32 %v3057, %v3060
        %v3067 = vmul.f32 %v3058, %v3060
        %v3068 = vmul.f32 %v3059, %v3060
        %v3069 = vperm.slane %v349, 0
        %v3070 = vadd.f32 %v3061, %v3069
        %v3071 = vadd.f32 %v3062, %v3069
        %v3072 = vadd.f32 %v3063, %v3069
        %v3073 = vadd.f32 %v3064, %v3069
        %v3074 = vadd.f32 %v3065, %v3069
        %v3075 = vadd.f32 %v3066, %v3069
        %v3076 = vadd.f32 %v3067, %v3069
        %v3077 = vadd.f32 %v3068, %v3069
        %v3078 = vperm.slane %v372, 0
        %3079 = vmatpush.msra.mxu0 0.0
        %3080 = vmatpush.msra.mxu0 0.0
        %3081 = vmatpush.msra.mxu0 0.0
        %3082 = vmatpush.msra.mxu0 0.0
        %3083 = vmatpush.msra.mxu0 0.0
        %3084 = vmatpush.msra.mxu0 0.0
        %3085 = vmatpush.msra.mxu0 0.0
        %3086 = vmatpush.msra.mxu0 0.0
        %3087 = vmatpush.msra.mxu0 0.0
        %3088 = vmatpush.msra.mxu0 0.0
        %3089 = vmatpush.msra.mxu0 0.0
        %3090 = vmatpush.msra.mxu0 0.0
        %3091 = vmatpush.msra.mxu0 %v371
        %3092 = vmatpush.msra.mxu0 %v370
        %3093 = vmatpush.msra.mxu0 %v369
        %3094 = vmatpush.msra.mxu0 %v368
        %3095 = vmatmul.f32.gmra.mxu0 %v1723
        %v3096 = vpop.f32.mrf.mxu0
        %v3097 = vadd.f32 %v3078, %v3096
        %3098 = vdwg.mxu0
        %v3099 = vperm.slane %v377, 0
        %3100 = vmatpush.msra.mxu0 0.0
        %3101 = vmatpush.msra.mxu0 0.0
        %3102 = vmatpush.msra.mxu0 0.0
        %3103 = vmatpush.msra.mxu0 0.0
        %3104 = vmatpush.msra.mxu0 0.0
        %3105 = vmatpush.msra.mxu0 0.0
        %3106 = vmatpush.msra.mxu0 0.0
        %3107 = vmatpush.msra.mxu0 0.0
        %3108 = vmatpush.msra.mxu0 0.0
        %3109 = vmatpush.msra.mxu0 0.0
        %3110 = vmatpush.msra.mxu0 0.0
        %3111 = vmatpush.msra.mxu0 0.0
        %3112 = vmatpush.msra.mxu0 %v376
        %3113 = vmatpush.msra.mxu0 %v375
        %3114 = vmatpush.msra.mxu0 %v374
        %3115 = vmatpush.msra.mxu0 %v373
        %3116 = vmatmul.f32.gmra.mxu0 %v1723
        %v3117 = vpop.f32.mrf.mxu0
        %v3118 = vadd.f32 %v3099, %v3117
        %3119 = vdwg.mxu0
        %v3120 = vperm.slane %v382, 0
        %3121 = vmatpush.msra.mxu0 0.0
        %3122 = vmatpush.msra.mxu0 0.0
        %3123 = vmatpush.msra.mxu0 0.0
        %3124 = vmatpush.msra.mxu0 0.0
        %3125 = vmatpush.msra.mxu0 0.0
        %3126 = vmatpush.msra.mxu0 0.0
        %3127 = vmatpush.msra.mxu0 0.0
        %3128 = vmatpush.msra.mxu0 0.0
        %3129 = vmatpush.msra.mxu0 0.0
        %3130 = vmatpush.msra.mxu0 0.0
        %3131 = vmatpush.msra.mxu0 0.0
        %3132 = vmatpush.msra.mxu0 0.0
        %3133 = vmatpush.msra.mxu0 %v381
        %3134 = vmatpush.msra.mxu0 %v380
        %3135 = vmatpush.msra.mxu0 %v379
        %3136 = vmatpush.msra.mxu0 %v378
        %3137 = vmatmul.f32.gmra.mxu0 %v1747
        %v3138 = vpop.f32.mrf.mxu0
        %v3139 = vadd.f32 %v3120, %v3138
        %3140 = vdwg.mxu0
        %v3142 = vsel %vm606, %v3097, 0
        %v3145 = vsel %vm606, %v3118, 0
        %3147 = vmatpush.xpose.msra.mxu0 0.0
        %3148 = vmatpush.xpose.msra.mxu0 0.0
        %3149 = vmatpush.xpose.msra.mxu0 0.0
        %3150 = vmatpush.xpose.msra.mxu0 0.0
        %3151 = vmatpush.xpose.msra.mxu0 0.0
        %3152 = vmatpush.xpose.msra.mxu0 0.0
        %3153 = vmatpush.xpose.msra.mxu0 0.0
        %3154 = vmatpush.xpose.msra.mxu0 0.0
        %3155 = vmatpush.xpose.msra.mxu0 0.0
        %3156 = vmatpush.xpose.msra.mxu0 0.0
        %3157 = vmatpush.xpose.msra.mxu0 0.0
        %3158 = vmatpush.xpose.msra.mxu0 0.0
        %3159 = vmatpush.xpose.msra.mxu0 0.0
        %3160 = vmatpush.xpose.msra.mxu0 0.0
        %3161 = vmatpush.xpose.msra.mxu0 0.0
        %3162 = vmatpush.xpose.msra.mxu0 %v3145
        %3163 = vmatmul.f32.gmra.mxu0 %v3142
        %v3164 = vpop.f32.mrf.mxu0
        %v3165 = vadd.f32 0.0, %v3164
        %3166 = vdwg.mxu0
        %v3167 = vsel %vm606, %v3165, -inf
        %3168 = vmax.xlane.f32.xlu0 %v3167
        %v3169 = vpop.xlane.xlu0 %3168
        %v3170 = vsub.f32 %v3165, %v3169
        %v3171 = vmul.f32 %v3170, 1.442695
        %v3172 = vpow.pop %v3171
        %v3173 = vsel %vm606, %v3172, 0.0
        %3174 = vadd.xlane.f32.xlu0 %v3173
        %v3175 = vpop.xlane.xlu0 %3174
        %v3176 = vrcp.pop %v3175
        %v3177 = vmul.f32 %v3172, %v3176
        %v3179 = vsel %vm606, %v3177, 0
        %3181 = vmatpush.msra.mxu0 0.0
        %3182 = vmatpush.msra.mxu0 0.0
        %3183 = vmatpush.msra.mxu0 0.0
        %3184 = vmatpush.msra.mxu0 0.0
        %3185 = vmatpush.msra.mxu0 0.0
        %3186 = vmatpush.msra.mxu0 0.0
        %3187 = vmatpush.msra.mxu0 0.0
        %3188 = vmatpush.msra.mxu0 0.0
        %3189 = vmatpush.msra.mxu0 0.0
        %3190 = vmatpush.msra.mxu0 0.0
        %3191 = vmatpush.msra.mxu0 0.0
        %3192 = vmatpush.msra.mxu0 0.0
        %3193 = vmatpush.msra.mxu0 0.0
        %3194 = vmatpush.msra.mxu0 0.0
        %3195 = vmatpush.msra.mxu0 0.0
        %3196 = vmatpush.msra.mxu0 %v3139
        %3197 = vmatmul.f32.gmra.mxu0 %v3179
        %v3198 = vpop.f32.mrf.mxu0
        %v3199 = vadd.f32 0.0, %v3198
        %3200 = vdwg.mxu0
        %3201 = vrot.lane.b32.xlu0 %v3097, 120
        %v3202 = vpop.permute.xlu0 %3201
        %3203 = vrot.lane.b32.xlu0 %v3118, 120
        %v3204 = vpop.permute.xlu0 %3203
        %v3205 = vsel %vm606, %v3202, 0
        %v3207 = vsel %vm606, %v3204, 0
        %3209 = vmatpush.xpose.msra.mxu0 0.0
        %3210 = vmatpush.xpose.msra.mxu0 0.0
        %3211 = vmatpush.xpose.msra.mxu0 0.0
        %3212 = vmatpush.xpose.msra.mxu0 0.0
        %3213 = vmatpush.xpose.msra.mxu0 0.0
        %3214 = vmatpush.xpose.msra.mxu0 0.0
        %3215 = vmatpush.xpose.msra.mxu0 0.0
        %3216 = vmatpush.xpose.msra.mxu0 0.0
        %3217 = vmatpush.xpose.msra.mxu0 0.0
        %3218 = vmatpush.xpose.msra.mxu0 0.0
        %3219 = vmatpush.xpose.msra.mxu0 0.0
        %3220 = vmatpush.xpose.msra.mxu0 0.0
        %3221 = vmatpush.xpose.msra.mxu0 0.0
        %3222 = vmatpush.xpose.msra.mxu0 0.0
        %3223 = vmatpush.xpose.msra.mxu0 0.0
        %3224 = vmatpush.xpose.msra.mxu0 %v3207
        %3225 = vmatmul.f32.gmra.mxu0 %v3205
        %v3226 = vpop.f32.mrf.mxu0
        %v3227 = vadd.f32 0.0, %v3226
        %3228 = vdwg.mxu0
        %v3229 = vsel %vm606, %v3227, -inf
        %3230 = vmax.xlane.f32.xlu0 %v3229
        %v3231 = vpop.xlane.xlu0 %3230
        %v3232 = vsub.f32 %v3227, %v3231
        %v3233 = vmul.f32 %v3232, 1.442695
        %v3234 = vpow.pop %v3233
        %v3235 = vsel %vm606, %v3234, 0.0
        %3236 = vadd.xlane.f32.xlu0 %v3235
        %v3237 = vpop.xlane.xlu0 %3236
        %v3238 = vrcp.pop %v3237
        %v3239 = vmul.f32 %v3234, %v3238
        %3241 = vrot.lane.b32.xlu0 %v3139, 120
        %v3242 = vpop.permute.xlu0 %3241
        %v3245 = vsel %vm606, %v3239, 0
        %3247 = vmatpush.msra.mxu0 0.0
        %3248 = vmatpush.msra.mxu0 0.0
        %3249 = vmatpush.msra.mxu0 0.0
        %3250 = vmatpush.msra.mxu0 0.0
        %3251 = vmatpush.msra.mxu0 0.0
        %3252 = vmatpush.msra.mxu0 0.0
        %3253 = vmatpush.msra.mxu0 0.0
        %3254 = vmatpush.msra.mxu0 0.0
        %3255 = vmatpush.msra.mxu0 0.0
        %3256 = vmatpush.msra.mxu0 0.0
        %3257 = vmatpush.msra.mxu0 0.0
        %3258 = vmatpush.msra.mxu0 0.0
        %3259 = vmatpush.msra.mxu0 0.0
        %3260 = vmatpush.msra.mxu0 0.0
        %3261 = vmatpush.msra.mxu0 0.0
        %3262 = vmatpush.msra.mxu0 %v3242
        %3263 = vmatmul.f32.gmra.mxu0 %v3245
        %v3264 = vpop.f32.mrf.mxu0
        %v3265 = vadd.f32 0.0, %v3264
        %3266 = vdwg.mxu0
        %3267 = vrot.lane.b32.xlu0 %v3097, 112
        %v3268 = vpop.permute.xlu0 %3267
        %3269 = vrot.lane.b32.xlu0 %v3118, 112
        %v3270 = vpop.permute.xlu0 %3269
        %v3271 = vsel %vm606, %v3268, 0
        %v3273 = vsel %vm606, %v3270, 0
        %3275 = vmatpush.xpose.msra.mxu0 0.0
        %3276 = vmatpush.xpose.msra.mxu0 0.0
        %3277 = vmatpush.xpose.msra.mxu0 0.0
        %3278 = vmatpush.xpose.msra.mxu0 0.0
        %3279 = vmatpush.xpose.msra.mxu0 0.0
        %3280 = vmatpush.xpose.msra.mxu0 0.0
        %3281 = vmatpush.xpose.msra.mxu0 0.0
        %3282 = vmatpush.xpose.msra.mxu0 0.0
        %3283 = vmatpush.xpose.msra.mxu0 0.0
        %3284 = vmatpush.xpose.msra.mxu0 0.0
        %3285 = vmatpush.xpose.msra.mxu0 0.0
        %3286 = vmatpush.xpose.msra.mxu0 0.0
        %3287 = vmatpush.xpose.msra.mxu0 0.0
        %3288 = vmatpush.xpose.msra.mxu0 0.0
        %3289 = vmatpush.xpose.msra.mxu0 0.0
        %3290 = vmatpush.xpose.msra.mxu0 %v3273
        %3291 = vmatmul.f32.gmra.mxu0 %v3271
        %v3292 = vpop.f32.mrf.mxu0
        %v3293 = vadd.f32 0.0, %v3292
        %3294 = vdwg.mxu0
        %v3295 = vsel %vm606, %v3293, -inf
        %3296 = vmax.xlane.f32.xlu0 %v3295
        %v3297 = vpop.xlane.xlu0 %3296
        %v3298 = vsub.f32 %v3293, %v3297
        %v3299 = vmul.f32 %v3298, 1.442695
        %v3300 = vpow.pop %v3299
        %v3301 = vsel %vm606, %v3300, 0.0
        %3302 = vadd.xlane.f32.xlu0 %v3301
        %v3303 = vpop.xlane.xlu0 %3302
        %v3304 = vrcp.pop %v3303
        %v3305 = vmul.f32 %v3300, %v3304
        %3306 = vrot.lane.b32.xlu0 %v3139, 112
        %v3307 = vpop.permute.xlu0 %3306
        %v3310 = vsel %vm606, %v3305, 0
        %3312 = vmatpush.msra.mxu0 0.0
        %3313 = vmatpush.msra.mxu0 0.0
        %3314 = vmatpush.msra.mxu0 0.0
        %3315 = vmatpush.msra.mxu0 0.0
        %3316 = vmatpush.msra.mxu0 0.0
        %3317 = vmatpush.msra.mxu0 0.0
        %3318 = vmatpush.msra.mxu0 0.0
        %3319 = vmatpush.msra.mxu0 0.0
        %3320 = vmatpush.msra.mxu0 0.0
        %3321 = vmatpush.msra.mxu0 0.0
        %3322 = vmatpush.msra.mxu0 0.0
        %3323 = vmatpush.msra.mxu0 0.0
        %3324 = vmatpush.msra.mxu0 0.0
        %3325 = vmatpush.msra.mxu0 0.0
        %3326 = vmatpush.msra.mxu0 0.0
        %3327 = vmatpush.msra.mxu0 %v3307
        %3328 = vmatmul.f32.gmra.mxu0 %v3310
        %v3329 = vpop.f32.mrf.mxu0
        %v3330 = vadd.f32 0.0, %v3329
        %3331 = vdwg.mxu0
        %3332 = vrot.lane.b32.xlu0 %v3097, 104
        %v3333 = vpop.permute.xlu0 %3332
        %3334 = vrot.lane.b32.xlu0 %v3118, 104
        %v3335 = vpop.permute.xlu0 %3334
        %v3336 = vsel %vm606, %v3333, 0
        %v3338 = vsel %vm606, %v3335, 0
        %3340 = vmatpush.xpose.msra.mxu0 0.0
        %3341 = vmatpush.xpose.msra.mxu0 0.0
        %3342 = vmatpush.xpose.msra.mxu0 0.0
        %3343 = vmatpush.xpose.msra.mxu0 0.0
        %3344 = vmatpush.xpose.msra.mxu0 0.0
        %3345 = vmatpush.xpose.msra.mxu0 0.0
        %3346 = vmatpush.xpose.msra.mxu0 0.0
        %3347 = vmatpush.xpose.msra.mxu0 0.0
        %3348 = vmatpush.xpose.msra.mxu0 0.0
        %3349 = vmatpush.xpose.msra.mxu0 0.0
        %3350 = vmatpush.xpose.msra.mxu0 0.0
        %3351 = vmatpush.xpose.msra.mxu0 0.0
        %3352 = vmatpush.xpose.msra.mxu0 0.0
        %3353 = vmatpush.xpose.msra.mxu0 0.0
        %3354 = vmatpush.xpose.msra.mxu0 0.0
        %3355 = vmatpush.xpose.msra.mxu0 %v3338
        %3356 = vmatmul.f32.gmra.mxu0 %v3336
        %v3357 = vpop.f32.mrf.mxu0
        %v3358 = vadd.f32 0.0, %v3357
        %3359 = vdwg.mxu0
        %v3360 = vsel %vm606, %v3358, -inf
        %3361 = vmax.xlane.f32.xlu0 %v3360
        %v3362 = vpop.xlane.xlu0 %3361
        %v3363 = vsub.f32 %v3358, %v3362
        %v3364 = vmul.f32 %v3363, 1.442695
        %v3365 = vpow.pop %v3364
        %v3366 = vsel %vm606, %v3365, 0.0
        %3367 = vadd.xlane.f32.xlu0 %v3366
        %v3368 = vpop.xlane.xlu0 %3367
        %v3369 = vrcp.pop %v3368
        %v3370 = vmul.f32 %v3365, %v3369
        %3371 = vrot.lane.b32.xlu0 %v3139, 104
        %v3372 = vpop.permute.xlu0 %3371
        %v3375 = vsel %vm606, %v3370, 0
        %3377 = vmatpush.msra.mxu0 0.0
        %3378 = vmatpush.msra.mxu0 0.0
        %3379 = vmatpush.msra.mxu0 0.0
        %3380 = vmatpush.msra.mxu0 0.0
        %3381 = vmatpush.msra.mxu0 0.0
        %3382 = vmatpush.msra.mxu0 0.0
        %3383 = vmatpush.msra.mxu0 0.0
        %3384 = vmatpush.msra.mxu0 0.0
        %3385 = vmatpush.msra.mxu0 0.0
        %3386 = vmatpush.msra.mxu0 0.0
        %3387 = vmatpush.msra.mxu0 0.0
        %3388 = vmatpush.msra.mxu0 0.0
        %3389 = vmatpush.msra.mxu0 0.0
        %3390 = vmatpush.msra.mxu0 0.0
        %3391 = vmatpush.msra.mxu0 0.0
        %3392 = vmatpush.msra.mxu0 %v3372
        %3393 = vmatmul.f32.gmra.mxu0 %v3375
        %v3394 = vpop.f32.mrf.mxu0
        %v3395 = vadd.f32 0.0, %v3394
        %3396 = vdwg.mxu0
        %3398 = vrot.lane.b32.xlu0 %v3265, 8
        %v3399 = vpop.permute.xlu0 %3398
        %3402 = vrot.lane.b32.xlu0 %v3330, 16
        %v3403 = vpop.permute.xlu0 %3402
        %3406 = vrot.lane.b32.xlu0 %v3395, 24
        %v3407 = vpop.permute.xlu0 %3406
        %v3409 = vsel %vm606, %v3199, %v3399
        %v3410 = vsel %vm876, %v3409, %v3403
        %v3411 = vsel %vm878, %v3410, %v3407
        %v3412 = vperm.slane %v387, 0
        %v3414 = vsel %vm540, %v3411, 0
        %3416 = vmatpush.msra.mxu0 0.0
        %3417 = vmatpush.msra.mxu0 0.0
        %3418 = vmatpush.msra.mxu0 0.0
        %3419 = vmatpush.msra.mxu0 0.0
        %3420 = vmatpush.msra.mxu0 0.0
        %3421 = vmatpush.msra.mxu0 0.0
        %3422 = vmatpush.msra.mxu0 0.0
        %3423 = vmatpush.msra.mxu0 0.0
        %3424 = vmatpush.msra.mxu0 0.0
        %3425 = vmatpush.msra.mxu0 0.0
        %3426 = vmatpush.msra.mxu0 0.0
        %3427 = vmatpush.msra.mxu0 0.0
        %3428 = vmatpush.msra.mxu0 %v386
        %3429 = vmatpush.msra.mxu0 %v385
        %3430 = vmatpush.msra.mxu0 %v384
        %3431 = vmatpush.msra.mxu0 %v383
        %3432 = vmatmul.f32.gmra.mxu0 %v3414
        %v3433 = vpop.f32.mrf.mxu0
        %v3434 = vadd.f32 %v3412, %v3433
        %3435 = vdwg.mxu0
        %v3436 = vadd.f32 %v1677, %v3434
        %v3437 = vsel %vm540, %v3436, 0.0
        %3438 = vadd.xlane.f32.xlu0 %v3437
        %v3439 = vpop.xlane.xlu0 %3438
        %v3440 = vmul.f32 %v3439, %v913
        %v3441 = vsub.f32 %v3436, %v3440
        %v3442 = vmul.f32 %v3441, %v3441
        %v3443 = vsel %vm540, %v3442, 0.0
        %3444 = vadd.xlane.f32.xlu0 %v3443
        %v3445 = vpop.xlane.xlu0 %3444
        %v3446 = vmul.f32 %v3445, %v913
        %v3447 = vadd.f32 %v3446, 1e-05
        %v3448 = vrsqrt.pop %v3447
        %v3449 = vmul.f32 %v3448, %v3447
        %v3450 = vmul.f32 %v3449, %v3448
        %v3451 = vmul.f32 0.5, %v3450
        %v3452 = vsub.f32 1.5, %v3451
        %v3453 = vmul.f32 %v3448, %v3452
        %vm3454 = vweird.f32 %v3447
        %vm3455 = vweird.f32 %v3448
        %vm3456 = vmor %vm3454, %vm3455
        %v3457 = vsel %vm3456, %v3448, %v3453
        %v3458 = vmul.f32 %v3441, %v3457
        %v3459 = vperm.slane %v388, 0
        %v3460 = vmul.f32 %v3458, %v3459
        %v3461 = vperm.slane %v389, 0
        %v3462 = vadd.f32 %v3460, %v3461
        %v3463 = vadd.f32 %v3462, %v466
        %v3464 = vadd.f32 %v3070, %v491
        %v3465 = vadd.f32 %v3071, %v492
        %v3466 = vadd.f32 %v3072, %v493
        %v3467 = vadd.f32 %v3073, %v494
        %v3468 = vadd.f32 %v3074, %v495
        %v3469 = vadd.f32 %v3075, %v496
        %v3470 = vadd.f32 %v3076, %v497
        %v3471 = vadd.f32 %v3077, %v498
        %v3472 = vperm.slane %v394, 0
        %v3474 = vsel %vm540, %v3463, 0
        %3476 = vmatpush.msra.mxu0 0.0
        %3477 = vmatpush.msra.mxu0 0.0
        %3478 = vmatpush.msra.mxu0 0.0
        %3479 = vmatpush.msra.mxu0 0.0
        %3480 = vmatpush.msra.mxu0 0.0
        %3481 = vmatpush.msra.mxu0 0.0
        %3482 = vmatpush.msra.mxu0 0.0
        %3483 = vmatpush.msra.mxu0 0.0
        %3484 = vmatpush.msra.mxu0 0.0
        %3485 = vmatpush.msra.mxu0 0.0
        %3486 = vmatpush.msra.mxu0 0.0
        %3487 = vmatpush.msra.mxu0 0.0
        %3488 = vmatpush.msra.mxu0 %v393
        %3489 = vmatpush.msra.mxu0 %v392
        %3490 = vmatpush.msra.mxu0 %v391
        %3491 = vmatpush.msra.mxu0 %v390
        %3492 = vmatmul.f32.gmra.mxu0 %v3474
        %v3493 = vpop.f32.mrf.mxu0
        %v3494 = vadd.f32 %v3472, %v3493
        %3495 = vdwg.mxu0
        %v3496 = vperm.slane %v399, 0
        %v3498 = vsel %vm540, %v3464, 0
        %v3501 = vsel %vm540, %v3465, 0
        %v3504 = vsel %vm540, %v3466, 0
        %v3507 = vsel %vm540, %v3467, 0
        %v3510 = vsel %vm540, %v3468, 0
        %v3513 = vsel %vm540, %v3469, 0
        %v3516 = vsel %vm540, %v3470, 0
        %v3519 = vsel %vm540, %v3471, 0
        %3521 = vmatpush.msra.mxu0 0.0
        %3522 = vmatpush.msra.mxu0 0.0
        %3523 = vmatpush.msra.mxu0 0.0
        %3524 = vmatpush.msra.mxu0 0.0
        %3525 = vmatpush.msra.mxu0 0.0
        %3526 = vmatpush.msra.mxu0 0.0
        %3527 = vmatpush.msra.mxu0 0.0
        %3528 = vmatpush.msra.mxu0 0.0
        %3529 = vmatpush.msra.mxu0 0.0
        %3530 = vmatpush.msra.mxu0 0.0
        %3531 = vmatpush.msra.mxu0 0.0
        %3532 = vmatpush.msra.mxu0 0.0
        %3533 = vmatpush.msra.mxu0 %v398
        %3534 = vmatpush.msra.mxu0 %v397
        %3535 = vmatpush.msra.mxu0 %v396
        %3536 = vmatpush.msra.mxu0 %v395
        %3537 = vmatmul.f32.gmra.mxu0 %v3498
        %v3538 = vpop.f32.mrf.mxu0
        %v3539 = vadd.f32 %v3496, %v3538
        %3540 = vmatmul.f32.gmra.mxu0 %v3501
        %v3541 = vpop.f32.mrf.mxu0
        %v3542 = vadd.f32 %v3496, %v3541
        %3543 = vmatmul.f32.gmra.mxu0 %v3504
        %v3544 = vpop.f32.mrf.mxu0
        %v3545 = vadd.f32 %v3496, %v3544
        %3546 = vmatmul.f32.gmra.mxu0 %v3507
        %v3547 = vpop.f32.mrf.mxu0
        %v3548 = vadd.f32 %v3496, %v3547
        %3549 = vmatmul.f32.gmra.mxu0 %v3510
        %v3550 = vpop.f32.mrf.mxu0
        %v3551 = vadd.f32 %v3496, %v3550
        %3552 = vmatmul.f32.gmra.mxu0 %v3513
        %v3553 = vpop.f32.mrf.mxu0
        %v3554 = vadd.f32 %v3496, %v3553
        %3555 = vmatmul.f32.gmra.mxu0 %v3516
        %v3556 = vpop.f32.mrf.mxu0
        %v3557 = vadd.f32 %v3496, %v3556
        %3558 = vmatmul.f32.gmra.mxu0 %v3519
        %v3559 = vpop.f32.mrf.mxu0
        %v3560 = vadd.f32 %v3496, %v3559
        %3561 = vdwg.mxu0
        %v3562 = vperm.slane %v404, 0
        %v3564 = vsel %vm540, %v3070, 0
        %v3567 = vsel %vm540, %v3071, 0
        %v3570 = vsel %vm540, %v3072, 0
        %v3573 = vsel %vm540, %v3073, 0
        %v3576 = vsel %vm540, %v3074, 0
        %v3579 = vsel %vm540, %v3075, 0
        %v3582 = vsel %vm540, %v3076, 0
        %v3585 = vsel %vm540, %v3077, 0
        %3587 = vmatpush.msra.mxu0 0.0
        %3588 = vmatpush.msra.mxu0 0.0
        %3589 = vmatpush.msra.mxu0 0.0
        %3590 = vmatpush.msra.mxu0 0.0
        %3591 = vmatpush.msra.mxu0 0.0
        %3592 = vmatpush.msra.mxu0 0.0
        %3593 = vmatpush.msra.mxu0 0.0
        %3594 = vmatpush.msra.mxu0 0.0
        %3595 = vmatpush.msra.mxu0 0.0
        %3596 = vmatpush.msra.mxu0 0.0
        %3597 = vmatpush.msra.mxu0 0.0
        %3598 = vmatpush.msra.mxu0 0.0
        %3599 = vmatpush.msra.mxu0 %v403
        %3600 = vmatpush.msra.mxu0 %v402
        %3601 = vmatpush.msra.mxu0 %v401
        %3602 = vmatpush.msra.mxu0 %v400
        %3603 = vmatmul.f32.gmra.mxu0 %v3564
        %v3604 = vpop.f32.mrf.mxu0
        %v3605 = vadd.f32 %v3562, %v3604
        %3606 = vmatmul.f32.gmra.mxu0 %v3567
        %v3607 = vpop.f32.mrf.mxu0
        %v3608 = vadd.f32 %v3562, %v3607
        %3609 = vmatmul.f32.gmra.mxu0 %v3570
        %v3610 = vpop.f32.mrf.mxu0
        %v3611 = vadd.f32 %v3562, %v3610
        %3612 = vmatmul.f32.gmra.mxu0 %v3573
        %v3613 = vpop.f32.mrf.mxu0
        %v3614 = vadd.f32 %v3562, %v3613
        %3615 = vmatmul.f32.gmra.mxu0 %v3576
        %v3616 = vpop.f32.mrf.mxu0
        %v3617 = vadd.f32 %v3562, %v3616
        %3618 = vmatmul.f32.gmra.mxu0 %v3579
        %v3619 = vpop.f32.mrf.mxu0
        %v3620 = vadd.f32 %v3562, %v3619
        %3621 = vmatmul.f32.gmra.mxu0 %v3582
        %v3622 = vpop.f32.mrf.mxu0
        %v3623 = vadd.f32 %v3562, %v3622
        %3624 = vmatmul.f32.gmra.mxu0 %v3585
        %v3625 = vpop.f32.mrf.mxu0
        %v3626 = vadd.f32 %v3562, %v3625
        %3627 = vdwg.mxu0
        %v3629 = vsel %vm1102, %v3494, 0
        %v3632 = vsel %vm1102, %v3539, 0
        %v3635 = vsel %vm1102, %v3542, 0
        %v3638 = vsel %vm1102, %v3545, 0
        %v3641 = vsel %vm1102, %v3548, 0
        %v3644 = vsel %vm1102, %v3551, 0
        %v3647 = vsel %vm1102, %v3554, 0
        %v3650 = vsel %vm1102, %v3557, 0
        %v3653 = vsel %vm1102, %v3560, 0
        %3655 = vmatpush.xpose.msra.mxu0 0.0
        %3656 = vmatpush.xpose.msra.mxu0 0.0
        %3657 = vmatpush.xpose.msra.mxu0 0.0
        %3658 = vmatpush.xpose.msra.mxu0 0.0
        %3659 = vmatpush.xpose.msra.mxu0 0.0
        %3660 = vmatpush.xpose.msra.mxu0 0.0
        %3661 = vmatpush.xpose.msra.mxu0 0.0
        %3662 = vmatpush.xpose.msra.mxu0 0.0
        %3663 = vmatpush.xpose.msra.mxu0 %v3653
        %3664 = vmatpush.xpose.msra.mxu0 %v3650
        %3665 = vmatpush.xpose.msra.mxu0 %v3647
        %3666 = vmatpush.xpose.msra.mxu0 %v3644
        %3667 = vmatpush.xpose.msra.mxu0 %v3641
        %3668 = vmatpush.xpose.msra.mxu0 %v3638
        %3669 = vmatpush.xpose.msra.mxu0 %v3635
        %3670 = vmatpush.xpose.msra.mxu0 %v3632
        %3671 = vmatmul.f32.gmra.mxu0 %v3629
        %v3672 = vpop.f32.mrf.mxu0
        %v3673 = vadd.f32 0.0, %v3672
        %3674 = vdwg.mxu0
        %v3675 = vsel %vm1150, %v3673, -inf
        %3676 = vmax.xlane.f32.xlu0 %v3675
        %v3677 = vpop.xlane.xlu0 %3676
        %v3678 = vsub.f32 %v3673, %v3677
        %v3679 = vmul.f32 %v3678, 1.442695
        %v3680 = vpow.pop %v3679
        %v3681 = vsel %vm1150, %v3680, 0.0
        %3682 = vadd.xlane.f32.xlu0 %v3681
        %v3683 = vpop.xlane.xlu0 %3682
        %v3684 = vrcp.pop %v3683
        %v3685 = vmul.f32 %v3680, %v3684
        %v3687 = vsel %vm1150, %v3685, 0
        %3689 = vmatpush.msra.mxu0 0.0
        %3690 = vmatpush.msra.mxu0 0.0
        %3691 = vmatpush.msra.mxu0 0.0
        %3692 = vmatpush.msra.mxu0 0.0
        %3693 = vmatpush.msra.mxu0 0.0
        %3694 = vmatpush.msra.mxu0 0.0
        %3695 = vmatpush.msra.mxu0 0.0
        %3696 = vmatpush.msra.mxu0 0.0
        %3697 = vmatpush.msra.mxu0 %v3626
        %3698 = vmatpush.msra.mxu0 %v3623
        %3699 = vmatpush.msra.mxu0 %v3620
        %3700 = vmatpush.msra.mxu0 %v3617
        %3701 = vmatpush.msra.mxu0 %v3614
        %3702 = vmatpush.msra.mxu0 %v3611
        %3703 = vmatpush.msra.mxu0 %v3608
        %3704 = vmatpush.msra.mxu0 %v3605
        %3705 = vmatmul.f32.gmra.mxu0 %v3687
        %v3706 = vpop.f32.mrf.mxu0
        %v3707 = vadd.f32 0.0, %v3706
        %3708 = vdwg.mxu0
        %3709 = vrot.lane.b32.xlu0 %v3494, 124
        %v3710 = vpop.permute.xlu0 %3709
        %3711 = vrot.lane.b32.xlu0 %v3539, 124
        %v3712 = vpop.permute.xlu0 %3711
        %3713 = vrot.lane.b32.xlu0 %v3542, 124
        %v3714 = vpop.permute.xlu0 %3713
        %3715 = vrot.lane.b32.xlu0 %v3545, 124
        %v3716 = vpop.permute.xlu0 %3715
        %3717 = vrot.lane.b32.xlu0 %v3548, 124
        %v3718 = vpop.permute.xlu0 %3717
        %3719 = vrot.lane.b32.xlu0 %v3551, 124
        %v3720 = vpop.permute.xlu0 %3719
        %3721 = vrot.lane.b32.xlu0 %v3554, 124
        %v3722 = vpop.permute.xlu0 %3721
        %3723 = vrot.lane.b32.xlu0 %v3557, 124
        %v3724 = vpop.permute.xlu0 %3723
        %3725 = vrot.lane.b32.xlu0 %v3560, 124
        %v3726 = vpop.permute.xlu0 %3725
        %v3727 = vsel %vm1102, %v3710, 0
        %v3729 = vsel %vm1102, %v3712, 0
        %v3731 = vsel %vm1102, %v3714, 0
        %v3733 = vsel %vm1102, %v3716, 0
        %v3735 = vsel %vm1102, %v3718, 0
        %v3737 = vsel %vm1102, %v3720, 0
        %v3739 = vsel %vm1102, %v3722, 0
        %v3741 = vsel %vm1102, %v3724, 0
        %v3743 = vsel %vm1102, %v3726, 0
        %3745 = vmatpush.xpose.msra.mxu0 0.0
        %3746 = vmatpush.xpose.msra.mxu0 0.0
        %3747 = vmatpush.xpose.msra.mxu0 0.0
        %3748 = vmatpush.xpose.msra.mxu0 0.0
        %3749 = vmatpush.xpose.msra.mxu0 0.0
        %3750 = vmatpush.xpose.msra.mxu0 0.0
        %3751 = vmatpush.xpose.msra.mxu0 0.0
        %3752 = vmatpush.xpose.msra.mxu0 0.0
        %3753 = vmatpush.xpose.msra.mxu0 %v3743
        %3754 = vmatpush.xpose.msra.mxu0 %v3741
        %3755 = vmatpush.xpose.msra.mxu0 %v3739
        %3756 = vmatpush.xpose.msra.mxu0 %v3737
        %3757 = vmatpush.xpose.msra.mxu0 %v3735
        %3758 = vmatpush.xpose.msra.mxu0 %v3733
        %3759 = vmatpush.xpose.msra.mxu0 %v3731
        %3760 = vmatpush.xpose.msra.mxu0 %v3729
        %3761 = vmatmul.f32.gmra.mxu0 %v3727
        %v3762 = vpop.f32.mrf.mxu0
        %v3763 = vadd.f32 0.0, %v3762
        %3764 = vdwg.mxu0
        %v3765 = vsel %vm1150, %v3763, -inf
        %3766 = vmax.xlane.f32.xlu0 %v3765
        %v3767 = vpop.xlane.xlu0 %3766
        %v3768 = vsub.f32 %v3763, %v3767
        %v3769 = vmul.f32 %v3768, 1.442695
        %v3770 = vpow.pop %v3769
        %v3771 = vsel %vm1150, %v3770, 0.0
        %3772 = vadd.xlane.f32.xlu0 %v3771
        %v3773 = vpop.xlane.xlu0 %3772
        %v3774 = vrcp.pop %v3773
        %v3775 = vmul.f32 %v3770, %v3774
        %3784 = vrot.lane.b32.xlu0 %v3605, 124
        %v3785 = vpop.permute.xlu0 %3784
        %3786 = vrot.lane.b32.xlu0 %v3608, 124
        %v3787 = vpop.permute.xlu0 %3786
        %3788 = vrot.lane.b32.xlu0 %v3611, 124
        %v3789 = vpop.permute.xlu0 %3788
        %3790 = vrot.lane.b32.xlu0 %v3614, 124
        %v3791 = vpop.permute.xlu0 %3790
        %3792 = vrot.lane.b32.xlu0 %v3617, 124
        %v3793 = vpop.permute.xlu0 %3792
        %3794 = vrot.lane.b32.xlu0 %v3620, 124
        %v3795 = vpop.permute.xlu0 %3794
        %3796 = vrot.lane.b32.xlu0 %v3623, 124
        %v3797 = vpop.permute.xlu0 %3796
        %3798 = vrot.lane.b32.xlu0 %v3626, 124
        %v3799 = vpop.permute.xlu0 %3798
        %v3809 = vsel %vm1150, %v3775, 0
        %3811 = vmatpush.msra.mxu0 0.0
        %3812 = vmatpush.msra.mxu0 0.0
        %3813 = vmatpush.msra.mxu0 0.0
        %3814 = vmatpush.msra.mxu0 0.0
        %3815 = vmatpush.msra.mxu0 0.0
        %3816 = vmatpush.msra.mxu0 0.0
        %3817 = vmatpush.msra.mxu0 0.0
        %3818 = vmatpush.msra.mxu0 0.0
        %3819 = vmatpush.msra.mxu0 %v3799
        %3820 = vmatpush.msra.mxu0 %v3797
        %3821 = vmatpush.msra.mxu0 %v3795
        %3822 = vmatpush.msra.mxu0 %v3793
        %3823 = vmatpush.msra.mxu0 %v3791
        %3824 = vmatpush.msra.mxu0 %v3789
        %3825 = vmatpush.msra.mxu0 %v3787
        %3826 = vmatpush.msra.mxu0 %v3785
        %3827 = vmatmul.f32.gmra.mxu0 %v3809
        %v3828 = vpop.f32.mrf.mxu0
        %v3829 = vadd.f32 0.0, %v3828
        %3830 = vdwg.mxu0
        %3831 = vrot.lane.b32.xlu0 %v3494, 120
        %v3832 = vpop.permute.xlu0 %3831
        %3833 = vrot.lane.b32.xlu0 %v3539, 120
        %v3834 = vpop.permute.xlu0 %3833
        %3835 = vrot.lane.b32.xlu0 %v3542, 120
        %v3836 = vpop.permute.xlu0 %3835
        %3837 = vrot.lane.b32.xlu0 %v3545, 120
        %v3838 = vpop.permute.xlu0 %3837
        %3839 = vrot.lane.b32.xlu0 %v3548, 120
        %v3840 = vpop.permute.xlu0 %3839
        %3841 = vrot.lane.b32.xlu0 %v3551, 120
        %v3842 = vpop.permute.xlu0 %3841
        %3843 = vrot.lane.b32.xlu0 %v3554, 120
        %v3844 = vpop.permute.xlu0 %3843
        %3845 = vrot.lane.b32.xlu0 %v3557, 120
        %v3846 = vpop.permute.xlu0 %3845
        %3847 = vrot.lane.b32.xlu0 %v3560, 120
        %v3848 = vpop.permute.xlu0 %3847
        %v3849 = vsel %vm1102, %v3832, 0
        %v3851 = vsel %vm1102, %v3834, 0
        %v3853 = vsel %vm1102, %v3836, 0
        %v3855 = vsel %vm1102, %v3838, 0
        %v3857 = vsel %vm1102, %v3840, 0
        %v3859 = vsel %vm1102, %v3842, 0
        %v3861 = vsel %vm1102, %v3844, 0
        %v3863 = vsel %vm1102, %v3846, 0
        %v3865 = vsel %vm1102, %v3848, 0
        %3867 = vmatpush.xpose.msra.mxu0 0.0
        %3868 = vmatpush.xpose.msra.mxu0 0.0
        %3869 = vmatpush.xpose.msra.mxu0 0.0
        %3870 = vmatpush.xpose.msra.mxu0 0.0
        %3871 = vmatpush.xpose.msra.mxu0 0.0
        %3872 = vmatpush.xpose.msra.mxu0 0.0
        %3873 = vmatpush.xpose.msra.mxu0 0.0
        %3874 = vmatpush.xpose.msra.mxu0 0.0
        %3875 = vmatpush.xpose.msra.mxu0 %v3865
        %3876 = vmatpush.xpose.msra.mxu0 %v3863
        %3877 = vmatpush.xpose.msra.mxu0 %v3861
        %3878 = vmatpush.xpose.msra.mxu0 %v3859
        %3879 = vmatpush.xpose.msra.mxu0 %v3857
        %3880 = vmatpush.xpose.msra.mxu0 %v3855
        %3881 = vmatpush.xpose.msra.mxu0 %v3853
        %3882 = vmatpush.xpose.msra.mxu0 %v3851
        %3883 = vmatmul.f32.gmra.mxu0 %v3849
        %v3884 = vpop.f32.mrf.mxu0
        %v3885 = vadd.f32 0.0, %v3884
        %3886 = vdwg.mxu0
        %v3887 = vsel %vm1150, %v3885, -inf
        %3888 = vmax.xlane.f32.xlu0 %v3887
        %v3889 = vpop.xlane.xlu0 %3888
        %v3890 = vsub.f32 %v3885, %v3889
        %v3891 = vmul.f32 %v3890, 1.442695
        %v3892 = vpow.pop %v3891
        %v3893 = vsel %vm1150, %v3892, 0.0
        %3894 = vadd.xlane.f32.xlu0 %v3893
        %v3895 = vpop.xlane.xlu0 %3894
        %v3896 = vrcp.pop %v3895
        %v3897 = vmul.f32 %v3892, %v3896
        %3898 = vrot.lane.b32.xlu0 %v3605, 120
        %v3899 = vpop.permute.xlu0 %3898
        %3900 = vrot.lane.b32.xlu0 %v3608, 120
        %v3901 = vpop.permute.xlu0 %3900
        %3902 = vrot.lane.b32.xlu0 %v3611, 120
        %v3903 = vpop.permute.xlu0 %3902
        %3904 = vrot.lane.b32.xlu0 %v3614, 120
        %v3905 = vpop.permute.xlu0 %3904
        %3906 = vrot.lane.b32.xlu0 %v3617, 120
        %v3907 = vpop.permute.xlu0 %3906
        %3908 = vrot.lane.b32.xlu0 %v3620, 120
        %v3909 = vpop.permute.xlu0 %3908
        %3910 = vrot.lane.b32.xlu0 %v3623, 120
        %v3911 = vpop.permute.xlu0 %3910
        %3912 = vrot.lane.b32.xlu0 %v3626, 120
        %v3913 = vpop.permute.xlu0 %3912
        %v3923 = vsel %vm1150, %v3897, 0
        %3925 = vmatpush.msra.mxu0 0.0
        %3926 = vmatpush.msra.mxu0 0.0
        %3927 = vmatpush.msra.mxu0 0.0
        %3928 = vmatpush.msra.mxu0 0.0
        %3929 = vmatpush.msra.mxu0 0.0
        %3930 = vmatpush.msra.mxu0 0.0
        %3931 = vmatpush.msra.mxu0 0.0
        %3932 = vmatpush.msra.mxu0 0.0
        %3933 = vmatpush.msra.mxu0 %v3913
        %3934 = vmatpush.msra.mxu0 %v3911
        %3935 = vmatpush.msra.mxu0 %v3909
        %3936 = vmatpush.msra.mxu0 %v3907
        %3937 = vmatpush.msra.mxu0 %v3905
        %3938 = vmatpush.msra.mxu0 %v3903
        %3939 = vmatpush.msra.mxu0 %v3901
        %3940 = vmatpush.msra.mxu0 %v3899
        %3941 = vmatmul.f32.gmra.mxu0 %v3923
        %v3942 = vpop.f32.mrf.mxu0
        %v3943 = vadd.f32 0.0, %v3942
        %3944 = vdwg.mxu0
        %3945 = vrot.lane.b32.xlu0 %v3494, 116
        %v3946 = vpop.permute.xlu0 %3945
        %3947 = vrot.lane.b32.xlu0 %v3539, 116
        %v3948 = vpop.permute.xlu0 %3947
        %3949 = vrot.lane.b32.xlu0 %v3542, 116
        %v3950 = vpop.permute.xlu0 %3949
        %3951 = vrot.lane.b32.xlu0 %v3545, 116
        %v3952 = vpop.permute.xlu0 %3951
        %3953 = vrot.lane.b32.xlu0 %v3548, 116
        %v3954 = vpop.permute.xlu0 %3953
        %3955 = vrot.lane.b32.xlu0 %v3551, 116
        %v3956 = vpop.permute.xlu0 %3955
        %3957 = vrot.lane.b32.xlu0 %v3554, 116
        %v3958 = vpop.permute.xlu0 %3957
        %3959 = vrot.lane.b32.xlu0 %v3557, 116
        %v3960 = vpop.permute.xlu0 %3959
        %3961 = vrot.lane.b32.xlu0 %v3560, 116
        %v3962 = vpop.permute.xlu0 %3961
        %v3963 = vsel %vm1102, %v3946, 0
        %v3965 = vsel %vm1102, %v3948, 0
        %v3967 = vsel %vm1102, %v3950, 0
        %v3969 = vsel %vm1102, %v3952, 0
        %v3971 = vsel %vm1102, %v3954, 0
        %v3973 = vsel %vm1102, %v3956, 0
        %v3975 = vsel %vm1102, %v3958, 0
        %v3977 = vsel %vm1102, %v3960, 0
        %v3979 = vsel %vm1102, %v3962, 0
        %3981 = vmatpush.xpose.msra.mxu0 0.0
        %3982 = vmatpush.xpose.msra.mxu0 0.0
        %3983 = vmatpush.xpose.msra.mxu0 0.0
        %3984 = vmatpush.xpose.msra.mxu0 0.0
        %3985 = vmatpush.xpose.msra.mxu0 0.0
        %3986 = vmatpush.xpose.msra.mxu0 0.0
        %3987 = vmatpush.xpose.msra.mxu0 0.0
        %3988 = vmatpush.xpose.msra.mxu0 0.0
        %3989 = vmatpush.xpose.msra.mxu0 %v3979
        %3990 = vmatpush.xpose.msra.mxu0 %v3977
        %3991 = vmatpush.xpose.msra.mxu0 %v3975
        %3992 = vmatpush.xpose.msra.mxu0 %v3973
        %3993 = vmatpush.xpose.msra.mxu0 %v3971
        %3994 = vmatpush.xpose.msra.mxu0 %v3969
        %3995 = vmatpush.xpose.msra.mxu0 %v3967
        %3996 = vmatpush.xpose.msra.mxu0 %v3965
        %3997 = vmatmul.f32.gmra.mxu0 %v3963
        %v3998 = vpop.f32.mrf.mxu0
        %v3999 = vadd.f32 0.0, %v3998
        %4000 = vdwg.mxu0
        %v4001 = vsel %vm1150, %v3999, -inf
        %4002 = vmax.xlane.f32.xlu0 %v4001
        %v4003 = vpop.xlane.xlu0 %4002
        %v4004 = vsub.f32 %v3999, %v4003
        %v4005 = vmul.f32 %v4004, 1.442695
        %v4006 = vpow.pop %v4005
        %v4007 = vsel %vm1150, %v4006, 0.0
        %4008 = vadd.xlane.f32.xlu0 %v4007
        %v4009 = vpop.xlane.xlu0 %4008
        %v4010 = vrcp.pop %v4009
        %v4011 = vmul.f32 %v4006, %v4010
        %4012 = vrot.lane.b32.xlu0 %v3605, 116
        %v4013 = vpop.permute.xlu0 %4012
        %4014 = vrot.lane.b32.xlu0 %v3608, 116
        %v4015 = vpop.permute.xlu0 %4014
        %4016 = vrot.lane.b32.xlu0 %v3611, 116
        %v4017 = vpop.permute.xlu0 %4016
        %4018 = vrot.lane.b32.xlu0 %v3614, 116
        %v4019 = vpop.permute.xlu0 %4018
        %4020 = vrot.lane.b32.xlu0 %v3617, 116
        %v4021 = vpop.permute.xlu0 %4020
        %4022 = vrot.lane.b32.xlu0 %v3620, 116
        %v4023 = vpop.permute.xlu0 %4022
        %4024 = vrot.lane.b32.xlu0 %v3623, 116
        %v4025 = vpop.permute.xlu0 %4024
        %4026 = vrot.lane.b32.xlu0 %v3626, 116
        %v4027 = vpop.permute.xlu0 %4026
        %v4037 = vsel %vm1150, %v4011, 0
        %4039 = vmatpush.msra.mxu0 0.0
        %4040 = vmatpush.msra.mxu0 0.0
        %4041 = vmatpush.msra.mxu0 0.0
        %4042 = vmatpush.msra.mxu0 0.0
        %4043 = vmatpush.msra.mxu0 0.0
        %4044 = vmatpush.msra.mxu0 0.0
        %4045 = vmatpush.msra.mxu0 0.0
        %4046 = vmatpush.msra.mxu0 0.0
        %4047 = vmatpush.msra.mxu0 %v4027
        %4048 = vmatpush.msra.mxu0 %v4025
        %4049 = vmatpush.msra.mxu0 %v4023
        %4050 = vmatpush.msra.mxu0 %v4021
        %4051 = vmatpush.msra.mxu0 %v4019
        %4052 = vmatpush.msra.mxu0 %v4017
        %4053 = vmatpush.msra.mxu0 %v4015
        %4054 = vmatpush.msra.mxu0 %v4013
        %4055 = vmatmul.f32.gmra.mxu0 %v4037
        %v4056 = vpop.f32.mrf.mxu0
        %v4057 = vadd.f32 0.0, %v4056
        %4058 = vdwg.mxu0
        %4060 = vrot.lane.b32.xlu0 %v3829, 4
        %v4061 = vpop.permute.xlu0 %4060
        %4064 = vrot.lane.b32.xlu0 %v3943, 8
        %v4065 = vpop.permute.xlu0 %4064
        %4068 = vrot.lane.b32.xlu0 %v4057, 12
        %v4069 = vpop.permute.xlu0 %4068
        %v4071 = vsel %vm1102, %v3707, %v4061
        %v4072 = vsel %vm606, %v4071, %v4065
        %v4073 = vsel %vm1549, %v4072, %v4069
        %v4074 = vperm.slane %v407, 0
        %v4076 = vsel %vm876, %v4073, 0
        %4078 = vmatpush.msra.mxu0 0.0
        %4079 = vmatpush.msra.mxu0 0.0
        %4080 = vmatpush.msra.mxu0 0.0
        %4081 = vmatpush.msra.mxu0 0.0
        %4082 = vmatpush.msra.mxu0 0.0
        %4083 = vmatpush.msra.mxu0 0.0
        %4084 = vmatpush.msra.mxu0 0.0
        %4085 = vmatpush.msra.mxu0 0.0
        %4086 = vmatpush.msra.mxu0 0.0
        %4087 = vmatpush.msra.mxu0 0.0
        %4088 = vmatpush.msra.mxu0 0.0
        %4089 = vmatpush.msra.mxu0 0.0
        %4090 = vmatpush.msra.mxu0 0.0
        %4091 = vmatpush.msra.mxu0 0.0
        %4092 = vmatpush.msra.mxu0 %v406
        %4093 = vmatpush.msra.mxu0 %v405
        %4094 = vmatmul.f32.gmra.mxu0 %v4076
        %v4095 = vpop.f32.mrf.mxu0
        %v4096 = vadd.f32 %v4074, %v4095
        %4097 = vdwg.mxu0
        %v4098 = vadd.f32 %v3462, %v4096
        %v4099 = vsel %vm540, %v4098, 0.0
        %4100 = vadd.xlane.f32.xlu0 %v4099
        %v4101 = vpop.xlane.xlu0 %4100
        %v4102 = vmul.f32 %v4101, %v913
        %v4103 = vsub.f32 %v4098, %v4102
        %v4104 = vmul.f32 %v4103, %v4103
        %v4105 = vsel %vm540, %v4104, 0.0
        %4106 = vadd.xlane.f32.xlu0 %v4105
        %v4107 = vpop.xlane.xlu0 %4106
        %v4108 = vmul.f32 %v4107, %v913
        %v4109 = vadd.f32 %v4108, 1e-05
        %v4110 = vrsqrt.pop %v4109
        %v4111 = vmul.f32 %v4110, %v4109
        %v4112 = vmul.f32 %v4111, %v4110
        %v4113 = vmul.f32 0.5, %v4112
        %v4114 = vsub.f32 1.5, %v4113
        %v4115 = vmul.f32 %v4110, %v4114
        %vm4116 = vweird.f32 %v4109
        %vm4117 = vweird.f32 %v4110
        %vm4118 = vmor %vm4116, %vm4117
        %v4119 = vsel %vm4118, %v4110, %v4115
        %v4120 = vmul.f32 %v4103, %v4119
        %v4121 = vperm.slane %v408, 0
        %v4122 = vmul.f32 %v4120, %v4121
        %v4123 = vperm.slane %v409, 0
        %v4124 = vadd.f32 %v4122, %v4123
        %v4125 = vperm.slane %v414, 0
        %v4127 = vsel %vm540, %v4124, 0
        %4129 = vmatpush.msra.mxu0 0.0
        %4130 = vmatpush.msra.mxu0 0.0
        %4131 = vmatpush.msra.mxu0 0.0
        %4132 = vmatpush.msra.mxu0 0.0
        %4133 = vmatpush.msra.mxu0 0.0
        %4134 = vmatpush.msra.mxu0 0.0
        %4135 = vmatpush.msra.mxu0 0.0
        %4136 = vmatpush.msra.mxu0 0.0
        %4137 = vmatpush.msra.mxu0 0.0
        %4138 = vmatpush.msra.mxu0 0.0
        %4139 = vmatpush.msra.mxu0 0.0
        %4140 = vmatpush.msra.mxu0 0.0
        %4141 = vmatpush.msra.mxu0 %v413
        %4142 = vmatpush.msra.mxu0 %v412
        %4143 = vmatpush.msra.mxu0 %v411
        %4144 = vmatpush.msra.mxu0 %v410
        %4145 = vmatmul.f32.gmra.mxu0 %v4127
        %v4146 = vpop.f32.mrf.mxu0
        %v4147 = vadd.f32 %v4125, %v4146
        %4148 = vdwg.mxu0
        %v4149 = vmax.f32 %v4147, 0.0
        %v4150 = vperm.slane %v423, 0
        %v4152 = vsel %vm1150, %v4149, 0
        %4154 = vmatpush.msra.mxu0 0.0
        %4155 = vmatpush.msra.mxu0 0.0
        %4156 = vmatpush.msra.mxu0 0.0
        %4157 = vmatpush.msra.mxu0 0.0
        %4158 = vmatpush.msra.mxu0 0.0
        %4159 = vmatpush.msra.mxu0 0.0
        %4160 = vmatpush.msra.mxu0 0.0
        %4161 = vmatpush.msra.mxu0 0.0
        %4162 = vmatpush.msra.mxu0 %v422
        %4163 = vmatpush.msra.mxu0 %v421
        %4164 = vmatpush.msra.mxu0 %v420
        %4165 = vmatpush.msra.mxu0 %v419
        %4166 = vmatpush.msra.mxu0 %v418
        %4167 = vmatpush.msra.mxu0 %v417
        %4168 = vmatpush.msra.mxu0 %v416
        %4169 = vmatpush.msra.mxu0 %v415
        %4170 = vmatmul.f32.gmra.mxu0 %v4152
        %v4171 = vpop.f32.mrf.mxu0
        %v4172 = vadd.f32 %v4150, %v4171
        %4173 = vdwg.mxu0
        %v4174 = vadd.f32 %v4124, %v4172
        %v4175 = vsel %vm540, %v4174, 0.0
        %4176 = vadd.xlane.f32.xlu0 %v4175
        %v4177 = vpop.xlane.xlu0 %4176
        %v4178 = vmul.f32 %v4177, %v913
        %v4179 = vsub.f32 %v4174, %v4178
        %v4180 = vmul.f32 %v4179, %v4179
        %v4181 = vsel %vm540, %v4180, 0.0
        %4182 = vadd.xlane.f32.xlu0 %v4181
        %v4183 = vpop.xlane.xlu0 %4182
        %v4184 = vmul.f32 %v4183, %v913
        %v4185 = vadd.f32 %v4184, 1e-05
        %v4186 = vrsqrt.pop %v4185
        %v4187 = vmul.f32 %v4186, %v4185
        %v4188 = vmul.f32 %v4187, %v4186
        %v4189 = vmul.f32 0.5, %v4188
        %v4190 = vsub.f32 1.5, %v4189
        %v4191 = vmul.f32 %v4186, %v4190
        %vm4192 = vweird.f32 %v4185
        %vm4193 = vweird.f32 %v4186
        %vm4194 = vmor %vm4192, %vm4193
        %v4195 = vsel %vm4194, %v4186, %v4191
        %v4196 = vmul.f32 %v4179, %v4195
        %v4197 = vperm.slane %v424, 0
        %v4198 = vmul.f32 %v4196, %v4197
        %v4199 = vperm.slane %v425, 0
        %v4200 = vadd.f32 %v4198, %v4199
        %v4201 = vadd.f32 %v4200, %v466
        %v4202 = vperm.slane %v432, 0
        %4203 = vmatpush.msra.mxu0 0.0
        %4204 = vmatpush.msra.mxu0 0.0
        %4205 = vmatpush.msra.mxu0 0.0
        %4206 = vmatpush.msra.mxu0 0.0
        %4207 = vmatpush.msra.mxu0 0.0
        %4208 = vmatpush.msra.mxu0 0.0
        %4209 = vmatpush.msra.mxu0 0.0
        %4210 = vmatpush.msra.mxu0 0.0
        %4211 = vmatpush.msra.mxu0 0.0
        %4212 = vmatpush.msra.mxu0 0.0
        %4213 = vmatpush.msra.mxu0 0.0
        %4214 = vmatpush.msra.mxu0 0.0
        %4215 = vmatpush.msra.mxu0 %v431
        %4216 = vmatpush.msra.mxu0 %v430
        %4217 = vmatpush.msra.mxu0 %v429
        %4218 = vmatpush.msra.mxu0 %v428
        %4219 = vmatmul.f32.gmra.mxu0 %v3498
        %v4220 = vpop.f32.mrf.mxu0
        %v4221 = vadd.f32 %v4202, %v4220
        %4222 = vmatmul.f32.gmra.mxu0 %v3501
        %v4223 = vpop.f32.mrf.mxu0
        %v4224 = vadd.f32 %v4202, %v4223
        %4225 = vmatmul.f32.gmra.mxu0 %v3504
        %v4226 = vpop.f32.mrf.mxu0
        %v4227 = vadd.f32 %v4202, %v4226
        %4228 = vmatmul.f32.gmra.mxu0 %v3507
        %v4229 = vpop.f32.mrf.mxu0
        %v4230 = vadd.f32 %v4202, %v4229
        %4231 = vmatmul.f32.gmra.mxu0 %v3510
        %v4232 = vpop.f32.mrf.mxu0
        %v4233 = vadd.f32 %v4202, %v4232
        %4234 = vmatmul.f32.gmra.mxu0 %v3513
        %v4235 = vpop.f32.mrf.mxu0
        %v4236 = vadd.f32 %v4202, %v4235
        %4237 = vmatmul.f32.gmra.mxu0 %v3516
        %v4238 = vpop.f32.mrf.mxu0
        %v4239 = vadd.f32 %v4202, %v4238
        %4240 = vmatmul.f32.gmra.mxu0 %v3519
        %v4241 = vpop.f32.mrf.mxu0
        %v4242 = vadd.f32 %v4202, %v4241
        %4243 = vdwg.mxu0
        %v4244 = vperm.slane %v437, 0
        %v4246 = vsel %vm540, %v4201, 0
        %4248 = vmatpush.msra.mxu0 0.0
        %4249 = vmatpush.msra.mxu0 0.0
        %4250 = vmatpush.msra.mxu0 0.0
        %4251 = vmatpush.msra.mxu0 0.0
        %4252 = vmatpush.msra.mxu0 0.0
        %4253 = vmatpush.msra.mxu0 0.0
        %4254 = vmatpush.msra.mxu0 0.0
        %4255 = vmatpush.msra.mxu0 0.0
        %4256 = vmatpush.msra.mxu0 0.0
        %4257 = vmatpush.msra.mxu0 0.0
        %4258 = vmatpush.msra.mxu0 0.0
        %4259 = vmatpush.msra.mxu0 0.0
        %4260 = vmatpush.msra.mxu0 %v436
        %4261 = vmatpush.msra.mxu0 %v435
        %4262 = vmatpush.msra.mxu0 %v434
        %4263 = vmatpush.msra.mxu0 %v433
        %4264 = vmatmul.f32.gmra.mxu0 %v4246
        %v4265 = vpop.f32.mrf.mxu0
        %v4266 = vadd.f32 %v4244, %v4265
        %4267 = vdwg.mxu0
        %v4268 = vperm.slane %v442, 0
        %v4270 = vsel %vm540, %v4200, 0
        %4272 = vmatpush.msra.mxu0 0.0
        %4273 = vmatpush.msra.mxu0 0.0
        %4274 = vmatpush.msra.mxu0 0.0
        %4275 = vmatpush.msra.mxu0 0.0
        %4276 = vmatpush.msra.mxu0 0.0
        %4277 = vmatpush.msra.mxu0 0.0
        %4278 = vmatpush.msra.mxu0 0.0
        %4279 = vmatpush.msra.mxu0 0.0
        %4280 = vmatpush.msra.mxu0 0.0
        %4281 = vmatpush.msra.mxu0 0.0
        %4282 = vmatpush.msra.mxu0 0.0
        %4283 = vmatpush.msra.mxu0 0.0
        %4284 = vmatpush.msra.mxu0 %v441
        %4285 = vmatpush.msra.mxu0 %v440
        %4286 = vmatpush.msra.mxu0 %v439
        %4287 = vmatpush.msra.mxu0 %v438
        %4288 = vmatmul.f32.gmra.mxu0 %v4270
        %v4289 = vpop.f32.mrf.mxu0
        %v4290 = vadd.f32 %v4268, %v4289
        %4291 = vdwg.mxu0
        %v4293 = vsel %vm1102, %v4221, 0
        %v4296 = vsel %vm1102, %v4224, 0
        %v4299 = vsel %vm1102, %v4227, 0
        %v4302 = vsel %vm1102, %v4230, 0
        %v4305 = vsel %vm1102, %v4233, 0
        %v4308 = vsel %vm1102, %v4236, 0
        %v4311 = vsel %vm1102, %v4239, 0
        %v4314 = vsel %vm1102, %v4242, 0
        %v4317 = vsel %vm1102, %v4266, 0
        %4319 = vmatpush.xpose.msra.mxu0 0.0
        %4320 = vmatpush.xpose.msra.mxu0 0.0
        %4321 = vmatpush.xpose.msra.mxu0 0.0
        %4322 = vmatpush.xpose.msra.mxu0 0.0
        %4323 = vmatpush.xpose.msra.mxu0 0.0
        %4324 = vmatpush.xpose.msra.mxu0 0.0
        %4325 = vmatpush.xpose.msra.mxu0 0.0
        %4326 = vmatpush.xpose.msra.mxu0 0.0
        %4327 = vmatpush.xpose.msra.mxu0 0.0
        %4328 = vmatpush.xpose.msra.mxu0 0.0
        %4329 = vmatpush.xpose.msra.mxu0 0.0
        %4330 = vmatpush.xpose.msra.mxu0 0.0
        %4331 = vmatpush.xpose.msra.mxu0 0.0
        %4332 = vmatpush.xpose.msra.mxu0 0.0
        %4333 = vmatpush.xpose.msra.mxu0 0.0
        %4334 = vmatpush.xpose.msra.mxu0 %v4317
        %4335 = vmatmul.f32.gmra.mxu0 %v4293
        %v4336 = vpop.f32.mrf.mxu0
        %v4337 = vadd.f32 0.0, %v4336
        %4338 = vmatmul.f32.gmra.mxu0 %v4296
        %v4339 = vpop.f32.mrf.mxu0
        %v4340 = vadd.f32 0.0, %v4339
        %4341 = vmatmul.f32.gmra.mxu0 %v4299
        %v4342 = vpop.f32.mrf.mxu0
        %v4343 = vadd.f32 0.0, %v4342
        %4344 = vmatmul.f32.gmra.mxu0 %v4302
        %v4345 = vpop.f32.mrf.mxu0
        %v4346 = vadd.f32 0.0, %v4345
        %4347 = vmatmul.f32.gmra.mxu0 %v4305
        %v4348 = vpop.f32.mrf.mxu0
        %v4349 = vadd.f32 0.0, %v4348
        %4350 = vmatmul.f32.gmra.mxu0 %v4308
        %v4351 = vpop.f32.mrf.mxu0
        %v4352 = vadd.f32 0.0, %v4351
        %4353 = vmatmul.f32.gmra.mxu0 %v4311
        %v4354 = vpop.f32.mrf.mxu0
        %v4355 = vadd.f32 0.0, %v4354
        %4356 = vmatmul.f32.gmra.mxu0 %v4314
        %v4357 = vpop.f32.mrf.mxu0
        %v4358 = vadd.f32 0.0, %v4357
        %4359 = vdwg.mxu0
        %v4360 = vsel %vm606, %v4337, -inf
        %4361 = vmax.xlane.f32.xlu0 %v4360
        %v4362 = vpop.xlane.xlu0 %4361
        %v4363 = vsel %vm606, %v4340, -inf
        %4364 = vmax.xlane.f32.xlu0 %v4363
        %v4365 = vpop.xlane.xlu0 %4364
        %v4366 = vsel %vm606, %v4343, -inf
        %4367 = vmax.xlane.f32.xlu0 %v4366
        %v4368 = vpop.xlane.xlu0 %4367
        %v4369 = vsel %vm606, %v4346, -inf
        %4370 = vmax.xlane.f32.xlu0 %v4369
        %v4371 = vpop.xlane.xlu0 %4370
        %v4372 = vsel %vm606, %v4349, -inf
        %4373 = vmax.xlane.f32.xlu0 %v4372
        %v4374 = vpop.xlane.xlu0 %4373
        %v4375 = vsel %vm606, %v4352, -inf
        %4376 = vmax.xlane.f32.xlu0 %v4375
        %v4377 = vpop.xlane.xlu0 %4376
        %v4378 = vsel %vm606, %v4355, -inf
        %4379 = vmax.xlane.f32.xlu0 %v4378
        %v4380 = vpop.xlane.xlu0 %4379
        %v4381 = vsel %vm606, %v4358, -inf
        %4382 = vmax.xlane.f32.xlu0 %v4381
        %v4383 = vpop.xlane.xlu0 %4382
        %v4384 = vsub.f32 %v4337, %v4362
        %v4385 = vsub.f32 %v4340, %v4365
        %v4386 = vsub.f32 %v4343, %v4368
        %v4387 = vsub.f32 %v4346, %v4371
        %v4388 = vsub.f32 %v4349, %v4374
        %v4389 = vsub.f32 %v4352, %v4377
        %v4390 = vsub.f32 %v4355, %v4380
        %v4391 = vsub.f32 %v4358, %v4383
        %v4392 = vmul.f32 %v4384, 1.442695
        %v4393 = vpow.pop %v4392
        %v4394 = vmul.f32 %v4385, 1.442695
        %v4395 = vpow.pop %v4394
        %v4396 = vmul.f32 %v4386, 1.442695
        %v4397 = vpow.pop %v4396
        %v4398 = vmul.f32 %v4387, 1.442695
        %v4399 = vpow.pop %v4398
        %v4400 = vmul.f32 %v4388, 1.442695
        %v4401 = vpow.pop %v4400
        %v4402 = vmul.f32 %v4389, 1.442695
        %v4403 = vpow.pop %v4402
        %v4404 = vmul.f32 %v4390, 1.442695
        %v4405 = vpow.pop %v4404
        %v4406 = vmul.f32 %v4391, 1.442695
        %v4407 = vpow.pop %v4406
        %v4408 = vsel %vm606, %v4393, 0.0
        %4409 = vadd.xlane.f32.xlu0 %v4408
        %v4410 = vpop.xlane.xlu0 %4409
        %v4411 = vsel %vm606, %v4395, 0.0
        %4412 = vadd.xlane.f32.xlu0 %v4411
        %v4413 = vpop.xlane.xlu0 %4412
        %v4414 = vsel %vm606, %v4397, 0.0
        %4415 = vadd.xlane.f32.xlu0 %v4414
        %v4416 = vpop.xlane.xlu0 %4415
        %v4417 = vsel %vm606, %v4399, 0.0
        %4418 = vadd.xlane.f32.xlu0 %v4417
        %v4419 = vpop.xlane.xlu0 %4418
        %v4420 = vsel %vm606, %v4401, 0.0
        %4421 = vadd.xlane.f32.xlu0 %v4420
        %v4422 = vpop.xlane.xlu0 %4421
        %v4423 = vsel %vm606, %v4403, 0.0
        %4424 = vadd.xlane.f32.xlu0 %v4423
        %v4425 = vpop.xlane.xlu0 %4424
        %v4426 = vsel %vm606, %v4405, 0.0
        %4427 = vadd.xlane.f32.xlu0 %v4426
        %v4428 = vpop.xlane.xlu0 %4427
        %v4429 = vsel %vm606, %v4407, 0.0
        %4430 = vadd.xlane.f32.xlu0 %v4429
        %v4431 = vpop.xlane.xlu0 %4430
        %v4432 = vrcp.pop %v4410
        %v4433 = vrcp.pop %v4413
        %v4434 = vrcp.pop %v4416
        %v4435 = vrcp.pop %v4419
        %v4436 = vrcp.pop %v4422
        %v4437 = vrcp.pop %v4425
        %v4438 = vrcp.pop %v4428
        %v4439 = vrcp.pop %v4431
        %v4440 = vmul.f32 %v4393, %v4432
        %v4441 = vmul.f32 %v4395, %v4433
        %v4442 = vmul.f32 %v4397, %v4434
        %v4443 = vmul.f32 %v4399, %v4435
        %v4444 = vmul.f32 %v4401, %v4436
        %v4445 = vmul.f32 %v4403, %v4437
        %v4446 = vmul.f32 %v4405, %v4438
        %v4447 = vmul.f32 %v4407, %v4439
        %v4449 = vsel %vm606, %v4440, 0
        %v4452 = vsel %vm606, %v4441, 0
        %v4455 = vsel %vm606, %v4442, 0
        %v4458 = vsel %vm606, %v4443, 0
        %v4461 = vsel %vm606, %v4444, 0
        %v4464 = vsel %vm606, %v4445, 0
        %v4467 = vsel %vm606, %v4446, 0
        %v4470 = vsel %vm606, %v4447, 0
        %4472 = vmatpush.msra.mxu0 0.0
        %4473 = vmatpush.msra.mxu0 0.0
        %4474 = vmatpush.msra.mxu0 0.0
        %4475 = vmatpush.msra.mxu0 0.0
        %4476 = vmatpush.msra.mxu0 0.0
        %4477 = vmatpush.msra.mxu0 0.0
        %4478 = vmatpush.msra.mxu0 0.0
        %4479 = vmatpush.msra.mxu0 0.0
        %4480 = vmatpush.msra.mxu0 0.0
        %4481 = vmatpush.msra.mxu0 0.0
        %4482 = vmatpush.msra.mxu0 0.0
        %4483 = vmatpush.msra.mxu0 0.0
        %4484 = vmatpush.msra.mxu0 0.0
        %4485 = vmatpush.msra.mxu0 0.0
        %4486 = vmatpush.msra.mxu0 0.0
        %4487 = vmatpush.msra.mxu0 %v4290
        %4488 = vmatmul.f32.gmra.mxu0 %v4449
        %v4489 = vpop.f32.mrf.mxu0
        %v4490 = vadd.f32 0.0, %v4489
        %4491 = vmatmul.f32.gmra.mxu0 %v4452
        %v4492 = vpop.f32.mrf.mxu0
        %v4493 = vadd.f32 0.0, %v4492
        %4494 = vmatmul.f32.gmra.mxu0 %v4455
        %v4495 = vpop.f32.mrf.mxu0
        %v4496 = vadd.f32 0.0, %v4495
        %4497 = vmatmul.f32.gmra.mxu0 %v4458
        %v4498 = vpop.f32.mrf.mxu0
        %v4499 = vadd.f32 0.0, %v4498
        %4500 = vmatmul.f32.gmra.mxu0 %v4461
        %v4501 = vpop.f32.mrf.mxu0
        %v4502 = vadd.f32 0.0, %v4501
        %4503 = vmatmul.f32.gmra.mxu0 %v4464
        %v4504 = vpop.f32.mrf.mxu0
        %v4505 = vadd.f32 0.0, %v4504
        %4506 = vmatmul.f32.gmra.mxu0 %v4467
        %v4507 = vpop.f32.mrf.mxu0
        %v4508 = vadd.f32 0.0, %v4507
        %4509 = vmatmul.f32.gmra.mxu0 %v4470
        %v4510 = vpop.f32.mrf.mxu0
        %v4511 = vadd.f32 0.0, %v4510
        %4512 = vdwg.mxu0
        %4513 = vrot.lane.b32.xlu0 %v4221, 124
        %v4514 = vpop.permute.xlu0 %4513
        %4515 = vrot.lane.b32.xlu0 %v4224, 124
        %v4516 = vpop.permute.xlu0 %4515
        %4517 = vrot.lane.b32.xlu0 %v4227, 124
        %v4518 = vpop.permute.xlu0 %4517
        %4519 = vrot.lane.b32.xlu0 %v4230, 124
        %v4520 = vpop.permute.xlu0 %4519
        %4521 = vrot.lane.b32.xlu0 %v4233, 124
        %v4522 = vpop.permute.xlu0 %4521
        %4523 = vrot.lane.b32.xlu0 %v4236, 124
        %v4524 = vpop.permute.xlu0 %4523
        %4525 = vrot.lane.b32.xlu0 %v4239, 124
        %v4526 = vpop.permute.xlu0 %4525
        %4527 = vrot.lane.b32.xlu0 %v4242, 124
        %v4528 = vpop.permute.xlu0 %4527
        %4529 = vrot.lane.b32.xlu0 %v4266, 124
        %v4530 = vpop.permute.xlu0 %4529
        %v4531 = vsel %vm1102, %v4514, 0
        %v4533 = vsel %vm1102, %v4516, 0
        %v4535 = vsel %vm1102, %v4518, 0
        %v4537 = vsel %vm1102, %v4520, 0
        %v4539 = vsel %vm1102, %v4522, 0
        %v4541 = vsel %vm1102, %v4524, 0
        %v4543 = vsel %vm1102, %v4526, 0
        %v4545 = vsel %vm1102, %v4528, 0
        %v4547 = vsel %vm1102, %v4530, 0
        %4549 = vmatpush.xpose.msra.mxu0 0.0
        %4550 = vmatpush.xpose.msra.mxu0 0.0
        %4551 = vmatpush.xpose.msra.mxu0 0.0
        %4552 = vmatpush.xpose.msra.mxu0 0.0
        %4553 = vmatpush.xpose.msra.mxu0 0.0
        %4554 = vmatpush.xpose.msra.mxu0 0.0
        %4555 = vmatpush.xpose.msra.mxu0 0.0
        %4556 = vmatpush.xpose.msra.mxu0 0.0
        %4557 = vmatpush.xpose.msra.mxu0 0.0
        %4558 = vmatpush.xpose.msra.mxu0 0.0
        %4559 = vmatpush.xpose.msra.mxu0 0.0
        %4560 = vmatpush.xpose.msra.mxu0 0.0
        %4561 = vmatpush.xpose.msra.mxu0 0.0
        %4562 = vmatpush.xpose.msra.mxu0 0.0
        %4563 = vmatpush.xpose.msra.mxu0 0.0
        %4564 = vmatpush.xpose.msra.mxu0 %v4547
        %4565 = vmatmul.f32.gmra.mxu0 %v4531
        %v4566 = vpop.f32.mrf.mxu0
        %v4567 = vadd.f32 0.0, %v4566
        %4568 = vmatmul.f32.gmra.mxu0 %v4533
        %v4569 = vpop.f32.mrf.mxu0
        %v4570 = vadd.f32 0.0, %v4569
        %4571 = vmatmul.f32.gmra.mxu0 %v4535
        %v4572 = vpop.f32.mrf.mxu0
        %v4573 = vadd.f32 0.0, %v4572
        %4574 = vmatmul.f32.gmra.mxu0 %v4537
        %v4575 = vpop.f32.mrf.mxu0
        %v4576 = vadd.f32 0.0, %v4575
        %4577 = vmatmul.f32.gmra.mxu0 %v4539
        %v4578 = vpop.f32.mrf.mxu0
        %v4579 = vadd.f32 0.0, %v4578
        %4580 = vmatmul.f32.gmra.mxu0 %v4541
        %v4581 = vpop.f32.mrf.mxu0
        %v4582 = vadd.f32 0.0, %v4581
        %4583 = vmatmul.f32.gmra.mxu0 %v4543
        %v4584 = vpop.f32.mrf.mxu0
        %v4585 = vadd.f32 0.0, %v4584
        %4586 = vmatmul.f32.gmra.mxu0 %v4545
        %v4587 = vpop.f32.mrf.mxu0
        %v4588 = vadd.f32 0.0, %v4587
        %4589 = vdwg.mxu0
        %v4590 = vsel %vm606, %v4567, -inf
        %4591 = vmax.xlane.f32.xlu0 %v4590
        %v4592 = vpop.xlane.xlu0 %4591
        %v4593 = vsel %vm606, %v4570, -inf
        %4594 = vmax.xlane.f32.xlu0 %v4593
        %v4595 = vpop.xlane.xlu0 %4594
        %v4596 = vsel %vm606, %v4573, -inf
        %4597 = vmax.xlane.f32.xlu0 %v4596
        %v4598 = vpop.xlane.xlu0 %4597
        %v4599 = vsel %vm606, %v4576, -inf
        %4600 = vmax.xlane.f32.xlu0 %v4599
        %v4601 = vpop.xlane.xlu0 %4600
        %v4602 = vsel %vm606, %v4579, -inf
        %4603 = vmax.xlane.f32.xlu0 %v4602
        %v4604 = vpop.xlane.xlu0 %4603
        %v4605 = vsel %vm606, %v4582, -inf
        %4606 = vmax.xlane.f32.xlu0 %v4605
        %v4607 = vpop.xlane.xlu0 %4606
        %v4608 = vsel %vm606, %v4585, -inf
        %4609 = vmax.xlane.f32.xlu0 %v4608
        %v4610 = vpop.xlane.xlu0 %4609
        %v4611 = vsel %vm606, %v4588, -inf
        %4612 = vmax.xlane.f32.xlu0 %v4611
        %v4613 = vpop.xlane.xlu0 %4612
        %v4614 = vsub.f32 %v4567, %v4592
        %v4615 = vsub.f32 %v4570, %v4595
        %v4616 = vsub.f32 %v4573, %v4598
        %v4617 = vsub.f32 %v4576, %v4601
        %v4618 = vsub.f32 %v4579, %v4604
        %v4619 = vsub.f32 %v4582, %v4607
        %v4620 = vsub.f32 %v4585, %v4610
        %v4621 = vsub.f32 %v4588, %v4613
        %v4622 = vmul.f32 %v4614, 1.442695
        %v4623 = vpow.pop %v4622
        %v4624 = vmul.f32 %v4615, 1.442695
        %v4625 = vpow.pop %v4624
        %v4626 = vmul.f32 %v4616, 1.442695
        %v4627 = vpow.pop %v4626
        %v4628 = vmul.f32 %v4617, 1.442695
        %v4629 = vpow.pop %v4628
        %v4630 = vmul.f32 %v4618, 1.442695
        %v4631 = vpow.pop %v4630
        %v4632 = vmul.f32 %v4619, 1.442695
        %v4633 = vpow.pop %v4632
        %v4634 = vmul.f32 %v4620, 1.442695
        %v4635 = vpow.pop %v4634
        %v4636 = vmul.f32 %v4621, 1.442695
        %v4637 = vpow.pop %v4636
        %v4638 = vsel %vm606, %v4623, 0.0
        %4639 = vadd.xlane.f32.xlu0 %v4638
        %v4640 = vpop.xlane.xlu0 %4639
        %v4641 = vsel %vm606, %v4625, 0.0
        %4642 = vadd.xlane.f32.xlu0 %v4641
        %v4643 = vpop.xlane.xlu0 %4642
        %v4644 = vsel %vm606, %v4627, 0.0
        %4645 = vadd.xlane.f32.xlu0 %v4644
        %v4646 = vpop.xlane.xlu0 %4645
        %v4647 = vsel %vm606, %v4629, 0.0
        %4648 = vadd.xlane.f32.xlu0 %v4647
        %v4649 = vpop.xlane.xlu0 %4648
        %v4650 = vsel %vm606, %v4631, 0.0
        %4651 = vadd.xlane.f32.xlu0 %v4650
        %v4652 = vpop.xlane.xlu0 %4651
        %v4653 = vsel %vm606, %v4633, 0.0
        %4654 = vadd.xlane.f32.xlu0 %v4653
        %v4655 = vpop.xlane.xlu0 %4654
        %v4656 = vsel %vm606, %v4635, 0.0
        %4657 = vadd.xlane.f32.xlu0 %v4656
        %v4658 = vpop.xlane.xlu0 %4657
        %v4659 = vsel %vm606, %v4637, 0.0
        %4660 = vadd.xlane.f32.xlu0 %v4659
        %v4661 = vpop.xlane.xlu0 %4660
        %v4662 = vrcp.pop %v4640
        %v4663 = vrcp.pop %v4643
        %v4664 = vrcp.pop %v4646
        %v4665 = vrcp.pop %v4649
        %v4666 = vrcp.pop %v4652
        %v4667 = vrcp.pop %v4655
        %v4668 = vrcp.pop %v4658
        %v4669 = vrcp.pop %v4661
        %v4670 = vmul.f32 %v4623, %v4662
        %v4671 = vmul.f32 %v4625, %v4663
        %v4672 = vmul.f32 %v4627, %v4664
        %v4673 = vmul.f32 %v4629, %v4665
        %v4674 = vmul.f32 %v4631, %v4666
        %v4675 = vmul.f32 %v4633, %v4667
        %v4676 = vmul.f32 %v4635, %v4668
        %v4677 = vmul.f32 %v4637, %v4669
        %4679 = vrot.lane.b32.xlu0 %v4290, 124
        %v4680 = vpop.permute.xlu0 %4679
        %v4683 = vsel %vm606, %v4670, 0
        %v4686 = vsel %vm606, %v4671, 0
        %v4689 = vsel %vm606, %v4672, 0
        %v4692 = vsel %vm606, %v4673, 0
        %v4695 = vsel %vm606, %v4674, 0
        %v4698 = vsel %vm606, %v4675, 0
        %v4701 = vsel %vm606, %v4676, 0
        %v4704 = vsel %vm606, %v4677, 0
        %4706 = vmatpush.msra.mxu0 0.0
        %4707 = vmatpush.msra.mxu0 0.0
        %4708 = vmatpush.msra.mxu0 0.0
        %4709 = vmatpush.msra.mxu0 0.0
        %4710 = vmatpush.msra.mxu0 0.0
        %4711 = vmatpush.msra.mxu0 0.0
        %4712 = vmatpush.msra.mxu0 0.0
        %4713 = vmatpush.msra.mxu0 0.0
        %4714 = vmatpush.msra.mxu0 0.0
        %4715 = vmatpush.msra.mxu0 0.0
        %4716 = vmatpush.msra.mxu0 0.0
        %4717 = vmatpush.msra.mxu0 0.0
        %4718 = vmatpush.msra.mxu0 0.0
        %4719 = vmatpush.msra.mxu0 0.0
        %4720 = vmatpush.msra.mxu0 0.0
        %4721 = vmatpush.msra.mxu0 %v4680
        %4722 = vmatmul.f32.gmra.mxu0 %v4683
        %v4723 = vpop.f32.mrf.mxu0
        %v4724 = vadd.f32 0.0, %v4723
        %4725 = vmatmul.f32.gmra.mxu0 %v4686
        %v4726 = vpop.f32.mrf.mxu0
        %v4727 = vadd.f32 0.0, %v4726
        %4728 = vmatmul.f32.gmra.mxu0 %v4689
        %v4729 = vpop.f32.mrf.mxu0
        %v4730 = vadd.f32 0.0, %v4729
        %4731 = vmatmul.f32.gmra.mxu0 %v4692
        %v4732 = vpop.f32.mrf.mxu0
        %v4733 = vadd.f32 0.0, %v4732
        %4734 = vmatmul.f32.gmra.mxu0 %v4695
        %v4735 = vpop.f32.mrf.mxu0
        %v4736 = vadd.f32 0.0, %v4735
        %4737 = vmatmul.f32.gmra.mxu0 %v4698
        %v4738 = vpop.f32.mrf.mxu0
        %v4739 = vadd.f32 0.0, %v4738
        %4740 = vmatmul.f32.gmra.mxu0 %v4701
        %v4741 = vpop.f32.mrf.mxu0
        %v4742 = vadd.f32 0.0, %v4741
        %4743 = vmatmul.f32.gmra.mxu0 %v4704
        %v4744 = vpop.f32.mrf.mxu0
        %v4745 = vadd.f32 0.0, %v4744
        %4746 = vdwg.mxu0
        %4747 = vrot.lane.b32.xlu0 %v4221, 120
        %v4748 = vpop.permute.xlu0 %4747
        %4749 = vrot.lane.b32.xlu0 %v4224, 120
        %v4750 = vpop.permute.xlu0 %4749
        %4751 = vrot.lane.b32.xlu0 %v4227, 120
        %v4752 = vpop.permute.xlu0 %4751
        %4753 = vrot.lane.b32.xlu0 %v4230, 120
        %v4754 = vpop.permute.xlu0 %4753
        %4755 = vrot.lane.b32.xlu0 %v4233, 120
        %v4756 = vpop.permute.xlu0 %4755
        %4757 = vrot.lane.b32.xlu0 %v4236, 120
        %v4758 = vpop.permute.xlu0 %4757
        %4759 = vrot.lane.b32.xlu0 %v4239, 120
        %v4760 = vpop.permute.xlu0 %4759
        %4761 = vrot.lane.b32.xlu0 %v4242, 120
        %v4762 = vpop.permute.xlu0 %4761
        %4763 = vrot.lane.b32.xlu0 %v4266, 120
        %v4764 = vpop.permute.xlu0 %4763
        %v4765 = vsel %vm1102, %v4748, 0
        %v4767 = vsel %vm1102, %v4750, 0
        %v4769 = vsel %vm1102, %v4752, 0
        %v4771 = vsel %vm1102, %v4754, 0
        %v4773 = vsel %vm1102, %v4756, 0
        %v4775 = vsel %vm1102, %v4758, 0
        %v4777 = vsel %vm1102, %v4760, 0
        %v4779 = vsel %vm1102, %v4762, 0
        %v4781 = vsel %vm1102, %v4764, 0
        %4783 = vmatpush.xpose.msra.mxu0 0.0
        %4784 = vmatpush.xpose.msra.mxu0 0.0
        %4785 = vmatpush.xpose.msra.mxu0 0.0
        %4786 = vmatpush.xpose.msra.mxu0 0.0
        %4787 = vmatpush.xpose.msra.mxu0 0.0
        %4788 = vmatpush.xpose.msra.mxu0 0.0
        %4789 = vmatpush.xpose.msra.mxu0 0.0
        %4790 = vmatpush.xpose.msra.mxu0 0.0
        %4791 = vmatpush.xpose.msra.mxu0 0.0
        %4792 = vmatpush.xpose.msra.mxu0 0.0
        %4793 = vmatpush.xpose.msra.mxu0 0.0
        %4794 = vmatpush.xpose.msra.mxu0 0.0
        %4795 = vmatpush.xpose.msra.mxu0 0.0
        %4796 = vmatpush.xpose.msra.mxu0 0.0
        %4797 = vmatpush.xpose.msra.mxu0 0.0
        %4798 = vmatpush.xpose.msra.mxu0 %v4781
        %4799 = vmatmul.f32.gmra.mxu0 %v4765
        %v4800 = vpop.f32.mrf.mxu0
        %v4801 = vadd.f32 0.0, %v4800
        %4802 = vmatmul.f32.gmra.mxu0 %v4767
        %v4803 = vpop.f32.mrf.mxu0
        %v4804 = vadd.f32 0.0, %v4803
        %4805 = vmatmul.f32.gmra.mxu0 %v4769
        %v4806 = vpop.f32.mrf.mxu0
        %v4807 = vadd.f32 0.0, %v4806
        %4808 = vmatmul.f32.gmra.mxu0 %v4771
        %v4809 = vpop.f32.mrf.mxu0
        %v4810 = vadd.f32 0.0, %v4809
        %4811 = vmatmul.f32.gmra.mxu0 %v4773
        %v4812 = vpop.f32.mrf.mxu0
        %v4813 = vadd.f32 0.0, %v4812
        %4814 = vmatmul.f32.gmra.mxu0 %v4775
        %v4815 = vpop.f32.mrf.mxu0
        %v4816 = vadd.f32 0.0, %v4815
        %4817 = vmatmul.f32.gmra.mxu0 %v4777
        %v4818 = vpop.f32.mrf.mxu0
        %v4819 = vadd.f32 0.0, %v4818
        %4820 = vmatmul.f32.gmra.mxu0 %v4779
        %v4821 = vpop.f32.mrf.mxu0
        %v4822 = vadd.f32 0.0, %v4821
        %4823 = vdwg.mxu0
        %v4824 = vsel %vm606, %v4801, -inf
        %4825 = vmax.xlane.f32.xlu0 %v4824
        %v4826 = vpop.xlane.xlu0 %4825
        %v4827 = vsel %vm606, %v4804, -inf
        %4828 = vmax.xlane.f32.xlu0 %v4827
        %v4829 = vpop.xlane.xlu0 %4828
        %v4830 = vsel %vm606, %v4807, -inf
        %4831 = vmax.xlane.f32.xlu0 %v4830
        %v4832 = vpop.xlane.xlu0 %4831
        %v4833 = vsel %vm606, %v4810, -inf
        %4834 = vmax.xlane.f32.xlu0 %v4833
        %v4835 = vpop.xlane.xlu0 %4834
        %v4836 = vsel %vm606, %v4813, -inf
        %4837 = vmax.xlane.f32.xlu0 %v4836
        %v4838 = vpop.xlane.xlu0 %4837
        %v4839 = vsel %vm606, %v4816, -inf
        %4840 = vmax.xlane.f32.xlu0 %v4839
        %v4841 = vpop.xlane.xlu0 %4840
        %v4842 = vsel %vm606, %v4819, -inf
        %4843 = vmax.xlane.f32.xlu0 %v4842
        %v4844 = vpop.xlane.xlu0 %4843
        %v4845 = vsel %vm606, %v4822, -inf
        %4846 = vmax.xlane.f32.xlu0 %v4845
        %v4847 = vpop.xlane.xlu0 %4846
        %v4848 = vsub.f32 %v4801, %v4826
        %v4849 = vsub.f32 %v4804, %v4829
        %v4850 = vsub.f32 %v4807, %v4832
        %v4851 = vsub.f32 %v4810, %v4835
        %v4852 = vsub.f32 %v4813, %v4838
        %v4853 = vsub.f32 %v4816, %v4841
        %v4854 = vsub.f32 %v4819, %v4844
        %v4855 = vsub.f32 %v4822, %v4847
        %v4856 = vmul.f32 %v4848, 1.442695
        %v4857 = vpow.pop %v4856
        %v4858 = vmul.f32 %v4849, 1.442695
        %v4859 = vpow.pop %v4858
        %v4860 = vmul.f32 %v4850, 1.442695
        %v4861 = vpow.pop %v4860
        %v4862 = vmul.f32 %v4851, 1.442695
        %v4863 = vpow.pop %v4862
        %v4864 = vmul.f32 %v4852, 1.442695
        %v4865 = vpow.pop %v4864
        %v4866 = vmul.f32 %v4853, 1.442695
        %v4867 = vpow.pop %v4866
        %v4868 = vmul.f32 %v4854, 1.442695
        %v4869 = vpow.pop %v4868
        %v4870 = vmul.f32 %v4855, 1.442695
        %v4871 = vpow.pop %v4870
        %v4872 = vsel %vm606, %v4857, 0.0
        %4873 = vadd.xlane.f32.xlu0 %v4872
        %v4874 = vpop.xlane.xlu0 %4873
        %v4875 = vsel %vm606, %v4859, 0.0
        %4876 = vadd.xlane.f32.xlu0 %v4875
        %v4877 = vpop.xlane.xlu0 %4876
        %v4878 = vsel %vm606, %v4861, 0.0
        %4879 = vadd.xlane.f32.xlu0 %v4878
        %v4880 = vpop.xlane.xlu0 %4879
        %v4881 = vsel %vm606, %v4863, 0.0
        %4882 = vadd.xlane.f32.xlu0 %v4881
        %v4883 = vpop.xlane.xlu0 %4882
        %v4884 = vsel %vm606, %v4865, 0.0
        %4885 = vadd.xlane.f32.xlu0 %v4884
        %v4886 = vpop.xlane.xlu0 %4885
        %v4887 = vsel %vm606, %v4867, 0.0
        %4888 = vadd.xlane.f32.xlu0 %v4887
        %v4889 = vpop.xlane.xlu0 %4888
        %v4890 = vsel %vm606, %v4869, 0.0
        %4891 = vadd.xlane.f32.xlu0 %v4890
        %v4892 = vpop.xlane.xlu0 %4891
        %v4893 = vsel %vm606, %v4871, 0.0
        %4894 = vadd.xlane.f32.xlu0 %v4893
        %v4895 = vpop.xlane.xlu0 %4894
        %v4896 = vrcp.pop %v4874
        %v4897 = vrcp.pop %v4877
        %v4898 = vrcp.pop %v4880
        %v4899 = vrcp.pop %v4883
        %v4900 = vrcp.pop %v4886
        %v4901 = vrcp.pop %v4889
        %v4902 = vrcp.pop %v4892
        %v4903 = vrcp.pop %v4895
        %v4904 = vmul.f32 %v4857, %v4896
        %v4905 = vmul.f32 %v4859, %v4897
        %v4906 = vmul.f32 %v4861, %v4898
        %v4907 = vmul.f32 %v4863, %v4899
        %v4908 = vmul.f32 %v4865, %v4900
        %v4909 = vmul.f32 %v4867, %v4901
        %v4910 = vmul.f32 %v4869, %v4902
        %v4911 = vmul.f32 %v4871, %v4903
        %4912 = vrot.lane.b32.xlu0 %v4290, 120
        %v4913 = vpop.permute.xlu0 %4912
        %v4916 = vsel %vm606, %v4904, 0
        %v4919 = vsel %vm606, %v4905, 0
        %v4922 = vsel %vm606, %v4906, 0
        %v4925 = vsel %vm606, %v4907, 0
        %v4928 = vsel %vm606, %v4908, 0
        %v4931 = vsel %vm606, %v4909, 0
        %v4934 = vsel %vm606, %v4910, 0
        %v4937 = vsel %vm606, %v4911, 0
        %4939 = vmatpush.msra.mxu0 0.0
        %4940 = vmatpush.msra.mxu0 0.0
        %4941 = vmatpush.msra.mxu0 0.0
        %4942 = vmatpush.msra.mxu0 0.0
        %4943 = vmatpush.msra.mxu0 0.0
        %4944 = vmatpush.msra.mxu0 0.0
        %4945 = vmatpush.msra.mxu0 0.0
        %4946 = vmatpush.msra.mxu0 0.0
        %4947 = vmatpush.msra.mxu0 0.0
        %4948 = vmatpush.msra.mxu0 0.0
        %4949 = vmatpush.msra.mxu0 0.0
        %4950 = vmatpush.msra.mxu0 0.0
        %4951 = vmatpush.msra.mxu0 0.0
        %4952 = vmatpush.msra.mxu0 0.0
        %4953 = vmatpush.msra.mxu0 0.0
        %4954 = vmatpush.msra.mxu0 %v4913
        %4955 = vmatmul.f32.gmra.mxu0 %v4916
        %v4956 = vpop.f32.mrf.mxu0
        %v4957 = vadd.f32 0.0, %v4956
        %4958 = vmatmul.f32.gmra.mxu0 %v4919
        %v4959 = vpop.f32.mrf.mxu0
        %v4960 = vadd.f32 0.0, %v4959
        %4961 = vmatmul.f32.gmra.mxu0 %v4922
        %v4962 = vpop.f32.mrf.mxu0
        %v4963 = vadd.f32 0.0, %v4962
        %4964 = vmatmul.f32.gmra.mxu0 %v4925
        %v4965 = vpop.f32.mrf.mxu0
        %v4966 = vadd.f32 0.0, %v4965
        %4967 = vmatmul.f32.gmra.mxu0 %v4928
        %v4968 = vpop.f32.mrf.mxu0
        %v4969 = vadd.f32 0.0, %v4968
        %4970 = vmatmul.f32.gmra.mxu0 %v4931
        %v4971 = vpop.f32.mrf.mxu0
        %v4972 = vadd.f32 0.0, %v4971
        %4973 = vmatmul.f32.gmra.mxu0 %v4934
        %v4974 = vpop.f32.mrf.mxu0
        %v4975 = vadd.f32 0.0, %v4974
        %4976 = vmatmul.f32.gmra.mxu0 %v4937
        %v4977 = vpop.f32.mrf.mxu0
        %v4978 = vadd.f32 0.0, %v4977
        %4979 = vdwg.mxu0
        %4980 = vrot.lane.b32.xlu0 %v4221, 116
        %v4981 = vpop.permute.xlu0 %4980
        %4982 = vrot.lane.b32.xlu0 %v4224, 116
        %v4983 = vpop.permute.xlu0 %4982
        %4984 = vrot.lane.b32.xlu0 %v4227, 116
        %v4985 = vpop.permute.xlu0 %4984
        %4986 = vrot.lane.b32.xlu0 %v4230, 116
        %v4987 = vpop.permute.xlu0 %4986
        %4988 = vrot.lane.b32.xlu0 %v4233, 116
        %v4989 = vpop.permute.xlu0 %4988
        %4990 = vrot.lane.b32.xlu0 %v4236, 116
        %v4991 = vpop.permute.xlu0 %4990
        %4992 = vrot.lane.b32.xlu0 %v4239, 116
        %v4993 = vpop.permute.xlu0 %4992
        %4994 = vrot.lane.b32.xlu0 %v4242, 116
        %v4995 = vpop.permute.xlu0 %4994
        %4996 = vrot.lane.b32.xlu0 %v4266, 116
        %v4997 = vpop.permute.xlu0 %4996
        %v4998 = vsel %vm1102, %v4981, 0
        %v5000 = vsel %vm1102, %v4983, 0
        %v5002 = vsel %vm1102, %v4985, 0
        %v5004 = vsel %vm1102, %v4987, 0
        %v5006 = vsel %vm1102, %v4989, 0
        %v5008 = vsel %vm1102, %v4991, 0
        %v5010 = vsel %vm1102, %v4993, 0
        %v5012 = vsel %vm1102, %v4995, 0
        %v5014 = vsel %vm1102, %v4997, 0
        %5016 = vmatpush.xpose.msra.mxu0 0.0
        %5017 = vmatpush.xpose.msra.mxu0 0.0
        %5018 = vmatpush.xpose.msra.mxu0 0.0
        %5019 = vmatpush.xpose.msra.mxu0 0.0
        %5020 = vmatpush.xpose.msra.mxu0 0.0
        %5021 = vmatpush.xpose.msra.mxu0 0.0
        %5022 = vmatpush.xpose.msra.mxu0 0.0
        %5023 = vmatpush.xpose.msra.mxu0 0.0
        %5024 = vmatpush.xpose.msra.mxu0 0.0
        %5025 = vmatpush.xpose.msra.mxu0 0.0
        %5026 = vmatpush.xpose.msra.mxu0 0.0
        %5027 = vmatpush.xpose.msra.mxu0 0.0
        %5028 = vmatpush.xpose.msra.mxu0 0.0
        %5029 = vmatpush.xpose.msra.mxu0 0.0
        %5030 = vmatpush.xpose.msra.mxu0 0.0
        %5031 = vmatpush.xpose.msra.mxu0 %v5014
        %5032 = vmatmul.f32.gmra.mxu0 %v4998
        %v5033 = vpop.f32.mrf.mxu0
        %v5034 = vadd.f32 0.0, %v5033
        %5035 = vmatmul.f32.gmra.mxu0 %v5000
        %v5036 = vpop.f32.mrf.mxu0
        %v5037 = vadd.f32 0.0, %v5036
        %5038 = vmatmul.f32.gmra.mxu0 %v5002
        %v5039 = vpop.f32.mrf.mxu0
        %v5040 = vadd.f32 0.0, %v5039
        %5041 = vmatmul.f32.gmra.mxu0 %v5004
        %v5042 = vpop.f32.mrf.mxu0
        %v5043 = vadd.f32 0.0, %v5042
        %5044 = vmatmul.f32.gmra.mxu0 %v5006
        %v5045 = vpop.f32.mrf.mxu0
        %v5046 = vadd.f32 0.0, %v5045
        %5047 = vmatmul.f32.gmra.mxu0 %v5008
        %v5048 = vpop.f32.mrf.mxu0
        %v5049 = vadd.f32 0.0, %v5048
        %5050 = vmatmul.f32.gmra.mxu0 %v5010
        %v5051 = vpop.f32.mrf.mxu0
        %v5052 = vadd.f32 0.0, %v5051
        %5053 = vmatmul.f32.gmra.mxu0 %v5012
        %v5054 = vpop.f32.mrf.mxu0
        %v5055 = vadd.f32 0.0, %v5054
        %5056 = vdwg.mxu0
        %v5057 = vsel %vm606, %v5034, -inf
        %5058 = vmax.xlane.f32.xlu0 %v5057
        %v5059 = vpop.xlane.xlu0 %5058
        %v5060 = vsel %vm606, %v5037, -inf
        %5061 = vmax.xlane.f32.xlu0 %v5060
        %v5062 = vpop.xlane.xlu0 %5061
        %v5063 = vsel %vm606, %v5040, -inf
        %5064 = vmax.xlane.f32.xlu0 %v5063
        %v5065 = vpop.xlane.xlu0 %5064
        %v5066 = vsel %vm606, %v5043, -inf
        %5067 = vmax.xlane.f32.xlu0 %v5066
        %v5068 = vpop.xlane.xlu0 %5067
        %v5069 = vsel %vm606, %v5046, -inf
        %5070 = vmax.xlane.f32.xlu0 %v5069
        %v5071 = vpop.xlane.xlu0 %5070
        %v5072 = vsel %vm606, %v5049, -inf
        %5073 = vmax.xlane.f32.xlu0 %v5072
        %v5074 = vpop.xlane.xlu0 %5073
        %v5075 = vsel %vm606, %v5052, -inf
        %5076 = vmax.xlane.f32.xlu0 %v5075
        %v5077 = vpop.xlane.xlu0 %5076
        %v5078 = vsel %vm606, %v5055, -inf
        %5079 = vmax.xlane.f32.xlu0 %v5078
        %v5080 = vpop.xlane.xlu0 %5079
        %v5081 = vsub.f32 %v5034, %v5059
        %v5082 = vsub.f32 %v5037, %v5062
        %v5083 = vsub.f32 %v5040, %v5065
        %v5084 = vsub.f32 %v5043, %v5068
        %v5085 = vsub.f32 %v5046, %v5071
        %v5086 = vsub.f32 %v5049, %v5074
        %v5087 = vsub.f32 %v5052, %v5077
        %v5088 = vsub.f32 %v5055, %v5080
        %v5089 = vmul.f32 %v5081, 1.442695
        %v5090 = vpow.pop %v5089
        %v5091 = vmul.f32 %v5082, 1.442695
        %v5092 = vpow.pop %v5091
        %v5093 = vmul.f32 %v5083, 1.442695
        %v5094 = vpow.pop %v5093
        %v5095 = vmul.f32 %v5084, 1.442695
        %v5096 = vpow.pop %v5095
        %v5097 = vmul.f32 %v5085, 1.442695
        %v5098 = vpow.pop %v5097
        %v5099 = vmul.f32 %v5086, 1.442695
        %v5100 = vpow.pop %v5099
        %v5101 = vmul.f32 %v5087, 1.442695
        %v5102 = vpow.pop %v5101
        %v5103 = vmul.f32 %v5088, 1.442695
        %v5104 = vpow.pop %v5103
        %v5105 = vsel %vm606, %v5090, 0.0
        %5106 = vadd.xlane.f32.xlu0 %v5105
        %v5107 = vpop.xlane.xlu0 %5106
        %v5108 = vsel %vm606, %v5092, 0.0
        %5109 = vadd.xlane.f32.xlu0 %v5108
        %v5110 = vpop.xlane.xlu0 %5109
        %v5111 = vsel %vm606, %v5094, 0.0
        %5112 = vadd.xlane.f32.xlu0 %v5111
        %v5113 = vpop.xlane.xlu0 %5112
        %v5114 = vsel %vm606, %v5096, 0.0
        %5115 = vadd.xlane.f32.xlu0 %v5114
        %v5116 = vpop.xlane.xlu0 %5115
        %v5117 = vsel %vm606, %v5098, 0.0
        %5118 = vadd.xlane.f32.xlu0 %v5117
        %v5119 = vpop.xlane.xlu0 %5118
        %v5120 = vsel %vm606, %v5100, 0.0
        %5121 = vadd.xlane.f32.xlu0 %v5120
        %v5122 = vpop.xlane.xlu0 %5121
        %v5123 = vsel %vm606, %v5102, 0.0
        %5124 = vadd.xlane.f32.xlu0 %v5123
        %v5125 = vpop.xlane.xlu0 %5124
        %v5126 = vsel %vm606, %v5104, 0.0
        %5127 = vadd.xlane.f32.xlu0 %v5126
        %v5128 = vpop.xlane.xlu0 %5127
        %v5129 = vrcp.pop %v5107
        %v5130 = vrcp.pop %v5110
        %v5131 = vrcp.pop %v5113
        %v5132 = vrcp.pop %v5116
        %v5133 = vrcp.pop %v5119
        %v5134 = vrcp.pop %v5122
        %v5135 = vrcp.pop %v5125
        %v5136 = vrcp.pop %v5128
        %v5137 = vmul.f32 %v5090, %v5129
        %v5138 = vmul.f32 %v5092, %v5130
        %v5139 = vmul.f32 %v5094, %v5131
        %v5140 = vmul.f32 %v5096, %v5132
        %v5141 = vmul.f32 %v5098, %v5133
        %v5142 = vmul.f32 %v5100, %v5134
        %v5143 = vmul.f32 %v5102, %v5135
        %v5144 = vmul.f32 %v5104, %v5136
        %5145 = vrot.lane.b32.xlu0 %v4290, 116
        %v5146 = vpop.permute.xlu0 %5145
        %v5149 = vsel %vm606, %v5137, 0
        %v5152 = vsel %vm606, %v5138, 0
        %v5155 = vsel %vm606, %v5139, 0
        %v5158 = vsel %vm606, %v5140, 0
        %v5161 = vsel %vm606, %v5141, 0
        %v5164 = vsel %vm606, %v5142, 0
        %v5167 = vsel %vm606, %v5143, 0
        %v5170 = vsel %vm606, %v5144, 0
        %5172 = vmatpush.msra.mxu0 0.0
        %5173 = vmatpush.msra.mxu0 0.0
        %5174 = vmatpush.msra.mxu0 0.0
        %5175 = vmatpush.msra.mxu0 0.0
        %5176 = vmatpush.msra.mxu0 0.0
        %5177 = vmatpush.msra.mxu0 0.0
        %5178 = vmatpush.msra.mxu0 0.0
        %5179 = vmatpush.msra.mxu0 0.0
        %5180 = vmatpush.msra.mxu0 0.0
        %5181 = vmatpush.msra.mxu0 0.0
        %5182 = vmatpush.msra.mxu0 0.0
        %5183 = vmatpush.msra.mxu0 0.0
        %5184 = vmatpush.msra.mxu0 0.0
        %5185 = vmatpush.msra.mxu0 0.0
        %5186 = vmatpush.msra.mxu0 0.0
        %5187 = vmatpush.msra.mxu0 %v5146
        %5188 = vmatmul.f32.gmra.mxu0 %v5149
        %v5189 = vpop.f32.mrf.mxu0
        %v5190 = vadd.f32 0.0, %v5189
        %5191 = vmatmul.f32.gmra.mxu0 %v5152
        %v5192 = vpop.f32.mrf.mxu0
        %v5193 = vadd.f32 0.0, %v5192
        %5194 = vmatmul.f32.gmra.mxu0 %v5155
        %v5195 = vpop.f32.mrf.mxu0
        %v5196 = vadd.f32 0.0, %v5195
        %5197 = vmatmul.f32.gmra.mxu0 %v5158
        %v5198 = vpop.f32.mrf.mxu0
        %v5199 = vadd.f32 0.0, %v5198
        %5200 = vmatmul.f32.gmra.mxu0 %v5161
        %v5201 = vpop.f32.mrf.mxu0
        %v5202 = vadd.f32 0.0, %v5201
        %5203 = vmatmul.f32.gmra.mxu0 %v5164
        %v5204 = vpop.f32.mrf.mxu0
        %v5205 = vadd.f32 0.0, %v5204
        %5206 = vmatmul.f32.gmra.mxu0 %v5167
        %v5207 = vpop.f32.mrf.mxu0
        %v5208 = vadd.f32 0.0, %v5207
        %5209 = vmatmul.f32.gmra.mxu0 %v5170
        %v5210 = vpop.f32.mrf.mxu0
        %v5211 = vadd.f32 0.0, %v5210
        %5212 = vdwg.mxu0
        %5221 = vrot.lane.b32.xlu0 %v4724, 4
        %v5222 = vpop.permute.xlu0 %5221
        %5223 = vrot.lane.b32.xlu0 %v4727, 4
        %v5224 = vpop.permute.xlu0 %5223
        %5225 = vrot.lane.b32.xlu0 %v4730, 4
        %v5226 = vpop.permute.xlu0 %5225
        %5227 = vrot.lane.b32.xlu0 %v4733, 4
        %v5228 = vpop.permute.xlu0 %5227
        %5229 = vrot.lane.b32.xlu0 %v4736, 4
        %v5230 = vpop.permute.xlu0 %5229
        %5231 = vrot.lane.b32.xlu0 %v4739, 4
        %v5232 = vpop.permute.xlu0 %5231
        %5233 = vrot.lane.b32.xlu0 %v4742, 4
        %v5234 = vpop.permute.xlu0 %5233
        %5235 = vrot.lane.b32.xlu0 %v4745, 4
        %v5236 = vpop.permute.xlu0 %5235
        %5253 = vrot.lane.b32.xlu0 %v4957, 8
        %v5254 = vpop.permute.xlu0 %5253
        %5255 = vrot.lane.b32.xlu0 %v4960, 8
        %v5256 = vpop.permute.xlu0 %5255
        %5257 = vrot.lane.b32.xlu0 %v4963, 8
        %v5258 = vpop.permute.xlu0 %5257
        %5259 = vrot.lane.b32.xlu0 %v4966, 8
        %v5260 = vpop.permute.xlu0 %5259
        %5261 = vrot.lane.b32.xlu0 %v4969, 8
        %v5262 = vpop.permute.xlu0 %5261
        %5263 = vrot.lane.b32.xlu0 %v4972, 8
        %v5264 = vpop.permute.xlu0 %5263
        %5265 = vrot.lane.b32.xlu0 %v4975, 8
        %v5266 = vpop.permute.xlu0 %5265
        %5267 = vrot.lane.b32.xlu0 %v4978, 8
        %v5268 = vpop.permute.xlu0 %5267
        %5285 = vrot.lane.b32.xlu0 %v5190, 12
        %v5286 = vpop.permute.xlu0 %5285
        %5287 = vrot.lane.b32.xlu0 %v5193, 12
        %v5288 = vpop.permute.xlu0 %5287
        %5289 = vrot.lane.b32.xlu0 %v5196, 12
        %v5290 = vpop.permute.xlu0 %5289
        %5291 = vrot.lane.b32.xlu0 %v5199, 12
        %v5292 = vpop.permute.xlu0 %5291
        %5293 = vrot.lane.b32.xlu0 %v5202, 12
        %v5294 = vpop.permute.xlu0 %5293
        %5295 = vrot.lane.b32.xlu0 %v5205, 12
        %v5296 = vpop.permute.xlu0 %5295
        %5297 = vrot.lane.b32.xlu0 %v5208, 12
        %v5298 = vpop.permute.xlu0 %5297
        %5299 = vrot.lane.b32.xlu0 %v5211, 12
        %v5300 = vpop.permute.xlu0 %5299
        %v5309 = vsel %vm1102, %v4490, %v5222
        %v5310 = vsel %vm1102, %v4493, %v5224
        %v5311 = vsel %vm1102, %v4496, %v5226
        %v5312 = vsel %vm1102, %v4499, %v5228
        %v5313 = vsel %vm1102, %v4502, %v5230
        %v5314 = vsel %vm1102, %v4505, %v5232
        %v5315 = vsel %vm1102, %v4508, %v5234
        %v5316 = vsel %vm1102, %v4511, %v5236
        %v5317 = vsel %vm606, %v5309, %v5254
        %v5318 = vsel %vm606, %v5310, %v5256
        %v5319 = vsel %vm606, %v5311, %v5258
        %v5320 = vsel %vm606, %v5312, %v5260
        %v5321 = vsel %vm606, %v5313, %v5262
        %v5322 = vsel %vm606, %v5314, %v5264
        %v5323 = vsel %vm606, %v5315, %v5266
        %v5324 = vsel %vm606, %v5316, %v5268
        %v5325 = vsel %vm1549, %v5317, %v5286
        %v5326 = vsel %vm1549, %v5318, %v5288
        %v5327 = vsel %vm1549, %v5319, %v5290
        %v5328 = vsel %vm1549, %v5320, %v5292
        %v5329 = vsel %vm1549, %v5321, %v5294
        %v5330 = vsel %vm1549, %v5322, %v5296
        %v5331 = vsel %vm1549, %v5323, %v5298
        %v5332 = vsel %vm1549, %v5324, %v5300
        %v5333 = vperm.slane %v445, 0
        %v5335 = vsel %vm876, %v5325, 0
        %v5338 = vsel %vm876, %v5326, 0
        %v5341 = vsel %vm876, %v5327, 0
        %v5344 = vsel %vm876, %v5328, 0
        %v5347 = vsel %vm876, %v5329, 0
        %v5350 = vsel %vm876, %v5330, 0
        %v5353 = vsel %vm876, %v5331, 0
        %v5356 = vsel %vm876, %v5332, 0
        %5358 = vmatpush.msra.mxu0 0.0
        %5359 = vmatpush.msra.mxu0 0.0
        %5360 = vmatpush.msra.mxu0 0.0
        %5361 = vmatpush.msra.mxu0 0.0
        %5362 = vmatpush.msra.mxu0 0.0
        %5363 = vmatpush.msra.mxu0 0.0
        %5364 = vmatpush.msra.mxu0 0.0
        %5365 = vmatpush.msra.mxu0 0.0
        %5366 = vmatpush.msra.mxu0 0.0
        %5367 = vmatpush.msra.mxu0 0.0
        %5368 = vmatpush.msra.mxu0 0.0
        %5369 = vmatpush.msra.mxu0 0.0
        %5370 = vmatpush.msra.mxu0 0.0
        %5371 = vmatpush.msra.mxu0 0.0
        %5372 = vmatpush.msra.mxu0 %v444
        %5373 = vmatpush.msra.mxu0 %v443
        %5374 = vmatmul.f32.gmra.mxu0 %v5335
        %v5375 = vpop.f32.mrf.mxu0
        %v5376 = vadd.f32 %v5333, %v5375
        %5377 = vmatmul.f32.gmra.mxu0 %v5338
        %v5378 = vpop.f32.mrf.mxu0
        %v5379 = vadd.f32 %v5333, %v5378
        %5380 = vmatmul.f32.gmra.mxu0 %v5341
        %v5381 = vpop.f32.mrf.mxu0
        %v5382 = vadd.f32 %v5333, %v5381
        %5383 = vmatmul.f32.gmra.mxu0 %v5344
        %v5384 = vpop.f32.mrf.mxu0
        %v5385 = vadd.f32 %v5333, %v5384
        %5386 = vmatmul.f32.gmra.mxu0 %v5347
        %v5387 = vpop.f32.mrf.mxu0
        %v5388 = vadd.f32 %v5333, %v5387
        %5389 = vmatmul.f32.gmra.mxu0 %v5350
        %v5390 = vpop.f32.mrf.mxu0
        %v5391 = vadd.f32 %v5333, %v5390
        %5392 = vmatmul.f32.gmra.mxu0 %v5353
        %v5393 = vpop.f32.mrf.mxu0
        %v5394 = vadd.f32 %v5333, %v5393
        %5395 = vmatmul.f32.gmra.mxu0 %v5356
        %v5396 = vpop.f32.mrf.mxu0
        %v5397 = vadd.f32 %v5333, %v5396
        %5398 = vdwg.mxu0
        %v5399 = vadd.f32 %v3070, %v5376
        %v5400 = vadd.f32 %v3071, %v5379
        %v5401 = vadd.f32 %v3072, %v5382
        %v5402 = vadd.f32 %v3073, %v5385
        %v5403 = vadd.f32 %v3074, %v5388
        %v5404 = vadd.f32 %v3075, %v5391
        %v5405 = vadd.f32 %v3076, %v5394
        %v5406 = vadd.f32 %v3077, %v5397
        %v5407 = vsel %vm540, %v5399, 0.0
        %5408 = vadd.xlane.f32.xlu0 %v5407
        %v5409 = vpop.xlane.xlu0 %5408
        %v5410 = vsel %vm540, %v5400, 0.0
        %5411 = vadd.xlane.f32.xlu0 %v5410
        %v5412 = vpop.xlane.xlu0 %5411
        %v5413 = vsel %vm540, %v5401, 0.0
        %5414 = vadd.xlane.f32.xlu0 %v5413
        %v5415 = vpop.xlane.xlu0 %5414
        %v5416 = vsel %vm540, %v5402, 0.0
        %5417 = vadd.xlane.f32.xlu0 %v5416
        %v5418 = vpop.xlane.xlu0 %5417
        %v5419 = vsel %vm540, %v5403, 0.0
        %5420 = vadd.xlane.f32.xlu0 %v5419
        %v5421 = vpop.xlane.xlu0 %5420
        %v5422 = vsel %vm540, %v5404, 0.0
        %5423 = vadd.xlane.f32.xlu0 %v5422
        %v5424 = vpop.xlane.xlu0 %5423
        %v5425 = vsel %vm540, %v5405, 0.0
        %5426 = vadd.xlane.f32.xlu0 %v5425
        %v5427 = vpop.xlane.xlu0 %5426
        %v5428 = vsel %vm540, %v5406, 0.0
        %5429 = vadd.xlane.f32.xlu0 %v5428
        %v5430 = vpop.xlane.xlu0 %5429
        %v5431 = vmul.f32 %v5409, %v913
        %v5432 = vmul.f32 %v5412, %v913
        %v5433 = vmul.f32 %v5415, %v913
        %v5434 = vmul.f32 %v5418, %v913
        %v5435 = vmul.f32 %v5421, %v913
        %v5436 = vmul.f32 %v5424, %v913
        %v5437 = vmul.f32 %v5427, %v913
        %v5438 = vmul.f32 %v5430, %v913
        %v5439 = vsub.f32 %v5399, %v5431
        %v5440 = vsub.f32 %v5400, %v5432
        %v5441 = vsub.f32 %v5401, %v5433
        %v5442 = vsub.f32 %v5402, %v5434
        %v5443 = vsub.f32 %v5403, %v5435
        %v5444 = vsub.f32 %v5404, %v5436
        %v5445 = vsub.f32 %v5405, %v5437
        %v5446 = vsub.f32 %v5406, %v5438
        %v5447 = vmul.f32 %v5439, %v5439
        %v5448 = vmul.f32 %v5440, %v5440
        %v5449 = vmul.f32 %v5441, %v5441
        %v5450 = vmul.f32 %v5442, %v5442
        %v5451 = vmul.f32 %v5443, %v5443
        %v5452 = vmul.f32 %v5444, %v5444
        %v5453 = vmul.f32 %v5445, %v5445
        %v5454 = vmul.f32 %v5446, %v5446
        %v5455 = vsel %vm540, %v5447, 0.0
        %5456 = vadd.xlane.f32.xlu0 %v5455
        %v5457 = vpop.xlane.xlu0 %5456
        %v5458 = vsel %vm540, %v5448, 0.0
        %5459 = vadd.xlane.f32.xlu0 %v5458
        %v5460 = vpop.xlane.xlu0 %5459
        %v5461 = vsel %vm540, %v5449, 0.0
        %5462 = vadd.xlane.f32.xlu0 %v5461
        %v5463 = vpop.xlane.xlu0 %5462
        %v5464 = vsel %vm540, %v5450, 0.0
        %5465 = vadd.xlane.f32.xlu0 %v5464
        %v5466 = vpop.xlane.xlu0 %5465
        %v5467 = vsel %vm540, %v5451, 0.0
        %5468 = vadd.xlane.f32.xlu0 %v5467
        %v5469 = vpop.xlane.xlu0 %5468
        %v5470 = vsel %vm540, %v5452, 0.0
        %5471 = vadd.xlane.f32.xlu0 %v5470
        %v5472 = vpop.xlane.xlu0 %5471
        %v5473 = vsel %vm540, %v5453, 0.0
        %5474 = vadd.xlane.f32.xlu0 %v5473
        %v5475 = vpop.xlane.xlu0 %5474
        %v5476 = vsel %vm540, %v5454, 0.0
        %5477 = vadd.xlane.f32.xlu0 %v5476
        %v5478 = vpop.xlane.xlu0 %5477
        %v5479 = vmul.f32 %v5457, %v913
        %v5480 = vmul.f32 %v5460, %v913
        %v5481 = vmul.f32 %v5463, %v913
        %v5482 = vmul.f32 %v5466, %v913
        %v5483 = vmul.f32 %v5469, %v913
        %v5484 = vmul.f32 %v5472, %v913
        %v5485 = vmul.f32 %v5475, %v913
        %v5486 = vmul.f32 %v5478, %v913
        %v5487 = vadd.f32 %v5479, 1e-05
        %v5488 = vadd.f32 %v5480, 1e-05
        %v5489 = vadd.f32 %v5481, 1e-05
        %v5490 = vadd.f32 %v5482, 1e-05
        %v5491 = vadd.f32 %v5483, 1e-05
        %v5492 = vadd.f32 %v5484, 1e-05
        %v5493 = vadd.f32 %v5485, 1e-05
        %v5494 = vadd.f32 %v5486, 1e-05
        %v5495 = vrsqrt.pop %v5487
        %v5496 = vmul.f32 %v5495, %v5487
        %v5497 = vmul.f32 %v5496, %v5495
        %v5498 = vmul.f32 0.5, %v5497
        %v5499 = vsub.f32 1.5, %v5498
        %v5500 = vmul.f32 %v5495, %v5499
        %vm5501 = vweird.f32 %v5487
        %vm5502 = vweird.f32 %v5495
        %vm5503 = vmor %vm5501, %vm5502
        %v5504 = vsel %vm5503, %v5495, %v5500
        %v5505 = vrsqrt.pop %v5488
        %v5506 = vmul.f32 %v5505, %v5488
        %v5507 = vmul.f32 %v5506, %v5505
        %v5508 = vmul.f32 0.5, %v5507
        %v5509 = vsub.f32 1.5, %v5508
        %v5510 = vmul.f32 %v5505, %v5509
        %vm5511 = vweird.f32 %v5488
        %vm5512 = vweird.f32 %v5505
        %vm5513 = vmor %vm5511, %vm5512
        %v5514 = vsel %vm5513, %v5505, %v5510
        %v5515 = vrsqrt.pop %v5489
        %v5516 = vmul.f32 %v5515, %v5489
        %v5517 = vmul.f32 %v5516, %v5515
        %v5518 = vmul.f32 0.5, %v5517
        %v5519 = vsub.f32 1.5, %v5518
        %v5520 = vmul.f32 %v5515, %v5519
        %vm5521 = vweird.f32 %v5489
        %vm5522 = vweird.f32 %v5515
        %vm5523 = vmor %vm5521, %vm5522
        %v5524 = vsel %vm5523, %v5515, %v5520
        %v5525 = vrsqrt.pop %v5490
        %v5526 = vmul.f32 %v5525, %v5490
        %v5527 = vmul.f32 %v5526, %v5525
        %v5528 = vmul.f32 0.5, %v5527
        %v5529 = vsub.f32 1.5, %v5528
        %v5530 = vmul.f32 %v5525, %v5529
        %vm5531 = vweird.f32 %v5490
        %vm5532 = vweird.f32 %v5525
        %vm5533 = vmor %vm5531, %vm5532
        %v5534 = vsel %vm5533, %v5525, %v5530
        %v5535 = vrsqrt.pop %v5491
        %v5536 = vmul.f32 %v5535, %v5491
        %v5537 = vmul.f32 %v5536, %v5535
        %v5538 = vmul.f32 0.5, %v5537
        %v5539 = vsub.f32 1.5, %v5538
        %v5540 = vmul.f32 %v5535, %v5539
        %vm5541 = vweird.f32 %v5491
        %vm5542 = vweird.f32 %v5535
        %vm5543 = vmor %vm5541, %vm5542
        %v5544 = vsel %vm5543, %v5535, %v5540
        %v5545 = vrsqrt.pop %v5492
        %v5546 = vmul.f32 %v5545, %v5492
        %v5547 = vmul.f32 %v5546, %v5545
        %v5548 = vmul.f32 0.5, %v5547
        %v5549 = vsub.f32 1.5, %v5548
        %v5550 = vmul.f32 %v5545, %v5549
        %vm5551 = vweird.f32 %v5492
        %vm5552 = vweird.f32 %v5545
        %vm5553 = vmor %vm5551, %vm5552
        %v5554 = vsel %vm5553, %v5545, %v5550
        %v5555 = vrsqrt.pop %v5493
        %v5556 = vmul.f32 %v5555, %v5493
        %v5557 = vmul.f32 %v5556, %v5555
        %v5558 = vmul.f32 0.5, %v5557
        %v5559 = vsub.f32 1.5, %v5558
        %v5560 = vmul.f32 %v5555, %v5559
        %vm5561 = vweird.f32 %v5493
        %vm5562 = vweird.f32 %v5555
        %vm5563 = vmor %vm5561, %vm5562
        %v5564 = vsel %vm5563, %v5555, %v5560
        %v5565 = vrsqrt.pop %v5494
        %v5566 = vmul.f32 %v5565, %v5494
        %v5567 = vmul.f32 %v5566, %v5565
        %v5568 = vmul.f32 0.5, %v5567
        %v5569 = vsub.f32 1.5, %v5568
        %v5570 = vmul.f32 %v5565, %v5569
        %vm5571 = vweird.f32 %v5494
        %vm5572 = vweird.f32 %v5565
        %vm5573 = vmor %vm5571, %vm5572
        %v5574 = vsel %vm5573, %v5565, %v5570
        %v5575 = vmul.f32 %v5439, %v5504
        %v5576 = vmul.f32 %v5440, %v5514
        %v5577 = vmul.f32 %v5441, %v5524
        %v5578 = vmul.f32 %v5442, %v5534
        %v5579 = vmul.f32 %v5443, %v5544
        %v5580 = vmul.f32 %v5444, %v5554
        %v5581 = vmul.f32 %v5445, %v5564
        %v5582 = vmul.f32 %v5446, %v5574
        %v5583 = vperm.slane %v426, 0
        %v5584 = vmul.f32 %v5575, %v5583
        %v5585 = vmul.f32 %v5576, %v5583
        %v5586 = vmul.f32 %v5577, %v5583
        %v5587 = vmul.f32 %v5578, %v5583
        %v5588 = vmul.f32 %v5579, %v5583
        %v5589 = vmul.f32 %v5580, %v5583
        %v5590 = vmul.f32 %v5581, %v5583
        %v5591 = vmul.f32 %v5582, %v5583
        %v5592 = vperm.slane %v427, 0
        %v5593 = vadd.f32 %v5584, %v5592
        %v5594 = vadd.f32 %v5585, %v5592
        %v5595 = vadd.f32 %v5586, %v5592
        %v5596 = vadd.f32 %v5587, %v5592
        %v5597 = vadd.f32 %v5588, %v5592
        %v5598 = vadd.f32 %v5589, %v5592
        %v5599 = vadd.f32 %v5590, %v5592
        %v5600 = vadd.f32 %v5591, %v5592
        %v5601 = vadd.f32 %v5593, %v491
        %v5602 = vadd.f32 %v5594, %v492
        %v5603 = vadd.f32 %v5595, %v493
        %v5604 = vadd.f32 %v5596, %v494
        %v5605 = vadd.f32 %v5597, %v495
        %v5606 = vadd.f32 %v5598, %v496
        %v5607 = vadd.f32 %v5599, %v497
        %v5608 = vadd.f32 %v5600, %v498
        %v5609 = vperm.slane %v450, 0
        %5610 = vmatpush.msra.mxu0 0.0
        %5611 = vmatpush.msra.mxu0 0.0
        %5612 = vmatpush.msra.mxu0 0.0
        %5613 = vmatpush.msra.mxu0 0.0
        %5614 = vmatpush.msra.mxu0 0.0
        %5615 = vmatpush.msra.mxu0 0.0
        %5616 = vmatpush.msra.mxu0 0.0
        %5617 = vmatpush.msra.mxu0 0.0
        %5618 = vmatpush.msra.mxu0 0.0
        %5619 = vmatpush.msra.mxu0 0.0
        %5620 = vmatpush.msra.mxu0 0.0
        %5621 = vmatpush.msra.mxu0 0.0
        %5622 = vmatpush.msra.mxu0 %v449
        %5623 = vmatpush.msra.mxu0 %v448
        %5624 = vmatpush.msra.mxu0 %v447
        %5625 = vmatpush.msra.mxu0 %v446
        %5626 = vmatmul.f32.gmra.mxu0 %v4246
        %v5627 = vpop.f32.mrf.mxu0
        %v5628 = vadd.f32 %v5609, %v5627
        %5629 = vdwg.mxu0
        %v5630 = vperm.slane %v455, 0
        %v5632 = vsel %vm540, %v5601, 0
        %v5635 = vsel %vm540, %v5602, 0
        %v5638 = vsel %vm540, %v5603, 0
        %v5641 = vsel %vm540, %v5604, 0
        %v5644 = vsel %vm540, %v5605, 0
        %v5647 = vsel %vm540, %v5606, 0
        %v5650 = vsel %vm540, %v5607, 0
        %v5653 = vsel %vm540, %v5608, 0
        %5655 = vmatpush.msra.mxu0 0.0
        %5656 = vmatpush.msra.mxu0 0.0
        %5657 = vmatpush.msra.mxu0 0.0
        %5658 = vmatpush.msra.mxu0 0.0
        %5659 = vmatpush.msra.mxu0 0.0
        %5660 = vmatpush.msra.mxu0 0.0
        %5661 = vmatpush.msra.mxu0 0.0
        %5662 = vmatpush.msra.mxu0 0.0
        %5663 = vmatpush.msra.mxu0 0.0
        %5664 = vmatpush.msra.mxu0 0.0
        %5665 = vmatpush.msra.mxu0 0.0
        %5666 = vmatpush.msra.mxu0 0.0
        %5667 = vmatpush.msra.mxu0 %v454
        %5668 = vmatpush.msra.mxu0 %v453
        %5669 = vmatpush.msra.mxu0 %v452
        %5670 = vmatpush.msra.mxu0 %v451
        %5671 = vmatmul.f32.gmra.mxu0 %v5632
        %v5672 = vpop.f32.mrf.mxu0
        %v5673 = vadd.f32 %v5630, %v5672
        %5674 = vmatmul.f32.gmra.mxu0 %v5635
        %v5675 = vpop.f32.mrf.mxu0
        %v5676 = vadd.f32 %v5630, %v5675
        %5677 = vmatmul.f32.gmra.mxu0 %v5638
        %v5678 = vpop.f32.mrf.mxu0
        %v5679 = vadd.f32 %v5630, %v5678
        %5680 = vmatmul.f32.gmra.mxu0 %v5641
        %v5681 = vpop.f32.mrf.mxu0
        %v5682 = vadd.f32 %v5630, %v5681
        %5683 = vmatmul.f32.gmra.mxu0 %v5644
        %v5684 = vpop.f32.mrf.mxu0
        %v5685 = vadd.f32 %v5630, %v5684
        %5686 = vmatmul.f32.gmra.mxu0 %v5647
        %v5687 = vpop.f32.mrf.mxu0
        %v5688 = vadd.f32 %v5630, %v5687
        %5689 = vmatmul.f32.gmra.mxu0 %v5650
        %v5690 = vpop.f32.mrf.mxu0
        %v5691 = vadd.f32 %v5630, %v5690
        %5692 = vmatmul.f32.gmra.mxu0 %v5653
        %v5693 = vpop.f32.mrf.mxu0
        %v5694 = vadd.f32 %v5630, %v5693
        %5695 = vdwg.mxu0
        %v5696 = vperm.slane %v460, 0
        %v5698 = vsel %vm540, %v5593, 0
        %v5701 = vsel %vm540, %v5594, 0
        %v5704 = vsel %vm540, %v5595, 0
        %v5707 = vsel %vm540, %v5596, 0
        %v5710 = vsel %vm540, %v5597, 0
        %v5713 = vsel %vm540, %v5598, 0
        %v5716 = vsel %vm540, %v5599, 0
        %v5719 = vsel %vm540, %v5600, 0
        %5721 = vmatpush.msra.mxu0 0.0
        %5722 = vmatpush.msra.mxu0 0.0
        %5723 = vmatpush.msra.mxu0 0.0
        %5724 = vmatpush.msra.mxu0 0.0
        %5725 = vmatpush.msra.mxu0 0.0
        %5726 = vmatpush.msra.mxu0 0.0
        %5727 = vmatpush.msra.mxu0 0.0
        %5728 = vmatpush.msra.mxu0 0.0
        %5729 = vmatpush.msra.mxu0 0.0
        %5730 = vmatpush.msra.mxu0 0.0
        %5731 = vmatpush.msra.mxu0 0.0
        %5732 = vmatpush.msra.mxu0 0.0
        %5733 = vmatpush.msra.mxu0 %v459
        %5734 = vmatpush.msra.mxu0 %v458
        %5735 = vmatpush.msra.mxu0 %v457
        %5736 = vmatpush.msra.mxu0 %v456
        %5737 = vmatmul.f32.gmra.mxu0 %v5698
        %v5738 = vpop.f32.mrf.mxu0
        %v5739 = vadd.f32 %v5696, %v5738
        %5740 = vmatmul.f32.gmra.mxu0 %v5701
        %v5741 = vpop.f32.mrf.mxu0
        %v5742 = vadd.f32 %v5696, %v5741
        %5743 = vmatmul.f32.gmra.mxu0 %v5704
        %v5744 = vpop.f32.mrf.mxu0
        %v5745 = vadd.f32 %v5696, %v5744
        %5746 = vmatmul.f32.gmra.mxu0 %v5707
        %v5747 = vpop.f32.mrf.mxu0
        %v5748 = vadd.f32 %v5696, %v5747
        %5749 = vmatmul.f32.gmra.mxu0 %v5710
        %v5750 = vpop.f32.mrf.mxu0
        %v5751 = vadd.f32 %v5696, %v5750
        %5752 = vmatmul.f32.gmra.mxu0 %v5713
        %v5753 = vpop.f32.mrf.mxu0
        %v5754 = vadd.f32 %v5696, %v5753
        %5755 = vmatmul.f32.gmra.mxu0 %v5716
        %v5756 = vpop.f32.mrf.mxu0
        %v5757 = vadd.f32 %v5696, %v5756
        %5758 = vmatmul.f32.gmra.mxu0 %v5719
        %v5759 = vpop.f32.mrf.mxu0
        %v5760 = vadd.f32 %v5696, %v5759
        %5761 = vdwg.mxu0
        %v5763 = vsel %vm1102, %v5628, 0
        %v5766 = vsel %vm1102, %v5673, 0
        %v5769 = vsel %vm1102, %v5676, 0
        %v5772 = vsel %vm1102, %v5679, 0
        %v5775 = vsel %vm1102, %v5682, 0
        %v5778 = vsel %vm1102, %v5685, 0
        %v5781 = vsel %vm1102, %v5688, 0
        %v5784 = vsel %vm1102, %v5691, 0
        %v5787 = vsel %vm1102, %v5694, 0
        %5789 = vmatpush.xpose.msra.mxu0 0.0
        %5790 = vmatpush.xpose.msra.mxu0 0.0
        %5791 = vmatpush.xpose.msra.mxu0 0.0
        %5792 = vmatpush.xpose.msra.mxu0 0.0
        %5793 = vmatpush.xpose.msra.mxu0 0.0
        %5794 = vmatpush.xpose.msra.mxu0 0.0
        %5795 = vmatpush.xpose.msra.mxu0 0.0
        %5796 = vmatpush.xpose.msra.mxu0 0.0
        %5797 = vmatpush.xpose.msra.mxu0 %v5787
        %5798 = vmatpush.xpose.msra.mxu0 %v5784
        %5799 = vmatpush.xpose.msra.mxu0 %v5781
        %5800 = vmatpush.xpose.msra.mxu0 %v5778
        %5801 = vmatpush.xpose.msra.mxu0 %v5775
        %5802 = vmatpush.xpose.msra.mxu0 %v5772
        %5803 = vmatpush.xpose.msra.mxu0 %v5769
        %5804 = vmatpush.xpose.msra.mxu0 %v5766
        %5805 = vmatmul.f32.gmra.mxu0 %v5763
        %v5806 = vpop.f32.mrf.mxu0
        %v5807 = vadd.f32 0.0, %v5806
        %5808 = vdwg.mxu0
        %v5809 = vsel %vm1150, %v5807, -inf
        %5810 = vmax.xlane.f32.xlu0 %v5809
        %v5811 = vpop.xlane.xlu0 %5810
        %v5812 = vsub.f32 %v5807, %v5811
        %v5813 = vmul.f32 %v5812, 1.442695
        %v5814 = vpow.pop %v5813
        %v5815 = vsel %vm1150, %v5814, 0.0
        %5816 = vadd.xlane.f32.xlu0 %v5815
        %v5817 = vpop.xlane.xlu0 %5816
        %v5818 = vrcp.pop %v5817
        %v5819 = vmul.f32 %v5814, %v5818
        %v5821 = vsel %vm1150, %v5819, 0
        %5823 = vmatpush.msra.mxu0 0.0
        %5824 = vmatpush.msra.mxu0 0.0
        %5825 = vmatpush.msra.mxu0 0.0
        %5826 = vmatpush.msra.mxu0 0.0
        %5827 = vmatpush.msra.mxu0 0.0
        %5828 = vmatpush.msra.mxu0 0.0
        %5829 = vmatpush.msra.mxu0 0.0
        %5830 = vmatpush.msra.mxu0 0.0
        %5831 = vmatpush.msra.mxu0 %v5760
        %5832 = vmatpush.msra.mxu0 %v5757
        %5833 = vmatpush.msra.mxu0 %v5754
        %5834 = vmatpush.msra.mxu0 %v5751
        %5835 = vmatpush.msra.mxu0 %v5748
        %5836 = vmatpush.msra.mxu0 %v5745
        %5837 = vmatpush.msra.mxu0 %v5742
        %5838 = vmatpush.msra.mxu0 %v5739
        %5839 = vmatmul.f32.gmra.mxu0 %v5821
        %v5840 = vpop.f32.mrf.mxu0
        %v5841 = vadd.f32 0.0, %v5840
        %5842 = vdwg.mxu0
        %5843 = vrot.lane.b32.xlu0 %v5628, 124
        %v5844 = vpop.permute.xlu0 %5843
        %5845 = vrot.lane.b32.xlu0 %v5673, 124
        %v5846 = vpop.permute.xlu0 %5845
        %5847 = vrot.lane.b32.xlu0 %v5676, 124
        %v5848 = vpop.permute.xlu0 %5847
        %5849 = vrot.lane.b32.xlu0 %v5679, 124
        %v5850 = vpop.permute.xlu0 %5849
        %5851 = vrot.lane.b32.xlu0 %v5682, 124
        %v5852 = vpop.permute.xlu0 %5851
        %5853 = vrot.lane.b32.xlu0 %v5685, 124
        %v5854 = vpop.permute.xlu0 %5853
        %5855 = vrot.lane.b32.xlu0 %v5688, 124
        %v5856 = vpop.permute.xlu0 %5855
        %5857 = vrot.lane.b32.xlu0 %v5691, 124
        %v5858 = vpop.permute.xlu0 %5857
        %5859 = vrot.lane.b32.xlu0 %v5694, 124
        %v5860 = vpop.permute.xlu0 %5859
        %v5861 = vsel %vm1102, %v5844, 0
        %v5863 = vsel %vm1102, %v5846, 0
        %v5865 = vsel %vm1102, %v5848, 0
        %v5867 = vsel %vm1102, %v5850, 0
        %v5869 = vsel %vm1102, %v5852, 0
        %v5871 = vsel %vm1102, %v5854, 0
        %v5873 = vsel %vm1102, %v5856, 0
        %v5875 = vsel %vm1102, %v5858, 0
        %v5877 = vsel %vm1102, %v5860, 0
        %5879 = vmatpush.xpose.msra.mxu0 0.0
        %5880 = vmatpush.xpose.msra.mxu0 0.0
        %5881 = vmatpush.xpose.msra.mxu0 0.0
        %5882 = vmatpush.xpose.msra.mxu0 0.0
        %5883 = vmatpush.xpose.msra.mxu0 0.0
        %5884 = vmatpush.xpose.msra.mxu0 0.0
        %5885 = vmatpush.xpose.msra.mxu0 0.0
        %5886 = vmatpush.xpose.msra.mxu0 0.0
        %5887 = vmatpush.xpose.msra.mxu0 %v5877
        %5888 = vmatpush.xpose.msra.mxu0 %v5875
        %5889 = vmatpush.xpose.msra.mxu0 %v5873
        %5890 = vmatpush.xpose.msra.mxu0 %v5871
        %5891 = vmatpush.xpose.msra.mxu0 %v5869
        %5892 = vmatpush.xpose.msra.mxu0 %v5867
        %5893 = vmatpush.xpose.msra.mxu0 %v5865
        %5894 = vmatpush.xpose.msra.mxu0 %v5863
        %5895 = vmatmul.f32.gmra.mxu0 %v5861
        %v5896 = vpop.f32.mrf.mxu0
        %v5897 = vadd.f32 0.0, %v5896
        %5898 = vdwg.mxu0
        %v5899 = vsel %vm1150, %v5897, -inf
        %5900 = vmax.xlane.f32.xlu0 %v5899
        %v5901 = vpop.xlane.xlu0 %5900
        %v5902 = vsub.f32 %v5897, %v5901
        %v5903 = vmul.f32 %v5902, 1.442695
        %v5904 = vpow.pop %v5903
        %v5905 = vsel %vm1150, %v5904, 0.0
        %5906 = vadd.xlane.f32.xlu0 %v5905
        %v5907 = vpop.xlane.xlu0 %5906
        %v5908 = vrcp.pop %v5907
        %v5909 = vmul.f32 %v5904, %v5908
        %5918 = vrot.lane.b32.xlu0 %v5739, 124
        %v5919 = vpop.permute.xlu0 %5918
        %5920 = vrot.lane.b32.xlu0 %v5742, 124
        %v5921 = vpop.permute.xlu0 %5920
        %5922 = vrot.lane.b32.xlu0 %v5745, 124
        %v5923 = vpop.permute.xlu0 %5922
        %5924 = vrot.lane.b32.xlu0 %v5748, 124
        %v5925 = vpop.permute.xlu0 %5924
        %5926 = vrot.lane.b32.xlu0 %v5751, 124
        %v5927 = vpop.permute.xlu0 %5926
        %5928 = vrot.lane.b32.xlu0 %v5754, 124
        %v5929 = vpop.permute.xlu0 %5928
        %5930 = vrot.lane.b32.xlu0 %v5757, 124
        %v5931 = vpop.permute.xlu0 %5930
        %5932 = vrot.lane.b32.xlu0 %v5760, 124
        %v5933 = vpop.permute.xlu0 %5932
        %v5943 = vsel %vm1150, %v5909, 0
        %5945 = vmatpush.msra.mxu0 0.0
        %5946 = vmatpush.msra.mxu0 0.0
        %5947 = vmatpush.msra.mxu0 0.0
        %5948 = vmatpush.msra.mxu0 0.0
        %5949 = vmatpush.msra.mxu0 0.0
        %5950 = vmatpush.msra.mxu0 0.0
        %5951 = vmatpush.msra.mxu0 0.0
        %5952 = vmatpush.msra.mxu0 0.0
        %5953 = vmatpush.msra.mxu0 %v5933
        %5954 = vmatpush.msra.mxu0 %v5931
        %5955 = vmatpush.msra.mxu0 %v5929
        %5956 = vmatpush.msra.mxu0 %v5927
        %5957 = vmatpush.msra.mxu0 %v5925
        %5958 = vmatpush.msra.mxu0 %v5923
        %5959 = vmatpush.msra.mxu0 %v5921
        %5960 = vmatpush.msra.mxu0 %v5919
        %5961 = vmatmul.f32.gmra.mxu0 %v5943
        %v5962 = vpop.f32.mrf.mxu0
        %v5963 = vadd.f32 0.0, %v5962
        %5964 = vdwg.mxu0
        %5965 = vrot.lane.b32.xlu0 %v5628, 120
        %v5966 = vpop.permute.xlu0 %5965
        %5967 = vrot.lane.b32.xlu0 %v5673, 120
        %v5968 = vpop.permute.xlu0 %5967
        %5969 = vrot.lane.b32.xlu0 %v5676, 120
        %v5970 = vpop.permute.xlu0 %5969
        %5971 = vrot.lane.b32.xlu0 %v5679, 120
        %v5972 = vpop.permute.xlu0 %5971
        %5973 = vrot.lane.b32.xlu0 %v5682, 120
        %v5974 = vpop.permute.xlu0 %5973
        %5975 = vrot.lane.b32.xlu0 %v5685, 120
        %v5976 = vpop.permute.xlu0 %5975
        %5977 = vrot.lane.b32.xlu0 %v5688, 120
        %v5978 = vpop.permute.xlu0 %5977
        %5979 = vrot.lane.b32.xlu0 %v5691, 120
        %v5980 = vpop.permute.xlu0 %5979
        %5981 = vrot.lane.b32.xlu0 %v5694, 120
        %v5982 = vpop.permute.xlu0 %5981
        %v5983 = vsel %vm1102, %v5966, 0
        %v5985 = vsel %vm1102, %v5968, 0
        %v5987 = vsel %vm1102, %v5970, 0
        %v5989 = vsel %vm1102, %v5972, 0
        %v5991 = vsel %vm1102, %v5974, 0
        %v5993 = vsel %vm1102, %v5976, 0
        %v5995 = vsel %vm1102, %v5978, 0
        %v5997 = vsel %vm1102, %v5980, 0
        %v5999 = vsel %vm1102, %v5982, 0
        %6001 = vmatpush.xpose.msra.mxu0 0.0
        %6002 = vmatpush.xpose.msra.mxu0 0.0
        %6003 = vmatpush.xpose.msra.mxu0 0.0
        %6004 = vmatpush.xpose.msra.mxu0 0.0
        %6005 = vmatpush.xpose.msra.mxu0 0.0
        %6006 = vmatpush.xpose.msra.mxu0 0.0
        %6007 = vmatpush.xpose.msra.mxu0 0.0
        %6008 = vmatpush.xpose.msra.mxu0 0.0
        %6009 = vmatpush.xpose.msra.mxu0 %v5999
        %6010 = vmatpush.xpose.msra.mxu0 %v5997
        %6011 = vmatpush.xpose.msra.mxu0 %v5995
        %6012 = vmatpush.xpose.msra.mxu0 %v5993
        %6013 = vmatpush.xpose.msra.mxu0 %v5991
        %6014 = vmatpush.xpose.msra.mxu0 %v5989
        %6015 = vmatpush.xpose.msra.mxu0 %v5987
        %6016 = vmatpush.xpose.msra.mxu0 %v5985
        %6017 = vmatmul.f32.gmra.mxu0 %v5983
        %v6018 = vpop.f32.mrf.mxu0
        %v6019 = vadd.f32 0.0, %v6018
        %6020 = vdwg.mxu0
        %v6021 = vsel %vm1150, %v6019, -inf
        %6022 = vmax.xlane.f32.xlu0 %v6021
        %v6023 = vpop.xlane.xlu0 %6022
        %v6024 = vsub.f32 %v6019, %v6023
        %v6025 = vmul.f32 %v6024, 1.442695
        %v6026 = vpow.pop %v6025
        %v6027 = vsel %vm1150, %v6026, 0.0
        %6028 = vadd.xlane.f32.xlu0 %v6027
        %v6029 = vpop.xlane.xlu0 %6028
        %v6030 = vrcp.pop %v6029
        %v6031 = vmul.f32 %v6026, %v6030
        %6032 = vrot.lane.b32.xlu0 %v5739, 120
        %v6033 = vpop.permute.xlu0 %6032
        %6034 = vrot.lane.b32.xlu0 %v5742, 120
        %v6035 = vpop.permute.xlu0 %6034
        %6036 = vrot.lane.b32.xlu0 %v5745, 120
        %v6037 = vpop.permute.xlu0 %6036
        %6038 = vrot.lane.b32.xlu0 %v5748, 120
        %v6039 = vpop.permute.xlu0 %6038
        %6040 = vrot.lane.b32.xlu0 %v5751, 120
        %v6041 = vpop.permute.xlu0 %6040
        %6042 = vrot.lane.b32.xlu0 %v5754, 120
        %v6043 = vpop.permute.xlu0 %6042
        %6044 = vrot.lane.b32.xlu0 %v5757, 120
        %v6045 = vpop.permute.xlu0 %6044
        %6046 = vrot.lane.b32.xlu0 %v5760, 120
        %v6047 = vpop.permute.xlu0 %6046
        %v6057 = vsel %vm1150, %v6031, 0
        %6059 = vmatpush.msra.mxu0 0.0
        %6060 = vmatpush.msra.mxu0 0.0
        %6061 = vmatpush.msra.mxu0 0.0
        %6062 = vmatpush.msra.mxu0 0.0
        %6063 = vmatpush.msra.mxu0 0.0
        %6064 = vmatpush.msra.mxu0 0.0
        %6065 = vmatpush.msra.mxu0 0.0
        %6066 = vmatpush.msra.mxu0 0.0
        %6067 = vmatpush.msra.mxu0 %v6047
        %6068 = vmatpush.msra.mxu0 %v6045
        %6069 = vmatpush.msra.mxu0 %v6043
        %6070 = vmatpush.msra.mxu0 %v6041
        %6071 = vmatpush.msra.mxu0 %v6039
        %6072 = vmatpush.msra.mxu0 %v6037
        %6073 = vmatpush.msra.mxu0 %v6035
        %6074 = vmatpush.msra.mxu0 %v6033
        %6075 = vmatmul.f32.gmra.mxu0 %v6057
        %v6076 = vpop.f32.mrf.mxu0
        %v6077 = vadd.f32 0.0, %v6076
        %6078 = vdwg.mxu0
        %6079 = vrot.lane.b32.xlu0 %v5628, 116
        %v6080 = vpop.permute.xlu0 %6079
        %6081 = vrot.lane.b32.xlu0 %v5673, 116
        %v6082 = vpop.permute.xlu0 %6081
        %6083 = vrot.lane.b32.xlu0 %v5676, 116
        %v6084 = vpop.permute.xlu0 %6083
        %6085 = vrot.lane.b32.xlu0 %v5679, 116
        %v6086 = vpop.permute.xlu0 %6085
        %6087 = vrot.lane.b32.xlu0 %v5682, 116
        %v6088 = vpop.permute.xlu0 %6087
        %6089 = vrot.lane.b32.xlu0 %v5685, 116
        %v6090 = vpop.permute.xlu0 %6089
        %6091 = vrot.lane.b32.xlu0 %v5688, 116
        %v6092 = vpop.permute.xlu0 %6091
        %6093 = vrot.lane.b32.xlu0 %v5691, 116
        %v6094 = vpop.permute.xlu0 %6093
        %6095 = vrot.lane.b32.xlu0 %v5694, 116
        %v6096 = vpop.permute.xlu0 %6095
        %v6097 = vsel %vm1102, %v6080, 0
        %v6099 = vsel %vm1102, %v6082, 0
        %v6101 = vsel %vm1102, %v6084, 0
        %v6103 = vsel %vm1102, %v6086, 0
        %v6105 = vsel %vm1102, %v6088, 0
        %v6107 = vsel %vm1102, %v6090, 0
        %v6109 = vsel %vm1102, %v6092, 0
        %v6111 = vsel %vm1102, %v6094, 0
        %v6113 = vsel %vm1102, %v6096, 0
        %6115 = vmatpush.xpose.msra.mxu0 0.0
        %6116 = vmatpush.xpose.msra.mxu0 0.0
        %6117 = vmatpush.xpose.msra.mxu0 0.0
        %6118 = vmatpush.xpose.msra.mxu0 0.0
        %6119 = vmatpush.xpose.msra.mxu0 0.0
        %6120 = vmatpush.xpose.msra.mxu0 0.0
        %6121 = vmatpush.xpose.msra.mxu0 0.0
        %6122 = vmatpush.xpose.msra.mxu0 0.0
        %6123 = vmatpush.xpose.msra.mxu0 %v6113
        %6124 = vmatpush.xpose.msra.mxu0 %v6111
        %6125 = vmatpush.xpose.msra.mxu0 %v6109
        %6126 = vmatpush.xpose.msra.mxu0 %v6107
        %6127 = vmatpush.xpose.msra.mxu0 %v6105
        %6128 = vmatpush.xpose.msra.mxu0 %v6103
        %6129 = vmatpush.xpose.msra.mxu0 %v6101
        %6130 = vmatpush.xpose.msra.mxu0 %v6099
        %6131 = vmatmul.f32.gmra.mxu0 %v6097
        %v6132 = vpop.f32.mrf.mxu0
        %v6133 = vadd.f32 0.0, %v6132
        %6134 = vdwg.mxu0
        %v6135 = vsel %vm1150, %v6133, -inf
        %6136 = vmax.xlane.f32.xlu0 %v6135
        %v6137 = vpop.xlane.xlu0 %6136
        %v6138 = vsub.f32 %v6133, %v6137
        %v6139 = vmul.f32 %v6138, 1.442695
        %v6140 = vpow.pop %v6139
        %v6141 = vsel %vm1150, %v6140, 0.0
        %6142 = vadd.xlane.f32.xlu0 %v6141
        %v6143 = vpop.xlane.xlu0 %6142
        %v6144 = vrcp.pop %v6143
        %v6145 = vmul.f32 %v6140, %v6144
        %6146 = vrot.lane.b32.xlu0 %v5739, 116
        %v6147 = vpop.permute.xlu0 %6146
        %6148 = vrot.lane.b32.xlu0 %v5742, 116
        %v6149 = vpop.permute.xlu0 %6148
        %6150 = vrot.lane.b32.xlu0 %v5745, 116
        %v6151 = vpop.permute.xlu0 %6150
        %6152 = vrot.lane.b32.xlu0 %v5748, 116
        %v6153 = vpop.permute.xlu0 %6152
        %6154 = vrot.lane.b32.xlu0 %v5751, 116
        %v6155 = vpop.permute.xlu0 %6154
        %6156 = vrot.lane.b32.xlu0 %v5754, 116
        %v6157 = vpop.permute.xlu0 %6156
        %6158 = vrot.lane.b32.xlu0 %v5757, 116
        %v6159 = vpop.permute.xlu0 %6158
        %6160 = vrot.lane.b32.xlu0 %v5760, 116
        %v6161 = vpop.permute.xlu0 %6160
        %v6171 = vsel %vm1150, %v6145, 0
        %6173 = vmatpush.msra.mxu0 0.0
        %6174 = vmatpush.msra.mxu0 0.0
        %6175 = vmatpush.msra.mxu0 0.0
        %6176 = vmatpush.msra.mxu0 0.0
        %6177 = vmatpush.msra.mxu0 0.0
        %6178 = vmatpush.msra.mxu0 0.0
        %6179 = vmatpush.msra.mxu0 0.0
        %6180 = vmatpush.msra.mxu0 0.0
        %6181 = vmatpush.msra.mxu0 %v6161
        %6182 = vmatpush.msra.mxu0 %v6159
        %6183 = vmatpush.msra.mxu0 %v6157
        %6184 = vmatpush.msra.mxu0 %v6155
        %6185 = vmatpush.msra.mxu0 %v6153
        %6186 = vmatpush.msra.mxu0 %v6151
        %6187 = vmatpush.msra.mxu0 %v6149
        %6188 = vmatpush.msra.mxu0 %v6147
        %6189 = vmatmul.f32.gmra.mxu0 %v6171
        %v6190 = vpop.f32.mrf.mxu0
        %v6191 = vadd.f32 0.0, %v6190
        %6192 = vdwg.mxu0
        %6194 = vrot.lane.b32.xlu0 %v5963, 4
        %v6195 = vpop.permute.xlu0 %6194
        %6198 = vrot.lane.b32.xlu0 %v6077, 8
        %v6199 = vpop.permute.xlu0 %6198
        %6202 = vrot.lane.b32.xlu0 %v6191, 12
        %v6203 = vpop.permute.xlu0 %6202
        %v6205 = vsel %vm1102, %v5841, %v6195
        %v6206 = vsel %vm606, %v6205, %v6199
        %v6207 = vsel %vm1549, %v6206, %v6203
        %v6208 = vperm.slane %v463, 0
        %v6210 = vsel %vm876, %v6207, 0
        %6212 = vmatpush.msra.mxu0 0.0
        %6213 = vmatpush.msra.mxu0 0.0
        %6214 = vmatpush.msra.mxu0 0.0
        %6215 = vmatpush.msra.mxu0 0.0
        %6216 = vmatpush.msra.mxu0 0.0
        %6217 = vmatpush.msra.mxu0 0.0
        %6218 = vmatpush.msra.mxu0 0.0
        %6219 = vmatpush.msra.mxu0 0.0
        %6220 = vmatpush.msra.mxu0 0.0
        %6221 = vmatpush.msra.mxu0 0.0
        %6222 = vmatpush.msra.mxu0 0.0
        %6223 = vmatpush.msra.mxu0 0.0
        %6224 = vmatpush.msra.mxu0 0.0
        %6225 = vmatpush.msra.mxu0 0.0
        %6226 = vmatpush.msra.mxu0 %v462
        %6227 = vmatpush.msra.mxu0 %v461
        %6228 = vmatmul.f32.gmra.mxu0 %v6210
        %v6229 = vpop.f32.mrf.mxu0
        %v6230 = vadd.f32 %v6208, %v6229
        %6231 = vdwg.mxu0
        %v6232 = vadd.f32 %v4200, %v6230
        %v6233 = vsel %vm540, %v6232, 0.0
        %6234 = vadd.xlane.f32.xlu0 %v6233
        %v6235 = vpop.xlane.xlu0 %6234
        %v6236 = vmul.f32 %v6235, %v913
        %v6237 = vsub.f32 %v6232, %v6236
        %v6238 = vmul.f32 %v6237, %v6237
        %v6239 = vsel %vm540, %v6238, 0.0
        %6240 = vadd.xlane.f32.xlu0 %v6239
        %v6241 = vpop.xlane.xlu0 %6240
        %v6242 = vmul.f32 %v6241, %v913
        %v6243 = vadd.f32 %v6242, 1e-05
        %v6244 = vrsqrt.pop %v6243
        %v6245 = vmul.f32 %v6244, %v6243
        %v6246 = vmul.f32 %v6245, %v6244
        %v6247 = vmul.f32 0.5, %v6246
        %v6248 = vsub.f32 1.5, %v6247
        %v6249 = vmul.f32 %v6244, %v6248
        %vm6250 = vweird.f32 %v6243
        %vm6251 = vweird.f32 %v6244
        %vm6252 = vmor %vm6250, %vm6251
        %v6253 = vsel %vm6252, %v6244, %v6249
        %v6254 = vmul.f32 %v6237, %v6253
        %v6255 = vperm.slane %v464, 0
        %v6256 = vmul.f32 %v6254, %v6255
        %v6257 = vperm.slane %v465, 0
        %v6258 = vadd.f32 %v6256, %v6257
        %6259 = vst.msk [vmem:[%s263] sm:$0xff] %vm540, %v6258
        %6260 = vst.msk [vmem:[%s289] sm:$0xff] %vm540, %v5593
        %6261 = vst.msk [vmem:[%s289 + $0x8] sm:$0xff] %vm540, %v5594
        %6262 = vst.msk [vmem:[%s289 + $0x10] sm:$0xff] %vm540, %v5595
        %6263 = vst.msk [vmem:[%s289 + $0x18] sm:$0xff] %vm540, %v5596
        %6264 = vst.msk [vmem:[%s289 + $0x20] sm:$0xff] %vm540, %v5597
        %6265 = vst.msk [vmem:[%s289 + $0x28] sm:$0xff] %vm540, %v5598
        %6266 = vst.msk [vmem:[%s289 + $0x30] sm:$0xff] %vm540, %v5599
        %6267 = vst.msk [vmem:[%s289 + $0x38] sm:$0xff] %vm540, %v5600
        %s6268 = sand.u32 %s128, 1
        %s6269 = scalar_lea.sflag [#allocation4], %s6268
        %s6270 = sand.u32 %s128, 1
        %s6271 = smul.addr %s6270, 8
        %s6272 = scalar_lea.vmem [#allocation5], %s6271
        %p6273 = scmp.lt.s32.totalorder %s21, 1
        %s6274 = scalar_select %p6273, %s21, 1
        %s6275 = smul.addr %s6274, 8
        %s6276 = smul.addr %s6275, 8
        %s6277 = scalar_lea.vmem %s5, %s6276
        // Predicated region
        $region41: #{two_way_transformer.1} parent=35 // pred_check
          %p6278 = pneg %p138
        $region42: #{two_way_transformer.1} parent=35 // pred_check_branch
          %6280 = sbr.rel (%p6278) target = $region44
        $region43: #{two_way_transformer.1} parent=35 // pred_region
          %6282 = vsyncadd %s6269, 0
          %s6283 = smul.addr %s21, 8
          %s6284 = scalar_lea.hbm %s4, %s6283
          %s6286 = sshll.u32 %s6272, 4
          %s6287 = int_to_ptr.vmem [resolvable:$true] %s6286
          %s6288 = sshll.u32 %s6284, 4
          %s6289 = int_to_ptr.hbm [resolvable:$true] %s6288
          %6291 = dma.vmem_to_hbm [thread:$0]  %s6287, 128, %s6289, %s6269
        $region44: #{two_way_transformer.1} parent=35 // pred_fallthru
          _
        // Predicated region
        $region45: #{two_way_transformer.1} parent=35 // pred_check
          %p6292 = pneg %p164
        $region46: #{two_way_transformer.1} parent=35 // pred_check_branch
          %6294 = sbr.rel (%p6292) target = $region48
        $region47: #{two_way_transformer.1} parent=35 // pred_region
          _
        $region48: #{two_way_transformer.1} parent=35 // pred_fallthru
          _
      $region36: #{two_way_transformer.1} parent=5 // pred_fallthru
        _
      %p6295 = scmp.le.s32.totalorder 2, %s16
      // Predicated region
      $region49: #{two_way_transformer.1} parent=5 // pred_check
        %p6296 = pneg %p6295
      $region50: #{two_way_transformer.1} parent=5 // pred_check_branch
        %6298 = sbr.rel (%p6296) target = $region52
      $region51: #{two_way_transformer.1} parent=5 // pred_region
        %s6299 = ssub.s32 %s16, 2
        // Predicated region
        $region53: #{two_way_transformer.1} parent=51 // pred_check
          %p6300 = pneg %p144
        $region54: #{two_way_transformer.1} parent=51 // pred_check_branch
          %6302 = sbr.rel (%p6300) target = $region56
        $region55: #{two_way_transformer.1} parent=51 // pred_region
          %s6303 = sand.u32 %s129, 1
          %s6304 = scalar_lea.sflag [#allocation4], %s6303
          %s6305 = sand.u32 %s129, 1
          %s6306 = smul.addr %s6305, 8
          %s6307 = scalar_lea.vmem [#allocation5], %s6306
          %6309 = dma.done %s6304, 128
        $region56: #{two_way_transformer.1} parent=51 // pred_fallthru
          _
        // Predicated region
        $region57: #{two_way_transformer.1} parent=51 // pred_check
          %p6310 = pneg %p170
        $region58: #{two_way_transformer.1} parent=51 // pred_check_branch
          %6312 = sbr.rel (%p6310) target = $region60
        $region59: #{two_way_transformer.1} parent=51 // pred_region
          %p6313 = scmp.lt.s32.totalorder %s22, 1
          %s6314 = scalar_select %p6313, %s22, 1
          %s6315 = smul.addr %s6314, 8
          %s6316 = smul.addr %s6315, 8
          %s6317 = scalar_lea.vmem %s5, %s6316
        $region60: #{two_way_transformer.1} parent=51 // pred_fallthru
          _
      $region52: #{two_way_transformer.1} parent=5 // pred_fallthru
        _
    $region6: #{two_way_transformer.1} parent=1 // loop_footer
      %s20 = sadd.s32 1, %s16
    $region7: #{two_way_transformer.1} parent=1 // loop_footer_branch
      %15 = sbr.rel target = $region3
    $region8: #{two_way_transformer.1} parent=1 // loop_exit
      _
    %6318 = vsyncpa [#allocation3], 1
    %s6319 = scalar_lea.sflag [#allocation3], 1
    %6320 = vsyncpa %s6319, 1
    %6321 = vsyncpa [#allocation4], 1
    %s6322 = scalar_lea.sflag [#allocation4], 1
    %6323 = vsyncpa %s6322, 1

</llo_original>
